<compile_context>
chip_gen: v5e
topology: v5e:2x2
jax: 0.10.0
libtpu: 0.0.40
codegen_flags: <defaults>
</compile_context>

<pallas_src>
import functools

import jax
import jax.numpy as jnp
from jax.experimental import pallas as pl
from jax.experimental.pallas import tpu as pltpu

EPS = 1e-5
_BF16 = jnp.bfloat16


def _round_up(x, m):
    return (x + m - 1) // m * m


def _cp(*sem):
    return pltpu.CompilerParams(dimension_semantics=tuple(sem),
                                vmem_limit_bytes=32 * 1024 * 1024)


def _chunk_rows(h, wp, cout):
    # Bound the live f32 accumulator per chunk to ~1 MiB (safe on v7x's 64 MiB VMEM).
    budget_rows = (1 << 18) // max(cout, 1)
    return max(1, min(h, budget_rows // wp))


# --------------------------------------------------------------------------- kernels
def _matmul_relu_kernel(lhs_ref, w_ref, o_ref):
    y = jnp.dot(lhs_ref[...], w_ref[...], preferred_element_type=jnp.float32)
    o_ref[...] = jnp.maximum(y, 0.0).astype(o_ref.dtype)


def _matmul_stats_kernel(lhs_ref, w_ref, y_ref, s_ref, q_ref):
    # Conv-as-matmul that also emits per-tile partial channel sum / sumsq (f32) so the
    # grid stays fully parallel; the (steps,1,C) partials are reduced by a tiny XLA sum.
    y = jnp.dot(lhs_ref[...], w_ref[...], preferred_element_type=jnp.float32)
    y_ref[...] = y.astype(y_ref.dtype)                      # raw conv output, bf16
    s_ref[0] = jnp.sum(y, axis=0, keepdims=True)
    q_ref[0] = jnp.sum(y * y, axis=0, keepdims=True)


def _acc_taps(xv, w_ref, cin, cout, base, length, wp):
    # 3x3 conv over a row-flattened zero-padded input: every tap (dy,dx) of the chunk
    # starting at flat row `base` is one contiguous slab at offset base + dy*wp + dx,
    # so the conv is 9 MXU matmuls accumulated in f32.
    acc = jnp.zeros((length, cout), jnp.float32)
    for dy in range(3):
        for dx in range(3):
            off = base + dy * wp + dx
            t = dy * 3 + dx
            acc = acc + jnp.dot(xv[off:off + length, :],
                                w_ref[t * cin:(t + 1) * cin, :],
                                preferred_element_type=jnp.float32)
    return acc


def _conv3x3_in_affine_stats_kernel(x_ref, w_ref, sc_ref, sh_ref, inmask_ref,
                                    colmask_ref, y_ref, s_ref, q_ref,
                                    *, h, wp, cin, cout, chunk_h):
    # x_ref: (1, hp*wp, cin) RAW (pre-BN) producer output, zero padded and flattened.
    # The producer's BN affine + ReLU is applied here (fused into the consumer), then
    # the pad mask restores exact zero padding.  Output is the RAW conv result (bf16,
    # this layer's own BN affine is applied by the next consumer) plus per-image
    # channel sum / sumsq of the valid pixels (wrapped columns zeroed by colmask).
    x = x_ref[0].astype(jnp.float32)
    x = jnp.maximum(x * sc_ref[...] + sh_ref[...], 0.0) * inmask_ref[...]
    xv = x.astype(_BF16)

    s_tot = jnp.zeros((1, cout), jnp.float32)
    q_tot = jnp.zeros((1, cout), jnp.float32)
    for i0 in range(0, h, chunk_h):
        ch = min(chunk_h, h - i0)
        base, length = i0 * wp, ch * wp
        acc = _acc_taps(xv, w_ref, cin, cout, base, length, wp)
        acc = acc * colmask_ref[base:base + length, :]       # zero wrapped columns
        y_ref[0, base:base + length, :] = acc.astype(y_ref.dtype)
        s_tot = s_tot + jnp.sum(acc, axis=0, keepdims=True)
        q_tot = q_tot + jnp.sum(acc * acc, axis=0, keepdims=True)
    s_ref[0] = s_tot
    q_ref[0] = q_tot


def _mixed_mid_kernel(x_ref, w_ref, o1_ref, o2_ref, *, h, wp, chunk_h):
    # x_ref: (1, hp*wp, 192) = padded [b0 | b1_1 | b2_1].  Block-diagonal (9*128, 160)
    # weight computes b1 (64) and b2-mid (96) in one pass over the shared activations;
    # b0 is copied through so o1 is a dense 128-wide slab [b0 | b1].
    xv = x_ref[0]
    xc = xv[:, 64:192]
    for i0 in range(0, h, chunk_h):
        ch = min(chunk_h, h - i0)
        base, length = i0 * wp, ch * wp
        acc = jnp.maximum(_acc_taps(xc, w_ref, 128, 160, base, length, wp), 0.0)
        o1_ref[0, base:base + length, 0:64] = \
            xv[base + wp + 1:base + wp + 1 + length, 0:64]
        o1_ref[0, base:base + length, 64:128] = acc[:, 0:64].astype(o1_ref.dtype)
        o2_ref[0, base:base + length, :] = acc[:, 64:160].astype(o2_ref.dtype)


def _mixed_tail_kernel(a_ref, x_ref, wa_ref, wb_ref, o_ref, *, h, wp, chunk_h):
    # a_ref: (1, hp*wp, 96) padded b2-mid; x_ref: (1, hp*wp, 192) padded Mixed_3b input.
    # Computes b2 = conv3x3(b2-mid) and the fused avgpool3x3+1x1 branch_pool, stored as
    # one 128-wide slab [b2 | pool].
    av = a_ref[0]
    xv = x_ref[0]
    for i0 in range(0, h, chunk_h):
        ch = min(chunk_h, h - i0)
        base, length = i0 * wp, ch * wp
        b2 = jnp.maximum(_acc_taps(av, wa_ref, 96, 96, base, length, wp), 0.0)
        bp = jnp.maximum(_acc_taps(xv, wb_ref, 192, 32, base, length, wp), 0.0)
        o_ref[0, base:base + length, 0:96] = b2.astype(o_ref.dtype)
        o_ref[0, base:base + length, 96:128] = bp.astype(o_ref.dtype)


def _maxpool_affine_kernel(x_ref, sc_ref, sh_ref, o_ref, *, hp, wp2, c, ho, wo):
    # x_ref: (1, hp, wp2, 2c) zero-padded RAW conv output with adjacent W columns
    # paired into channels (free reshape in the wrapper).  The producer's BN affine
    # + ReLU is applied here, pads are masked back to 0 (post-ReLU values are >= 0, so
    # 0-pads never win the max -> identical to PyTorch's pad-excluding maxpool), then
    # the 3x3 / stride-2 max is computed directly.
    z = x_ref[0].astype(jnp.float32)
    z = jnp.maximum(z * sc_ref[...] + sh_ref[...], 0.0)
    ri = jax.lax.broadcasted_iota(jnp.int32, z.shape, 0)
    pi = jax.lax.broadcasted_iota(jnp.int32, z.shape, 1)
    ci = jax.lax.broadcasted_iota(jnp.int32, z.shape, 2)
    pad = ((ri == 0) | (ri == hp - 1)
           | ((pi == 0) & (ci < c)) | ((pi == wp2 - 1) & (ci >= c)))
    z = jnp.where(pad, 0.0, z)
    a = z[:, 0:wo, 0:c]
    b = z[:, 0:wo, c:2 * c]
    d = z[:, 1:wo + 1, 0:c]
    mw = jnp.maximum(jnp.maximum(a, b), d)                   # (hp, wo, c)
    m2 = mw.reshape(hp // 2, 2, wo, c)                       # outer-dim split: free
    r0 = m2[0:ho, 0, :, :]
    r1 = m2[0:ho, 1, :, :]
    r2 = m2[1:ho + 1, 0, :, :]
    o_ref[0] = jnp.maximum(jnp.maximum(r0, r1), r2).astype(o_ref.dtype)


# ------------------------------------------------------------------------- matmul ops
def _matmul_relu(lhs, w):
    m, k = lhs.shape
    cout = w.shape[1]
    tm = min(1024, _round_up(m, 16))
    mpad = _round_up(m, tm)
    if mpad != m:
        lhs = jnp.pad(lhs, ((0, mpad - m), (0, 0)))
    out = pl.pallas_call(
        _matmul_relu_kernel,
        out_shape=jax.ShapeDtypeStruct((mpad, cout), _BF16),
        grid=(mpad // tm,),
        in_specs=[pl.BlockSpec((tm, k), lambda i: (i, 0)),
                  pl.BlockSpec((k, cout), lambda i: (0, 0))],
        out_specs=pl.BlockSpec((tm, cout), lambda i: (i, 0)),
        compiler_params=_cp("parallel"),
    )(lhs, w)
    return out[:m]


def _matmul_bn_stats(lhs, w):
    # Returns raw conv output (bf16) plus per-channel sum / sumsq (f32, (1,Cout)).
    m, k = lhs.shape
    cout = w.shape[1]
    tm = min(1024, _round_up(m, 16))
    mpad = _round_up(m, tm)
    if mpad != m:
        # zero rows map to zero conv outputs -> they do not perturb the BN sums.
        lhs = jnp.pad(lhs, ((0, mpad - m), (0, 0)))
    nt = mpad // tm
    y, s, q = pl.pallas_call(
        _matmul_stats_kernel,
        out_shape=(jax.ShapeDtypeStruct((mpad, cout), _BF16),
                   jax.ShapeDtypeStruct((nt, 1, cout), jnp.float32),
                   jax.ShapeDtypeStruct((nt, 1, cout), jnp.float32)),
        grid=(nt,),
        in_specs=[pl.BlockSpec((tm, k), lambda i: (i, 0)),
                  pl.BlockSpec((k, cout), lambda i: (0, 0))],
        out_specs=(pl.BlockSpec((tm, cout), lambda i: (i, 0)),
                   pl.BlockSpec((1, 1, cout), lambda i: (i, 0, 0)),
                   pl.BlockSpec((1, 1, cout), lambda i: (i, 0, 0))),
        compiler_params=_cp("parallel"),
    )(lhs, w)
    return y[:m], jnp.sum(s, axis=0), jnp.sum(q, axis=0)


def _bn_scale_shift(s, q, rows, gamma, beta):
    # Training-mode BatchNorm (biased batch variance), eps=1e-5.
    mean = s / rows
    var = jnp.maximum(q / rows - mean * mean, 0.0)
    scale = gamma.reshape(1, -1) * jax.lax.rsqrt(var + EPS)
    shift = beta.reshape(1, -1) - mean * scale
    return scale, shift


# --------------------------------------------------------------------- conv wrappers
def _tap_weight(w_oihw):
    cout, cin, kh, kw = w_oihw.shape
    return jnp.transpose(w_oihw, (2, 3, 1, 0)).reshape(kh * kw * cin, cout)


def _pad_flatten_for_conv3x3(x):
    # Zero-pad spatially (1 top, 2 bottom so tap slabs stay in bounds; 1 left, and
    # right-pad so the padded width wp is a multiple of 8 -> dy*wp is sublane aligned)
    # and row-flatten (free reshape).
    n, h, w, c = x.shape
    wp = _round_up(w + 2, 8)
    hp = h + 3
    xp = jnp.pad(x, ((0, 0), (1, 2), (1, wp - w - 1), (0, 0)))
    return xp.reshape(n, hp * wp, c), hp, wp


def _im2col(x, k, stride, pad):
    # Only used for the Cin=3 stem conv (K = 147); 3x3 convs never im2col.
    n, h, w, c = x.shape
    xp = jnp.pad(x, ((0, 0), (pad, pad), (pad, pad), (0, 0)))
    ho = (h + 2 * pad - k) // stride + 1
    wo = (w + 2 * pad - k) // stride + 1
    cols = []
    for dy in range(k):
        for dx in range(k):
            cols.append(xp[:, dy:dy + stride * (ho - 1) + 1:stride,
                           dx:dx + stride * (wo - 1) + 1:stride, :])
    patches = jnp.concatenate(cols, axis=-1)
    return patches.reshape(n * ho * wo, k * k * c), (n, ho, wo)


def conv7x7_s2_p3_stats(x, w_oihw):
    # Returns RAW conv output (n,ho,wo,64) bf16 plus BN batch sums (the affine+ReLU is
    # applied by the following maxpool kernel).
    cout, cin, kh, _ = w_oihw.shape
    patches, (n, ho, wo) = _im2col(x, kh, 2, 3)              # bf16 patches
    k = kh * kh * cin
    kpad = _round_up(k, 16)                                  # bf16 sublane alignment
    w2 = jnp.transpose(w_oihw, (2, 3, 1, 0)).reshape(k, cout)
    if kpad != k:
        patches = jnp.pad(patches, ((0, 0), (0, kpad - k)))
        w2 = jnp.pad(w2, ((0, kpad - k), (0, 0)))
    y, s, q = _matmul_bn_stats(patches.astype(_BF16), w2.astype(_BF16))
    return y.reshape(n, ho, wo, cout), s, q


def conv3x3_bn_stats_fused_in(x_raw, sc_in, sh_in, w_oihw):
    # 3x3 / s1 / p1 conv whose input is the RAW output of the previous BN layer: the
    # previous layer's affine+ReLU is fused in-kernel (pad mask keeps zero padding
    # exact).  Returns this layer's RAW conv output (bf16) + BN batch sums.
    n, h, w, cin = x_raw.shape
    cout = w_oihw.shape[0]
    xf, hp, wp = _pad_flatten_for_conv3x3(x_raw)
    w_flat = _tap_weight(w_oihw).astype(_BF16)
    inmask = jnp.pad(jnp.ones((h, w), jnp.float32),
                     ((1, 2), (1, wp - w - 1))).reshape(hp * wp, 1)
    colmask = (jnp.arange(h * wp) % wp < w).astype(jnp.float32).reshape(h * wp, 1)
    chunk_h = _chunk_rows(h, wp, cout)
    kern = functools.partial(_conv3x3_in_affine_stats_kernel,
                             h=h, wp=wp, cin=cin, cout=cout, chunk_h=chunk_h)
    y, s, q = pl.pallas_call(
        kern,
        out_shape=(jax.ShapeDtypeStruct((n, h * wp, cout), _BF16),
                   jax.ShapeDtypeStruct((n, 1, cout), jnp.float32),
                   jax.ShapeDtypeStruct((n, 1, cout), jnp.float32)),
        grid=(n,),
        in_specs=[pl.BlockSpec((1, hp * wp, cin), lambda i: (i, 0, 0)),
                  pl.BlockSpec((9 * cin, cout), lambda i: (0, 0)),
                  pl.BlockSpec((1, cin), lambda i: (0, 0)),
                  pl.BlockSpec((1, cin), lambda i: (0, 0)),
                  pl.BlockSpec((hp * wp, 1), lambda i: (0, 0)),
                  pl.BlockSpec((h * wp, 1), lambda i: (0, 0))],
        out_specs=(pl.BlockSpec((1, h * wp, cout), lambda i: (i, 0, 0)),
                   pl.BlockSpec((1, 1, cout), lambda i: (i, 0, 0)),
                   pl.BlockSpec((1, 1, cout), lambda i: (i, 0, 0))),
        compiler_params=_cp("parallel"),
    )(xf, w_flat, sc_in, sh_in, inmask, colmask)
    y = y.reshape(n, h, wp, cout)[:, :, :w, :]               # trim wrapped columns
    return y, jnp.sum(s, axis=0), jnp.sum(q, axis=0)


def max_pool_3x3_s2_p1_bn_relu(y_raw, scale, shift):
    # BN affine + ReLU (fused from the producing conv) followed by maxpool(3,2,1).
    n, h, w, c = y_raw.shape
    assert h % 2 == 0 and w % 2 == 0, "stride-2 pair trick assumes even spatial dims"
    xp = jnp.pad(y_raw, ((0, 0), (1, 1), (1, 1), (0, 0)))    # pad value masked in-kernel
    hp, wpd = h + 2, w + 2
    wp2 = wpd // 2
    xp2 = xp.reshape(n, hp, wp2, 2 * c)                      # free reshape: pair W cols
    ho, wo = h // 2, w // 2
    sc2 = jnp.concatenate([scale, scale], axis=-1)           # (1, 2c)
    sh2 = jnp.concatenate([shift, shift], axis=-1)
    kern = functools.partial(_maxpool_affine_kernel, hp=hp, wp2=wp2, c=c, ho=ho, wo=wo)
    return pl.pallas_call(
        kern,
        out_shape=jax.ShapeDtypeStruct((n, ho, wo, c), _BF16),
        grid=(n,),
        in_specs=[pl.BlockSpec((1, hp, wp2, 2 * c), lambda i: (i, 0, 0, 0)),
                  pl.BlockSpec((1, 2 * c), lambda i: (0, 0)),
                  pl.BlockSpec((1, 2 * c), lambda i: (0, 0))],
        out_specs=pl.BlockSpec((1, ho, wo, c), lambda i: (i, 0, 0, 0)),
        compiler_params=_cp("parallel"),
    )(xp2, sc2, sh2)


def mixed_mid(fused, w_b1_2, w_b2_2):
    # fused: (n,h,w,192) = [b0 | b1_1 | b2_1] post-ReLU.  Block-diagonal 3x3 conv over
    # the 128 contiguous channels 64:192 -> outputs [b0|b1] (128) and b2-mid (96).
    n, h, w, _ = fused.shape
    xf, hp, wp = _pad_flatten_for_conv3x3(fused)
    wb1 = jnp.transpose(w_b1_2, (2, 3, 1, 0))                # (3,3,64,64)
    wb2 = jnp.transpose(w_b2_2, (2, 3, 1, 0))                # (3,3,64,96)
    top = jnp.concatenate([wb1, jnp.zeros((3, 3, 64, 96), jnp.float32)], axis=3)
    bot = jnp.concatenate([jnp.zeros((3, 3, 64, 64), jnp.float32), wb2], axis=3)
    w_bd = jnp.concatenate([top, bot], axis=2).reshape(9 * 128, 160).astype(_BF16)
    chunk_h = _chunk_rows(h, wp, 160)
    kern = functools.partial(_mixed_mid_kernel, h=h, wp=wp, chunk_h=chunk_h)
    o1, o2 = pl.pallas_call(
        kern,
        out_shape=(jax.ShapeDtypeStruct((n, h * wp, 128), _BF16),
                   jax.ShapeDtypeStruct((n, h * wp, 96), _BF16)),
        grid=(n,),
        in_specs=[pl.BlockSpec((1, hp * wp, 192), lambda i: (i, 0, 0)),
                  pl.BlockSpec((9 * 128, 160), lambda i: (0, 0))],
        out_specs=(pl.BlockSpec((1, h * wp, 128), lambda i: (i, 0, 0)),
                   pl.BlockSpec((1, h * wp, 96), lambda i: (i, 0, 0))),
        compiler_params=_cp("parallel"),
    )(xf, w_bd)
    o1 = o1.reshape(n, h, wp, 128)[:, :, :w, :]
    o2 = o2.reshape(n, h, wp, 96)[:, :, :w, :]
    return o1, o2


def mixed_tail(b2mid, x, w_b2_3, w_bp):
    # One kernel producing the second 128-wide output slab [b2 (96) | branch_pool (32)].
    # avg_pool2d(3,1,1,count_include_pad=True)+1x1 == 3x3 conv with the 1x1 weight / 9
    # on every tap of the zero-padded input.
    n, h, w, _ = x.shape
    af, hp, wp = _pad_flatten_for_conv3x3(b2mid)
    xf, _, _ = _pad_flatten_for_conv3x3(x)
    wa = _tap_weight(w_b2_3).astype(_BF16)                   # (9*96, 96)
    w_tap = jnp.transpose(w_bp.reshape(32, 192), (1, 0)) * (1.0 / 9.0)
    wb = jnp.tile(w_tap, (9, 1)).astype(_BF16)               # (9*192, 32)
    chunk_h = _chunk_rows(h, wp, 128)
    kern = functools.partial(_mixed_tail_kernel, h=h, wp=wp, chunk_h=chunk_h)
    o = pl.pallas_call(
        kern,
        out_shape=jax.ShapeDtypeStruct((n, h * wp, 128), _BF16),
        grid=(n,),
        in_specs=[pl.BlockSpec((1, hp * wp, 96), lambda i: (i, 0, 0)),
                  pl.BlockSpec((1, hp * wp, 192), lambda i: (i, 0, 0)),
                  pl.BlockSpec((9 * 96, 96), lambda i: (0, 0)),
                  pl.BlockSpec((9 * 192, 32), lambda i: (0, 0))],
        out_specs=pl.BlockSpec((1, h * wp, 128), lambda i: (i, 0, 0)),
        compiler_params=_cp("parallel"),
    )(af, xf, wa, wb)
    return o.reshape(n, h, wp, 128)[:, :, :w, :]


# ------------------------------------------------------------------------------ model
def init_params(key):
    def conv_w(k, cout, cin, ks):
        return jax.random.normal(k, (cout, cin, ks, ks), jnp.float32) * 0.05

    keys = jax.random.split(key, 24)
    p = {}
    # stem (BasicConv2d with_bn=True, training-mode batch statistics)
    p["conv1a_w"] = conv_w(keys[0], 64, 3, 7)
    p["conv1a_g"] = 1.0 + 0.1 * jax.random.normal(keys[1], (64,), jnp.float32)
    p["conv1a_b"] = 0.1 * jax.random.normal(keys[2], (64,), jnp.float32)
    p["conv2b_w"] = conv_w(keys[3], 64, 64, 1)
    p["conv2b_g"] = 1.0 + 0.1 * jax.random.normal(keys[4], (64,), jnp.float32)
    p["conv2b_b"] = 0.1 * jax.random.normal(keys[5], (64,), jnp.float32)
    p["conv2c_w"] = conv_w(keys[6], 192, 64, 3)
    p["conv2c_g"] = 1.0 + 0.1 * jax.random.normal(keys[7], (192,), jnp.float32)
    p["conv2c_b"] = 0.1 * jax.random.normal(keys[8], (192,), jnp.float32)
    # Mixed_3b = InceptionD(192, pool_features=32) -- with_bn defaults to False
    p["b0_w"] = conv_w(keys[9], 64, 192, 1)
    p["b1_1_w"] = conv_w(keys[10], 64, 192, 1)
    p["b1_2_w"] = conv_w(keys[11], 64, 64, 3)
    p["b2_1_w"] = conv_w(keys[12], 64, 192, 1)
    p["b2_2_w"] = conv_w(keys[13], 96, 64, 3)
    p["b2_3_w"] = conv_w(keys[14], 96, 96, 3)
    p["bp_w"] = conv_w(keys[15], 32, 192, 1)
    return p


@jax.jit
def inception2_forward(params, x_nchw):
    x = jnp.transpose(x_nchw, (0, 2, 3, 1)).astype(_BF16)    # NCHW -> NHWC, bf16 acts

    # ---- stem ----
    y1, s1, q1 = conv7x7_s2_p3_stats(x, params["conv1a_w"])
    n, h1, w1, _ = y1.shape
    sc1, sh1 = _bn_scale_shift(s1, q1, n * h1 * w1,
                               params["conv1a_g"], params["conv1a_b"])
    x = max_pool_3x3_s2_p1_bn_relu(y1, sc1, sh1)             # affine+ReLU fused here

    n, h2, w2, c2 = x.shape
    w2b = jnp.transpose(params["conv2b_w"].reshape(64, c2), (1, 0)).astype(_BF16)
    y2, s2, q2 = _matmul_bn_stats(x.reshape(n * h2 * w2, c2), w2b)
    sc2, sh2 = _bn_scale_shift(s2, q2, n * h2 * w2,
                               params["conv2b_g"], params["conv2b_b"])
    y2 = y2.reshape(n, h2, w2, 64)                           # raw conv2b output

    # conv2c consumes raw conv2b output: conv2b's affine+ReLU fused into conv2c input
    y3, s3, q3 = conv3x3_bn_stats_fused_in(y2, sc2, sh2, params["conv2c_w"])
    sc3, sh3 = _bn_scale_shift(s3, q3, n * h2 * w2,
                               params["conv2c_g"], params["conv2c_b"])
    x = max_pool_3x3_s2_p1_bn_relu(y3, sc3, sh3)             # affine+ReLU fused here

    # ---- Mixed_3b = InceptionD(192, pool_features=32), no BN ----
    n, h, w, cin = x.shape
    # fuse the three 1x1 convs that all read x into one lane-dense (192 -> 192) matmul
    w_fused = jnp.concatenate(
        [params["b0_w"].reshape(64, cin),
         params["b1_1_w"].reshape(64, cin),
         params["b2_1_w"].reshape(64, cin)], axis=0)
    w_fused = jnp.transpose(w_fused, (1, 0)).astype(_BF16)   # (192, 192)
    fused = _matmul_relu(x.reshape(n * h * w, cin), w_fused).reshape(n, h, w, 192)

    o01, b2mid = mixed_mid(fused, params["b1_2_w"], params["b2_2_w"])   # [b0|b1], b2mid
    tail = mixed_tail(b2mid, x, params["b2_3_w"], params["bp_w"])       # [b2|pool]

    out = jnp.concatenate([o01, tail], axis=-1)              # torch.cat channel order
    return jnp.transpose(out, (0, 3, 1, 2)).astype(jnp.float32)   # NHWC -> NCHW


if __name__ == "__main__":
    key = jax.random.PRNGKey(0)
    k_x, k_p = jax.random.split(key)
    x = jax.random.normal(k_x, (2, 3, 16, 16), jnp.float32)  # NCHW
    params = init_params(k_p)

    out = inception2_forward(params, x)
    out = jax.block_until_ready(out)

    assert out.shape == (2, 256, 2, 2), out.shape            # 64 + 64 + 96 + 32 = 256
    assert bool(jnp.all(jnp.isfinite(out)))
    assert bool(jnp.all(out >= 0.0))                         # every branch ends in ReLU
    print("KERNEL_OK")
</pallas_src>

<mosaic_0001>
module attributes {stable_mosaic.version = 11 : i64} {
  func.func @_matmul_stats_kernel(%arg0: i32, %arg1: memref<128x160xbf16, #tpu.memory_space<vmem>>, %arg2: memref<160x64xbf16, #tpu.memory_space<vmem>>, %arg3: memref<128x64xbf16, #tpu.memory_space<vmem>>, %arg4: memref<1x1x64xf32, #tpu.memory_space<vmem>>, %arg5: memref<1x1x64xf32, #tpu.memory_space<vmem>>) attributes {dimension_semantics = [#tpu.dimension_semantics<parallel>], iteration_bounds = array<i64: 1>, scalar_prefetch = 0 : i64, scratch_operands = 0 : i64, tpu.core_type = #tpu.core_type<tc>, window_params = [{transform_indices = @transform_0, window_bounds = array<i64: 128, 160>}, {pipeline_mode = #tpu.pipeline_mode<synchronous>, transform_indices = @transform_1, window_bounds = array<i64: 160, 64>}, {transform_indices = @transform_2, window_bounds = array<i64: 128, 64>}, {transform_indices = @transform_3, window_bounds = array<i64: 1, 1, 64>}, {transform_indices = @transform_4, window_bounds = array<i64: 1, 1, 64>}]} {
    %c0 = arith.constant 0 : index
    %c0_0 = arith.constant 0 : index
    %0 = vector.load %arg1[%c0, %c0_0] : memref<128x160xbf16, #tpu.memory_space<vmem>>, vector<128x160xbf16>
    %c0_1 = arith.constant 0 : index
    %c0_2 = arith.constant 0 : index
    %1 = vector.load %arg2[%c0_1, %c0_2] : memref<160x64xbf16, #tpu.memory_space<vmem>>, vector<160x64xbf16>
    %cst = arith.constant dense<0.000000e+00> : vector<128x64xf32>
    %2 = tpu.matmul %0, %1, %cst {dimension_numbers = #tpu.dot_dimension_numbers<[1], [0], [0], [1], [0, 0, 1, 1], [], []>} : vector<128x160xbf16>, vector<160x64xbf16>, vector<128x64xf32> -> vector<128x64xf32>
    %3 = arith.truncf %2 : vector<128x64xf32> to vector<128x64xbf16>
    %c0_3 = arith.constant 0 : index
    %c0_4 = arith.constant 0 : index
    %4 = vector.load %arg3[%c0_3, %c0_4] : memref<128x64xbf16, #tpu.memory_space<vmem>>, vector<128x64xbf16>
    tpu.vector_store %arg3[%c0_3, %c0_4], %3 {strides = array<i32>} : memref<128x64xbf16, #tpu.memory_space<vmem>>, vector<128x64xbf16>,
    %cst_5 = arith.constant dense<0.000000e+00> : vector<64xf32>
    %5 = vector.multi_reduction <add>, %2, %cst_5 [0] : vector<128x64xf32> to vector<64xf32>
    %6 = vector.shape_cast %5 : vector<64xf32> to vector<1x64xf32>
    %c0_6 = arith.constant 0 : index
    %c0_7 = arith.constant 0 : index
    %c0_8 = arith.constant 0 : index
    %7 = vector.load %arg4[%c0_6, %c0_7, %c0_8] : memref<1x1x64xf32, #tpu.memory_space<vmem>>, vector<1x1x64xf32>
    %8 = vector.shape_cast %7 : vector<1x1x64xf32> to vector<1x64xf32>
    %9 = vector.shape_cast %6 : vector<1x64xf32> to vector<1x1x64xf32>
    tpu.vector_store %arg4[%c0_6, %c0_7, %c0_8], %9 {strides = array<i32>} : memref<1x1x64xf32, #tpu.memory_space<vmem>>, vector<1x1x64xf32>,
    %10 = arith.mulf %2, %2 : vector<128x64xf32>
    %cst_9 = arith.constant dense<0.000000e+00> : vector<64xf32>
    %11 = vector.multi_reduction <add>, %10, %cst_9 [0] : vector<128x64xf32> to vector<64xf32>
    %12 = vector.shape_cast %11 : vector<64xf32> to vector<1x64xf32>
    %c0_10 = arith.constant 0 : index
    %c0_11 = arith.constant 0 : index
    %c0_12 = arith.constant 0 : index
    %13 = vector.load %arg5[%c0_10, %c0_11, %c0_12] : memref<1x1x64xf32, #tpu.memory_space<vmem>>, vector<1x1x64xf32>
    %14 = vector.shape_cast %13 : vector<1x1x64xf32> to vector<1x64xf32>
    %15 = vector.shape_cast %12 : vector<1x64xf32> to vector<1x1x64xf32>
    tpu.vector_store %arg5[%c0_10, %c0_11, %c0_12], %15 {strides = array<i32>} : memref<1x1x64xf32, #tpu.memory_space<vmem>>, vector<1x1x64xf32>,
    return
  }
  func.func @transform_0(%arg0: i32) -> (i32, i32) {
    %c0_i32 = arith.constant 0 : i32
    %c0_i32_0 = arith.constant 0 : i32
    return %arg0, %c0_i32 : i32, i32
  }
  func.func @transform_1(%arg0: i32) -> (i32, i32) {
    %c0_i32 = arith.constant 0 : i32
    %c0_i32_0 = arith.constant 0 : i32
    %c0_i32_1 = arith.constant 0 : i32
    return %c0_i32, %c0_i32_0 : i32, i32
  }
  func.func @transform_2(%arg0: i32) -> (i32, i32) {
    %c0_i32 = arith.constant 0 : i32
    %c0_i32_0 = arith.constant 0 : i32
    return %arg0, %c0_i32 : i32, i32
  }
  func.func @transform_3(%arg0: i32) -> (i32, i32, i32) {
    %c0_i32 = arith.constant 0 : i32
    %c0_i32_0 = arith.constant 0 : i32
    %c0_i32_1 = arith.constant 0 : i32
    return %arg0, %c0_i32, %c0_i32_0 : i32, i32, i32
  }
  func.func @transform_4(%arg0: i32) -> (i32, i32, i32) {
    %c0_i32 = arith.constant 0 : i32
    %c0_i32_0 = arith.constant 0 : i32
    %c0_i32_1 = arith.constant 0 : i32
    return %arg0, %c0_i32, %c0_i32_0 : i32, i32, i32
  }
}

module attributes {stable_mosaic.version = 11 : i64} {
  func.func @_maxpool_affine_kernel(%arg0: i32, %arg1: memref<1x10x5x128xbf16, #tpu.memory_space<vmem>>, %arg2: memref<1x128xf32, #tpu.memory_space<vmem>>, %arg3: memref<1x128xf32, #tpu.memory_space<vmem>>, %arg4: memref<1x4x4x64xbf16, #tpu.memory_space<vmem>>) attributes {dimension_semantics = [#tpu.dimension_semantics<parallel>], iteration_bounds = array<i64: 2>, scalar_prefetch = 0 : i64, scratch_operands = 0 : i64, tpu.core_type = #tpu.core_type<tc>, window_params = [{transform_indices = @transform_0, window_bounds = array<i64: 1, 10, 5, 128>}, {pipeline_mode = #tpu.pipeline_mode<synchronous>, transform_indices = @transform_1, window_bounds = array<i64: 1, 128>}, {pipeline_mode = #tpu.pipeline_mode<synchronous>, transform_indices = @transform_2, window_bounds = array<i64: 1, 128>}, {transform_indices = @transform_3, window_bounds = array<i64: 1, 4, 4, 64>}]} {
    %c0 = arith.constant 0 : index
    %c0_0 = arith.constant 0 : index
    %c0_1 = arith.constant 0 : index
    %c0_2 = arith.constant 0 : index
    %0 = vector.load %arg1[%c0, %c0_0, %c0_1, %c0_2] : memref<1x10x5x128xbf16, #tpu.memory_space<vmem>>, vector<1x10x5x128xbf16>
    %1 = vector.shape_cast %0 : vector<1x10x5x128xbf16> to vector<10x5x128xbf16>
    %2 = arith.extf %1 : vector<10x5x128xbf16> to vector<10x5x128xf32>
    %c0_3 = arith.constant 0 : index
    %c0_4 = arith.constant 0 : index
    %3 = vector.load %arg2[%c0_3, %c0_4] : memref<1x128xf32, #tpu.memory_space<vmem>>, vector<1x128xf32>
    %4 = vector.shape_cast %3 : vector<1x128xf32> to vector<1x1x128xf32>
    %5 = vector.broadcast %4 : vector<1x1x128xf32> to vector<10x5x128xf32>
    %6 = arith.mulf %2, %5 : vector<10x5x128xf32>
    %c0_5 = arith.constant 0 : index
    %c0_6 = arith.constant 0 : index
    %7 = vector.load %arg3[%c0_5, %c0_6] : memref<1x128xf32, #tpu.memory_space<vmem>>, vector<1x128xf32>
    %8 = vector.shape_cast %7 : vector<1x128xf32> to vector<1x1x128xf32>
    %9 = vector.broadcast %8 : vector<1x1x128xf32> to vector<10x5x128xf32>
    %10 = arith.addf %6, %9 : vector<10x5x128xf32>
    %cst = arith.constant 0.000000e+00 : f32
    %11 = vector.broadcast %cst : f32 to vector<10x5x128xf32>
    %12 = arith.maximumf %10, %11 : vector<10x5x128xf32>
    %13 = tpu.iota {dimensions = array<i32: 0>} : vector<10x5x128xi32>
    %14 = tpu.iota {dimensions = array<i32: 1>} : vector<10x5x128xi32>
    %15 = tpu.iota {dimensions = array<i32: 2>} : vector<10x5x128xi32>
    %c0_i32 = arith.constant 0 : i32
    %16 = vector.broadcast %c0_i32 : i32 to vector<10x5x128xi32>
    %17 = arith.cmpi eq, %13, %16 : vector<10x5x128xi32>
    %c9_i32 = arith.constant 9 : i32
    %18 = vector.broadcast %c9_i32 : i32 to vector<10x5x128xi32>
    %19 = arith.cmpi eq, %13, %18 : vector<10x5x128xi32>
    %20 = arith.ori %17, %19 : vector<10x5x128xi1>
    %c0_i32_7 = arith.constant 0 : i32
    %21 = vector.broadcast %c0_i32_7 : i32 to vector<10x5x128xi32>
    %22 = arith.cmpi eq, %14, %21 : vector<10x5x128xi32>
    %c64_i32 = arith.constant 64 : i32
    %23 = vector.broadcast %c64_i32 : i32 to vector<10x5x128xi32>
    %24 = arith.cmpi slt, %15, %23 : vector<10x5x128xi32>
    %25 = arith.andi %22, %24 : vector<10x5x128xi1>
    %26 = arith.ori %20, %25 : vector<10x5x128xi1>
    %c4_i32 = arith.constant 4 : i32
    %27 = vector.broadcast %c4_i32 : i32 to vector<10x5x128xi32>
    %28 = arith.cmpi eq, %14, %27 : vector<10x5x128xi32>
    %c64_i32_8 = arith.constant 64 : i32
    %29 = vector.broadcast %c64_i32_8 : i32 to vector<10x5x128xi32>
    %30 = arith.cmpi sge, %15, %29 : vector<10x5x128xi32>
    %31 = arith.andi %28, %30 : vector<10x5x128xi1>
    %32 = arith.ori %26, %31 : vector<10x5x128xi1>
    %cst_9 = arith.constant 0.000000e+00 : f32
    %33 = vector.broadcast %cst_9 : f32 to vector<10x5x128xf32>
    %34 = arith.select %32, %33, %12 : vector<10x5x128xi1>, vector<10x5x128xf32>
    %35 = vector.extract_strided_slice %34 {offsets = [0, 0, 0], sizes = [10, 4, 64], strides = [1, 1, 1]} : vector<10x5x128xf32> to vector<10x4x64xf32>
    %36 = vector.extract_strided_slice %34 {offsets = [0, 0, 64], sizes = [10, 4, 64], strides = [1, 1, 1]} : vector<10x5x128xf32> to vector<10x4x64xf32>
    %37 = vector.extract_strided_slice %34 {offsets = [0, 1, 0], sizes = [10, 4, 64], strides = [1, 1, 1]} : vector<10x5x128xf32> to vector<10x4x64xf32>
    %38 = arith.maximumf %35, %36 : vector<10x4x64xf32>
    %39 = arith.maximumf %38, %37 : vector<10x4x64xf32>
    %40 = vector.shape_cast %39 : vector<10x4x64xf32> to vector<5x2x4x64xf32>
    %41 = vector.extract_strided_slice %40 {offsets = [0, 0, 0, 0], sizes = [4, 1, 4, 64], strides = [1, 1, 1, 1]} : vector<5x2x4x64xf32> to vector<4x1x4x64xf32>
    %42 = vector.shape_cast %41 : vector<4x1x4x64xf32> to vector<4x4x64xf32>
    %43 = vector.extract_strided_slice %40 {offsets = [0, 1, 0, 0], sizes = [4, 1, 4, 64], strides = [1, 1, 1, 1]} : vector<5x2x4x64xf32> to vector<4x1x4x64xf32>
    %44 = vector.shape_cast %43 : vector<4x1x4x64xf32> to vector<4x4x64xf32>
    %45 = vector.extract_strided_slice %40 {offsets = [1, 0, 0, 0], sizes = [4, 1, 4, 64], strides = [1, 1, 1, 1]} : vector<5x2x4x64xf32> to vector<4x1x4x64xf32>
    %46 = vector.shape_cast %45 : vector<4x1x4x64xf32> to vector<4x4x64xf32>
    %47 = arith.maximumf %42, %44 : vector<4x4x64xf32>
    %48 = arith.maximumf %47, %46 : vector<4x4x64xf32>
    %49 = arith.truncf %48 : vector<4x4x64xf32> to vector<4x4x64xbf16>
    %c0_10 = arith.constant 0 : index
    %c0_11 = arith.constant 0 : index
    %c0_12 = arith.constant 0 : index
    %c0_13 = arith.constant 0 : index
    %50 = vector.load %arg4[%c0_10, %c0_11, %c0_12, %c0_13] : memref<1x4x4x64xbf16, #tpu.memory_space<vmem>>, vector<1x4x4x64xbf16>
    %51 = vector.shape_cast %50 : vector<1x4x4x64xbf16> to vector<4x4x64xbf16>
    %52 = vector.shape_cast %49 : vector<4x4x64xbf16> to vector<1x4x4x64xbf16>
    tpu.vector_store %arg4[%c0_10, %c0_11, %c0_12, %c0_13], %52 {strides = array<i32>} : memref<1x4x4x64xbf16, #tpu.memory_space<vmem>>, vector<1x4x4x64xbf16>,
    return
  }
  func.func @transform_0(%arg0: i32) -> (i32, i32, i32, i32) {
    %c0_i32 = arith.constant 0 : i32
    %c0_i32_0 = arith.constant 0 : i32
    %c0_i32_1 = arith.constant 0 : i32
    %c0_i32_2 = arith.constant 0 : i32
    return %arg0, %c0_i32, %c0_i32_0, %c0_i32_1 : i32, i32, i32, i32
  }
  func.func @transform_1(%arg0: i32) -> (i32, i32) {
    %c0_i32 = arith.constant 0 : i32
    %c0_i32_0 = arith.constant 0 : i32
    %c0_i32_1 = arith.constant 0 : i32
    return %c0_i32, %c0_i32_0 : i32, i32
  }
  func.func @transform_2(%arg0: i32) -> (i32, i32) {
    %c0_i32 = arith.constant 0 : i32
    %c0_i32_0 = arith.constant 0 : i32
    %c0_i32_1 = arith.constant 0 : i32
    return %c0_i32, %c0_i32_0 : i32, i32
  }
  func.func @transform_3(%arg0: i32) -> (i32, i32, i32, i32) {
    %c0_i32 = arith.constant 0 : i32
    %c0_i32_0 = arith.constant 0 : i32
    %c0_i32_1 = arith.constant 0 : i32
    %c0_i32_2 = arith.constant 0 : i32
    return %arg0, %c0_i32, %c0_i32_0, %c0_i32_1 : i32, i32, i32, i32
  }
}

module attributes {stable_mosaic.version = 11 : i64} {
  func.func @_matmul_stats_kernel(%arg0: i32, %arg1: memref<32x64xbf16, #tpu.memory_space<vmem>>, %arg2: memref<64x64xbf16, #tpu.memory_space<vmem>>, %arg3: memref<32x64xbf16, #tpu.memory_space<vmem>>, %arg4: memref<1x1x64xf32, #tpu.memory_space<vmem>>, %arg5: memref<1x1x64xf32, #tpu.memory_space<vmem>>) attributes {dimension_semantics = [#tpu.dimension_semantics<parallel>], iteration_bounds = array<i64: 1>, scalar_prefetch = 0 : i64, scratch_operands = 0 : i64, tpu.core_type = #tpu.core_type<tc>, window_params = [{transform_indices = @transform_0, window_bounds = array<i64: 32, 64>}, {pipeline_mode = #tpu.pipeline_mode<synchronous>, transform_indices = @transform_1, window_bounds = array<i64: 64, 64>}, {transform_indices = @transform_2, window_bounds = array<i64: 32, 64>}, {transform_indices = @transform_3, window_bounds = array<i64: 1, 1, 64>}, {transform_indices = @transform_4, window_bounds = array<i64: 1, 1, 64>}]} {
    %c0 = arith.constant 0 : index
    %c0_0 = arith.constant 0 : index
    %0 = vector.load %arg1[%c0, %c0_0] : memref<32x64xbf16, #tpu.memory_space<vmem>>, vector<32x64xbf16>
    %c0_1 = arith.constant 0 : index
    %c0_2 = arith.constant 0 : index
    %1 = vector.load %arg2[%c0_1, %c0_2] : memref<64x64xbf16, #tpu.memory_space<vmem>>, vector<64x64xbf16>
    %cst = arith.constant dense<0.000000e+00> : vector<32x64xf32>
    %2 = tpu.matmul %0, %1, %cst {dimension_numbers = #tpu.dot_dimension_numbers<[1], [0], [0], [1], [0, 0, 1, 1], [], []>} : vector<32x64xbf16>, vector<64x64xbf16>, vector<32x64xf32> -> vector<32x64xf32>
    %3 = arith.truncf %2 : vector<32x64xf32> to vector<32x64xbf16>
    %c0_3 = arith.constant 0 : index
    %c0_4 = arith.constant 0 : index
    %4 = vector.load %arg3[%c0_3, %c0_4] : memref<32x64xbf16, #tpu.memory_space<vmem>>, vector<32x64xbf16>
    tpu.vector_store %arg3[%c0_3, %c0_4], %3 {strides = array<i32>} : memref<32x64xbf16, #tpu.memory_space<vmem>>, vector<32x64xbf16>,
    %cst_5 = arith.constant dense<0.000000e+00> : vector<64xf32>
    %5 = vector.multi_reduction <add>, %2, %cst_5 [0] : vector<32x64xf32> to vector<64xf32>
    %6 = vector.shape_cast %5 : vector<64xf32> to vector<1x64xf32>
    %c0_6 = arith.constant 0 : index
    %c0_7 = arith.constant 0 : index
    %c0_8 = arith.constant 0 : index
    %7 = vector.load %arg4[%c0_6, %c0_7, %c0_8] : memref<1x1x64xf32, #tpu.memory_space<vmem>>, vector<1x1x64xf32>
    %8 = vector.shape_cast %7 : vector<1x1x64xf32> to vector<1x64xf32>
    %9 = vector.shape_cast %6 : vector<1x64xf32> to vector<1x1x64xf32>
    tpu.vector_store %arg4[%c0_6, %c0_7, %c0_8], %9 {strides = array<i32>} : memref<1x1x64xf32, #tpu.memory_space<vmem>>, vector<1x1x64xf32>,
    %10 = arith.mulf %2, %2 : vector<32x64xf32>
    %cst_9 = arith.constant dense<0.000000e+00> : vector<64xf32>
    %11 = vector.multi_reduction <add>, %10, %cst_9 [0] : vector<32x64xf32> to vector<64xf32>
    %12 = vector.shape_cast %11 : vector<64xf32> to vector<1x64xf32>
    %c0_10 = arith.constant 0 : index
    %c0_11 = arith.constant 0 : index
    %c0_12 = arith.constant 0 : index
    %13 = vector.load %arg5[%c0_10, %c0_11, %c0_12] : memref<1x1x64xf32, #tpu.memory_space<vmem>>, vector<1x1x64xf32>
    %14 = vector.shape_cast %13 : vector<1x1x64xf32> to vector<1x64xf32>
    %15 = vector.shape_cast %12 : vector<1x64xf32> to vector<1x1x64xf32>
    tpu.vector_store %arg5[%c0_10, %c0_11, %c0_12], %15 {strides = array<i32>} : memref<1x1x64xf32, #tpu.memory_space<vmem>>, vector<1x1x64xf32>,
    return
  }
  func.func @transform_0(%arg0: i32) -> (i32, i32) {
    %c0_i32 = arith.constant 0 : i32
    %c0_i32_0 = arith.constant 0 : i32
    return %arg0, %c0_i32 : i32, i32
  }
  func.func @transform_1(%arg0: i32) -> (i32, i32) {
    %c0_i32 = arith.constant 0 : i32
    %c0_i32_0 = arith.constant 0 : i32
    %c0_i32_1 = arith.constant 0 : i32
    return %c0_i32, %c0_i32_0 : i32, i32
  }
  func.func @transform_2(%arg0: i32) -> (i32, i32) {
    %c0_i32 = arith.constant 0 : i32
    %c0_i32_0 = arith.constant 0 : i32
    return %arg0, %c0_i32 : i32, i32
  }
  func.func @transform_3(%arg0: i32) -> (i32, i32, i32) {
    %c0_i32 = arith.constant 0 : i32
    %c0_i32_0 = arith.constant 0 : i32
    %c0_i32_1 = arith.constant 0 : i32
    return %arg0, %c0_i32, %c0_i32_0 : i32, i32, i32
  }
  func.func @transform_4(%arg0: i32) -> (i32, i32, i32) {
    %c0_i32 = arith.constant 0 : i32
    %c0_i32_0 = arith.constant 0 : i32
    %c0_i32_1 = arith.constant 0 : i32
    return %arg0, %c0_i32, %c0_i32_0 : i32, i32, i32
  }
}

module attributes {stable_mosaic.version = 11 : i64} {
  func.func @_conv3x3_in_affine_stats_kernel(%arg0: i32, %arg1: memref<1x56x64xbf16, #tpu.memory_space<vmem>>, %arg2: memref<576x192xbf16, #tpu.memory_space<vmem>>, %arg3: memref<1x64xf32, #tpu.memory_space<vmem>>, %arg4: memref<1x64xf32, #tpu.memory_space<vmem>>, %arg5: memref<56x1xf32, #tpu.memory_space<vmem>>, %arg6: memref<32x1xf32, #tpu.memory_space<vmem>>, %arg7: memref<1x32x192xbf16, #tpu.memory_space<vmem>>, %arg8: memref<1x1x192xf32, #tpu.memory_space<vmem>>, %arg9: memref<1x1x192xf32, #tpu.memory_space<vmem>>) attributes {dimension_semantics = [#tpu.dimension_semantics<parallel>], iteration_bounds = array<i64: 2>, scalar_prefetch = 0 : i64, scratch_operands = 0 : i64, tpu.core_type = #tpu.core_type<tc>, window_params = [{transform_indices = @transform_0, window_bounds = array<i64: 1, 56, 64>}, {pipeline_mode = #tpu.pipeline_mode<synchronous>, transform_indices = @transform_1, window_bounds = array<i64: 576, 192>}, {pipeline_mode = #tpu.pipeline_mode<synchronous>, transform_indices = @transform_2, window_bounds = array<i64: 1, 64>}, {pipeline_mode = #tpu.pipeline_mode<synchronous>, transform_indices = @transform_3, window_bounds = array<i64: 1, 64>}, {pipeline_mode = #tpu.pipeline_mode<synchronous>, transform_indices = @transform_4, window_bounds = array<i64: 56, 1>}, {pipeline_mode = #tpu.pipeline_mode<synchronous>, transform_indices = @transform_5, window_bounds = array<i64: 32, 1>}, {transform_indices = @transform_6, window_bounds = array<i64: 1, 32, 192>}, {transform_indices = @transform_7, window_bounds = array<i64: 1, 1, 192>}, {transform_indices = @transform_8, window_bounds = array<i64: 1, 1, 192>}]} {
    %c0 = arith.constant 0 : index
    %c0_0 = arith.constant 0 : index
    %c0_1 = arith.constant 0 : index
    %0 = vector.load %arg1[%c0, %c0_0, %c0_1] : memref<1x56x64xbf16, #tpu.memory_space<vmem>>, vector<1x56x64xbf16>
    %1 = vector.shape_cast %0 : vector<1x56x64xbf16> to vector<56x64xbf16>
    %2 = arith.extf %1 : vector<56x64xbf16> to vector<56x64xf32>
    %c0_2 = arith.constant 0 : index
    %c0_3 = arith.constant 0 : index
    %3 = vector.load %arg3[%c0_2, %c0_3] : memref<1x64xf32, #tpu.memory_space<vmem>>, vector<1x64xf32>
    %4 = vector.broadcast %3 : vector<1x64xf32> to vector<56x64xf32>
    %5 = arith.mulf %2, %4 : vector<56x64xf32>
    %c0_4 = arith.constant 0 : index
    %c0_5 = arith.constant 0 : index
    %6 = vector.load %arg4[%c0_4, %c0_5] : memref<1x64xf32, #tpu.memory_space<vmem>>, vector<1x64xf32>
    %7 = vector.broadcast %6 : vector<1x64xf32> to vector<56x64xf32>
    %8 = arith.addf %5, %7 : vector<56x64xf32>
    %cst = arith.constant 0.000000e+00 : f32
    %9 = vector.broadcast %cst : f32 to vector<56x64xf32>
    %10 = arith.maximumf %8, %9 : vector<56x64xf32>
    %c0_6 = arith.constant 0 : index
    %c0_7 = arith.constant 0 : index
    %11 = vector.load %arg5[%c0_6, %c0_7] : memref<56x1xf32, #tpu.memory_space<vmem>>, vector<56x1xf32>
    %12 = vector.broadcast %11 : vector<56x1xf32> to vector<56x64xf32>
    %13 = arith.mulf %10, %12 : vector<56x64xf32>
    %14 = arith.truncf %13 : vector<56x64xf32> to vector<56x64xbf16>
    %cst_8 = arith.constant 0.000000e+00 : f32
    %15 = vector.broadcast %cst_8 : f32 to vector<1x192xf32>
    %cst_9 = arith.constant 0.000000e+00 : f32
    %16 = vector.broadcast %cst_9 : f32 to vector<1x192xf32>
    %cst_10 = arith.constant 0.000000e+00 : f32
    %17 = vector.broadcast %cst_10 : f32 to vector<32x192xf32>
    %18 = vector.extract_strided_slice %14 {offsets = [0, 0], sizes = [32, 64], strides = [1, 1]} : vector<56x64xbf16> to vector<32x64xbf16>
    %c0_11 = arith.constant 0 : index
    %c0_12 = arith.constant 0 : index
    %19 = vector.load %arg2[%c0_11, %c0_12] : memref<576x192xbf16, #tpu.memory_space<vmem>>, vector<64x192xbf16>
    %cst_13 = arith.constant dense<0.000000e+00> : vector<32x192xf32>
    %20 = tpu.matmul %18, %19, %cst_13 {dimension_numbers = #tpu.dot_dimension_numbers<[1], [0], [0], [1], [0, 0, 1, 1], [], []>} : vector<32x64xbf16>, vector<64x192xbf16>, vector<32x192xf32> -> vector<32x192xf32>
    %21 = arith.addf %17, %20 : vector<32x192xf32>
    %22 = vector.extract_strided_slice %14 {offsets = [1, 0], sizes = [32, 64], strides = [1, 1]} : vector<56x64xbf16> to vector<32x64xbf16>
    %c64 = arith.constant 64 : index
    %c0_14 = arith.constant 0 : index
    %23 = vector.load %arg2[%c64, %c0_14] : memref<576x192xbf16, #tpu.memory_space<vmem>>, vector<64x192xbf16>
    %cst_15 = arith.constant dense<0.000000e+00> : vector<32x192xf32>
    %24 = tpu.matmul %22, %23, %cst_15 {dimension_numbers = #tpu.dot_dimension_numbers<[1], [0], [0], [1], [0, 0, 1, 1], [], []>} : vector<32x64xbf16>, vector<64x192xbf16>, vector<32x192xf32> -> vector<32x192xf32>
    %25 = arith.addf %21, %24 : vector<32x192xf32>
    %26 = vector.extract_strided_slice %14 {offsets = [2, 0], sizes = [32, 64], strides = [1, 1]} : vector<56x64xbf16> to vector<32x64xbf16>
    %c128 = arith.constant 128 : index
    %c0_16 = arith.constant 0 : index
    %27 = vector.load %arg2[%c128, %c0_16] : memref<576x192xbf16, #tpu.memory_space<vmem>>, vector<64x192xbf16>
    %cst_17 = arith.constant dense<0.000000e+00> : vector<32x192xf32>
    %28 = tpu.matmul %26, %27, %cst_17 {dimension_numbers = #tpu.dot_dimension_numbers<[1], [0], [0], [1], [0, 0, 1, 1], [], []>} : vector<32x64xbf16>, vector<64x192xbf16>, vector<32x192xf32> -> vector<32x192xf32>
    %29 = arith.addf %25, %28 : vector<32x192xf32>
    %30 = vector.extract_strided_slice %14 {offsets = [8, 0], sizes = [32, 64], strides = [1, 1]} : vector<56x64xbf16> to vector<32x64xbf16>
    %c192 = arith.constant 192 : index
    %c0_18 = arith.constant 0 : index
    %31 = vector.load %arg2[%c192, %c0_18] : memref<576x192xbf16, #tpu.memory_space<vmem>>, vector<64x192xbf16>
    %cst_19 = arith.constant dense<0.000000e+00> : vector<32x192xf32>
    %32 = tpu.matmul %30, %31, %cst_19 {dimension_numbers = #tpu.dot_dimension_numbers<[1], [0], [0], [1], [0, 0, 1, 1], [], []>} : vector<32x64xbf16>, vector<64x192xbf16>, vector<32x192xf32> -> vector<32x192xf32>
    %33 = arith.addf %29, %32 : vector<32x192xf32>
    %34 = vector.extract_strided_slice %14 {offsets = [9, 0], sizes = [32, 64], strides = [1, 1]} : vector<56x64xbf16> to vector<32x64xbf16>
    %c256 = arith.constant 256 : index
    %c0_20 = arith.constant 0 : index
    %35 = vector.load %arg2[%c256, %c0_20] : memref<576x192xbf16, #tpu.memory_space<vmem>>, vector<64x192xbf16>
    %cst_21 = arith.constant dense<0.000000e+00> : vector<32x192xf32>
    %36 = tpu.matmul %34, %35, %cst_21 {dimension_numbers = #tpu.dot_dimension_numbers<[1], [0], [0], [1], [0, 0, 1, 1], [], []>} : vector<32x64xbf16>, vector<64x192xbf16>, vector<32x192xf32> -> vector<32x192xf32>
    %37 = arith.addf %33, %36 : vector<32x192xf32>
    %38 = vector.extract_strided_slice %14 {offsets = [10, 0], sizes = [32, 64], strides = [1, 1]} : vector<56x64xbf16> to vector<32x64xbf16>
    %c320 = arith.constant 320 : index
    %c0_22 = arith.constant 0 : index
    %39 = vector.load %arg2[%c320, %c0_22] : memref<576x192xbf16, #tpu.memory_space<vmem>>, vector<64x192xbf16>
    %cst_23 = arith.constant dense<0.000000e+00> : vector<32x192xf32>
    %40 = tpu.matmul %38, %39, %cst_23 {dimension_numbers = #tpu.dot_dimension_numbers<[1], [0], [0], [1], [0, 0, 1, 1], [], []>} : vector<32x64xbf16>, vector<64x192xbf16>, vector<32x192xf32> -> vector<32x192xf32>
    %41 = arith.addf %37, %40 : vector<32x192xf32>
    %42 = vector.extract_strided_slice %14 {offsets = [16, 0], sizes = [32, 64], strides = [1, 1]} : vector<56x64xbf16> to vector<32x64xbf16>
    %c384 = arith.constant 384 : index
    %c0_24 = arith.constant 0 : index
    %43 = vector.load %arg2[%c384, %c0_24] : memref<576x192xbf16, #tpu.memory_space<vmem>>, vector<64x192xbf16>
    %cst_25 = arith.constant dense<0.000000e+00> : vector<32x192xf32>
    %44 = tpu.matmul %42, %43, %cst_25 {dimension_numbers = #tpu.dot_dimension_numbers<[1], [0], [0], [1], [0, 0, 1, 1], [], []>} : vector<32x64xbf16>, vector<64x192xbf16>, vector<32x192xf32> -> vector<32x192xf32>
    %45 = arith.addf %41, %44 : vector<32x192xf32>
    %46 = vector.extract_strided_slice %14 {offsets = [17, 0], sizes = [32, 64], strides = [1, 1]} : vector<56x64xbf16> to vector<32x64xbf16>
    %c448 = arith.constant 448 : index
    %c0_26 = arith.constant 0 : index
    %47 = vector.load %arg2[%c448, %c0_26] : memref<576x192xbf16, #tpu.memory_space<vmem>>, vector<64x192xbf16>
    %cst_27 = arith.constant dense<0.000000e+00> : vector<32x192xf32>
    %48 = tpu.matmul %46, %47, %cst_27 {dimension_numbers = #tpu.dot_dimension_numbers<[1], [0], [0], [1], [0, 0, 1, 1], [], []>} : vector<32x64xbf16>, vector<64x192xbf16>, vector<32x192xf32> -> vector<32x192xf32>
    %49 = arith.addf %45, %48 : vector<32x192xf32>
    %50 = vector.extract_strided_slice %14 {offsets = [18, 0], sizes = [32, 64], strides = [1, 1]} : vector<56x64xbf16> to vector<32x64xbf16>
    %c512 = arith.constant 512 : index
    %c0_28 = arith.constant 0 : index
    %51 = vector.load %arg2[%c512, %c0_28] : memref<576x192xbf16, #tpu.memory_space<vmem>>, vector<64x192xbf16>
    %cst_29 = arith.constant dense<0.000000e+00> : vector<32x192xf32>
    %52 = tpu.matmul %50, %51, %cst_29 {dimension_numbers = #tpu.dot_dimension_numbers<[1], [0], [0], [1], [0, 0, 1, 1], [], []>} : vector<32x64xbf16>, vector<64x192xbf16>, vector<32x192xf32> -> vector<32x192xf32>
    %53 = arith.addf %49, %52 : vector<32x192xf32>
    %c0_30 = arith.constant 0 : index
    %c0_31 = arith.constant 0 : index
    %54 = vector.load %arg6[%c0_30, %c0_31] : memref<32x1xf32, #tpu.memory_space<vmem>>, vector<32x1xf32>
    %55 = vector.broadcast %54 : vector<32x1xf32> to vector<32x192xf32>
    %56 = arith.mulf %53, %55 : vector<32x192xf32>
    %57 = arith.truncf %56 : vector<32x192xf32> to vector<32x192xbf16>
    %c0_32 = arith.constant 0 : index
    %c0_33 = arith.constant 0 : index
    %c0_34 = arith.constant 0 : index
    %58 = vector.load %arg7[%c0_32, %c0_33, %c0_34] : memref<1x32x192xbf16, #tpu.memory_space<vmem>>, vector<1x32x192xbf16>
    %59 = vector.shape_cast %58 : vector<1x32x192xbf16> to vector<32x192xbf16>
    %60 = vector.shape_cast %57 : vector<32x192xbf16> to vector<1x32x192xbf16>
    tpu.vector_store %arg7[%c0_32, %c0_33, %c0_34], %60 {strides = array<i32>} : memref<1x32x192xbf16, #tpu.memory_space<vmem>>, vector<1x32x192xbf16>,
    %cst_35 = arith.constant dense<0.000000e+00> : vector<192xf32>
    %61 = vector.multi_reduction <add>, %56, %cst_35 [0] : vector<32x192xf32> to vector<192xf32>
    %62 = vector.shape_cast %61 : vector<192xf32> to vector<1x192xf32>
    %63 = arith.addf %15, %62 : vector<1x192xf32>
    %64 = arith.mulf %56, %56 : vector<32x192xf32>
    %cst_36 = arith.constant dense<0.000000e+00> : vector<192xf32>
    %65 = vector.multi_reduction <add>, %64, %cst_36 [0] : vector<32x192xf32> to vector<192xf32>
    %66 = vector.shape_cast %65 : vector<192xf32> to vector<1x192xf32>
    %67 = arith.addf %16, %66 : vector<1x192xf32>
    %c0_37 = arith.constant 0 : index
    %c0_38 = arith.constant 0 : index
    %c0_39 = arith.constant 0 : index
    %68 = vector.load %arg8[%c0_37, %c0_38, %c0_39] : memref<1x1x192xf32, #tpu.memory_space<vmem>>, vector<1x1x192xf32>
    %69 = vector.shape_cast %68 : vector<1x1x192xf32> to vector<1x192xf32>
    %70 = vector.shape_cast %63 : vector<1x192xf32> to vector<1x1x192xf32>
    tpu.vector_store %arg8[%c0_37, %c0_38, %c0_39], %70 {strides = array<i32>} : memref<1x1x192xf32, #tpu.memory_space<vmem>>, vector<1x1x192xf32>,
    %c0_40 = arith.constant 0 : index
    %c0_41 = arith.constant 0 : index
    %c0_42 = arith.constant 0 : index
    %71 = vector.load %arg9[%c0_40, %c0_41, %c0_42] : memref<1x1x192xf32, #tpu.memory_space<vmem>>, vector<1x1x192xf32>
    %72 = vector.shape_cast %71 : vector<1x1x192xf32> to vector<1x192xf32>
    %73 = vector.shape_cast %67 : vector<1x192xf32> to vector<1x1x192xf32>
    tpu.vector_store %arg9[%c0_40, %c0_41, %c0_42], %73 {strides = array<i32>} : memref<1x1x192xf32, #tpu.memory_space<vmem>>, vector<1x1x192xf32>,
    return
  }
  func.func @transform_0(%arg0: i32) -> (i32, i32, i32) {
    %c0_i32 = arith.constant 0 : i32
    %c0_i32_0 = arith.constant 0 : i32
    %c0_i32_1 = arith.constant 0 : i32
    return %arg0, %c0_i32, %c0_i32_0 : i32, i32, i32
  }
  func.func @transform_1(%arg0: i32) -> (i32, i32) {
    %c0_i32 = arith.constant 0 : i32
    %c0_i32_0 = arith.constant 0 : i32
    %c0_i32_1 = arith.constant 0 : i32
    return %c0_i32, %c0_i32_0 : i32, i32
  }
  func.func @transform_2(%arg0: i32) -> (i32, i32) {
    %c0_i32 = arith.constant 0 : i32
    %c0_i32_0 = arith.constant 0 : i32
    %c0_i32_1 = arith.constant 0 : i32
    return %c0_i32, %c0_i32_0 : i32, i32
  }
  func.func @transform_3(%arg0: i32) -> (i32, i32) {
    %c0_i32 = arith.constant 0 : i32
    %c0_i32_0 = arith.constant 0 : i32
    %c0_i32_1 = arith.constant 0 : i32
    return %c0_i32, %c0_i32_0 : i32, i32
  }
  func.func @transform_4(%arg0: i32) -> (i32, i32) {
    %c0_i32 = arith.constant 0 : i32
    %c0_i32_0 = arith.constant 0 : i32
    %c0_i32_1 = arith.constant 0 : i32
    return %c0_i32, %c0_i32_0 : i32, i32
  }
  func.func @transform_5(%arg0: i32) -> (i32, i32) {
    %c0_i32 = arith.constant 0 : i32
    %c0_i32_0 = arith.constant 0 : i32
    %c0_i32_1 = arith.constant 0 : i32
    return %c0_i32, %c0_i32_0 : i32, i32
  }
  func.func @transform_6(%arg0: i32) -> (i32, i32, i32) {
    %c0_i32 = arith.constant 0 : i32
    %c0_i32_0 = arith.constant 0 : i32
    %c0_i32_1 = arith.constant 0 : i32
    return %arg0, %c0_i32, %c0_i32_0 : i32, i32, i32
  }
  func.func @transform_7(%arg0: i32) -> (i32, i32, i32) {
    %c0_i32 = arith.constant 0 : i32
    %c0_i32_0 = arith.constant 0 : i32
    %c0_i32_1 = arith.constant 0 : i32
    return %arg0, %c0_i32, %c0_i32_0 : i32, i32, i32
  }
  func.func @transform_8(%arg0: i32) -> (i32, i32, i32) {
    %c0_i32 = arith.constant 0 : i32
    %c0_i32_0 = arith.constant 0 : i32
    %c0_i32_1 = arith.constant 0 : i32
    return %arg0, %c0_i32, %c0_i32_0 : i32, i32, i32
  }
}

module attributes {stable_mosaic.version = 11 : i64} {
  func.func @_maxpool_affine_kernel(%arg0: i32, %arg1: memref<1x6x3x384xbf16, #tpu.memory_space<vmem>>, %arg2: memref<1x384xf32, #tpu.memory_space<vmem>>, %arg3: memref<1x384xf32, #tpu.memory_space<vmem>>, %arg4: memref<1x2x2x192xbf16, #tpu.memory_space<vmem>>) attributes {dimension_semantics = [#tpu.dimension_semantics<parallel>], iteration_bounds = array<i64: 2>, scalar_prefetch = 0 : i64, scratch_operands = 0 : i64, tpu.core_type = #tpu.core_type<tc>, window_params = [{transform_indices = @transform_0, window_bounds = array<i64: 1, 6, 3, 384>}, {pipeline_mode = #tpu.pipeline_mode<synchronous>, transform_indices = @transform_1, window_bounds = array<i64: 1, 384>}, {pipeline_mode = #tpu.pipeline_mode<synchronous>, transform_indices = @transform_2, window_bounds = array<i64: 1, 384>}, {transform_indices = @transform_3, window_bounds = array<i64: 1, 2, 2, 192>}]} {
    %c0 = arith.constant 0 : index
    %c0_0 = arith.constant 0 : index
    %c0_1 = arith.constant 0 : index
    %c0_2 = arith.constant 0 : index
    %0 = vector.load %arg1[%c0, %c0_0, %c0_1, %c0_2] : memref<1x6x3x384xbf16, #tpu.memory_space<vmem>>, vector<1x6x3x384xbf16>
    %1 = vector.shape_cast %0 : vector<1x6x3x384xbf16> to vector<6x3x384xbf16>
    %2 = arith.extf %1 : vector<6x3x384xbf16> to vector<6x3x384xf32>
    %c0_3 = arith.constant 0 : index
    %c0_4 = arith.constant 0 : index
    %3 = vector.load %arg2[%c0_3, %c0_4] : memref<1x384xf32, #tpu.memory_space<vmem>>, vector<1x384xf32>
    %4 = vector.shape_cast %3 : vector<1x384xf32> to vector<1x1x384xf32>
    %5 = vector.broadcast %4 : vector<1x1x384xf32> to vector<6x3x384xf32>
    %6 = arith.mulf %2, %5 : vector<6x3x384xf32>
    %c0_5 = arith.constant 0 : index
    %c0_6 = arith.constant 0 : index
    %7 = vector.load %arg3[%c0_5, %c0_6] : memref<1x384xf32, #tpu.memory_space<vmem>>, vector<1x384xf32>
    %8 = vector.shape_cast %7 : vector<1x384xf32> to vector<1x1x384xf32>
    %9 = vector.broadcast %8 : vector<1x1x384xf32> to vector<6x3x384xf32>
    %10 = arith.addf %6, %9 : vector<6x3x384xf32>
    %cst = arith.constant 0.000000e+00 : f32
    %11 = vector.broadcast %cst : f32 to vector<6x3x384xf32>
    %12 = arith.maximumf %10, %11 : vector<6x3x384xf32>
    %13 = tpu.iota {dimensions = array<i32: 0>} : vector<6x3x384xi32>
    %14 = tpu.iota {dimensions = array<i32: 1>} : vector<6x3x384xi32>
    %15 = tpu.iota {dimensions = array<i32: 2>} : vector<6x3x384xi32>
    %c0_i32 = arith.constant 0 : i32
    %16 = vector.broadcast %c0_i32 : i32 to vector<6x3x384xi32>
    %17 = arith.cmpi eq, %13, %16 : vector<6x3x384xi32>
    %c5_i32 = arith.constant 5 : i32
    %18 = vector.broadcast %c5_i32 : i32 to vector<6x3x384xi32>
    %19 = arith.cmpi eq, %13, %18 : vector<6x3x384xi32>
    %20 = arith.ori %17, %19 : vector<6x3x384xi1>
    %c0_i32_7 = arith.constant 0 : i32
    %21 = vector.broadcast %c0_i32_7 : i32 to vector<6x3x384xi32>
    %22 = arith.cmpi eq, %14, %21 : vector<6x3x384xi32>
    %c192_i32 = arith.constant 192 : i32
    %23 = vector.broadcast %c192_i32 : i32 to vector<6x3x384xi32>
    %24 = arith.cmpi slt, %15, %23 : vector<6x3x384xi32>
    %25 = arith.andi %22, %24 : vector<6x3x384xi1>
    %26 = arith.ori %20, %25 : vector<6x3x384xi1>
    %c2_i32 = arith.constant 2 : i32
    %27 = vector.broadcast %c2_i32 : i32 to vector<6x3x384xi32>
    %28 = arith.cmpi eq, %14, %27 : vector<6x3x384xi32>
    %c192_i32_8 = arith.constant 192 : i32
    %29 = vector.broadcast %c192_i32_8 : i32 to vector<6x3x384xi32>
    %30 = arith.cmpi sge, %15, %29 : vector<6x3x384xi32>
    %31 = arith.andi %28, %30 : vector<6x3x384xi1>
    %32 = arith.ori %26, %31 : vector<6x3x384xi1>
    %cst_9 = arith.constant 0.000000e+00 : f32
    %33 = vector.broadcast %cst_9 : f32 to vector<6x3x384xf32>
    %34 = arith.select %32, %33, %12 : vector<6x3x384xi1>, vector<6x3x384xf32>
    %35 = vector.extract_strided_slice %34 {offsets = [0, 0, 0], sizes = [6, 2, 192], strides = [1, 1, 1]} : vector<6x3x384xf32> to vector<6x2x192xf32>
    %36 = vector.extract_strided_slice %34 {offsets = [0, 0, 192], sizes = [6, 2, 192], strides = [1, 1, 1]} : vector<6x3x384xf32> to vector<6x2x192xf32>
    %37 = vector.extract_strided_slice %34 {offsets = [0, 1, 0], sizes = [6, 2, 192], strides = [1, 1, 1]} : vector<6x3x384xf32> to vector<6x2x192xf32>
    %38 = arith.maximumf %35, %36 : vector<6x2x192xf32>
    %39 = arith.maximumf %38, %37 : vector<6x2x192xf32>
    %40 = vector.shape_cast %39 : vector<6x2x192xf32> to vector<3x2x2x192xf32>
    %41 = vector.extract_strided_slice %40 {offsets = [0, 0, 0, 0], sizes = [2, 1, 2, 192], strides = [1, 1, 1, 1]} : vector<3x2x2x192xf32> to vector<2x1x2x192xf32>
    %42 = vector.shape_cast %41 : vector<2x1x2x192xf32> to vector<2x2x192xf32>
    %43 = vector.extract_strided_slice %40 {offsets = [0, 1, 0, 0], sizes = [2, 1, 2, 192], strides = [1, 1, 1, 1]} : vector<3x2x2x192xf32> to vector<2x1x2x192xf32>
    %44 = vector.shape_cast %43 : vector<2x1x2x192xf32> to vector<2x2x192xf32>
    %45 = vector.extract_strided_slice %40 {offsets = [1, 0, 0, 0], sizes = [2, 1, 2, 192], strides = [1, 1, 1, 1]} : vector<3x2x2x192xf32> to vector<2x1x2x192xf32>
    %46 = vector.shape_cast %45 : vector<2x1x2x192xf32> to vector<2x2x192xf32>
    %47 = arith.maximumf %42, %44 : vector<2x2x192xf32>
    %48 = arith.maximumf %47, %46 : vector<2x2x192xf32>
    %49 = arith.truncf %48 : vector<2x2x192xf32> to vector<2x2x192xbf16>
    %c0_10 = arith.constant 0 : index
    %c0_11 = arith.constant 0 : index
    %c0_12 = arith.constant 0 : index
    %c0_13 = arith.constant 0 : index
    %50 = vector.load %arg4[%c0_10, %c0_11, %c0_12, %c0_13] : memref<1x2x2x192xbf16, #tpu.memory_space<vmem>>, vector<1x2x2x192xbf16>
    %51 = vector.shape_cast %50 : vector<1x2x2x192xbf16> to vector<2x2x192xbf16>
    %52 = vector.shape_cast %49 : vector<2x2x192xbf16> to vector<1x2x2x192xbf16>
    tpu.vector_store %arg4[%c0_10, %c0_11, %c0_12, %c0_13], %52 {strides = array<i32>} : memref<1x2x2x192xbf16, #tpu.memory_space<vmem>>, vector<1x2x2x192xbf16>,
    return
  }
  func.func @transform_0(%arg0: i32) -> (i32, i32, i32, i32) {
    %c0_i32 = arith.constant 0 : i32
    %c0_i32_0 = arith.constant 0 : i32
    %c0_i32_1 = arith.constant 0 : i32
    %c0_i32_2 = arith.constant 0 : i32
    return %arg0, %c0_i32, %c0_i32_0, %c0_i32_1 : i32, i32, i32, i32
  }
  func.func @transform_1(%arg0: i32) -> (i32, i32) {
    %c0_i32 = arith.constant 0 : i32
    %c0_i32_0 = arith.constant 0 : i32
    %c0_i32_1 = arith.constant 0 : i32
    return %c0_i32, %c0_i32_0 : i32, i32
  }
  func.func @transform_2(%arg0: i32) -> (i32, i32) {
    %c0_i32 = arith.constant 0 : i32
    %c0_i32_0 = arith.constant 0 : i32
    %c0_i32_1 = arith.constant 0 : i32
    return %c0_i32, %c0_i32_0 : i32, i32
  }
  func.func @transform_3(%arg0: i32) -> (i32, i32, i32, i32) {
    %c0_i32 = arith.constant 0 : i32
    %c0_i32_0 = arith.constant 0 : i32
    %c0_i32_1 = arith.constant 0 : i32
    %c0_i32_2 = arith.constant 0 : i32
    return %arg0, %c0_i32, %c0_i32_0, %c0_i32_1 : i32, i32, i32, i32
  }
}

module attributes {stable_mosaic.version = 11 : i64} {
  func.func @_matmul_relu_kernel(%arg0: i32, %arg1: memref<16x192xbf16, #tpu.memory_space<vmem>>, %arg2: memref<192x192xbf16, #tpu.memory_space<vmem>>, %arg3: memref<16x192xbf16, #tpu.memory_space<vmem>>) attributes {dimension_semantics = [#tpu.dimension_semantics<parallel>], iteration_bounds = array<i64: 1>, scalar_prefetch = 0 : i64, scratch_operands = 0 : i64, tpu.core_type = #tpu.core_type<tc>, window_params = [{transform_indices = @transform_0, window_bounds = array<i64: 16, 192>}, {pipeline_mode = #tpu.pipeline_mode<synchronous>, transform_indices = @transform_1, window_bounds = array<i64: 192, 192>}, {transform_indices = @transform_2, window_bounds = array<i64: 16, 192>}]} {
    %c0 = arith.constant 0 : index
    %c0_0 = arith.constant 0 : index
    %0 = vector.load %arg1[%c0, %c0_0] : memref<16x192xbf16, #tpu.memory_space<vmem>>, vector<16x192xbf16>
    %c0_1 = arith.constant 0 : index
    %c0_2 = arith.constant 0 : index
    %1 = vector.load %arg2[%c0_1, %c0_2] : memref<192x192xbf16, #tpu.memory_space<vmem>>, vector<192x192xbf16>
    %cst = arith.constant dense<0.000000e+00> : vector<16x192xf32>
    %2 = tpu.matmul %0, %1, %cst {dimension_numbers = #tpu.dot_dimension_numbers<[1], [0], [0], [1], [0, 0, 1, 1], [], []>} : vector<16x192xbf16>, vector<192x192xbf16>, vector<16x192xf32> -> vector<16x192xf32>
    %cst_3 = arith.constant 0.000000e+00 : f32
    %3 = vector.broadcast %cst_3 : f32 to vector<16x192xf32>
    %4 = arith.maximumf %2, %3 : vector<16x192xf32>
    %5 = arith.truncf %4 : vector<16x192xf32> to vector<16x192xbf16>
    %c0_4 = arith.constant 0 : index
    %c0_5 = arith.constant 0 : index
    %6 = vector.load %arg3[%c0_4, %c0_5] : memref<16x192xbf16, #tpu.memory_space<vmem>>, vector<16x192xbf16>
    tpu.vector_store %arg3[%c0_4, %c0_5], %5 {strides = array<i32>} : memref<16x192xbf16, #tpu.memory_space<vmem>>, vector<16x192xbf16>,
    return
  }
  func.func @transform_0(%arg0: i32) -> (i32, i32) {
    %c0_i32 = arith.constant 0 : i32
    %c0_i32_0 = arith.constant 0 : i32
    return %arg0, %c0_i32 : i32, i32
  }
  func.func @transform_1(%arg0: i32) -> (i32, i32) {
    %c0_i32 = arith.constant 0 : i32
    %c0_i32_0 = arith.constant 0 : i32
    %c0_i32_1 = arith.constant 0 : i32
    return %c0_i32, %c0_i32_0 : i32, i32
  }
  func.func @transform_2(%arg0: i32) -> (i32, i32) {
    %c0_i32 = arith.constant 0 : i32
    %c0_i32_0 = arith.constant 0 : i32
    return %arg0, %c0_i32 : i32, i32
  }
}

module attributes {stable_mosaic.version = 11 : i64} {
  func.func @_mixed_mid_kernel(%arg0: i32, %arg1: memref<1x40x192xbf16, #tpu.memory_space<vmem>>, %arg2: memref<1152x160xbf16, #tpu.memory_space<vmem>>, %arg3: memref<1x16x128xbf16, #tpu.memory_space<vmem>>, %arg4: memref<1x16x96xbf16, #tpu.memory_space<vmem>>) attributes {dimension_semantics = [#tpu.dimension_semantics<parallel>], iteration_bounds = array<i64: 2>, scalar_prefetch = 0 : i64, scratch_operands = 0 : i64, tpu.core_type = #tpu.core_type<tc>, window_params = [{transform_indices = @transform_0, window_bounds = array<i64: 1, 40, 192>}, {pipeline_mode = #tpu.pipeline_mode<synchronous>, transform_indices = @transform_1, window_bounds = array<i64: 1152, 160>}, {transform_indices = @transform_2, window_bounds = array<i64: 1, 16, 128>}, {transform_indices = @transform_3, window_bounds = array<i64: 1, 16, 96>}]} {
    %c0 = arith.constant 0 : index
    %c0_0 = arith.constant 0 : index
    %c0_1 = arith.constant 0 : index
    %0 = vector.load %arg1[%c0, %c0_0, %c0_1] : memref<1x40x192xbf16, #tpu.memory_space<vmem>>, vector<1x40x192xbf16>
    %1 = vector.shape_cast %0 : vector<1x40x192xbf16> to vector<40x192xbf16>
    %2 = vector.extract_strided_slice %1 {offsets = [0, 64], sizes = [40, 128], strides = [1, 1]} : vector<40x192xbf16> to vector<40x128xbf16>
    %cst = arith.constant 0.000000e+00 : f32
    %3 = vector.broadcast %cst : f32 to vector<16x160xf32>
    %4 = vector.extract_strided_slice %2 {offsets = [0, 0], sizes = [16, 128], strides = [1, 1]} : vector<40x128xbf16> to vector<16x128xbf16>
    %c0_2 = arith.constant 0 : index
    %c0_3 = arith.constant 0 : index
    %5 = vector.load %arg2[%c0_2, %c0_3] : memref<1152x160xbf16, #tpu.memory_space<vmem>>, vector<128x160xbf16>
    %cst_4 = arith.constant dense<0.000000e+00> : vector<16x160xf32>
    %6 = tpu.matmul %4, %5, %cst_4 {dimension_numbers = #tpu.dot_dimension_numbers<[1], [0], [0], [1], [0, 0, 1, 1], [], []>} : vector<16x128xbf16>, vector<128x160xbf16>, vector<16x160xf32> -> vector<16x160xf32>
    %7 = arith.addf %3, %6 : vector<16x160xf32>
    %8 = vector.extract_strided_slice %2 {offsets = [1, 0], sizes = [16, 128], strides = [1, 1]} : vector<40x128xbf16> to vector<16x128xbf16>
    %c128 = arith.constant 128 : index
    %c0_5 = arith.constant 0 : index
    %9 = vector.load %arg2[%c128, %c0_5] : memref<1152x160xbf16, #tpu.memory_space<vmem>>, vector<128x160xbf16>
    %cst_6 = arith.constant dense<0.000000e+00> : vector<16x160xf32>
    %10 = tpu.matmul %8, %9, %cst_6 {dimension_numbers = #tpu.dot_dimension_numbers<[1], [0], [0], [1], [0, 0, 1, 1], [], []>} : vector<16x128xbf16>, vector<128x160xbf16>, vector<16x160xf32> -> vector<16x160xf32>
    %11 = arith.addf %7, %10 : vector<16x160xf32>
    %12 = vector.extract_strided_slice %2 {offsets = [2, 0], sizes = [16, 128], strides = [1, 1]} : vector<40x128xbf16> to vector<16x128xbf16>
    %c256 = arith.constant 256 : index
    %c0_7 = arith.constant 0 : index
    %13 = vector.load %arg2[%c256, %c0_7] : memref<1152x160xbf16, #tpu.memory_space<vmem>>, vector<128x160xbf16>
    %cst_8 = arith.constant dense<0.000000e+00> : vector<16x160xf32>
    %14 = tpu.matmul %12, %13, %cst_8 {dimension_numbers = #tpu.dot_dimension_numbers<[1], [0], [0], [1], [0, 0, 1, 1], [], []>} : vector<16x128xbf16>, vector<128x160xbf16>, vector<16x160xf32> -> vector<16x160xf32>
    %15 = arith.addf %11, %14 : vector<16x160xf32>
    %16 = vector.extract_strided_slice %2 {offsets = [8, 0], sizes = [16, 128], strides = [1, 1]} : vector<40x128xbf16> to vector<16x128xbf16>
    %c384 = arith.constant 384 : index
    %c0_9 = arith.constant 0 : index
    %17 = vector.load %arg2[%c384, %c0_9] : memref<1152x160xbf16, #tpu.memory_space<vmem>>, vector<128x160xbf16>
    %cst_10 = arith.constant dense<0.000000e+00> : vector<16x160xf32>
    %18 = tpu.matmul %16, %17, %cst_10 {dimension_numbers = #tpu.dot_dimension_numbers<[1], [0], [0], [1], [0, 0, 1, 1], [], []>} : vector<16x128xbf16>, vector<128x160xbf16>, vector<16x160xf32> -> vector<16x160xf32>
    %19 = arith.addf %15, %18 : vector<16x160xf32>
    %20 = vector.extract_strided_slice %2 {offsets = [9, 0], sizes = [16, 128], strides = [1, 1]} : vector<40x128xbf16> to vector<16x128xbf16>
    %c512 = arith.constant 512 : index
    %c0_11 = arith.constant 0 : index
    %21 = vector.load %arg2[%c512, %c0_11] : memref<1152x160xbf16, #tpu.memory_space<vmem>>, vector<128x160xbf16>
    %cst_12 = arith.constant dense<0.000000e+00> : vector<16x160xf32>
    %22 = tpu.matmul %20, %21, %cst_12 {dimension_numbers = #tpu.dot_dimension_numbers<[1], [0], [0], [1], [0, 0, 1, 1], [], []>} : vector<16x128xbf16>, vector<128x160xbf16>, vector<16x160xf32> -> vector<16x160xf32>
    %23 = arith.addf %19, %22 : vector<16x160xf32>
    %24 = vector.extract_strided_slice %2 {offsets = [10, 0], sizes = [16, 128], strides = [1, 1]} : vector<40x128xbf16> to vector<16x128xbf16>
    %c640 = arith.constant 640 : index
    %c0_13 = arith.constant 0 : index
    %25 = vector.load %arg2[%c640, %c0_13] : memref<1152x160xbf16, #tpu.memory_space<vmem>>, vector<128x160xbf16>
    %cst_14 = arith.constant dense<0.000000e+00> : vector<16x160xf32>
    %26 = tpu.matmul %24, %25, %cst_14 {dimension_numbers = #tpu.dot_dimension_numbers<[1], [0], [0], [1], [0, 0, 1, 1], [], []>} : vector<16x128xbf16>, vector<128x160xbf16>, vector<16x160xf32> -> vector<16x160xf32>
    %27 = arith.addf %23, %26 : vector<16x160xf32>
    %28 = vector.extract_strided_slice %2 {offsets = [16, 0], sizes = [16, 128], strides = [1, 1]} : vector<40x128xbf16> to vector<16x128xbf16>
    %c768 = arith.constant 768 : index
    %c0_15 = arith.constant 0 : index
    %29 = vector.load %arg2[%c768, %c0_15] : memref<1152x160xbf16, #tpu.memory_space<vmem>>, vector<128x160xbf16>
    %cst_16 = arith.constant dense<0.000000e+00> : vector<16x160xf32>
    %30 = tpu.matmul %28, %29, %cst_16 {dimension_numbers = #tpu.dot_dimension_numbers<[1], [0], [0], [1], [0, 0, 1, 1], [], []>} : vector<16x128xbf16>, vector<128x160xbf16>, vector<16x160xf32> -> vector<16x160xf32>
    %31 = arith.addf %27, %30 : vector<16x160xf32>
    %32 = vector.extract_strided_slice %2 {offsets = [17, 0], sizes = [16, 128], strides = [1, 1]} : vector<40x128xbf16> to vector<16x128xbf16>
    %c896 = arith.constant 896 : index
    %c0_17 = arith.constant 0 : index
    %33 = vector.load %arg2[%c896, %c0_17] : memref<1152x160xbf16, #tpu.memory_space<vmem>>, vector<128x160xbf16>
    %cst_18 = arith.constant dense<0.000000e+00> : vector<16x160xf32>
    %34 = tpu.matmul %32, %33, %cst_18 {dimension_numbers = #tpu.dot_dimension_numbers<[1], [0], [0], [1], [0, 0, 1, 1], [], []>} : vector<16x128xbf16>, vector<128x160xbf16>, vector<16x160xf32> -> vector<16x160xf32>
    %35 = arith.addf %31, %34 : vector<16x160xf32>
    %36 = vector.extract_strided_slice %2 {offsets = [18, 0], sizes = [16, 128], strides = [1, 1]} : vector<40x128xbf16> to vector<16x128xbf16>
    %c1024 = arith.constant 1024 : index
    %c0_19 = arith.constant 0 : index
    %37 = vector.load %arg2[%c1024, %c0_19] : memref<1152x160xbf16, #tpu.memory_space<vmem>>, vector<128x160xbf16>
    %cst_20 = arith.constant dense<0.000000e+00> : vector<16x160xf32>
    %38 = tpu.matmul %36, %37, %cst_20 {dimension_numbers = #tpu.dot_dimension_numbers<[1], [0], [0], [1], [0, 0, 1, 1], [], []>} : vector<16x128xbf16>, vector<128x160xbf16>, vector<16x160xf32> -> vector<16x160xf32>
    %39 = arith.addf %35, %38 : vector<16x160xf32>
    %cst_21 = arith.constant 0.000000e+00 : f32
    %40 = vector.broadcast %cst_21 : f32 to vector<16x160xf32>
    %41 = arith.maximumf %39, %40 : vector<16x160xf32>
    %42 = vector.extract_strided_slice %1 {offsets = [9, 0], sizes = [16, 64], strides = [1, 1]} : vector<40x192xbf16> to vector<16x64xbf16>
    %c0_22 = arith.constant 0 : index
    %c0_23 = arith.constant 0 : index
    %c0_24 = arith.constant 0 : index
    %43 = vector.load %arg3[%c0_22, %c0_23, %c0_24] : memref<1x16x128xbf16, #tpu.memory_space<vmem>>, vector<1x16x64xbf16>
    %44 = vector.shape_cast %43 : vector<1x16x64xbf16> to vector<16x64xbf16>
    %45 = vector.shape_cast %42 : vector<16x64xbf16> to vector<1x16x64xbf16>
    tpu.vector_store %arg3[%c0_22, %c0_23, %c0_24], %45 {strides = array<i32>} : memref<1x16x128xbf16, #tpu.memory_space<vmem>>, vector<1x16x64xbf16>,
    %46 = vector.extract_strided_slice %41 {offsets = [0, 0], sizes = [16, 64], strides = [1, 1]} : vector<16x160xf32> to vector<16x64xf32>
    %47 = arith.truncf %46 : vector<16x64xf32> to vector<16x64xbf16>
    %c0_25 = arith.constant 0 : index
    %c0_26 = arith.constant 0 : index
    %c64 = arith.constant 64 : index
    %48 = vector.load %arg3[%c0_25, %c0_26, %c64] : memref<1x16x128xbf16, #tpu.memory_space<vmem>>, vector<1x16x64xbf16>
    %49 = vector.shape_cast %48 : vector<1x16x64xbf16> to vector<16x64xbf16>
    %50 = vector.shape_cast %47 : vector<16x64xbf16> to vector<1x16x64xbf16>
    tpu.vector_store %arg3[%c0_25, %c0_26, %c64], %50 {strides = array<i32>} : memref<1x16x128xbf16, #tpu.memory_space<vmem>>, vector<1x16x64xbf16>,
    %51 = vector.extract_strided_slice %41 {offsets = [0, 64], sizes = [16, 96], strides = [1, 1]} : vector<16x160xf32> to vector<16x96xf32>
    %52 = arith.truncf %51 : vector<16x96xf32> to vector<16x96xbf16>
    %c0_27 = arith.constant 0 : index
    %c0_28 = arith.constant 0 : index
    %c0_29 = arith.constant 0 : index
    %53 = vector.load %arg4[%c0_27, %c0_28, %c0_29] : memref<1x16x96xbf16, #tpu.memory_space<vmem>>, vector<1x16x96xbf16>
    %54 = vector.shape_cast %53 : vector<1x16x96xbf16> to vector<16x96xbf16>
    %55 = vector.shape_cast %52 : vector<16x96xbf16> to vector<1x16x96xbf16>
    tpu.vector_store %arg4[%c0_27, %c0_28, %c0_29], %55 {strides = array<i32>} : memref<1x16x96xbf16, #tpu.memory_space<vmem>>, vector<1x16x96xbf16>,
    return
  }
  func.func @transform_0(%arg0: i32) -> (i32, i32, i32) {
    %c0_i32 = arith.constant 0 : i32
    %c0_i32_0 = arith.constant 0 : i32
    %c0_i32_1 = arith.constant 0 : i32
    return %arg0, %c0_i32, %c0_i32_0 : i32, i32, i32
  }
  func.func @transform_1(%arg0: i32) -> (i32, i32) {
    %c0_i32 = arith.constant 0 : i32
    %c0_i32_0 = arith.constant 0 : i32
    %c0_i32_1 = arith.constant 0 : i32
    return %c0_i32, %c0_i32_0 : i32, i32
  }
  func.func @transform_2(%arg0: i32) -> (i32, i32, i32) {
    %c0_i32 = arith.constant 0 : i32
    %c0_i32_0 = arith.constant 0 : i32
    %c0_i32_1 = arith.constant 0 : i32
    return %arg0, %c0_i32, %c0_i32_0 : i32, i32, i32
  }
  func.func @transform_3(%arg0: i32) -> (i32, i32, i32) {
    %c0_i32 = arith.constant 0 : i32
    %c0_i32_0 = arith.constant 0 : i32
    %c0_i32_1 = arith.constant 0 : i32
    return %arg0, %c0_i32, %c0_i32_0 : i32, i32, i32
  }
}

module attributes {stable_mosaic.version = 11 : i64} {
  func.func @_mixed_tail_kernel(%arg0: i32, %arg1: memref<1x40x96xbf16, #tpu.memory_space<vmem>>, %arg2: memref<1x40x192xbf16, #tpu.memory_space<vmem>>, %arg3: memref<864x96xbf16, #tpu.memory_space<vmem>>, %arg4: memref<1728x32xbf16, #tpu.memory_space<vmem>>, %arg5: memref<1x16x128xbf16, #tpu.memory_space<vmem>>) attributes {dimension_semantics = [#tpu.dimension_semantics<parallel>], iteration_bounds = array<i64: 2>, scalar_prefetch = 0 : i64, scratch_operands = 0 : i64, tpu.core_type = #tpu.core_type<tc>, window_params = [{transform_indices = @transform_0, window_bounds = array<i64: 1, 40, 96>}, {transform_indices = @transform_1, window_bounds = array<i64: 1, 40, 192>}, {pipeline_mode = #tpu.pipeline_mode<synchronous>, transform_indices = @transform_2, window_bounds = array<i64: 864, 96>}, {pipeline_mode = #tpu.pipeline_mode<synchronous>, transform_indices = @transform_3, window_bounds = array<i64: 1728, 32>}, {transform_indices = @transform_4, window_bounds = array<i64: 1, 16, 128>}]} {
    %c0 = arith.constant 0 : index
    %c0_0 = arith.constant 0 : index
    %c0_1 = arith.constant 0 : index
    %0 = vector.load %arg1[%c0, %c0_0, %c0_1] : memref<1x40x96xbf16, #tpu.memory_space<vmem>>, vector<1x40x96xbf16>
    %1 = vector.shape_cast %0 : vector<1x40x96xbf16> to vector<40x96xbf16>
    %c0_2 = arith.constant 0 : index
    %c0_3 = arith.constant 0 : index
    %c0_4 = arith.constant 0 : index
    %2 = vector.load %arg2[%c0_2, %c0_3, %c0_4] : memref<1x40x192xbf16, #tpu.memory_space<vmem>>, vector<1x40x192xbf16>
    %3 = vector.shape_cast %2 : vector<1x40x192xbf16> to vector<40x192xbf16>
    %cst = arith.constant 0.000000e+00 : f32
    %4 = vector.broadcast %cst : f32 to vector<16x96xf32>
    %5 = vector.extract_strided_slice %1 {offsets = [0, 0], sizes = [16, 96], strides = [1, 1]} : vector<40x96xbf16> to vector<16x96xbf16>
    %c0_5 = arith.constant 0 : index
    %c0_6 = arith.constant 0 : index
    %6 = vector.load %arg3[%c0_5, %c0_6] : memref<864x96xbf16, #tpu.memory_space<vmem>>, vector<96x96xbf16>
    %cst_7 = arith.constant dense<0.000000e+00> : vector<16x96xf32>
    %7 = tpu.matmul %5, %6, %cst_7 {dimension_numbers = #tpu.dot_dimension_numbers<[1], [0], [0], [1], [0, 0, 1, 1], [], []>} : vector<16x96xbf16>, vector<96x96xbf16>, vector<16x96xf32> -> vector<16x96xf32>
    %8 = arith.addf %4, %7 : vector<16x96xf32>
    %9 = vector.extract_strided_slice %1 {offsets = [1, 0], sizes = [16, 96], strides = [1, 1]} : vector<40x96xbf16> to vector<16x96xbf16>
    %c96 = arith.constant 96 : index
    %c0_8 = arith.constant 0 : index
    %10 = vector.load %arg3[%c96, %c0_8] : memref<864x96xbf16, #tpu.memory_space<vmem>>, vector<96x96xbf16>
    %cst_9 = arith.constant dense<0.000000e+00> : vector<16x96xf32>
    %11 = tpu.matmul %9, %10, %cst_9 {dimension_numbers = #tpu.dot_dimension_numbers<[1], [0], [0], [1], [0, 0, 1, 1], [], []>} : vector<16x96xbf16>, vector<96x96xbf16>, vector<16x96xf32> -> vector<16x96xf32>
    %12 = arith.addf %8, %11 : vector<16x96xf32>
    %13 = vector.extract_strided_slice %1 {offsets = [2, 0], sizes = [16, 96], strides = [1, 1]} : vector<40x96xbf16> to vector<16x96xbf16>
    %c192 = arith.constant 192 : index
    %c0_10 = arith.constant 0 : index
    %14 = vector.load %arg3[%c192, %c0_10] : memref<864x96xbf16, #tpu.memory_space<vmem>>, vector<96x96xbf16>
    %cst_11 = arith.constant dense<0.000000e+00> : vector<16x96xf32>
    %15 = tpu.matmul %13, %14, %cst_11 {dimension_numbers = #tpu.dot_dimension_numbers<[1], [0], [0], [1], [0, 0, 1, 1], [], []>} : vector<16x96xbf16>, vector<96x96xbf16>, vector<16x96xf32> -> vector<16x96xf32>
    %16 = arith.addf %12, %15 : vector<16x96xf32>
    %17 = vector.extract_strided_slice %1 {offsets = [8, 0], sizes = [16, 96], strides = [1, 1]} : vector<40x96xbf16> to vector<16x96xbf16>
    %c288 = arith.constant 288 : index
    %c0_12 = arith.constant 0 : index
    %18 = vector.load %arg3[%c288, %c0_12] : memref<864x96xbf16, #tpu.memory_space<vmem>>, vector<96x96xbf16>
    %cst_13 = arith.constant dense<0.000000e+00> : vector<16x96xf32>
    %19 = tpu.matmul %17, %18, %cst_13 {dimension_numbers = #tpu.dot_dimension_numbers<[1], [0], [0], [1], [0, 0, 1, 1], [], []>} : vector<16x96xbf16>, vector<96x96xbf16>, vector<16x96xf32> -> vector<16x96xf32>
    %20 = arith.addf %16, %19 : vector<16x96xf32>
    %21 = vector.extract_strided_slice %1 {offsets = [9, 0], sizes = [16, 96], strides = [1, 1]} : vector<40x96xbf16> to vector<16x96xbf16>
    %c384 = arith.constant 384 : index
    %c0_14 = arith.constant 0 : index
    %22 = vector.load %arg3[%c384, %c0_14] : memref<864x96xbf16, #tpu.memory_space<vmem>>, vector<96x96xbf16>
    %cst_15 = arith.constant dense<0.000000e+00> : vector<16x96xf32>
    %23 = tpu.matmul %21, %22, %cst_15 {dimension_numbers = #tpu.dot_dimension_numbers<[1], [0], [0], [1], [0, 0, 1, 1], [], []>} : vector<16x96xbf16>, vector<96x96xbf16>, vector<16x96xf32> -> vector<16x96xf32>
    %24 = arith.addf %20, %23 : vector<16x96xf32>
    %25 = vector.extract_strided_slice %1 {offsets = [10, 0], sizes = [16, 96], strides = [1, 1]} : vector<40x96xbf16> to vector<16x96xbf16>
    %c480 = arith.constant 480 : index
    %c0_16 = arith.constant 0 : index
    %26 = vector.load %arg3[%c480, %c0_16] : memref<864x96xbf16, #tpu.memory_space<vmem>>, vector<96x96xbf16>
    %cst_17 = arith.constant dense<0.000000e+00> : vector<16x96xf32>
    %27 = tpu.matmul %25, %26, %cst_17 {dimension_numbers = #tpu.dot_dimension_numbers<[1], [0], [0], [1], [0, 0, 1, 1], [], []>} : vector<16x96xbf16>, vector<96x96xbf16>, vector<16x96xf32> -> vector<16x96xf32>
    %28 = arith.addf %24, %27 : vector<16x96xf32>
    %29 = vector.extract_strided_slice %1 {offsets = [16, 0], sizes = [16, 96], strides = [1, 1]} : vector<40x96xbf16> to vector<16x96xbf16>
    %c576 = arith.constant 576 : index
    %c0_18 = arith.constant 0 : index
    %30 = vector.load %arg3[%c576, %c0_18] : memref<864x96xbf16, #tpu.memory_space<vmem>>, vector<96x96xbf16>
    %cst_19 = arith.constant dense<0.000000e+00> : vector<16x96xf32>
    %31 = tpu.matmul %29, %30, %cst_19 {dimension_numbers = #tpu.dot_dimension_numbers<[1], [0], [0], [1], [0, 0, 1, 1], [], []>} : vector<16x96xbf16>, vector<96x96xbf16>, vector<16x96xf32> -> vector<16x96xf32>
    %32 = arith.addf %28, %31 : vector<16x96xf32>
    %33 = vector.extract_strided_slice %1 {offsets = [17, 0], sizes = [16, 96], strides = [1, 1]} : vector<40x96xbf16> to vector<16x96xbf16>
    %c672 = arith.constant 672 : index
    %c0_20 = arith.constant 0 : index
    %34 = vector.load %arg3[%c672, %c0_20] : memref<864x96xbf16, #tpu.memory_space<vmem>>, vector<96x96xbf16>
    %cst_21 = arith.constant dense<0.000000e+00> : vector<16x96xf32>
    %35 = tpu.matmul %33, %34, %cst_21 {dimension_numbers = #tpu.dot_dimension_numbers<[1], [0], [0], [1], [0, 0, 1, 1], [], []>} : vector<16x96xbf16>, vector<96x96xbf16>, vector<16x96xf32> -> vector<16x96xf32>
    %36 = arith.addf %32, %35 : vector<16x96xf32>
    %37 = vector.extract_strided_slice %1 {offsets = [18, 0], sizes = [16, 96], strides = [1, 1]} : vector<40x96xbf16> to vector<16x96xbf16>
    %c768 = arith.constant 768 : index
    %c0_22 = arith.constant 0 : index
    %38 = vector.load %arg3[%c768, %c0_22] : memref<864x96xbf16, #tpu.memory_space<vmem>>, vector<96x96xbf16>
    %cst_23 = arith.constant dense<0.000000e+00> : vector<16x96xf32>
    %39 = tpu.matmul %37, %38, %cst_23 {dimension_numbers = #tpu.dot_dimension_numbers<[1], [0], [0], [1], [0, 0, 1, 1], [], []>} : vector<16x96xbf16>, vector<96x96xbf16>, vector<16x96xf32> -> vector<16x96xf32>
    %40 = arith.addf %36, %39 : vector<16x96xf32>
    %cst_24 = arith.constant 0.000000e+00 : f32
    %41 = vector.broadcast %cst_24 : f32 to vector<16x96xf32>
    %42 = arith.maximumf %40, %41 : vector<16x96xf32>
    %cst_25 = arith.constant 0.000000e+00 : f32
    %43 = vector.broadcast %cst_25 : f32 to vector<16x32xf32>
    %44 = vector.extract_strided_slice %3 {offsets = [0, 0], sizes = [16, 192], strides = [1, 1]} : vector<40x192xbf16> to vector<16x192xbf16>
    %c0_26 = arith.constant 0 : index
    %c0_27 = arith.constant 0 : index
    %45 = vector.load %arg4[%c0_26, %c0_27] : memref<1728x32xbf16, #tpu.memory_space<vmem>>, vector<192x32xbf16>
    %cst_28 = arith.constant dense<0.000000e+00> : vector<16x32xf32>
    %46 = tpu.matmul %44, %45, %cst_28 {dimension_numbers = #tpu.dot_dimension_numbers<[1], [0], [0], [1], [0, 0, 1, 1], [], []>} : vector<16x192xbf16>, vector<192x32xbf16>, vector<16x32xf32> -> vector<16x32xf32>
    %47 = arith.addf %43, %46 : vector<16x32xf32>
    %48 = vector.extract_strided_slice %3 {offsets = [1, 0], sizes = [16, 192], strides = [1, 1]} : vector<40x192xbf16> to vector<16x192xbf16>
    %c192_29 = arith.constant 192 : index
    %c0_30 = arith.constant 0 : index
    %49 = vector.load %arg4[%c192_29, %c0_30] : memref<1728x32xbf16, #tpu.memory_space<vmem>>, vector<192x32xbf16>
    %cst_31 = arith.constant dense<0.000000e+00> : vector<16x32xf32>
    %50 = tpu.matmul %48, %49, %cst_31 {dimension_numbers = #tpu.dot_dimension_numbers<[1], [0], [0], [1], [0, 0, 1, 1], [], []>} : vector<16x192xbf16>, vector<192x32xbf16>, vector<16x32xf32> -> vector<16x32xf32>
    %51 = arith.addf %47, %50 : vector<16x32xf32>
    %52 = vector.extract_strided_slice %3 {offsets = [2, 0], sizes = [16, 192], strides = [1, 1]} : vector<40x192xbf16> to vector<16x192xbf16>
    %c384_32 = arith.constant 384 : index
    %c0_33 = arith.constant 0 : index
    %53 = vector.load %arg4[%c384_32, %c0_33] : memref<1728x32xbf16, #tpu.memory_space<vmem>>, vector<192x32xbf16>
    %cst_34 = arith.constant dense<0.000000e+00> : vector<16x32xf32>
    %54 = tpu.matmul %52, %53, %cst_34 {dimension_numbers = #tpu.dot_dimension_numbers<[1], [0], [0], [1], [0, 0, 1, 1], [], []>} : vector<16x192xbf16>, vector<192x32xbf16>, vector<16x32xf32> -> vector<16x32xf32>
    %55 = arith.addf %51, %54 : vector<16x32xf32>
    %56 = vector.extract_strided_slice %3 {offsets = [8, 0], sizes = [16, 192], strides = [1, 1]} : vector<40x192xbf16> to vector<16x192xbf16>
    %c576_35 = arith.constant 576 : index
    %c0_36 = arith.constant 0 : index
    %57 = vector.load %arg4[%c576_35, %c0_36] : memref<1728x32xbf16, #tpu.memory_space<vmem>>, vector<192x32xbf16>
    %cst_37 = arith.constant dense<0.000000e+00> : vector<16x32xf32>
    %58 = tpu.matmul %56, %57, %cst_37 {dimension_numbers = #tpu.dot_dimension_numbers<[1], [0], [0], [1], [0, 0, 1, 1], [], []>} : vector<16x192xbf16>, vector<192x32xbf16>, vector<16x32xf32> -> vector<16x32xf32>
    %59 = arith.addf %55, %58 : vector<16x32xf32>
    %60 = vector.extract_strided_slice %3 {offsets = [9, 0], sizes = [16, 192], strides = [1, 1]} : vector<40x192xbf16> to vector<16x192xbf16>
    %c768_38 = arith.constant 768 : index
    %c0_39 = arith.constant 0 : index
    %61 = vector.load %arg4[%c768_38, %c0_39] : memref<1728x32xbf16, #tpu.memory_space<vmem>>, vector<192x32xbf16>
    %cst_40 = arith.constant dense<0.000000e+00> : vector<16x32xf32>
    %62 = tpu.matmul %60, %61, %cst_40 {dimension_numbers = #tpu.dot_dimension_numbers<[1], [0], [0], [1], [0, 0, 1, 1], [], []>} : vector<16x192xbf16>, vector<192x32xbf16>, vector<16x32xf32> -> vector<16x32xf32>
    %63 = arith.addf %59, %62 : vector<16x32xf32>
    %64 = vector.extract_strided_slice %3 {offsets = [10, 0], sizes = [16, 192], strides = [1, 1]} : vector<40x192xbf16> to vector<16x192xbf16>
    %c960 = arith.constant 960 : index
    %c0_41 = arith.constant 0 : index
    %65 = vector.load %arg4[%c960, %c0_41] : memref<1728x32xbf16, #tpu.memory_space<vmem>>, vector<192x32xbf16>
    %cst_42 = arith.constant dense<0.000000e+00> : vector<16x32xf32>
    %66 = tpu.matmul %64, %65, %cst_42 {dimension_numbers = #tpu.dot_dimension_numbers<[1], [0], [0], [1], [0, 0, 1, 1], [], []>} : vector<16x192xbf16>, vector<192x32xbf16>, vector<16x32xf32> -> vector<16x32xf32>
    %67 = arith.addf %63, %66 : vector<16x32xf32>
    %68 = vector.extract_strided_slice %3 {offsets = [16, 0], sizes = [16, 192], strides = [1, 1]} : vector<40x192xbf16> to vector<16x192xbf16>
    %c1152 = arith.constant 1152 : index
    %c0_43 = arith.constant 0 : index
    %69 = vector.load %arg4[%c1152, %c0_43] : memref<1728x32xbf16, #tpu.memory_space<vmem>>, vector<192x32xbf16>
    %cst_44 = arith.constant dense<0.000000e+00> : vector<16x32xf32>
    %70 = tpu.matmul %68, %69, %cst_44 {dimension_numbers = #tpu.dot_dimension_numbers<[1], [0], [0], [1], [0, 0, 1, 1], [], []>} : vector<16x192xbf16>, vector<192x32xbf16>, vector<16x32xf32> -> vector<16x32xf32>
    %71 = arith.addf %67, %70 : vector<16x32xf32>
    %72 = vector.extract_strided_slice %3 {offsets = [17, 0], sizes = [16, 192], strides = [1, 1]} : vector<40x192xbf16> to vector<16x192xbf16>
    %c1344 = arith.constant 1344 : index
    %c0_45 = arith.constant 0 : index
    %73 = vector.load %arg4[%c1344, %c0_45] : memref<1728x32xbf16, #tpu.memory_space<vmem>>, vector<192x32xbf16>
    %cst_46 = arith.constant dense<0.000000e+00> : vector<16x32xf32>
    %74 = tpu.matmul %72, %73, %cst_46 {dimension_numbers = #tpu.dot_dimension_numbers<[1], [0], [0], [1], [0, 0, 1, 1], [], []>} : vector<16x192xbf16>, vector<192x32xbf16>, vector<16x32xf32> -> vector<16x32xf32>
    %75 = arith.addf %71, %74 : vector<16x32xf32>
    %76 = vector.extract_strided_slice %3 {offsets = [18, 0], sizes = [16, 192], strides = [1, 1]} : vector<40x192xbf16> to vector<16x192xbf16>
    %c1536 = arith.constant 1536 : index
    %c0_47 = arith.constant 0 : index
    %77 = vector.load %arg4[%c1536, %c0_47] : memref<1728x32xbf16, #tpu.memory_space<vmem>>, vector<192x32xbf16>
    %cst_48 = arith.constant dense<0.000000e+00> : vector<16x32xf32>
    %78 = tpu.matmul %76, %77, %cst_48 {dimension_numbers = #tpu.dot_dimension_numbers<[1], [0], [0], [1], [0, 0, 1, 1], [], []>} : vector<16x192xbf16>, vector<192x32xbf16>, vector<16x32xf32> -> vector<16x32xf32>
    %79 = arith.addf %75, %78 : vector<16x32xf32>
    %cst_49 = arith.constant 0.000000e+00 : f32
    %80 = vector.broadcast %cst_49 : f32 to vector<16x32xf32>
    %81 = arith.maximumf %79, %80 : vector<16x32xf32>
    %82 = arith.truncf %42 : vector<16x96xf32> to vector<16x96xbf16>
    %c0_50 = arith.constant 0 : index
    %c0_51 = arith.constant 0 : index
    %c0_52 = arith.constant 0 : index
    %83 = vector.load %arg5[%c0_50, %c0_51, %c0_52] : memref<1x16x128xbf16, #tpu.memory_space<vmem>>, vector<1x16x96xbf16>
    %84 = vector.shape_cast %83 : vector<1x16x96xbf16> to vector<16x96xbf16>
    %85 = vector.shape_cast %82 : vector<16x96xbf16> to vector<1x16x96xbf16>
    tpu.vector_store %arg5[%c0_50, %c0_51, %c0_52], %85 {strides = array<i32>} : memref<1x16x128xbf16, #tpu.memory_space<vmem>>, vector<1x16x96xbf16>,
    %86 = arith.truncf %81 : vector<16x32xf32> to vector<16x32xbf16>
    %c0_53 = arith.constant 0 : index
    %c0_54 = arith.constant 0 : index
    %c96_55 = arith.constant 96 : index
    %87 = vector.load %arg5[%c0_53, %c0_54, %c96_55] : memref<1x16x128xbf16, #tpu.memory_space<vmem>>, vector<1x16x32xbf16>
    %88 = vector.shape_cast %87 : vector<1x16x32xbf16> to vector<16x32xbf16>
    %89 = vector.shape_cast %86 : vector<16x32xbf16> to vector<1x16x32xbf16>
    tpu.vector_store %arg5[%c0_53, %c0_54, %c96_55], %89 {strides = array<i32>} : memref<1x16x128xbf16, #tpu.memory_space<vmem>>, vector<1x16x32xbf16>,
    return
  }
  func.func @transform_0(%arg0: i32) -> (i32, i32, i32) {
    %c0_i32 = arith.constant 0 : i32
    %c0_i32_0 = arith.constant 0 : i32
    %c0_i32_1 = arith.constant 0 : i32
    return %arg0, %c0_i32, %c0_i32_0 : i32, i32, i32
  }
  func.func @transform_1(%arg0: i32) -> (i32, i32, i32) {
    %c0_i32 = arith.constant 0 : i32
    %c0_i32_0 = arith.constant 0 : i32
    %c0_i32_1 = arith.constant 0 : i32
    return %arg0, %c0_i32, %c0_i32_0 : i32, i32, i32
  }
  func.func @transform_2(%arg0: i32) -> (i32, i32) {
    %c0_i32 = arith.constant 0 : i32
    %c0_i32_0 = arith.constant 0 : i32
    %c0_i32_1 = arith.constant 0 : i32
    return %c0_i32, %c0_i32_0 : i32, i32
  }
  func.func @transform_3(%arg0: i32) -> (i32, i32) {
    %c0_i32 = arith.constant 0 : i32
    %c0_i32_0 = arith.constant 0 : i32
    %c0_i32_1 = arith.constant 0 : i32
    return %c0_i32, %c0_i32_0 : i32, i32
  }
  func.func @transform_4(%arg0: i32) -> (i32, i32, i32) {
    %c0_i32 = arith.constant 0 : i32
    %c0_i32_0 = arith.constant 0 : i32
    %c0_i32_1 = arith.constant 0 : i32
    return %arg0, %c0_i32, %c0_i32_0 : i32, i32, i32
  }
}

</mosaic_0001>

<llo_original>
// kernel: inception2_forward.9
$region0: #{inception2_forward.9}
  #allocation0 [shape = 'u32[]', space=smem, size = 0x4, offset = 0x4, fixed_abs, tag = 'smem constant byte address 0x4 - core index']
  #allocation1 [shape = 'u32[72,128]{1,0:T(1,128)}', space=vmem, size = 0x9000, scoped, tag = 'internal scratch']
  %s0 = inlined_call_operand.vmem [shape: bf16[2,10,5,128], index: 0, kind: input, shape index: {}]
  %s1 = inlined_call_operand.vmem [shape: f32[1,128], index: 1, kind: input, shape index: {}]
  %s2 = inlined_call_operand.vmem [shape: f32[1,128], index: 2, kind: input, shape index: {}]
  %s3 = inlined_call_operand.vmem [shape: bf16[2,4,4,64], index: 3, kind: output, shape index: {}]
  %s4 = sld [smem:[#allocation0]]
  $region45: #{inception2_forward.9} parent=0
    _
  %s6 = ssub.s32 1, %s4
  %s7 = scalar_select 0, %s6, %s4
  loop: start=0, step=1, limit=4
  $region2: #{inception2_forward.9} parent=0 // loop_pre_header
    _
  $region3: #{inception2_forward.9} parent=0 // loop_header
    %s9 = sphi 0, %s13
    %p10 = scmp.ge.s32.totalorder %s9, 4
    %s19 = sphi 0, %s21
    %s22 = sphi 0, %s19
    %s23 = sphi 0, %s22
    %s39 = sphi 0, %s23
    %s43 = sphi 0, %s43
    %s45 = sphi 0, %s43
    %s46 = sphi 0, %s45
    %s60 = sphi 0, %s46
    %s64 = sphi 0, %s64
    %s66 = sphi 0, %s64
    %s67 = sphi 0, %s66
    %s81 = sphi 0, %s67
    %s87 = sphi 0, %s89
    %s90 = sphi 0, %s87
    %s91 = sphi 0, %s90
    %s107 = sphi 0, %s91
  $region4: #{inception2_forward.9} parent=0 // loop_header_branch
    %12 = sbr.rel (%p10) target = $region8
  $region5: #{inception2_forward.9} parent=0 // loop_body
    %s14 = ssub.s32 %s9, 1
    %s15 = ssub.s32 %s9, 2
    %s16 = sadd.s32 %s9, 1
    %s17 = ssub.s32 %s9, %s16
    %p18 = scmp.eq.s32.totalorder %s17, 0
    %s20 = sadd.s32 %s19, 1
    %s21 = scalar_select %p18, %s19, %s20
    %p24 = pneg %p18
    %p25 = scmp.eq.s32.totalorder %s9, 1
    %p26 = por %p24, %p25
    %p27 = scmp.ne.s32.totalorder %s19, %s22
    %p28 = scmp.eq.s32.totalorder %s9, 0
    %p29 = por %p27, %p28
    %p30 = scmp.ne.s32.totalorder %s19, %s22
    %p31 = scmp.eq.s32.totalorder %s14, 1
    %p32 = por %p30, %p31
    %p33 = scmp.ne.s32.totalorder %s22, %s23
    %p34 = scmp.eq.s32.totalorder %s14, 0
    %p35 = por %p33, %p34
    %p36 = scmp.ne.s32.totalorder %s22, %s23
    %p37 = scmp.eq.s32.totalorder %s15, 1
    %p38 = por %p36, %p37
    %p40 = scmp.ne.s32.totalorder %s23, %s39
    %p41 = scmp.eq.s32.totalorder %s15, 0
    %p42 = por %p40, %p41
    %s44 = sadd.s32 %s43, 1
    %p47 = scmp.eq.s32.totalorder %s9, 1
    %p48 = scmp.ne.s32.totalorder %s43, %s45
    %p49 = scmp.eq.s32.totalorder %s9, 0
    %p50 = por %p48, %p49
    %p51 = scmp.ne.s32.totalorder %s43, %s45
    %p52 = scmp.eq.s32.totalorder %s14, 1
    %p53 = por %p51, %p52
    %p54 = scmp.ne.s32.totalorder %s45, %s46
    %p55 = scmp.eq.s32.totalorder %s14, 0
    %p56 = por %p54, %p55
    %p57 = scmp.ne.s32.totalorder %s45, %s46
    %p58 = scmp.eq.s32.totalorder %s15, 1
    %p59 = por %p57, %p58
    %p61 = scmp.ne.s32.totalorder %s46, %s60
    %p62 = scmp.eq.s32.totalorder %s15, 0
    %p63 = por %p61, %p62
    %s65 = sadd.s32 %s64, 1
    %p68 = scmp.eq.s32.totalorder %s9, 1
    %p69 = scmp.ne.s32.totalorder %s64, %s66
    %p70 = scmp.eq.s32.totalorder %s9, 0
    %p71 = por %p69, %p70
    %p72 = scmp.ne.s32.totalorder %s64, %s66
    %p73 = scmp.eq.s32.totalorder %s14, 1
    %p74 = por %p72, %p73
    %p75 = scmp.ne.s32.totalorder %s66, %s67
    %p76 = scmp.eq.s32.totalorder %s14, 0
    %p77 = por %p75, %p76
    %p78 = scmp.ne.s32.totalorder %s66, %s67
    %p79 = scmp.eq.s32.totalorder %s15, 1
    %p80 = por %p78, %p79
    %p82 = scmp.ne.s32.totalorder %s67, %s81
    %p83 = scmp.eq.s32.totalorder %s15, 0
    %p84 = por %p82, %p83
    %s85 = ssub.s32 %s9, %s16
    %p86 = scmp.eq.s32.totalorder %s85, 0
    %s88 = sadd.s32 %s87, 1
    %s89 = scalar_select %p86, %s87, %s88
    %p92 = pneg %p86
    %p93 = scmp.eq.s32.totalorder %s9, 1
    %p94 = por %p92, %p93
    %p95 = scmp.ne.s32.totalorder %s87, %s90
    %p96 = scmp.eq.s32.totalorder %s9, 0
    %p97 = por %p95, %p96
    %p98 = scmp.ne.s32.totalorder %s87, %s90
    %p99 = scmp.eq.s32.totalorder %s14, 1
    %p100 = por %p98, %p99
    %p101 = scmp.ne.s32.totalorder %s90, %s91
    %p102 = scmp.eq.s32.totalorder %s14, 0
    %p103 = por %p101, %p102
    %p104 = scmp.ne.s32.totalorder %s90, %s91
    %p105 = scmp.eq.s32.totalorder %s15, 1
    %p106 = por %p104, %p105
    %p108 = scmp.ne.s32.totalorder %s91, %s107
    %p109 = scmp.eq.s32.totalorder %s15, 0
    %p110 = por %p108, %p109
    %p111 = scmp.le.s32.totalorder 1, %s9
    %p112 = scmp.lt.s32.totalorder %s9, 3
    %p113 = pnand %p111, %p112
    %p114 = pneg %p113
    // Predicated region
    $region9: #{inception2_forward.9} parent=5 // pred_check
      _
    $region10: #{inception2_forward.9} parent=5 // pred_check_branch
      %116 = sbr.rel (%p113) target = $region12
    $region11: #{inception2_forward.9} parent=5 // pred_region
      %s117 = ssub.s32 %s9, 1
      // Predicated region
      $region13: #{inception2_forward.9} parent=11 // pred_check
        %p118 = pneg %p56
      $region14: #{inception2_forward.9} parent=11 // pred_check_branch
        %120 = sbr.rel (%p118) target = $region16
      $region15: #{inception2_forward.9} parent=11 // pred_region
        _
      $region16: #{inception2_forward.9} parent=11 // pred_fallthru
        _
      // Predicated region
      $region17: #{inception2_forward.9} parent=11 // pred_check
        %p121 = pneg %p77
      $region18: #{inception2_forward.9} parent=11 // pred_check_branch
        %123 = sbr.rel (%p121) target = $region20
      $region19: #{inception2_forward.9} parent=11 // pred_region
        _
      $region20: #{inception2_forward.9} parent=11 // pred_fallthru
        _
    $region12: #{inception2_forward.9} parent=5 // pred_fallthru
      _
    %p124 = scmp.lt.s32.totalorder %s9, 2
    // Predicated region
    $region21: #{inception2_forward.9} parent=5 // pred_check
      %p125 = pneg %p124
    $region22: #{inception2_forward.9} parent=5 // pred_check_branch
      %127 = sbr.rel (%p125) target = $region24
    $region23: #{inception2_forward.9} parent=5 // pred_region
      // Predicated region
      $region25: #{inception2_forward.9} parent=23 // pred_check
        %p128 = pneg %p29
      $region26: #{inception2_forward.9} parent=23 // pred_check_branch
        %130 = sbr.rel (%p128) target = $region28
      $region27: #{inception2_forward.9} parent=23 // pred_region
        %p131 = scmp.lt.s32.totalorder %s9, 1
        %s132 = scalar_select %p131, %s9, 1
        %s133 = smul.addr %s132, 10
        %s134 = smul.addr %s133, 4
        %s135 = scalar_lea.vmem %s0, %s134
      $region28: #{inception2_forward.9} parent=23 // pred_fallthru
        _
    $region24: #{inception2_forward.9} parent=5 // pred_fallthru
      _
    %p136 = scmp.le.s32.totalorder 1, %s9
    %p137 = scmp.lt.s32.totalorder %s9, 3
    %p138 = pnand %p136, %p137
    %p139 = pneg %p138
    // Predicated region
    $region29: #{inception2_forward.9} parent=5 // pred_check
      _
    $region30: #{inception2_forward.9} parent=5 // pred_check_branch
      %141 = sbr.rel (%p138) target = $region32
    $region31: #{inception2_forward.9} parent=5 // pred_region
      %s142 = ssub.s32 %s9, 1
      %p143 = scmp.lt.s32.totalorder %s14, 1
      %s144 = scalar_select %p143, %s14, 1
      %s145 = smul.addr %s144, 10
      %s146 = smul.addr %s145, 4
      %s147 = scalar_lea.vmem %s0, %s146
      %p148 = pneg %p35
      %p149 = pneg %p32
      %p150 = pneg %p56
      %p151 = pneg %p53
      %p152 = pneg %p77
      %p153 = pneg %p74
      %p154 = pneg %p103
      %p155 = pneg %p100
      %p156 = scmp.lt.s32.totalorder %s14, 1
      %s157 = scalar_select %p156, %s14, 1
      %s158 = smul.addr %s157, 4
      %s159 = smul.addr %s158, 2
      %s160 = scalar_lea.vmem %s3, %s159
      %p161 = scmp.lt.s32.totalorder %s14, 1
      %s162 = scalar_select %p161, %s14, 1
      %s163 = smul.addr %s162, 10
      %s164 = smul.addr %s163, 4
      %s165 = scalar_lea.vmem %s0, %s164
      %p166 = scmp.lt.s32.totalorder %s14, 1
      %s167 = scalar_select %p166, %s14, 1
      %s168 = smul.addr %s167, 4
      %s169 = smul.addr %s168, 2
      %s170 = scalar_lea.vmem %s3, %s169
      %v171 = vld [vmem:[%s165] sm:$0x7]
      %v172 = vld [vmem:[%s165 + $0x4] sm:$0x7]
      %v173 = vld [vmem:[%s165 + $0x8] sm:$0x7]
      %v174 = vld [vmem:[%s165 + $0xc] sm:$0x7]
      %v175 = vld [vmem:[%s165 + $0x10] sm:$0x7]
      %v176 = vld [vmem:[%s165 + $0x14] sm:$0x7]
      %v177 = vld [vmem:[%s165 + $0x18] sm:$0x7]
      %v178 = vld [vmem:[%s165 + $0x1c] sm:$0x7]
      %v179 = vld [vmem:[%s165 + $0x20] sm:$0x7]
      %v180 = vunpack.c.l.bf16 %v171
      %v181 = vunpack.c.l.bf16 %v172
      %v182 = vunpack.c.l.bf16 %v173
      %v183 = vunpack.c.l.bf16 %v174
      %v184 = vunpack.c.l.bf16 %v175
      %v185 = vunpack.c.l.bf16 %v176
      %v186 = vunpack.c.l.bf16 %v177
      %v187 = vunpack.c.l.bf16 %v178
      %v188 = vunpack.c.l.bf16 %v179
      %v189 = vld [vmem:[%s1] sm:$0x1]
      %v191 = vperm.slane %v189, 0
      %v193 = vmul.f32 %v180, %v191
      %v194 = vmul.f32 %v181, %v191
      %v195 = vmul.f32 %v182, %v191
      %v196 = vmul.f32 %v183, %v191
      %v197 = vmul.f32 %v184, %v191
      %v198 = vmul.f32 %v185, %v191
      %v199 = vmul.f32 %v186, %v191
      %v200 = vmul.f32 %v187, %v191
      %v201 = vmul.f32 %v188, %v191
      %v202 = vld [vmem:[%s2] sm:$0x1]
      %v204 = vperm.slane %v202, 0
      %v206 = vadd.f32 %v193, %v204
      %v207 = vadd.f32 %v194, %v204
      %v208 = vadd.f32 %v195, %v204
      %v209 = vadd.f32 %v196, %v204
      %v210 = vadd.f32 %v197, %v204
      %v211 = vadd.f32 %v198, %v204
      %v212 = vadd.f32 %v199, %v204
      %v213 = vadd.f32 %v200, %v204
      %v214 = vadd.f32 %v201, %v204
      %v215 = vmax.f32 %v206, 0.0
      %v216 = vmax.f32 %v207, 0.0
      %v217 = vmax.f32 %v208, 0.0
      %v218 = vmax.f32 %v209, 0.0
      %v219 = vmax.f32 %v210, 0.0
      %v220 = vmax.f32 %v211, 0.0
      %v221 = vmax.f32 %v212, 0.0
      %v222 = vmax.f32 %v213, 0.0
      %v223 = vmax.f32 %v214, 0.0
      %v224 = vlaneseq
      %v225 = vshrl.u32 %v224, 7
      %v226 = vlaneseq
      %v227 = vand.u32 %v226, 127
      %vm228 = vcmp.eq.s32.totalorder %v225, 0
      %vm229 = vcmp.lt.s32.totalorder %v227, 64
      %vm230 = vmand %vm228, %vm229
      %vm231 = vmor 1, %vm230
      %vm232 = vmor 0, %vm230
      %vm233 = vcmp.eq.s32.totalorder %v225, 4
      %vm234 = vcmp.ge.s32.totalorder %v227, 64
      %vm235 = vmand %vm233, %vm234
      %vm236 = vmor %vm231, %vm235
      %vm237 = vmor %vm232, %vm235
      %v238 = vsel %vm236, 0.0, %v215
      %v239 = vsel %vm237, 0.0, %v216
      %v240 = vsel %vm237, 0.0, %v217
      %v241 = vsel %vm237, 0.0, %v218
      %v242 = vsel %vm237, 0.0, %v219
      %v243 = vsel %vm237, 0.0, %v220
      %v244 = vsel %vm237, 0.0, %v221
      %v245 = vsel %vm237, 0.0, %v222
      %v246 = vsel %vm237, 0.0, %v223
      %256 = vrot.lane.b32.xlu0 %v238, 64
      %v257 = vpop.permute.xlu0 %256
      %258 = vrot.lane.b32.xlu0 %v239, 64
      %v259 = vpop.permute.xlu0 %258
      %260 = vrot.lane.b32.xlu0 %v240, 64
      %v261 = vpop.permute.xlu0 %260
      %262 = vrot.lane.b32.xlu0 %v241, 64
      %v263 = vpop.permute.xlu0 %262
      %264 = vrot.lane.b32.xlu0 %v242, 64
      %v265 = vpop.permute.xlu0 %264
      %266 = vrot.lane.b32.xlu0 %v243, 64
      %v267 = vpop.permute.xlu0 %266
      %268 = vrot.lane.b32.xlu0 %v244, 64
      %v269 = vpop.permute.xlu0 %268
      %270 = vrot.lane.b32.xlu0 %v245, 64
      %v271 = vpop.permute.xlu0 %270
      %272 = vrot.lane.b32.xlu0 %v246, 64
      %v273 = vpop.permute.xlu0 %272
      %v283 = vmax.f32 %v238, %v257
      %v284 = vmax.f32 %v239, %v259
      %v285 = vmax.f32 %v240, %v261
      %v286 = vmax.f32 %v241, %v263
      %v287 = vmax.f32 %v242, %v265
      %v288 = vmax.f32 %v243, %v267
      %v289 = vmax.f32 %v244, %v269
      %v290 = vmax.f32 %v245, %v271
      %v291 = vmax.f32 %v246, %v273
      %v292 = vrot.slane %v238, 1
      %v293 = vrot.slane %v239, 1
      %v294 = vrot.slane %v240, 1
      %v295 = vrot.slane %v241, 1
      %v296 = vrot.slane %v242, 1
      %v297 = vrot.slane %v243, 1
      %v298 = vrot.slane %v244, 1
      %v299 = vrot.slane %v245, 1
      %v300 = vrot.slane %v246, 1
      %v310 = vmax.f32 %v283, %v292
      %v311 = vmax.f32 %v284, %v293
      %v312 = vmax.f32 %v285, %v294
      %v313 = vmax.f32 %v286, %v295
      %v314 = vmax.f32 %v287, %v296
      %v315 = vmax.f32 %v288, %v297
      %v316 = vmax.f32 %v289, %v298
      %v317 = vmax.f32 %v290, %v299
      %v318 = vmax.f32 %v291, %v300
      %v319 = vmax.f32 %v310, %v311
      %v320 = vmax.f32 %v312, %v313
      %v321 = vmax.f32 %v314, %v315
      %v322 = vmax.f32 %v316, %v317
      %v323 = vmax.f32 %v319, %v312
      %v324 = vmax.f32 %v320, %v314
      %v325 = vmax.f32 %v321, %v316
      %v326 = vmax.f32 %v322, %v318
      %v327 = vpack.c.bf16 %v323, %v323
      %v328 = vpack.c.bf16 %v324, %v324
      %v329 = vpack.c.bf16 %v325, %v325
      %v330 = vpack.c.bf16 %v326, %v326
      %vm331 = vcmask 517120
      %332 = vst.msk [vmem:[%s170] sm:$0x3] %vm331, %v327
      %333 = vst.msk [vmem:[%s170 + $0x2] sm:$0x3] %vm331, %v328
      %334 = vst.msk [vmem:[%s170 + $0x4] sm:$0x3] %vm331, %v329
      %335 = vst.msk [vmem:[%s170 + $0x6] sm:$0x3] %vm331, %v330
      %p336 = scmp.lt.s32.totalorder %s14, 1
      %s337 = scalar_select %p336, %s14, 1
      %s338 = smul.addr %s337, 4
      %s339 = smul.addr %s338, 2
      %s340 = scalar_lea.vmem %s3, %s339
      // Predicated region
      $region33: #{inception2_forward.9} parent=31 // pred_check
        %p341 = pneg %p100
      $region34: #{inception2_forward.9} parent=31 // pred_check_branch
        %343 = sbr.rel (%p341) target = $region36
      $region35: #{inception2_forward.9} parent=31 // pred_region
        _
      $region36: #{inception2_forward.9} parent=31 // pred_fallthru
        _
    $region32: #{inception2_forward.9} parent=5 // pred_fallthru
      _
    %p344 = scmp.le.s32.totalorder 2, %s9
    // Predicated region
    $region37: #{inception2_forward.9} parent=5 // pred_check
      %p345 = pneg %p344
    $region38: #{inception2_forward.9} parent=5 // pred_check_branch
      %347 = sbr.rel (%p345) target = $region40
    $region39: #{inception2_forward.9} parent=5 // pred_region
      %s348 = ssub.s32 %s9, 2
      // Predicated region
      $region41: #{inception2_forward.9} parent=39 // pred_check
        %p349 = pneg %p106
      $region42: #{inception2_forward.9} parent=39 // pred_check_branch
        %351 = sbr.rel (%p349) target = $region44
      $region43: #{inception2_forward.9} parent=39 // pred_region
        %p352 = scmp.lt.s32.totalorder %s15, 1
        %s353 = scalar_select %p352, %s15, 1
        %s354 = smul.addr %s353, 4
        %s355 = smul.addr %s354, 2
        %s356 = scalar_lea.vmem %s3, %s355
      $region44: #{inception2_forward.9} parent=39 // pred_fallthru
        _
    $region40: #{inception2_forward.9} parent=5 // pred_fallthru
      _
  $region6: #{inception2_forward.9} parent=0 // loop_footer
    %s13 = sadd.s32 1, %s9
  $region7: #{inception2_forward.9} parent=0 // loop_footer_branch
    %8 = sbr.rel target = $region3
  $region8: #{inception2_forward.9} parent=0 // loop_exit
    _

// kernel: inception2_forward.8
$region0: #{inception2_forward.8}
  #allocation0 [shape = 'u32[]', space=smem, size = 0x4, offset = 0x4, fixed_abs, tag = 'smem constant byte address 0x4 - core index']
  #allocation1 [shape = 'u32[72,128]{1,0:T(1,128)}', space=vmem, size = 0x9000, scoped, tag = 'internal scratch']
  %s0 = inlined_call_operand.vmem [shape: bf16[128,160], index: 0, kind: input, shape index: {}]
  %s1 = inlined_call_operand.vmem [shape: bf16[160,64], index: 1, kind: input, shape index: {}]
  %s2 = inlined_call_operand.vmem [shape: bf16[128,64], index: 2, kind: output, shape index: {0}]
  %s3 = inlined_call_operand.vmem [shape: f32[1,1,64], index: 3, kind: output, shape index: {1}]
  %s4 = inlined_call_operand.vmem [shape: f32[1,1,64], index: 4, kind: output, shape index: {2}]
  %5 = xla_tuple %s2, %s3, %s4
  %s6 = sld [smem:[#allocation0]]
  $region34: #{inception2_forward.8} parent=0
    _
  %s8 = ssub.s32 1, %s6
  %s9 = scalar_select 0, %s8, %s6
  // Predicated region
  $region2: #{inception2_forward.8} parent=0 // pred_check
    _
  $region3: #{inception2_forward.8} parent=0 // pred_check_branch
    %11 = sbr.rel (0) target = $region5
  $region4: #{inception2_forward.8} parent=0 // pred_region
    _
  $region5: #{inception2_forward.8} parent=0 // pred_fallthru
    _
  // Predicated region
  $region6: #{inception2_forward.8} parent=0 // pred_check
    _
  $region7: #{inception2_forward.8} parent=0 // pred_check_branch
    %13 = sbr.rel (0) target = $region9
  $region8: #{inception2_forward.8} parent=0 // pred_region
    _
  $region9: #{inception2_forward.8} parent=0 // pred_fallthru
    _
  %v15 = vld [vmem:[%s0] sm:$0xff]
  %v16 = vld [vmem:[%s0 + $0x8] sm:$0xff]
  %v17 = vld [vmem:[%s0 + $0x10] sm:$0xff]
  %v18 = vld [vmem:[%s0 + $0x18] sm:$0xff]
  %v19 = vld [vmem:[%s0 + $0x20] sm:$0xff]
  %v20 = vld [vmem:[%s0 + $0x28] sm:$0xff]
  %v21 = vld [vmem:[%s0 + $0x30] sm:$0xff]
  %v22 = vld [vmem:[%s0 + $0x38] sm:$0xff]
  %v23 = vld [vmem:[%s0 + $0x40] sm:$0xff]
  %v24 = vld [vmem:[%s0 + $0x48] sm:$0xff]
  %v25 = vld [vmem:[%s0 + $0x50] sm:$0xff]
  %v26 = vld [vmem:[%s0 + $0x58] sm:$0xff]
  %v27 = vld [vmem:[%s0 + $0x60] sm:$0xff]
  %v28 = vld [vmem:[%s0 + $0x68] sm:$0xff]
  %v29 = vld [vmem:[%s0 + $0x70] sm:$0xff]
  %v30 = vld [vmem:[%s0 + $0x78] sm:$0xff]
  %v31 = vld [vmem:[%s1] sm:$0xf]
  %v32 = vld [vmem:[%s1 + $0x4] sm:$0xf]
  %v33 = vld [vmem:[%s1 + $0x8] sm:$0xf]
  %v34 = vld [vmem:[%s1 + $0xc] sm:$0xf]
  %v35 = vld [vmem:[%s1 + $0x10] sm:$0xf]
  %v36 = vld [vmem:[%s1 + $0x14] sm:$0xf]
  %v37 = vld [vmem:[%s1 + $0x18] sm:$0xf]
  %v38 = vld [vmem:[%s1 + $0x1c] sm:$0xf]
  %v39 = vld [vmem:[%s1 + $0x20] sm:$0xf]
  %v40 = vld [vmem:[%s1 + $0x24] sm:$0xf]
  %v41 = vld [vmem:[%s1 + $0x28] sm:$0xf]
  %v42 = vld [vmem:[%s1 + $0x2c] sm:$0xf]
  %v43 = vld [vmem:[%s1 + $0x30] sm:$0xf]
  %v44 = vld [vmem:[%s1 + $0x34] sm:$0xf]
  %v45 = vld [vmem:[%s1 + $0x38] sm:$0xf]
  %v46 = vld [vmem:[%s1 + $0x3c] sm:$0xf]
  %v47 = vld [vmem:[%s1 + $0x40] sm:$0xf]
  %v48 = vld [vmem:[%s1 + $0x44] sm:$0xf]
  %v49 = vld [vmem:[%s1 + $0x48] sm:$0xf]
  %v50 = vld [vmem:[%s1 + $0x4c] sm:$0xf]
  %v67 = vunpack.c.l.b16 %v15
  %v68 = vunpack.c.h.b16 %v15
  %v69 = vunpack.c.l.b16 %v16
  %v70 = vunpack.c.h.b16 %v16
  %v71 = vunpack.c.l.b16 %v17
  %v72 = vunpack.c.h.b16 %v17
  %v73 = vunpack.c.l.b16 %v18
  %v74 = vunpack.c.h.b16 %v18
  %v75 = vunpack.c.l.b16 %v19
  %v76 = vunpack.c.h.b16 %v19
  %v77 = vunpack.c.l.b16 %v20
  %v78 = vunpack.c.h.b16 %v20
  %v79 = vunpack.c.l.b16 %v21
  %v80 = vunpack.c.h.b16 %v21
  %v81 = vunpack.c.l.b16 %v22
  %v82 = vunpack.c.h.b16 %v22
  %v83 = vunpack.c.l.b16 %v23
  %v84 = vunpack.c.h.b16 %v23
  %v85 = vunpack.c.l.b16 %v24
  %v86 = vunpack.c.h.b16 %v24
  %v87 = vunpack.c.l.b16 %v25
  %v88 = vunpack.c.h.b16 %v25
  %v89 = vunpack.c.l.b16 %v26
  %v90 = vunpack.c.h.b16 %v26
  %v91 = vunpack.c.l.b16 %v27
  %v92 = vunpack.c.h.b16 %v27
  %v93 = vunpack.c.l.b16 %v28
  %v94 = vunpack.c.h.b16 %v28
  %v95 = vunpack.c.l.b16 %v29
  %v96 = vunpack.c.h.b16 %v29
  %v97 = vunpack.c.l.b16 %v30
  %v98 = vunpack.c.h.b16 %v30
  %v99 = vpack.c.b16 %v69, %v67
  %v100 = vpack.c.b16 %v70, %v68
  %v101 = vpack.c.b16 %v73, %v71
  %v102 = vpack.c.b16 %v74, %v72
  %v103 = vpack.c.b16 %v77, %v75
  %v104 = vpack.c.b16 %v78, %v76
  %v105 = vpack.c.b16 %v81, %v79
  %v106 = vpack.c.b16 %v82, %v80
  %v107 = vpack.c.b16 %v85, %v83
  %v108 = vpack.c.b16 %v86, %v84
  %v109 = vpack.c.b16 %v89, %v87
  %v110 = vpack.c.b16 %v90, %v88
  %v111 = vpack.c.b16 %v93, %v91
  %v112 = vpack.c.b16 %v94, %v92
  %v113 = vpack.c.b16 %v97, %v95
  %v114 = vpack.c.b16 %v98, %v96
  %v143 = vunpack.c.l.b16 %v31
  %v144 = vunpack.c.l.b16 %v32
  %v145 = vunpack.c.l.b16 %v33
  %v146 = vunpack.c.l.b16 %v34
  %v147 = vunpack.c.l.b16 %v35
  %v148 = vunpack.c.l.b16 %v36
  %v149 = vunpack.c.l.b16 %v37
  %v150 = vunpack.c.l.b16 %v38
  %v151 = vunpack.c.l.b16 %v39
  %v152 = vunpack.c.l.b16 %v40
  %v153 = vunpack.c.l.b16 %v41
  %v154 = vunpack.c.l.b16 %v42
  %v155 = vunpack.c.l.b16 %v43
  %v156 = vunpack.c.l.b16 %v44
  %v157 = vunpack.c.l.b16 %v45
  %v158 = vunpack.c.l.b16 %v46
  %v159 = vunpack.c.l.b16 %v47
  %v160 = vunpack.c.l.b16 %v48
  %v161 = vunpack.c.l.b16 %v49
  %v162 = vunpack.c.l.b16 %v50
  %v163 = vpack.c.b16 %v144, %v143
  %v164 = vpack.c.b16 %v146, %v145
  %v165 = vpack.c.b16 %v148, %v147
  %v166 = vpack.c.b16 %v150, %v149
  %v167 = vpack.c.b16 %v152, %v151
  %v168 = vpack.c.b16 %v154, %v153
  %v169 = vpack.c.b16 %v156, %v155
  %v170 = vpack.c.b16 %v158, %v157
  %v171 = vpack.c.b16 %v160, %v159
  %v172 = vpack.c.b16 %v162, %v161
  %vm183 = vcmask 261120
  %v185 = vsel %vm183, %v100, 0
  %v188 = vsel %vm183, %v102, 0
  %v191 = vsel %vm183, %v104, 0
  %v194 = vsel %vm183, %v106, 0
  %v197 = vsel %vm183, %v108, 0
  %v200 = vsel %vm183, %v110, 0
  %v203 = vsel %vm183, %v112, 0
  %v206 = vsel %vm183, %v114, 0
  %208 = vmatpush.bf16.msra.mxu0 %v170
  %209 = vmatpush.bf16.msra.mxu0 %v169
  %210 = vmatpush.bf16.msra.mxu0 %v168
  %211 = vmatpush.bf16.msra.mxu0 %v167
  %212 = vmatpush.bf16.msra.mxu0 %v166
  %213 = vmatpush.bf16.msra.mxu0 %v165
  %214 = vmatpush.bf16.msra.mxu0 %v164
  %215 = vmatpush.bf16.msra.mxu0 %v163
  %216 = vmatmul.bf16.gmra.mxu0 %v99
  %v217 = vpop.f32.mrf.mxu0
  %v218 = vadd.f32 0.0, %v217
  %v219 = vpop.f32.mrf.mxu0
  %v220 = vadd.f32 0.0, %v219
  %221 = vmatmul.bf16.gmra.mxu0 %v101
  %v222 = vpop.f32.mrf.mxu0
  %v223 = vadd.f32 0.0, %v222
  %v224 = vpop.f32.mrf.mxu0
  %v225 = vadd.f32 0.0, %v224
  %226 = vmatmul.bf16.gmra.mxu0 %v103
  %v227 = vpop.f32.mrf.mxu0
  %v228 = vadd.f32 0.0, %v227
  %v229 = vpop.f32.mrf.mxu0
  %v230 = vadd.f32 0.0, %v229
  %231 = vmatmul.bf16.gmra.mxu0 %v105
  %v232 = vpop.f32.mrf.mxu0
  %v233 = vadd.f32 0.0, %v232
  %v234 = vpop.f32.mrf.mxu0
  %v235 = vadd.f32 0.0, %v234
  %236 = vmatmul.bf16.gmra.mxu0 %v107
  %v237 = vpop.f32.mrf.mxu0
  %v238 = vadd.f32 0.0, %v237
  %v239 = vpop.f32.mrf.mxu0
  %v240 = vadd.f32 0.0, %v239
  %241 = vmatmul.bf16.gmra.mxu0 %v109
  %v242 = vpop.f32.mrf.mxu0
  %v243 = vadd.f32 0.0, %v242
  %v244 = vpop.f32.mrf.mxu0
  %v245 = vadd.f32 0.0, %v244
  %246 = vmatmul.bf16.gmra.mxu0 %v111
  %v247 = vpop.f32.mrf.mxu0
  %v248 = vadd.f32 0.0, %v247
  %v249 = vpop.f32.mrf.mxu0
  %v250 = vadd.f32 0.0, %v249
  %251 = vmatmul.bf16.gmra.mxu0 %v113
  %v252 = vpop.f32.mrf.mxu0
  %v253 = vadd.f32 0.0, %v252
  %v254 = vpop.f32.mrf.mxu0
  %v255 = vadd.f32 0.0, %v254
  %256 = vdwg.mxu0
  %257 = vmatpush.bf16.msra.mxu0 0
  %258 = vmatpush.bf16.msra.mxu0 0
  %259 = vmatpush.bf16.msra.mxu0 0
  %260 = vmatpush.bf16.msra.mxu0 0
  %261 = vmatpush.bf16.msra.mxu0 0
  %262 = vmatpush.bf16.msra.mxu0 0
  %263 = vmatpush.bf16.msra.mxu0 %v172
  %264 = vmatpush.bf16.msra.mxu0 %v171
  %265 = vmatmul.bf16.gmra.mxu0 %v185
  %v266 = vpop.f32.mrf.mxu0
  %v267 = vadd.f32 %v218, %v266
  %v268 = vpop.f32.mrf.mxu0
  %v269 = vadd.f32 %v220, %v268
  %270 = vmatmul.bf16.gmra.mxu0 %v188
  %v271 = vpop.f32.mrf.mxu0
  %v272 = vadd.f32 %v223, %v271
  %v273 = vpop.f32.mrf.mxu0
  %v274 = vadd.f32 %v225, %v273
  %275 = vmatmul.bf16.gmra.mxu0 %v191
  %v276 = vpop.f32.mrf.mxu0
  %v277 = vadd.f32 %v228, %v276
  %v278 = vpop.f32.mrf.mxu0
  %v279 = vadd.f32 %v230, %v278
  %280 = vmatmul.bf16.gmra.mxu0 %v194
  %v281 = vpop.f32.mrf.mxu0
  %v282 = vadd.f32 %v233, %v281
  %v283 = vpop.f32.mrf.mxu0
  %v284 = vadd.f32 %v235, %v283
  %285 = vmatmul.bf16.gmra.mxu0 %v197
  %v286 = vpop.f32.mrf.mxu0
  %v287 = vadd.f32 %v238, %v286
  %v288 = vpop.f32.mrf.mxu0
  %v289 = vadd.f32 %v240, %v288
  %290 = vmatmul.bf16.gmra.mxu0 %v200
  %v291 = vpop.f32.mrf.mxu0
  %v292 = vadd.f32 %v243, %v291
  %v293 = vpop.f32.mrf.mxu0
  %v294 = vadd.f32 %v245, %v293
  %295 = vmatmul.bf16.gmra.mxu0 %v203
  %v296 = vpop.f32.mrf.mxu0
  %v297 = vadd.f32 %v248, %v296
  %v298 = vpop.f32.mrf.mxu0
  %v299 = vadd.f32 %v250, %v298
  %300 = vmatmul.bf16.gmra.mxu0 %v206
  %v301 = vpop.f32.mrf.mxu0
  %v302 = vadd.f32 %v253, %v301
  %v303 = vpop.f32.mrf.mxu0
  %v304 = vadd.f32 %v255, %v303
  %305 = vdwg.mxu0
  %v306 = vpack.c.bf16 %v267, %v267
  %v307 = vpack.c.bf16 %v269, %v269
  %v308 = vpack.c.bf16 %v272, %v272
  %v309 = vpack.c.bf16 %v274, %v274
  %v310 = vpack.c.bf16 %v277, %v277
  %v311 = vpack.c.bf16 %v279, %v279
  %v312 = vpack.c.bf16 %v282, %v282
  %v313 = vpack.c.bf16 %v284, %v284
  %v314 = vpack.c.bf16 %v287, %v287
  %v315 = vpack.c.bf16 %v289, %v289
  %v316 = vpack.c.bf16 %v292, %v292
  %v317 = vpack.c.bf16 %v294, %v294
  %v318 = vpack.c.bf16 %v297, %v297
  %v319 = vpack.c.bf16 %v299, %v299
  %v320 = vpack.c.bf16 %v302, %v302
  %v321 = vpack.c.bf16 %v304, %v304
  %vm322 = vcmask 519168
  %323 = vst.msk [vmem:[%s2] sm:$0xf] %vm322, %v306
  %324 = vst.msk [vmem:[%s2 + $0x4] sm:$0xf] %vm322, %v307
  %325 = vst.msk [vmem:[%s2 + $0x8] sm:$0xf] %vm322, %v308
  %326 = vst.msk [vmem:[%s2 + $0xc] sm:$0xf] %vm322, %v309
  %327 = vst.msk [vmem:[%s2 + $0x10] sm:$0xf] %vm322, %v310
  %328 = vst.msk [vmem:[%s2 + $0x14] sm:$0xf] %vm322, %v311
  %329 = vst.msk [vmem:[%s2 + $0x18] sm:$0xf] %vm322, %v312
  %330 = vst.msk [vmem:[%s2 + $0x1c] sm:$0xf] %vm322, %v313
  %331 = vst.msk [vmem:[%s2 + $0x20] sm:$0xf] %vm322, %v314
  %332 = vst.msk [vmem:[%s2 + $0x24] sm:$0xf] %vm322, %v315
  %333 = vst.msk [vmem:[%s2 + $0x28] sm:$0xf] %vm322, %v316
  %334 = vst.msk [vmem:[%s2 + $0x2c] sm:$0xf] %vm322, %v317
  %335 = vst.msk [vmem:[%s2 + $0x30] sm:$0xf] %vm322, %v318
  %336 = vst.msk [vmem:[%s2 + $0x34] sm:$0xf] %vm322, %v319
  %337 = vst.msk [vmem:[%s2 + $0x38] sm:$0xf] %vm322, %v320
  %338 = vst.msk [vmem:[%s2 + $0x3c] sm:$0xf] %vm322, %v321
  %vm339 = vcmask 523264
  %v340 = vsel %vm339, %v267, 0.0
  %v341 = vsel %vm339, %v269, 0.0
  %v342 = vadd.f32 %v340, %v341
  %v343 = vsel %vm339, %v272, 0.0
  %v344 = vadd.f32 %v342, %v343
  %v345 = vsel %vm339, %v274, 0.0
  %v346 = vadd.f32 %v344, %v345
  %v347 = vsel %vm339, %v277, 0.0
  %v348 = vadd.f32 %v346, %v347
  %v349 = vsel %vm339, %v279, 0.0
  %v350 = vadd.f32 %v348, %v349
  %v351 = vsel %vm339, %v282, 0.0
  %v352 = vadd.f32 %v350, %v351
  %v353 = vsel %vm339, %v284, 0.0
  %v354 = vadd.f32 %v352, %v353
  %v355 = vsel %vm339, %v287, 0.0
  %v356 = vadd.f32 %v354, %v355
  %v357 = vsel %vm339, %v289, 0.0
  %v358 = vadd.f32 %v356, %v357
  %v359 = vsel %vm339, %v292, 0.0
  %v360 = vadd.f32 %v358, %v359
  %v361 = vsel %vm339, %v294, 0.0
  %v362 = vadd.f32 %v360, %v361
  %v363 = vsel %vm339, %v297, 0.0
  %v364 = vadd.f32 %v362, %v363
  %v365 = vsel %vm339, %v299, 0.0
  %v366 = vadd.f32 %v364, %v365
  %v367 = vsel %vm339, %v302, 0.0
  %v368 = vadd.f32 %v366, %v367
  %v369 = vsel %vm339, %v304, 0.0
  %v370 = vadd.f32 %v368, %v369
  %v371 = vrot.slane %v370, 4
  %v372 = vadd.f32 %v370, %v371
  %v373 = vrot.slane %v372, 2
  %v374 = vadd.f32 %v372, %v373
  %v375 = vrot.slane %v374, 1
  %v376 = vadd.f32 %v374, %v375
  %vm377 = vcmask 516096
  %378 = vst.msk [vmem:[%s3] sm:$0x1] %vm377, %v376
  %v379 = vmul.f32 %v267, %v267
  %v380 = vmul.f32 %v269, %v269
  %v381 = vmul.f32 %v272, %v272
  %v382 = vmul.f32 %v274, %v274
  %v383 = vmul.f32 %v277, %v277
  %v384 = vmul.f32 %v279, %v279
  %v385 = vmul.f32 %v282, %v282
  %v386 = vmul.f32 %v284, %v284
  %v387 = vmul.f32 %v287, %v287
  %v388 = vmul.f32 %v289, %v289
  %v389 = vmul.f32 %v292, %v292
  %v390 = vmul.f32 %v294, %v294
  %v391 = vmul.f32 %v297, %v297
  %v392 = vmul.f32 %v299, %v299
  %v393 = vmul.f32 %v302, %v302
  %v394 = vmul.f32 %v304, %v304
  %v395 = vsel %vm339, %v379, 0.0
  %v396 = vsel %vm339, %v380, 0.0
  %v397 = vadd.f32 %v395, %v396
  %v398 = vsel %vm339, %v381, 0.0
  %v399 = vadd.f32 %v397, %v398
  %v400 = vsel %vm339, %v382, 0.0
  %v401 = vadd.f32 %v399, %v400
  %v402 = vsel %vm339, %v383, 0.0
  %v403 = vadd.f32 %v401, %v402
  %v404 = vsel %vm339, %v384, 0.0
  %v405 = vadd.f32 %v403, %v404
  %v406 = vsel %vm339, %v385, 0.0
  %v407 = vadd.f32 %v405, %v406
  %v408 = vsel %vm339, %v386, 0.0
  %v409 = vadd.f32 %v407, %v408
  %v410 = vsel %vm339, %v387, 0.0
  %v411 = vadd.f32 %v409, %v410
  %v412 = vsel %vm339, %v388, 0.0
  %v413 = vadd.f32 %v411, %v412
  %v414 = vsel %vm339, %v389, 0.0
  %v415 = vadd.f32 %v413, %v414
  %v416 = vsel %vm339, %v390, 0.0
  %v417 = vadd.f32 %v415, %v416
  %v418 = vsel %vm339, %v391, 0.0
  %v419 = vadd.f32 %v417, %v418
  %v420 = vsel %vm339, %v392, 0.0
  %v421 = vadd.f32 %v419, %v420
  %v422 = vsel %vm339, %v393, 0.0
  %v423 = vadd.f32 %v421, %v422
  %v424 = vsel %vm339, %v394, 0.0
  %v425 = vadd.f32 %v423, %v424
  %v426 = vrot.slane %v425, 4
  %v427 = vadd.f32 %v425, %v426
  %v428 = vrot.slane %v427, 2
  %v429 = vadd.f32 %v427, %v428
  %v430 = vrot.slane %v429, 1
  %v431 = vadd.f32 %v429, %v430
  %432 = vst.msk [vmem:[%s4] sm:$0x1] %vm377, %v431
  // Predicated region
  $region10: #{inception2_forward.8} parent=0 // pred_check
    _
  $region11: #{inception2_forward.8} parent=0 // pred_check_branch
    %434 = sbr.rel (0) target = $region13
  $region12: #{inception2_forward.8} parent=0 // pred_region
    _
  $region13: #{inception2_forward.8} parent=0 // pred_fallthru
    _
  // Predicated region
  $region14: #{inception2_forward.8} parent=0 // pred_check
    _
  $region15: #{inception2_forward.8} parent=0 // pred_check_branch
    %436 = sbr.rel (0) target = $region17
  $region16: #{inception2_forward.8} parent=0 // pred_region
    _
  $region17: #{inception2_forward.8} parent=0 // pred_fallthru
    _
  // Predicated region
  $region18: #{inception2_forward.8} parent=0 // pred_check
    _
  $region19: #{inception2_forward.8} parent=0 // pred_check_branch
    %438 = sbr.rel (0) target = $region21
  $region20: #{inception2_forward.8} parent=0 // pred_region
    _
  $region21: #{inception2_forward.8} parent=0 // pred_fallthru
    _
  // Predicated region
  $region22: #{inception2_forward.8} parent=0 // pred_check
    _
  $region23: #{inception2_forward.8} parent=0 // pred_check_branch
    %440 = sbr.rel (0) target = $region25
  $region24: #{inception2_forward.8} parent=0 // pred_region
    _
  $region25: #{inception2_forward.8} parent=0 // pred_fallthru
    _
  // Predicated region
  $region26: #{inception2_forward.8} parent=0 // pred_check
    _
  $region27: #{inception2_forward.8} parent=0 // pred_check_branch
    %442 = sbr.rel (0) target = $region29
  $region28: #{inception2_forward.8} parent=0 // pred_region
    _
  $region29: #{inception2_forward.8} parent=0 // pred_fallthru
    _
  // Predicated region
  $region30: #{inception2_forward.8} parent=0 // pred_check
    _
  $region31: #{inception2_forward.8} parent=0 // pred_check_branch
    %444 = sbr.rel (0) target = $region33
  $region32: #{inception2_forward.8} parent=0 // pred_region
    _
  $region33: #{inception2_forward.8} parent=0 // pred_fallthru
    _

// kernel: inception2_forward.10
$region0: #{inception2_forward.10}
  #allocation0 [shape = 'u32[]', space=smem, size = 0x4, offset = 0x4, fixed_abs, tag = 'smem constant byte address 0x4 - core index']
  #allocation1 [shape = 'u32[72,128]{1,0:T(1,128)}', space=vmem, size = 0x9000, scoped, tag = 'internal scratch']
  %s0 = inlined_call_operand.vmem [shape: bf16[32,64], index: 0, kind: input, shape index: {}]
  %s1 = inlined_call_operand.vmem [shape: bf16[64,64], index: 1, kind: input, shape index: {}]
  %s2 = inlined_call_operand.vmem [shape: bf16[32,64], index: 2, kind: output, shape index: {0}]
  %s3 = inlined_call_operand.vmem [shape: f32[1,1,64], index: 3, kind: output, shape index: {1}]
  %s4 = inlined_call_operand.vmem [shape: f32[1,1,64], index: 4, kind: output, shape index: {2}]
  %5 = xla_tuple %s2, %s3, %s4
  %s6 = sld [smem:[#allocation0]]
  $region34: #{inception2_forward.10} parent=0
    _
  %s8 = ssub.s32 1, %s6
  %s9 = scalar_select 0, %s8, %s6
  // Predicated region
  $region2: #{inception2_forward.10} parent=0 // pred_check
    _
  $region3: #{inception2_forward.10} parent=0 // pred_check_branch
    %11 = sbr.rel (0) target = $region5
  $region4: #{inception2_forward.10} parent=0 // pred_region
    _
  $region5: #{inception2_forward.10} parent=0 // pred_fallthru
    _
  // Predicated region
  $region6: #{inception2_forward.10} parent=0 // pred_check
    _
  $region7: #{inception2_forward.10} parent=0 // pred_check_branch
    %13 = sbr.rel (0) target = $region9
  $region8: #{inception2_forward.10} parent=0 // pred_region
    _
  $region9: #{inception2_forward.10} parent=0 // pred_fallthru
    _
  %v15 = vld [vmem:[%s0] sm:$0xf]
  %v16 = vld [vmem:[%s0 + $0x4] sm:$0xf]
  %v17 = vld [vmem:[%s0 + $0x8] sm:$0xf]
  %v18 = vld [vmem:[%s0 + $0xc] sm:$0xf]
  %v19 = vld [vmem:[%s1] sm:$0xf]
  %v20 = vld [vmem:[%s1 + $0x4] sm:$0xf]
  %v21 = vld [vmem:[%s1 + $0x8] sm:$0xf]
  %v22 = vld [vmem:[%s1 + $0xc] sm:$0xf]
  %v23 = vld [vmem:[%s1 + $0x10] sm:$0xf]
  %v24 = vld [vmem:[%s1 + $0x14] sm:$0xf]
  %v25 = vld [vmem:[%s1 + $0x18] sm:$0xf]
  %v26 = vld [vmem:[%s1 + $0x1c] sm:$0xf]
  %v31 = vunpack.c.l.b16 %v15
  %v32 = vunpack.c.l.b16 %v16
  %v33 = vunpack.c.l.b16 %v17
  %v34 = vunpack.c.l.b16 %v18
  %v35 = vpack.c.b16 %v32, %v31
  %v36 = vpack.c.b16 %v34, %v33
  %v45 = vunpack.c.l.b16 %v19
  %v46 = vunpack.c.l.b16 %v20
  %v47 = vunpack.c.l.b16 %v21
  %v48 = vunpack.c.l.b16 %v22
  %v49 = vunpack.c.l.b16 %v23
  %v50 = vunpack.c.l.b16 %v24
  %v51 = vunpack.c.l.b16 %v25
  %v52 = vunpack.c.l.b16 %v26
  %v53 = vpack.c.b16 %v46, %v45
  %v54 = vpack.c.b16 %v48, %v47
  %v55 = vpack.c.b16 %v50, %v49
  %v56 = vpack.c.b16 %v52, %v51
  %vm61 = vcmask 523264
  %v63 = vsel %vm61, %v35, 0
  %v66 = vsel %vm61, %v36, 0
  %68 = vmatpush.bf16.msra.mxu0 0
  %69 = vmatpush.bf16.msra.mxu0 0
  %70 = vmatpush.bf16.msra.mxu0 0
  %71 = vmatpush.bf16.msra.mxu0 0
  %72 = vmatpush.bf16.msra.mxu0 %v56
  %73 = vmatpush.bf16.msra.mxu0 %v55
  %74 = vmatpush.bf16.msra.mxu0 %v54
  %75 = vmatpush.bf16.msra.mxu0 %v53
  %76 = vmatmul.bf16.gmra.mxu0 %v63
  %v77 = vpop.f32.mrf.mxu0
  %v78 = vadd.f32 0.0, %v77
  %v79 = vpop.f32.mrf.mxu0
  %v80 = vadd.f32 0.0, %v79
  %81 = vmatmul.bf16.gmra.mxu0 %v66
  %v82 = vpop.f32.mrf.mxu0
  %v83 = vadd.f32 0.0, %v82
  %v84 = vpop.f32.mrf.mxu0
  %v85 = vadd.f32 0.0, %v84
  %86 = vdwg.mxu0
  %v87 = vpack.c.bf16 %v78, %v78
  %v88 = vpack.c.bf16 %v80, %v80
  %v89 = vpack.c.bf16 %v83, %v83
  %v90 = vpack.c.bf16 %v85, %v85
  %vm91 = vcmask 519168
  %92 = vst.msk [vmem:[%s2] sm:$0xf] %vm91, %v87
  %93 = vst.msk [vmem:[%s2 + $0x4] sm:$0xf] %vm91, %v88
  %94 = vst.msk [vmem:[%s2 + $0x8] sm:$0xf] %vm91, %v89
  %95 = vst.msk [vmem:[%s2 + $0xc] sm:$0xf] %vm91, %v90
  %v96 = vsel %vm61, %v78, 0.0
  %v97 = vsel %vm61, %v80, 0.0
  %v98 = vadd.f32 %v96, %v97
  %v99 = vsel %vm61, %v83, 0.0
  %v100 = vadd.f32 %v98, %v99
  %v101 = vsel %vm61, %v85, 0.0
  %v102 = vadd.f32 %v100, %v101
  %v103 = vrot.slane %v102, 4
  %v104 = vadd.f32 %v102, %v103
  %v105 = vrot.slane %v104, 2
  %v106 = vadd.f32 %v104, %v105
  %v107 = vrot.slane %v106, 1
  %v108 = vadd.f32 %v106, %v107
  %vm109 = vcmask 516096
  %110 = vst.msk [vmem:[%s3] sm:$0x1] %vm109, %v108
  %v111 = vmul.f32 %v78, %v78
  %v112 = vmul.f32 %v80, %v80
  %v113 = vmul.f32 %v83, %v83
  %v114 = vmul.f32 %v85, %v85
  %v115 = vsel %vm61, %v111, 0.0
  %v116 = vsel %vm61, %v112, 0.0
  %v117 = vadd.f32 %v115, %v116
  %v118 = vsel %vm61, %v113, 0.0
  %v119 = vadd.f32 %v117, %v118
  %v120 = vsel %vm61, %v114, 0.0
  %v121 = vadd.f32 %v119, %v120
  %v122 = vrot.slane %v121, 4
  %v123 = vadd.f32 %v121, %v122
  %v124 = vrot.slane %v123, 2
  %v125 = vadd.f32 %v123, %v124
  %v126 = vrot.slane %v125, 1
  %v127 = vadd.f32 %v125, %v126
  %128 = vst.msk [vmem:[%s4] sm:$0x1] %vm109, %v127
  // Predicated region
  $region10: #{inception2_forward.10} parent=0 // pred_check
    _
  $region11: #{inception2_forward.10} parent=0 // pred_check_branch
    %130 = sbr.rel (0) target = $region13
  $region12: #{inception2_forward.10} parent=0 // pred_region
    _
  $region13: #{inception2_forward.10} parent=0 // pred_fallthru
    _
  // Predicated region
  $region14: #{inception2_forward.10} parent=0 // pred_check
    _
  $region15: #{inception2_forward.10} parent=0 // pred_check_branch
    %132 = sbr.rel (0) target = $region17
  $region16: #{inception2_forward.10} parent=0 // pred_region
    _
  $region17: #{inception2_forward.10} parent=0 // pred_fallthru
    _
  // Predicated region
  $region18: #{inception2_forward.10} parent=0 // pred_check
    _
  $region19: #{inception2_forward.10} parent=0 // pred_check_branch
    %134 = sbr.rel (0) target = $region21
  $region20: #{inception2_forward.10} parent=0 // pred_region
    _
  $region21: #{inception2_forward.10} parent=0 // pred_fallthru
    _
  // Predicated region
  $region22: #{inception2_forward.10} parent=0 // pred_check
    _
  $region23: #{inception2_forward.10} parent=0 // pred_check_branch
    %136 = sbr.rel (0) target = $region25
  $region24: #{inception2_forward.10} parent=0 // pred_region
    _
  $region25: #{inception2_forward.10} parent=0 // pred_fallthru
    _
  // Predicated region
  $region26: #{inception2_forward.10} parent=0 // pred_check
    _
  $region27: #{inception2_forward.10} parent=0 // pred_check_branch
    %138 = sbr.rel (0) target = $region29
  $region28: #{inception2_forward.10} parent=0 // pred_region
    _
  $region29: #{inception2_forward.10} parent=0 // pred_fallthru
    _
  // Predicated region
  $region30: #{inception2_forward.10} parent=0 // pred_check
    _
  $region31: #{inception2_forward.10} parent=0 // pred_check_branch
    %140 = sbr.rel (0) target = $region33
  $region32: #{inception2_forward.10} parent=0 // pred_region
    _
  $region33: #{inception2_forward.10} parent=0 // pred_fallthru
    _

// kernel: inception2_forward.12
$region0: #{inception2_forward.12}
  #allocation0 [shape = 'u32[]', space=smem, size = 0x4, offset = 0x4, fixed_abs, tag = 'smem constant byte address 0x4 - core index']
  #allocation1 [shape = 'u32[72,128]{1,0:T(1,128)}', space=vmem, size = 0x9000, scoped, tag = 'internal scratch']
  %s0 = inlined_call_operand.vmem [shape: bf16[2,6,3,384], index: 0, kind: input, shape index: {}]
  %s1 = inlined_call_operand.vmem [shape: f32[1,384], index: 1, kind: input, shape index: {}]
  %s2 = inlined_call_operand.vmem [shape: f32[1,384], index: 2, kind: input, shape index: {}]
  %s3 = inlined_call_operand.vmem [shape: bf16[2,2,2,192], index: 3, kind: output, shape index: {}]
  %s4 = sld [smem:[#allocation0]]
  $region45: #{inception2_forward.12} parent=0
    _
  %s6 = ssub.s32 1, %s4
  %s7 = scalar_select 0, %s6, %s4
  loop: start=0, step=1, limit=4
  $region2: #{inception2_forward.12} parent=0 // loop_pre_header
    _
  $region3: #{inception2_forward.12} parent=0 // loop_header
    %s9 = sphi 0, %s13
    %p10 = scmp.ge.s32.totalorder %s9, 4
    %s19 = sphi 0, %s21
    %s22 = sphi 0, %s19
    %s23 = sphi 0, %s22
    %s39 = sphi 0, %s23
    %s43 = sphi 0, %s43
    %s45 = sphi 0, %s43
    %s46 = sphi 0, %s45
    %s60 = sphi 0, %s46
    %s64 = sphi 0, %s64
    %s66 = sphi 0, %s64
    %s67 = sphi 0, %s66
    %s81 = sphi 0, %s67
    %s87 = sphi 0, %s89
    %s90 = sphi 0, %s87
    %s91 = sphi 0, %s90
    %s107 = sphi 0, %s91
  $region4: #{inception2_forward.12} parent=0 // loop_header_branch
    %12 = sbr.rel (%p10) target = $region8
  $region5: #{inception2_forward.12} parent=0 // loop_body
    %s14 = ssub.s32 %s9, 1
    %s15 = ssub.s32 %s9, 2
    %s16 = sadd.s32 %s9, 1
    %s17 = ssub.s32 %s9, %s16
    %p18 = scmp.eq.s32.totalorder %s17, 0
    %s20 = sadd.s32 %s19, 1
    %s21 = scalar_select %p18, %s19, %s20
    %p24 = pneg %p18
    %p25 = scmp.eq.s32.totalorder %s9, 1
    %p26 = por %p24, %p25
    %p27 = scmp.ne.s32.totalorder %s19, %s22
    %p28 = scmp.eq.s32.totalorder %s9, 0
    %p29 = por %p27, %p28
    %p30 = scmp.ne.s32.totalorder %s19, %s22
    %p31 = scmp.eq.s32.totalorder %s14, 1
    %p32 = por %p30, %p31
    %p33 = scmp.ne.s32.totalorder %s22, %s23
    %p34 = scmp.eq.s32.totalorder %s14, 0
    %p35 = por %p33, %p34
    %p36 = scmp.ne.s32.totalorder %s22, %s23
    %p37 = scmp.eq.s32.totalorder %s15, 1
    %p38 = por %p36, %p37
    %p40 = scmp.ne.s32.totalorder %s23, %s39
    %p41 = scmp.eq.s32.totalorder %s15, 0
    %p42 = por %p40, %p41
    %s44 = sadd.s32 %s43, 1
    %p47 = scmp.eq.s32.totalorder %s9, 1
    %p48 = scmp.ne.s32.totalorder %s43, %s45
    %p49 = scmp.eq.s32.totalorder %s9, 0
    %p50 = por %p48, %p49
    %p51 = scmp.ne.s32.totalorder %s43, %s45
    %p52 = scmp.eq.s32.totalorder %s14, 1
    %p53 = por %p51, %p52
    %p54 = scmp.ne.s32.totalorder %s45, %s46
    %p55 = scmp.eq.s32.totalorder %s14, 0
    %p56 = por %p54, %p55
    %p57 = scmp.ne.s32.totalorder %s45, %s46
    %p58 = scmp.eq.s32.totalorder %s15, 1
    %p59 = por %p57, %p58
    %p61 = scmp.ne.s32.totalorder %s46, %s60
    %p62 = scmp.eq.s32.totalorder %s15, 0
    %p63 = por %p61, %p62
    %s65 = sadd.s32 %s64, 1
    %p68 = scmp.eq.s32.totalorder %s9, 1
    %p69 = scmp.ne.s32.totalorder %s64, %s66
    %p70 = scmp.eq.s32.totalorder %s9, 0
    %p71 = por %p69, %p70
    %p72 = scmp.ne.s32.totalorder %s64, %s66
    %p73 = scmp.eq.s32.totalorder %s14, 1
    %p74 = por %p72, %p73
    %p75 = scmp.ne.s32.totalorder %s66, %s67
    %p76 = scmp.eq.s32.totalorder %s14, 0
    %p77 = por %p75, %p76
    %p78 = scmp.ne.s32.totalorder %s66, %s67
    %p79 = scmp.eq.s32.totalorder %s15, 1
    %p80 = por %p78, %p79
    %p82 = scmp.ne.s32.totalorder %s67, %s81
    %p83 = scmp.eq.s32.totalorder %s15, 0
    %p84 = por %p82, %p83
    %s85 = ssub.s32 %s9, %s16
    %p86 = scmp.eq.s32.totalorder %s85, 0
    %s88 = sadd.s32 %s87, 1
    %s89 = scalar_select %p86, %s87, %s88
    %p92 = pneg %p86
    %p93 = scmp.eq.s32.totalorder %s9, 1
    %p94 = por %p92, %p93
    %p95 = scmp.ne.s32.totalorder %s87, %s90
    %p96 = scmp.eq.s32.totalorder %s9, 0
    %p97 = por %p95, %p96
    %p98 = scmp.ne.s32.totalorder %s87, %s90
    %p99 = scmp.eq.s32.totalorder %s14, 1
    %p100 = por %p98, %p99
    %p101 = scmp.ne.s32.totalorder %s90, %s91
    %p102 = scmp.eq.s32.totalorder %s14, 0
    %p103 = por %p101, %p102
    %p104 = scmp.ne.s32.totalorder %s90, %s91
    %p105 = scmp.eq.s32.totalorder %s15, 1
    %p106 = por %p104, %p105
    %p108 = scmp.ne.s32.totalorder %s91, %s107
    %p109 = scmp.eq.s32.totalorder %s15, 0
    %p110 = por %p108, %p109
    %p111 = scmp.le.s32.totalorder 1, %s9
    %p112 = scmp.lt.s32.totalorder %s9, 3
    %p113 = pnand %p111, %p112
    %p114 = pneg %p113
    // Predicated region
    $region9: #{inception2_forward.12} parent=5 // pred_check
      _
    $region10: #{inception2_forward.12} parent=5 // pred_check_branch
      %116 = sbr.rel (%p113) target = $region12
    $region11: #{inception2_forward.12} parent=5 // pred_region
      %s117 = ssub.s32 %s9, 1
      // Predicated region
      $region13: #{inception2_forward.12} parent=11 // pred_check
        %p118 = pneg %p56
      $region14: #{inception2_forward.12} parent=11 // pred_check_branch
        %120 = sbr.rel (%p118) target = $region16
      $region15: #{inception2_forward.12} parent=11 // pred_region
        _
      $region16: #{inception2_forward.12} parent=11 // pred_fallthru
        _
      // Predicated region
      $region17: #{inception2_forward.12} parent=11 // pred_check
        %p121 = pneg %p77
      $region18: #{inception2_forward.12} parent=11 // pred_check_branch
        %123 = sbr.rel (%p121) target = $region20
      $region19: #{inception2_forward.12} parent=11 // pred_region
        _
      $region20: #{inception2_forward.12} parent=11 // pred_fallthru
        _
    $region12: #{inception2_forward.12} parent=5 // pred_fallthru
      _
    %p124 = scmp.lt.s32.totalorder %s9, 2
    // Predicated region
    $region21: #{inception2_forward.12} parent=5 // pred_check
      %p125 = pneg %p124
    $region22: #{inception2_forward.12} parent=5 // pred_check_branch
      %127 = sbr.rel (%p125) target = $region24
    $region23: #{inception2_forward.12} parent=5 // pred_region
      // Predicated region
      $region25: #{inception2_forward.12} parent=23 // pred_check
        %p128 = pneg %p29
      $region26: #{inception2_forward.12} parent=23 // pred_check_branch
        %130 = sbr.rel (%p128) target = $region28
      $region27: #{inception2_forward.12} parent=23 // pred_region
        %p131 = scmp.lt.s32.totalorder %s9, 1
        %s132 = scalar_select %p131, %s9, 1
        %s133 = smul.addr %s132, 18
        %s134 = smul.addr %s133, 2
        %s135 = scalar_lea.vmem %s0, %s134
      $region28: #{inception2_forward.12} parent=23 // pred_fallthru
        _
    $region24: #{inception2_forward.12} parent=5 // pred_fallthru
      _
    %p136 = scmp.le.s32.totalorder 1, %s9
    %p137 = scmp.lt.s32.totalorder %s9, 3
    %p138 = pnand %p136, %p137
    %p139 = pneg %p138
    // Predicated region
    $region29: #{inception2_forward.12} parent=5 // pred_check
      _
    $region30: #{inception2_forward.12} parent=5 // pred_check_branch
      %141 = sbr.rel (%p138) target = $region32
    $region31: #{inception2_forward.12} parent=5 // pred_region
      %s142 = ssub.s32 %s9, 1
      %p143 = scmp.lt.s32.totalorder %s14, 1
      %s144 = scalar_select %p143, %s14, 1
      %s145 = smul.addr %s144, 18
      %s146 = smul.addr %s145, 2
      %s147 = scalar_lea.vmem %s0, %s146
      %p148 = pneg %p35
      %p149 = pneg %p32
      %p150 = pneg %p56
      %p151 = pneg %p53
      %p152 = pneg %p77
      %p153 = pneg %p74
      %p154 = pneg %p103
      %p155 = pneg %p100
      %p156 = scmp.lt.s32.totalorder %s14, 1
      %s157 = scalar_select %p156, %s14, 1
      %s158 = smul.addr %s157, 4
      %s159 = scalar_lea.vmem %s3, %s158
      %p160 = scmp.lt.s32.totalorder %s14, 1
      %s161 = scalar_select %p160, %s14, 1
      %s162 = smul.addr %s161, 18
      %s163 = smul.addr %s162, 2
      %s164 = scalar_lea.vmem %s0, %s163
      %p165 = scmp.lt.s32.totalorder %s14, 1
      %s166 = scalar_select %p165, %s14, 1
      %s167 = smul.addr %s166, 4
      %s168 = scalar_lea.vmem %s3, %s167
      %v169 = vld [vmem:[%s164] sm:$0x3f]
      %v170 = vld [vmem:[%s164 + $0x6] sm:$0x3f]
      %v171 = vld [vmem:[%s164 + $0xc] sm:$0x3f]
      %v172 = vld [vmem:[%s164 + $0x12] sm:$0x3f]
      %v173 = vld [vmem:[%s164 + $0x18] sm:$0x3f]
      %v174 = vld [vmem:[%s164 + $0x1e] sm:$0x3f]
      %v175 = vunpack.c.l.bf16 %v169
      %v176 = vunpack.c.h.bf16 %v169
      %v177 = vunpack.c.l.bf16 %v170
      %v178 = vunpack.c.h.bf16 %v170
      %v179 = vunpack.c.l.bf16 %v171
      %v180 = vunpack.c.h.bf16 %v171
      %v181 = vunpack.c.l.bf16 %v172
      %v182 = vunpack.c.h.bf16 %v172
      %v183 = vunpack.c.l.bf16 %v173
      %v184 = vunpack.c.h.bf16 %v173
      %v185 = vunpack.c.l.bf16 %v174
      %v186 = vunpack.c.h.bf16 %v174
      %v187 = vld [vmem:[%s1] sm:$0x7]
      %v189 = vperm.slane %v187, 0
      %v190 = vperm.slane %v187, 1
      %v191 = vperm.slane %v187, 2
      %v193 = vrot.slane %v190, 4
      %vm194 = vcmask 1043456
      %v195 = vsel %vm194, %v189, %v193
      %v197 = vmul.f32 %v175, %v195
      %v198 = vmul.f32 %v176, %v191
      %v199 = vmul.f32 %v177, %v195
      %v200 = vmul.f32 %v178, %v191
      %v201 = vmul.f32 %v179, %v195
      %v202 = vmul.f32 %v180, %v191
      %v203 = vmul.f32 %v181, %v195
      %v204 = vmul.f32 %v182, %v191
      %v205 = vmul.f32 %v183, %v195
      %v206 = vmul.f32 %v184, %v191
      %v207 = vmul.f32 %v185, %v195
      %v208 = vmul.f32 %v186, %v191
      %v209 = vld [vmem:[%s2] sm:$0x7]
      %v211 = vperm.slane %v209, 0
      %v212 = vperm.slane %v209, 1
      %v213 = vperm.slane %v209, 2
      %v215 = vrot.slane %v212, 4
      %v216 = vsel %vm194, %v211, %v215
      %v218 = vadd.f32 %v197, %v216
      %v219 = vadd.f32 %v198, %v213
      %v220 = vadd.f32 %v199, %v216
      %v221 = vadd.f32 %v200, %v213
      %v222 = vadd.f32 %v201, %v216
      %v223 = vadd.f32 %v202, %v213
      %v224 = vadd.f32 %v203, %v216
      %v225 = vadd.f32 %v204, %v213
      %v226 = vadd.f32 %v205, %v216
      %v227 = vadd.f32 %v206, %v213
      %v228 = vadd.f32 %v207, %v216
      %v229 = vadd.f32 %v208, %v213
      %v230 = vmax.f32 %v218, 0.0
      %v231 = vmax.f32 %v219, 0.0
      %v232 = vmax.f32 %v220, 0.0
      %v233 = vmax.f32 %v221, 0.0
      %v234 = vmax.f32 %v222, 0.0
      %v235 = vmax.f32 %v223, 0.0
      %v236 = vmax.f32 %v224, 0.0
      %v237 = vmax.f32 %v225, 0.0
      %v238 = vmax.f32 %v226, 0.0
      %v239 = vmax.f32 %v227, 0.0
      %v240 = vmax.f32 %v228, 0.0
      %v241 = vmax.f32 %v229, 0.0
      %v242 = vlaneseq
      %v243 = vshrl.u32 %v242, 7
      %v244 = vlaneseq
      %v245 = vand.u32 %v244, 127
      %v246 = vadd.s32 %v245, 128
      %v247 = vadd.s32 %v245, 256
      %vm248 = vcmp.eq.s32.totalorder %v243, 0
      %vm249 = vcmp.lt.s32.totalorder %v245, 192
      %vm250 = vcmp.lt.s32.totalorder %v246, 192
      %vm251 = vcmp.lt.s32.totalorder %v247, 192
      %vm252 = vmand %vm248, %vm249
      %vm253 = vmand %vm248, %vm250
      %vm254 = vmand %vm248, %vm251
      %vm255 = vmor 1, %vm252
      %vm256 = vmor 1, %vm253
      %vm257 = vmor 1, %vm254
      %vm258 = vmor 0, %vm252
      %vm259 = vmor 0, %vm253
      %vm260 = vmor 0, %vm254
      %vm261 = vcmp.eq.s32.totalorder %v243, 2
      %vm262 = vcmp.ge.s32.totalorder %v245, 192
      %vm263 = vcmp.ge.s32.totalorder %v246, 192
      %vm264 = vcmp.ge.s32.totalorder %v247, 192
      %vm265 = vmand %vm261, %vm262
      %vm266 = vmand %vm261, %vm263
      %vm267 = vmand %vm261, %vm264
      %vm268 = vmor %vm255, %vm265
      %vm269 = vmor %vm256, %vm266
      %vm270 = vmor %vm257, %vm267
      %vm271 = vmor %vm258, %vm265
      %vm272 = vmor %vm259, %vm266
      %vm273 = vmor %vm260, %vm267
      %286 = vst [vmem:[#allocation1] ss:$2 sm:$0xff] %v230
      %s287 = scalar_lea.vmem [#allocation1], 16
      %288 = vst [vmem:[%s287] ss:$2 sm:$0xff] %v231
      %v289 = vld.sshfl [vmem:[#allocation1] sm:$0xff pattern:$0x75316420]
      %v290 = vld.sshfl [vmem:[#allocation1 + $0x8] sm:$0xff pattern:$0x75316420]
      %v291 = vld.sshfl [vmem:[#allocation1 + $0x10] sm:$0xff pattern:$0x75316420]
      %s292 = scalar_lea.vmem [#allocation1], 32
      %293 = vst [vmem:[%s292] ss:$2 sm:$0xff] %v232
      %s294 = scalar_lea.vmem [#allocation1], 48
      %295 = vst [vmem:[%s294] ss:$2 sm:$0xff] %v233
      %v296 = vld.sshfl [vmem:[#allocation1 + $0x20] sm:$0xff pattern:$0x75316420]
      %v297 = vld.sshfl [vmem:[#allocation1 + $0x28] sm:$0xff pattern:$0x75316420]
      %v298 = vld.sshfl [vmem:[#allocation1 + $0x30] sm:$0xff pattern:$0x75316420]
      %299 = vst [vmem:[#allocation1] ss:$2 sm:$0xff] %v234
      %300 = vst [vmem:[%s287] ss:$2 sm:$0xff] %v235
      %v301 = vld.sshfl [vmem:[#allocation1] sm:$0xff pattern:$0x75316420]
      %v302 = vld.sshfl [vmem:[#allocation1 + $0x8] sm:$0xff pattern:$0x75316420]
      %v303 = vld.sshfl [vmem:[#allocation1 + $0x10] sm:$0xff pattern:$0x75316420]
      %304 = vst [vmem:[%s292] ss:$2 sm:$0xff] %v236
      %305 = vst [vmem:[%s294] ss:$2 sm:$0xff] %v237
      %v306 = vld.sshfl [vmem:[#allocation1 + $0x20] sm:$0xff pattern:$0x75316420]
      %v307 = vld.sshfl [vmem:[#allocation1 + $0x28] sm:$0xff pattern:$0x75316420]
      %v308 = vld.sshfl [vmem:[#allocation1 + $0x30] sm:$0xff pattern:$0x75316420]
      %309 = vst [vmem:[#allocation1] ss:$2 sm:$0xff] %v238
      %310 = vst [vmem:[%s287] ss:$2 sm:$0xff] %v239
      %v311 = vld.sshfl [vmem:[#allocation1] sm:$0xff pattern:$0x75316420]
      %v312 = vld.sshfl [vmem:[#allocation1 + $0x8] sm:$0xff pattern:$0x75316420]
      %v313 = vld.sshfl [vmem:[#allocation1 + $0x10] sm:$0xff pattern:$0x75316420]
      %314 = vst [vmem:[%s292] ss:$2 sm:$0xff] %v240
      %315 = vst [vmem:[%s294] ss:$2 sm:$0xff] %v241
      %v331 = vsel %vm268, 0.0, %v289
      %v332 = vsel %vm269, 0.0, %v290
      %v333 = vsel %vm270, 0.0, %v291
      %v334 = vsel %vm271, 0.0, %v296
      %v335 = vsel %vm272, 0.0, %v297
      %v336 = vsel %vm273, 0.0, %v298
      %v337 = vsel %vm271, 0.0, %v301
      %v338 = vsel %vm272, 0.0, %v302
      %v339 = vsel %vm273, 0.0, %v303
      %v340 = vsel %vm271, 0.0, %v306
      %v341 = vsel %vm272, 0.0, %v307
      %v342 = vsel %vm273, 0.0, %v308
      %v343 = vsel %vm271, 0.0, %v311
      %v344 = vsel %vm272, 0.0, %v312
      %v345 = vsel %vm273, 0.0, %v313
      %356 = vrot.lane.b32.xlu0 %v332, 64
      %v357 = vpop.permute.xlu0 %356
      %358 = vrot.lane.b32.xlu0 %v333, 64
      %v359 = vpop.permute.xlu0 %358
      %360 = vrot.lane.b32.xlu0 %v335, 64
      %v361 = vpop.permute.xlu0 %360
      %362 = vrot.lane.b32.xlu0 %v336, 64
      %v363 = vpop.permute.xlu0 %362
      %364 = vrot.lane.b32.xlu0 %v338, 64
      %v365 = vpop.permute.xlu0 %364
      %366 = vrot.lane.b32.xlu0 %v339, 64
      %v367 = vpop.permute.xlu0 %366
      %368 = vrot.lane.b32.xlu0 %v341, 64
      %v369 = vpop.permute.xlu0 %368
      %370 = vrot.lane.b32.xlu0 %v342, 64
      %v371 = vpop.permute.xlu0 %370
      %372 = vrot.lane.b32.xlu0 %v344, 64
      %v373 = vpop.permute.xlu0 %372
      %374 = vrot.lane.b32.xlu0 %v345, 64
      %v375 = vpop.permute.xlu0 %374
      %vm376 = vcmask 523264
      %v377 = vsel %vm376, %v357, %v359
      %v378 = vsel %vm376, %v361, %v363
      %v379 = vsel %vm376, %v365, %v367
      %v380 = vsel %vm376, %v369, %v371
      %v381 = vsel %vm376, %v373, %v375
      %v392 = vmax.f32 %v331, %v377
      %v393 = vmax.f32 %v332, %v359
      %v394 = vmax.f32 %v334, %v378
      %v395 = vmax.f32 %v335, %v363
      %v396 = vmax.f32 %v337, %v379
      %v397 = vmax.f32 %v338, %v367
      %v398 = vmax.f32 %v340, %v380
      %v399 = vmax.f32 %v341, %v371
      %v400 = vmax.f32 %v343, %v381
      %v401 = vmax.f32 %v344, %v375
      %v407 = vrot.slane %v331, 1
      %v408 = vrot.slane %v332, 1
      %v409 = vrot.slane %v334, 1
      %v410 = vrot.slane %v335, 1
      %v411 = vrot.slane %v337, 1
      %v412 = vrot.slane %v338, 1
      %v413 = vrot.slane %v340, 1
      %v414 = vrot.slane %v341, 1
      %v415 = vrot.slane %v343, 1
      %v416 = vrot.slane %v344, 1
      %v427 = vmax.f32 %v392, %v407
      %v428 = vmax.f32 %v393, %v408
      %v429 = vmax.f32 %v394, %v409
      %v430 = vmax.f32 %v395, %v410
      %v431 = vmax.f32 %v396, %v411
      %v432 = vmax.f32 %v397, %v412
      %v433 = vmax.f32 %v398, %v413
      %v434 = vmax.f32 %v399, %v414
      %v435 = vmax.f32 %v400, %v415
      %v436 = vmax.f32 %v401, %v416
      %v437 = vmax.f32 %v427, %v429
      %v438 = vmax.f32 %v428, %v430
      %v439 = vmax.f32 %v431, %v433
      %v440 = vmax.f32 %v432, %v434
      %v441 = vmax.f32 %v437, %v431
      %v442 = vmax.f32 %v438, %v432
      %v443 = vmax.f32 %v439, %v435
      %v444 = vmax.f32 %v440, %v436
      %v445 = vpack.c.bf16 %v442, %v441
      %v446 = vpack.c.bf16 %v444, %v443
      %v449 = vrot.slane %v445, 3
      %v450 = vrot.slane %v446, 3
      %vm451 = vcmask 1040384
      %v454 = vsel %vm451, %v445, %v449
      %v457 = vsel %vm451, %v446, %v450
      %vm460 = vcmask 517121
      %vm461 = vmor %vm460, %vm451
      %462 = vst.msk [vmem:[%s168] sm:$0x3] %vm461, %v454
      %463 = vst.msk [vmem:[%s168 + $0x2] sm:$0x3] %vm461, %v457
      %p464 = scmp.lt.s32.totalorder %s14, 1
      %s465 = scalar_select %p464, %s14, 1
      %s466 = smul.addr %s465, 4
      %s467 = scalar_lea.vmem %s3, %s466
      // Predicated region
      $region33: #{inception2_forward.12} parent=31 // pred_check
        %p468 = pneg %p100
      $region34: #{inception2_forward.12} parent=31 // pred_check_branch
        %470 = sbr.rel (%p468) target = $region36
      $region35: #{inception2_forward.12} parent=31 // pred_region
        _
      $region36: #{inception2_forward.12} parent=31 // pred_fallthru
        _
    $region32: #{inception2_forward.12} parent=5 // pred_fallthru
      _
    %p471 = scmp.le.s32.totalorder 2, %s9
    // Predicated region
    $region37: #{inception2_forward.12} parent=5 // pred_check
      %p472 = pneg %p471
    $region38: #{inception2_forward.12} parent=5 // pred_check_branch
      %474 = sbr.rel (%p472) target = $region40
    $region39: #{inception2_forward.12} parent=5 // pred_region
      %s475 = ssub.s32 %s9, 2
      // Predicated region
      $region41: #{inception2_forward.12} parent=39 // pred_check
        %p476 = pneg %p106
      $region42: #{inception2_forward.12} parent=39 // pred_check_branch
        %478 = sbr.rel (%p476) target = $region44
      $region43: #{inception2_forward.12} parent=39 // pred_region
        %p479 = scmp.lt.s32.totalorder %s15, 1
        %s480 = scalar_select %p479, %s15, 1
        %s481 = smul.addr %s480, 4
        %s482 = scalar_lea.vmem %s3, %s481
      $region44: #{inception2_forward.12} parent=39 // pred_fallthru
        _
    $region40: #{inception2_forward.12} parent=5 // pred_fallthru
      _
  $region6: #{inception2_forward.12} parent=0 // loop_footer
    %s13 = sadd.s32 1, %s9
  $region7: #{inception2_forward.12} parent=0 // loop_footer_branch
    %8 = sbr.rel target = $region3
  $region8: #{inception2_forward.12} parent=0 // loop_exit
    _

// kernel: inception2_forward.11
$region0: #{inception2_forward.11}
  #allocation0 [shape = 'u32[]', space=smem, size = 0x4, offset = 0x4, fixed_abs, tag = 'smem constant byte address 0x4 - core index']
  #allocation1 [shape = 'u32[72,128]{1,0:T(1,128)}', space=vmem, size = 0x9000, scoped, tag = 'internal scratch']
  %s0 = inlined_call_operand.vmem [shape: bf16[2,56,64], index: 0, kind: input, shape index: {}]
  %s1 = inlined_call_operand.vmem [shape: bf16[576,192], index: 1, kind: input, shape index: {}]
  %s2 = inlined_call_operand.vmem [shape: f32[1,64], index: 2, kind: input, shape index: {}]
  %s3 = inlined_call_operand.vmem [shape: f32[1,64], index: 3, kind: input, shape index: {}]
  %s4 = inlined_call_operand.vmem [shape: f32[56,1], index: 4, kind: input, shape index: {}]
  %s5 = inlined_call_operand.vmem [shape: f32[32,1], index: 5, kind: input, shape index: {}]
  %s6 = inlined_call_operand.vmem [shape: bf16[2,32,192], index: 6, kind: output, shape index: {0}]
  %s7 = inlined_call_operand.vmem [shape: f32[2,1,192], index: 7, kind: output, shape index: {1}]
  %s8 = inlined_call_operand.vmem [shape: f32[2,1,192], index: 8, kind: output, shape index: {2}]
  %9 = xla_tuple %s6, %s7, %s8
  %s10 = sld [smem:[#allocation0]]
  $region73: #{inception2_forward.11} parent=0
    _
  %s12 = ssub.s32 1, %s10
  %s13 = scalar_select 0, %s12, %s10
  loop: start=0, step=1, limit=4
  $region2: #{inception2_forward.11} parent=0 // loop_pre_header
    _
  $region3: #{inception2_forward.11} parent=0 // loop_header
    %s15 = sphi 0, %s19
    %p16 = scmp.ge.s32.totalorder %s15, 4
    %s25 = sphi 0, %s27
    %s28 = sphi 0, %s25
    %s29 = sphi 0, %s28
    %s45 = sphi 0, %s29
    %s49 = sphi 0, %s49
    %s51 = sphi 0, %s49
    %s52 = sphi 0, %s51
    %s66 = sphi 0, %s52
    %s70 = sphi 0, %s70
    %s72 = sphi 0, %s70
    %s73 = sphi 0, %s72
    %s87 = sphi 0, %s73
    %s91 = sphi 0, %s91
    %s93 = sphi 0, %s91
    %s94 = sphi 0, %s93
    %s108 = sphi 0, %s94
    %s112 = sphi 0, %s112
    %s114 = sphi 0, %s112
    %s115 = sphi 0, %s114
    %s129 = sphi 0, %s115
    %s133 = sphi 0, %s133
    %s135 = sphi 0, %s133
    %s136 = sphi 0, %s135
    %s150 = sphi 0, %s136
    %s156 = sphi 0, %s158
    %s159 = sphi 0, %s156
    %s160 = sphi 0, %s159
    %s176 = sphi 0, %s160
    %s182 = sphi 0, %s184
    %s185 = sphi 0, %s182
    %s186 = sphi 0, %s185
    %s202 = sphi 0, %s186
    %s208 = sphi 0, %s210
    %s211 = sphi 0, %s208
    %s212 = sphi 0, %s211
    %s228 = sphi 0, %s212
  $region4: #{inception2_forward.11} parent=0 // loop_header_branch
    %18 = sbr.rel (%p16) target = $region8
  $region5: #{inception2_forward.11} parent=0 // loop_body
    %s20 = ssub.s32 %s15, 1
    %s21 = ssub.s32 %s15, 2
    %s22 = sadd.s32 %s15, 1
    %s23 = ssub.s32 %s15, %s22
    %p24 = scmp.eq.s32.totalorder %s23, 0
    %s26 = sadd.s32 %s25, 1
    %s27 = scalar_select %p24, %s25, %s26
    %p30 = pneg %p24
    %p31 = scmp.eq.s32.totalorder %s15, 1
    %p32 = por %p30, %p31
    %p33 = scmp.ne.s32.totalorder %s25, %s28
    %p34 = scmp.eq.s32.totalorder %s15, 0
    %p35 = por %p33, %p34
    %p36 = scmp.ne.s32.totalorder %s25, %s28
    %p37 = scmp.eq.s32.totalorder %s20, 1
    %p38 = por %p36, %p37
    %p39 = scmp.ne.s32.totalorder %s28, %s29
    %p40 = scmp.eq.s32.totalorder %s20, 0
    %p41 = por %p39, %p40
    %p42 = scmp.ne.s32.totalorder %s28, %s29
    %p43 = scmp.eq.s32.totalorder %s21, 1
    %p44 = por %p42, %p43
    %p46 = scmp.ne.s32.totalorder %s29, %s45
    %p47 = scmp.eq.s32.totalorder %s21, 0
    %p48 = por %p46, %p47
    %s50 = sadd.s32 %s49, 1
    %p53 = scmp.eq.s32.totalorder %s15, 1
    %p54 = scmp.ne.s32.totalorder %s49, %s51
    %p55 = scmp.eq.s32.totalorder %s15, 0
    %p56 = por %p54, %p55
    %p57 = scmp.ne.s32.totalorder %s49, %s51
    %p58 = scmp.eq.s32.totalorder %s20, 1
    %p59 = por %p57, %p58
    %p60 = scmp.ne.s32.totalorder %s51, %s52
    %p61 = scmp.eq.s32.totalorder %s20, 0
    %p62 = por %p60, %p61
    %p63 = scmp.ne.s32.totalorder %s51, %s52
    %p64 = scmp.eq.s32.totalorder %s21, 1
    %p65 = por %p63, %p64
    %p67 = scmp.ne.s32.totalorder %s52, %s66
    %p68 = scmp.eq.s32.totalorder %s21, 0
    %p69 = por %p67, %p68
    %s71 = sadd.s32 %s70, 1
    %p74 = scmp.eq.s32.totalorder %s15, 1
    %p75 = scmp.ne.s32.totalorder %s70, %s72
    %p76 = scmp.eq.s32.totalorder %s15, 0
    %p77 = por %p75, %p76
    %p78 = scmp.ne.s32.totalorder %s70, %s72
    %p79 = scmp.eq.s32.totalorder %s20, 1
    %p80 = por %p78, %p79
    %p81 = scmp.ne.s32.totalorder %s72, %s73
    %p82 = scmp.eq.s32.totalorder %s20, 0
    %p83 = por %p81, %p82
    %p84 = scmp.ne.s32.totalorder %s72, %s73
    %p85 = scmp.eq.s32.totalorder %s21, 1
    %p86 = por %p84, %p85
    %p88 = scmp.ne.s32.totalorder %s73, %s87
    %p89 = scmp.eq.s32.totalorder %s21, 0
    %p90 = por %p88, %p89
    %s92 = sadd.s32 %s91, 1
    %p95 = scmp.eq.s32.totalorder %s15, 1
    %p96 = scmp.ne.s32.totalorder %s91, %s93
    %p97 = scmp.eq.s32.totalorder %s15, 0
    %p98 = por %p96, %p97
    %p99 = scmp.ne.s32.totalorder %s91, %s93
    %p100 = scmp.eq.s32.totalorder %s20, 1
    %p101 = por %p99, %p100
    %p102 = scmp.ne.s32.totalorder %s93, %s94
    %p103 = scmp.eq.s32.totalorder %s20, 0
    %p104 = por %p102, %p103
    %p105 = scmp.ne.s32.totalorder %s93, %s94
    %p106 = scmp.eq.s32.totalorder %s21, 1
    %p107 = por %p105, %p106
    %p109 = scmp.ne.s32.totalorder %s94, %s108
    %p110 = scmp.eq.s32.totalorder %s21, 0
    %p111 = por %p109, %p110
    %s113 = sadd.s32 %s112, 1
    %p116 = scmp.eq.s32.totalorder %s15, 1
    %p117 = scmp.ne.s32.totalorder %s112, %s114
    %p118 = scmp.eq.s32.totalorder %s15, 0
    %p119 = por %p117, %p118
    %p120 = scmp.ne.s32.totalorder %s112, %s114
    %p121 = scmp.eq.s32.totalorder %s20, 1
    %p122 = por %p120, %p121
    %p123 = scmp.ne.s32.totalorder %s114, %s115
    %p124 = scmp.eq.s32.totalorder %s20, 0
    %p125 = por %p123, %p124
    %p126 = scmp.ne.s32.totalorder %s114, %s115
    %p127 = scmp.eq.s32.totalorder %s21, 1
    %p128 = por %p126, %p127
    %p130 = scmp.ne.s32.totalorder %s115, %s129
    %p131 = scmp.eq.s32.totalorder %s21, 0
    %p132 = por %p130, %p131
    %s134 = sadd.s32 %s133, 1
    %p137 = scmp.eq.s32.totalorder %s15, 1
    %p138 = scmp.ne.s32.totalorder %s133, %s135
    %p139 = scmp.eq.s32.totalorder %s15, 0
    %p140 = por %p138, %p139
    %p141 = scmp.ne.s32.totalorder %s133, %s135
    %p142 = scmp.eq.s32.totalorder %s20, 1
    %p143 = por %p141, %p142
    %p144 = scmp.ne.s32.totalorder %s135, %s136
    %p145 = scmp.eq.s32.totalorder %s20, 0
    %p146 = por %p144, %p145
    %p147 = scmp.ne.s32.totalorder %s135, %s136
    %p148 = scmp.eq.s32.totalorder %s21, 1
    %p149 = por %p147, %p148
    %p151 = scmp.ne.s32.totalorder %s136, %s150
    %p152 = scmp.eq.s32.totalorder %s21, 0
    %p153 = por %p151, %p152
    %s154 = ssub.s32 %s15, %s22
    %p155 = scmp.eq.s32.totalorder %s154, 0
    %s157 = sadd.s32 %s156, 1
    %s158 = scalar_select %p155, %s156, %s157
    %p161 = pneg %p155
    %p162 = scmp.eq.s32.totalorder %s15, 1
    %p163 = por %p161, %p162
    %p164 = scmp.ne.s32.totalorder %s156, %s159
    %p165 = scmp.eq.s32.totalorder %s15, 0
    %p166 = por %p164, %p165
    %p167 = scmp.ne.s32.totalorder %s156, %s159
    %p168 = scmp.eq.s32.totalorder %s20, 1
    %p169 = por %p167, %p168
    %p170 = scmp.ne.s32.totalorder %s159, %s160
    %p171 = scmp.eq.s32.totalorder %s20, 0
    %p172 = por %p170, %p171
    %p173 = scmp.ne.s32.totalorder %s159, %s160
    %p174 = scmp.eq.s32.totalorder %s21, 1
    %p175 = por %p173, %p174
    %p177 = scmp.ne.s32.totalorder %s160, %s176
    %p178 = scmp.eq.s32.totalorder %s21, 0
    %p179 = por %p177, %p178
    %s180 = ssub.s32 %s15, %s22
    %p181 = scmp.eq.s32.totalorder %s180, 0
    %s183 = sadd.s32 %s182, 1
    %s184 = scalar_select %p181, %s182, %s183
    %p187 = pneg %p181
    %p188 = scmp.eq.s32.totalorder %s15, 1
    %p189 = por %p187, %p188
    %p190 = scmp.ne.s32.totalorder %s182, %s185
    %p191 = scmp.eq.s32.totalorder %s15, 0
    %p192 = por %p190, %p191
    %p193 = scmp.ne.s32.totalorder %s182, %s185
    %p194 = scmp.eq.s32.totalorder %s20, 1
    %p195 = por %p193, %p194
    %p196 = scmp.ne.s32.totalorder %s185, %s186
    %p197 = scmp.eq.s32.totalorder %s20, 0
    %p198 = por %p196, %p197
    %p199 = scmp.ne.s32.totalorder %s185, %s186
    %p200 = scmp.eq.s32.totalorder %s21, 1
    %p201 = por %p199, %p200
    %p203 = scmp.ne.s32.totalorder %s186, %s202
    %p204 = scmp.eq.s32.totalorder %s21, 0
    %p205 = por %p203, %p204
    %s206 = ssub.s32 %s15, %s22
    %p207 = scmp.eq.s32.totalorder %s206, 0
    %s209 = sadd.s32 %s208, 1
    %s210 = scalar_select %p207, %s208, %s209
    %p213 = pneg %p207
    %p214 = scmp.eq.s32.totalorder %s15, 1
    %p215 = por %p213, %p214
    %p216 = scmp.ne.s32.totalorder %s208, %s211
    %p217 = scmp.eq.s32.totalorder %s15, 0
    %p218 = por %p216, %p217
    %p219 = scmp.ne.s32.totalorder %s208, %s211
    %p220 = scmp.eq.s32.totalorder %s20, 1
    %p221 = por %p219, %p220
    %p222 = scmp.ne.s32.totalorder %s211, %s212
    %p223 = scmp.eq.s32.totalorder %s20, 0
    %p224 = por %p222, %p223
    %p225 = scmp.ne.s32.totalorder %s211, %s212
    %p226 = scmp.eq.s32.totalorder %s21, 1
    %p227 = por %p225, %p226
    %p229 = scmp.ne.s32.totalorder %s212, %s228
    %p230 = scmp.eq.s32.totalorder %s21, 0
    %p231 = por %p229, %p230
    %p232 = scmp.le.s32.totalorder 1, %s15
    %p233 = scmp.lt.s32.totalorder %s15, 3
    %p234 = pnand %p232, %p233
    %p235 = pneg %p234
    // Predicated region
    $region9: #{inception2_forward.11} parent=5 // pred_check
      _
    $region10: #{inception2_forward.11} parent=5 // pred_check_branch
      %237 = sbr.rel (%p234) target = $region12
    $region11: #{inception2_forward.11} parent=5 // pred_region
      %s238 = ssub.s32 %s15, 1
      // Predicated region
      $region13: #{inception2_forward.11} parent=11 // pred_check
        %p239 = pneg %p62
      $region14: #{inception2_forward.11} parent=11 // pred_check_branch
        %241 = sbr.rel (%p239) target = $region16
      $region15: #{inception2_forward.11} parent=11 // pred_region
        _
      $region16: #{inception2_forward.11} parent=11 // pred_fallthru
        _
      // Predicated region
      $region17: #{inception2_forward.11} parent=11 // pred_check
        %p242 = pneg %p83
      $region18: #{inception2_forward.11} parent=11 // pred_check_branch
        %244 = sbr.rel (%p242) target = $region20
      $region19: #{inception2_forward.11} parent=11 // pred_region
        _
      $region20: #{inception2_forward.11} parent=11 // pred_fallthru
        _
      // Predicated region
      $region21: #{inception2_forward.11} parent=11 // pred_check
        %p245 = pneg %p104
      $region22: #{inception2_forward.11} parent=11 // pred_check_branch
        %247 = sbr.rel (%p245) target = $region24
      $region23: #{inception2_forward.11} parent=11 // pred_region
        _
      $region24: #{inception2_forward.11} parent=11 // pred_fallthru
        _
      // Predicated region
      $region25: #{inception2_forward.11} parent=11 // pred_check
        %p248 = pneg %p125
      $region26: #{inception2_forward.11} parent=11 // pred_check_branch
        %250 = sbr.rel (%p248) target = $region28
      $region27: #{inception2_forward.11} parent=11 // pred_region
        _
      $region28: #{inception2_forward.11} parent=11 // pred_fallthru
        _
      // Predicated region
      $region29: #{inception2_forward.11} parent=11 // pred_check
        %p251 = pneg %p146
      $region30: #{inception2_forward.11} parent=11 // pred_check_branch
        %253 = sbr.rel (%p251) target = $region32
      $region31: #{inception2_forward.11} parent=11 // pred_region
        _
      $region32: #{inception2_forward.11} parent=11 // pred_fallthru
        _
    $region12: #{inception2_forward.11} parent=5 // pred_fallthru
      _
    %p254 = scmp.lt.s32.totalorder %s15, 2
    // Predicated region
    $region33: #{inception2_forward.11} parent=5 // pred_check
      %p255 = pneg %p254
    $region34: #{inception2_forward.11} parent=5 // pred_check_branch
      %257 = sbr.rel (%p255) target = $region36
    $region35: #{inception2_forward.11} parent=5 // pred_region
      // Predicated region
      $region37: #{inception2_forward.11} parent=35 // pred_check
        %p258 = pneg %p35
      $region38: #{inception2_forward.11} parent=35 // pred_check_branch
        %260 = sbr.rel (%p258) target = $region40
      $region39: #{inception2_forward.11} parent=35 // pred_region
        %p261 = scmp.lt.s32.totalorder %s15, 1
        %s262 = scalar_select %p261, %s15, 1
        %s263 = smul.addr %s262, 7
        %s264 = smul.addr %s263, 4
        %s265 = scalar_lea.vmem %s0, %s264
      $region40: #{inception2_forward.11} parent=35 // pred_fallthru
        _
    $region36: #{inception2_forward.11} parent=5 // pred_fallthru
      _
    %p266 = scmp.le.s32.totalorder 1, %s15
    %p267 = scmp.lt.s32.totalorder %s15, 3
    %p268 = pnand %p266, %p267
    %p269 = pneg %p268
    // Predicated region
    $region41: #{inception2_forward.11} parent=5 // pred_check
      _
    $region42: #{inception2_forward.11} parent=5 // pred_check_branch
      %271 = sbr.rel (%p268) target = $region44
    $region43: #{inception2_forward.11} parent=5 // pred_region
      %s272 = ssub.s32 %s15, 1
      %p273 = scmp.lt.s32.totalorder %s20, 1
      %s274 = scalar_select %p273, %s20, 1
      %s275 = smul.addr %s274, 7
      %s276 = smul.addr %s275, 4
      %s277 = scalar_lea.vmem %s0, %s276
      %p278 = pneg %p41
      %p279 = pneg %p38
      %p280 = pneg %p62
      %p281 = pneg %p59
      %p282 = pneg %p83
      %p283 = pneg %p80
      %p284 = pneg %p104
      %p285 = pneg %p101
      %p286 = pneg %p125
      %p287 = pneg %p122
      %p288 = pneg %p146
      %p289 = pneg %p143
      %p290 = pneg %p172
      %p291 = pneg %p169
      %p292 = scmp.lt.s32.totalorder %s20, 1
      %s293 = scalar_select %p292, %s20, 1
      %s294 = smul.addr %s293, 8
      %s295 = smul.addr %s294, 4
      %s296 = scalar_lea.vmem %s6, %s295
      %p297 = pneg %p198
      %p298 = pneg %p195
      %p299 = scmp.lt.s32.totalorder %s20, 1
      %s300 = scalar_select %p299, %s20, 1
      %s301 = smul.addr %s300, 2
      %s302 = scalar_lea.vmem %s7, %s301
      %p303 = pneg %p224
      %p304 = pneg %p221
      %p305 = scmp.lt.s32.totalorder %s20, 1
      %s306 = scalar_select %p305, %s20, 1
      %s307 = smul.addr %s306, 2
      %s308 = scalar_lea.vmem %s8, %s307
      %p309 = scmp.lt.s32.totalorder %s20, 1
      %s310 = scalar_select %p309, %s20, 1
      %s311 = smul.addr %s310, 7
      %s312 = smul.addr %s311, 4
      %s313 = scalar_lea.vmem %s0, %s312
      %p314 = scmp.lt.s32.totalorder %s20, 1
      %s315 = scalar_select %p314, %s20, 1
      %s316 = smul.addr %s315, 8
      %s317 = smul.addr %s316, 4
      %s318 = scalar_lea.vmem %s6, %s317
      %p319 = scmp.lt.s32.totalorder %s20, 1
      %s320 = scalar_select %p319, %s20, 1
      %s321 = smul.addr %s320, 2
      %s322 = scalar_lea.vmem %s7, %s321
      %p323 = scmp.lt.s32.totalorder %s20, 1
      %s324 = scalar_select %p323, %s20, 1
      %s325 = smul.addr %s324, 2
      %s326 = scalar_lea.vmem %s8, %s325
      %v328 = vld [vmem:[%s313] sm:$0xf]
      %v329 = vld [vmem:[%s313 + $0x4] sm:$0xf]
      %v330 = vld [vmem:[%s313 + $0x8] sm:$0xf]
      %v331 = vld [vmem:[%s313 + $0xc] sm:$0xf]
      %v332 = vld [vmem:[%s313 + $0x10] sm:$0xf]
      %v333 = vld [vmem:[%s313 + $0x14] sm:$0xf]
      %v334 = vld [vmem:[%s313 + $0x18] sm:$0xf]
      %v335 = vunpack.c.l.bf16 %v328
      %v336 = vunpack.c.l.bf16 %v329
      %v337 = vunpack.c.l.bf16 %v330
      %v338 = vunpack.c.l.bf16 %v331
      %v339 = vunpack.c.l.bf16 %v332
      %v340 = vunpack.c.l.bf16 %v333
      %v341 = vunpack.c.l.bf16 %v334
      %v342 = vld [vmem:[%s2] sm:$0x1]
      %v344 = vperm.slane %v342, 0
      %v346 = vmul.f32 %v335, %v344
      %v347 = vmul.f32 %v336, %v344
      %v348 = vmul.f32 %v337, %v344
      %v349 = vmul.f32 %v338, %v344
      %v350 = vmul.f32 %v339, %v344
      %v351 = vmul.f32 %v340, %v344
      %v352 = vmul.f32 %v341, %v344
      %v353 = vld [vmem:[%s3] sm:$0x1]
      %v355 = vperm.slane %v353, 0
      %v357 = vadd.f32 %v346, %v355
      %v358 = vadd.f32 %v347, %v355
      %v359 = vadd.f32 %v348, %v355
      %v360 = vadd.f32 %v349, %v355
      %v361 = vadd.f32 %v350, %v355
      %v362 = vadd.f32 %v351, %v355
      %v363 = vadd.f32 %v352, %v355
      %v364 = vmax.f32 %v357, 0.0
      %v365 = vmax.f32 %v358, 0.0
      %v366 = vmax.f32 %v359, 0.0
      %v367 = vmax.f32 %v360, 0.0
      %v368 = vmax.f32 %v361, 0.0
      %v369 = vmax.f32 %v362, 0.0
      %v370 = vmax.f32 %v363, 0.0
      %v371 = vld [vmem:[%s4] sm:$0xff]
      %v372 = vld [vmem:[%s4 + $0x8] sm:$0xff]
      %v373 = vld [vmem:[%s4 + $0x10] sm:$0xff]
      %v374 = vld [vmem:[%s4 + $0x18] sm:$0xff]
      %v375 = vld [vmem:[%s4 + $0x20] sm:$0xff]
      %v376 = vld [vmem:[%s4 + $0x28] sm:$0xff]
      %v377 = vld [vmem:[%s4 + $0x30] sm:$0xff]
      %379 = vset.pattern.permute.xlu0 0
      %380 = vperm.xlu0 %379, %v371
      %v381 = vpop.permute.xlu0 %380
      %384 = vset.pattern.permute.xlu0 0
      %385 = vperm.xlu0 %384, %v372
      %v386 = vpop.permute.xlu0 %385
      %389 = vset.pattern.permute.xlu0 0
      %390 = vperm.xlu0 %389, %v373
      %v391 = vpop.permute.xlu0 %390
      %394 = vset.pattern.permute.xlu0 0
      %395 = vperm.xlu0 %394, %v374
      %v396 = vpop.permute.xlu0 %395
      %399 = vset.pattern.permute.xlu0 0
      %400 = vperm.xlu0 %399, %v375
      %v401 = vpop.permute.xlu0 %400
      %404 = vset.pattern.permute.xlu0 0
      %405 = vperm.xlu0 %404, %v376
      %v406 = vpop.permute.xlu0 %405
      %409 = vset.pattern.permute.xlu0 0
      %410 = vperm.xlu0 %409, %v377
      %v411 = vpop.permute.xlu0 %410
      %v413 = vmul.f32 %v364, %v381
      %v414 = vmul.f32 %v365, %v386
      %v415 = vmul.f32 %v366, %v391
      %v416 = vmul.f32 %v367, %v396
      %v417 = vmul.f32 %v368, %v401
      %v418 = vmul.f32 %v369, %v406
      %v419 = vmul.f32 %v370, %v411
      %v420 = vpack.c.bf16 %v413, %v413
      %v421 = vpack.c.bf16 %v414, %v414
      %v422 = vpack.c.bf16 %v415, %v415
      %v423 = vpack.c.bf16 %v416, %v416
      %v424 = vpack.c.bf16 %v417, %v417
      %v425 = vpack.c.bf16 %v418, %v418
      %v426 = vpack.c.bf16 %v419, %v419
      %v427 = vld [vmem:[%s1] sm:$0xff]
      %v428 = vld [vmem:[%s1 + $0x8] sm:$0xff]
      %v429 = vld [vmem:[%s1 + $0x10] sm:$0xff]
      %v430 = vld [vmem:[%s1 + $0x18] sm:$0xff]
      %v431 = vld [vmem:[%s1 + $0x20] sm:$0xff]
      %v432 = vld [vmem:[%s1 + $0x28] sm:$0xff]
      %v433 = vld [vmem:[%s1 + $0x30] sm:$0xff]
      %v434 = vld [vmem:[%s1 + $0x38] sm:$0xff]
      %v435 = vld [vmem:[%s1 + $0x40] sm:$0xff]
      %v436 = vld [vmem:[%s1 + $0x48] sm:$0xff]
      %v437 = vld [vmem:[%s1 + $0x50] sm:$0xff]
      %v438 = vld [vmem:[%s1 + $0x58] sm:$0xff]
      %v439 = vld [vmem:[%s1 + $0x60] sm:$0xff]
      %v440 = vld [vmem:[%s1 + $0x68] sm:$0xff]
      %v441 = vld [vmem:[%s1 + $0x70] sm:$0xff]
      %v442 = vld [vmem:[%s1 + $0x78] sm:$0xff]
      %v448 = vunpack.c.l.b16 %v420
      %v449 = vunpack.c.l.b16 %v421
      %v450 = vunpack.c.l.b16 %v422
      %v451 = vunpack.c.l.b16 %v423
      %v452 = vunpack.c.l.b16 %v424
      %v453 = vpack.c.b16 %v449, %v448
      %v454 = vpack.c.b16 %v451, %v450
      %v455 = vpack.c.b16 %v452, %v452
      %vm456 = vsmask.f32 7424
      %v458 = vshrl.u32 %v453, 16
      %v460 = vshll.u32 %v453, 16
      %v462 = vrot.slane %v460, 1
      %v463 = vor.u32 %v458, %v462
      %v465 = vshll.u32 %v454, 16
      %v467 = vrot.slane %v465, 1
      %v468 = vsel %vm456, %v463, %v467
      %v469 = vshrl.u32 %v454, 16
      %v471 = vor.u32 %v469, %v467
      %v473 = vshll.u32 %v455, 16
      %v475 = vrot.slane %v473, 1
      %v476 = vsel %vm456, %v471, %v475
      %v485 = vunpack.c.l.b16 %v435
      %v486 = vunpack.c.h.b16 %v435
      %v487 = vunpack.c.l.b16 %v436
      %v488 = vunpack.c.h.b16 %v436
      %v489 = vunpack.c.l.b16 %v437
      %v490 = vunpack.c.h.b16 %v437
      %v491 = vunpack.c.l.b16 %v438
      %v492 = vunpack.c.h.b16 %v438
      %v493 = vunpack.c.l.b16 %v439
      %v494 = vunpack.c.h.b16 %v439
      %v495 = vunpack.c.l.b16 %v440
      %v496 = vunpack.c.h.b16 %v440
      %v497 = vunpack.c.l.b16 %v441
      %v498 = vunpack.c.h.b16 %v441
      %v499 = vunpack.c.l.b16 %v442
      %v500 = vunpack.c.h.b16 %v442
      %v501 = vpack.c.b16 %v487, %v485
      %v502 = vpack.c.b16 %v488, %v486
      %v503 = vpack.c.b16 %v491, %v489
      %v504 = vpack.c.b16 %v492, %v490
      %v505 = vpack.c.b16 %v495, %v493
      %v506 = vpack.c.b16 %v496, %v494
      %v507 = vpack.c.b16 %v499, %v497
      %v508 = vpack.c.b16 %v500, %v498
      %vm517 = vcmask 523264
      %v519 = vsel %vm517, %v468, 0
      %v522 = vsel %vm517, %v476, 0
      %524 = vmatpush.bf16.msra.mxu0 0
      %525 = vmatpush.bf16.msra.mxu0 0
      %526 = vmatpush.bf16.msra.mxu0 0
      %527 = vmatpush.bf16.msra.mxu0 0
      %528 = vmatpush.bf16.msra.mxu0 %v507
      %529 = vmatpush.bf16.msra.mxu0 %v505
      %530 = vmatpush.bf16.msra.mxu0 %v503
      %531 = vmatpush.bf16.msra.mxu0 %v501
      %532 = vmatmul.bf16.gmra.mxu0 %v519
      %v533 = vpop.f32.mrf.mxu0
      %v534 = vadd.f32 0.0, %v533
      %v535 = vpop.f32.mrf.mxu0
      %v536 = vadd.f32 0.0, %v535
      %537 = vmatmul.bf16.gmra.mxu0 %v522
      %v538 = vpop.f32.mrf.mxu0
      %v539 = vadd.f32 0.0, %v538
      %v540 = vpop.f32.mrf.mxu0
      %v541 = vadd.f32 0.0, %v540
      %542 = vdwg.mxu0
      %543 = vmatpush.bf16.msra.mxu0 0
      %544 = vmatpush.bf16.msra.mxu0 0
      %545 = vmatpush.bf16.msra.mxu0 0
      %546 = vmatpush.bf16.msra.mxu0 0
      %547 = vmatpush.bf16.msra.mxu0 %v508
      %548 = vmatpush.bf16.msra.mxu0 %v506
      %549 = vmatpush.bf16.msra.mxu0 %v504
      %550 = vmatpush.bf16.msra.mxu0 %v502
      %551 = vmatmul.bf16.gmra.mxu0 %v519
      %v552 = vpop.f32.mrf.mxu0
      %v553 = vadd.f32 0.0, %v552
      %v554 = vpop.f32.mrf.mxu0
      %v555 = vadd.f32 0.0, %v554
      %556 = vmatmul.bf16.gmra.mxu0 %v522
      %v557 = vpop.f32.mrf.mxu0
      %v558 = vadd.f32 0.0, %v557
      %v559 = vpop.f32.mrf.mxu0
      %v560 = vadd.f32 0.0, %v559
      %561 = vdwg.mxu0
      %v570 = vunpack.c.l.b16 %v427
      %v571 = vunpack.c.h.b16 %v427
      %v572 = vunpack.c.l.b16 %v428
      %v573 = vunpack.c.h.b16 %v428
      %v574 = vunpack.c.l.b16 %v429
      %v575 = vunpack.c.h.b16 %v429
      %v576 = vunpack.c.l.b16 %v430
      %v577 = vunpack.c.h.b16 %v430
      %v578 = vunpack.c.l.b16 %v431
      %v579 = vunpack.c.h.b16 %v431
      %v580 = vunpack.c.l.b16 %v432
      %v581 = vunpack.c.h.b16 %v432
      %v582 = vunpack.c.l.b16 %v433
      %v583 = vunpack.c.h.b16 %v433
      %v584 = vunpack.c.l.b16 %v434
      %v585 = vunpack.c.h.b16 %v434
      %v586 = vpack.c.b16 %v572, %v570
      %v587 = vpack.c.b16 %v573, %v571
      %v588 = vpack.c.b16 %v576, %v574
      %v589 = vpack.c.b16 %v577, %v575
      %v590 = vpack.c.b16 %v580, %v578
      %v591 = vpack.c.b16 %v581, %v579
      %v592 = vpack.c.b16 %v584, %v582
      %v593 = vpack.c.b16 %v585, %v583
      %v602 = vsel %vm517, %v453, 0
      %v604 = vsel %vm517, %v454, 0
      %606 = vmatpush.bf16.msra.mxu0 0
      %607 = vmatpush.bf16.msra.mxu0 0
      %608 = vmatpush.bf16.msra.mxu0 0
      %609 = vmatpush.bf16.msra.mxu0 0
      %610 = vmatpush.bf16.msra.mxu0 %v592
      %611 = vmatpush.bf16.msra.mxu0 %v590
      %612 = vmatpush.bf16.msra.mxu0 %v588
      %613 = vmatpush.bf16.msra.mxu0 %v586
      %614 = vmatmul.bf16.gmra.mxu0 %v602
      %v615 = vpop.f32.mrf.mxu0
      %v616 = vadd.f32 %v534, %v615
      %v617 = vpop.f32.mrf.mxu0
      %v618 = vadd.f32 %v536, %v617
      %619 = vmatmul.bf16.gmra.mxu0 %v604
      %v620 = vpop.f32.mrf.mxu0
      %v621 = vadd.f32 %v539, %v620
      %v622 = vpop.f32.mrf.mxu0
      %v623 = vadd.f32 %v541, %v622
      %624 = vdwg.mxu0
      %625 = vmatpush.bf16.msra.mxu0 0
      %626 = vmatpush.bf16.msra.mxu0 0
      %627 = vmatpush.bf16.msra.mxu0 0
      %628 = vmatpush.bf16.msra.mxu0 0
      %629 = vmatpush.bf16.msra.mxu0 %v593
      %630 = vmatpush.bf16.msra.mxu0 %v591
      %631 = vmatpush.bf16.msra.mxu0 %v589
      %632 = vmatpush.bf16.msra.mxu0 %v587
      %633 = vmatmul.bf16.gmra.mxu0 %v602
      %v634 = vpop.f32.mrf.mxu0
      %v635 = vadd.f32 %v553, %v634
      %v636 = vpop.f32.mrf.mxu0
      %v637 = vadd.f32 %v555, %v636
      %638 = vmatmul.bf16.gmra.mxu0 %v604
      %v639 = vpop.f32.mrf.mxu0
      %v640 = vadd.f32 %v558, %v639
      %v641 = vpop.f32.mrf.mxu0
      %v642 = vadd.f32 %v560, %v641
      %643 = vdwg.mxu0
      %v644 = vld [vmem:[%s1 + $0x80] sm:$0xff]
      %v645 = vld [vmem:[%s1 + $0x88] sm:$0xff]
      %v646 = vld [vmem:[%s1 + $0x90] sm:$0xff]
      %v647 = vld [vmem:[%s1 + $0x98] sm:$0xff]
      %v648 = vld [vmem:[%s1 + $0xa0] sm:$0xff]
      %v649 = vld [vmem:[%s1 + $0xa8] sm:$0xff]
      %v650 = vld [vmem:[%s1 + $0xb0] sm:$0xff]
      %v651 = vld [vmem:[%s1 + $0xb8] sm:$0xff]
      %vm652 = vcmask 1046528
      %v653 = vrot.slane %v453, 1
      %v654 = vrot.slane %v454, 1
      %v655 = vsel %vm652, %v653, %v654
      %v656 = vrot.slane %v455, 1
      %v657 = vsel %vm652, %v654, %v656
      %v666 = vunpack.c.l.b16 %v644
      %v667 = vunpack.c.h.b16 %v644
      %v668 = vunpack.c.l.b16 %v645
      %v669 = vunpack.c.h.b16 %v645
      %v670 = vunpack.c.l.b16 %v646
      %v671 = vunpack.c.h.b16 %v646
      %v672 = vunpack.c.l.b16 %v647
      %v673 = vunpack.c.h.b16 %v647
      %v674 = vunpack.c.l.b16 %v648
      %v675 = vunpack.c.h.b16 %v648
      %v676 = vunpack.c.l.b16 %v649
      %v677 = vunpack.c.h.b16 %v649
      %v678 = vunpack.c.l.b16 %v650
      %v679 = vunpack.c.h.b16 %v650
      %v680 = vunpack.c.l.b16 %v651
      %v681 = vunpack.c.h.b16 %v651
      %v682 = vpack.c.b16 %v668, %v666
      %v683 = vpack.c.b16 %v669, %v667
      %v684 = vpack.c.b16 %v672, %v670
      %v685 = vpack.c.b16 %v673, %v671
      %v686 = vpack.c.b16 %v676, %v674
      %v687 = vpack.c.b16 %v677, %v675
      %v688 = vpack.c.b16 %v680, %v678
      %v689 = vpack.c.b16 %v681, %v679
      %v699 = vsel %vm517, %v655, 0
      %v702 = vsel %vm517, %v657, 0
      %704 = vmatpush.bf16.msra.mxu0 0
      %705 = vmatpush.bf16.msra.mxu0 0
      %706 = vmatpush.bf16.msra.mxu0 0
      %707 = vmatpush.bf16.msra.mxu0 0
      %708 = vmatpush.bf16.msra.mxu0 %v688
      %709 = vmatpush.bf16.msra.mxu0 %v686
      %710 = vmatpush.bf16.msra.mxu0 %v684
      %711 = vmatpush.bf16.msra.mxu0 %v682
      %712 = vmatmul.bf16.gmra.mxu0 %v699
      %v713 = vpop.f32.mrf.mxu0
      %v714 = vadd.f32 0.0, %v713
      %v715 = vpop.f32.mrf.mxu0
      %v716 = vadd.f32 0.0, %v715
      %717 = vmatmul.bf16.gmra.mxu0 %v702
      %v718 = vpop.f32.mrf.mxu0
      %v719 = vadd.f32 0.0, %v718
      %v720 = vpop.f32.mrf.mxu0
      %v721 = vadd.f32 0.0, %v720
      %722 = vdwg.mxu0
      %723 = vmatpush.bf16.msra.mxu0 0
      %724 = vmatpush.bf16.msra.mxu0 0
      %725 = vmatpush.bf16.msra.mxu0 0
      %726 = vmatpush.bf16.msra.mxu0 0
      %727 = vmatpush.bf16.msra.mxu0 %v689
      %728 = vmatpush.bf16.msra.mxu0 %v687
      %729 = vmatpush.bf16.msra.mxu0 %v685
      %730 = vmatpush.bf16.msra.mxu0 %v683
      %731 = vmatmul.bf16.gmra.mxu0 %v699
      %v732 = vpop.f32.mrf.mxu0
      %v733 = vadd.f32 0.0, %v732
      %v734 = vpop.f32.mrf.mxu0
      %v735 = vadd.f32 0.0, %v734
      %736 = vmatmul.bf16.gmra.mxu0 %v702
      %v737 = vpop.f32.mrf.mxu0
      %v738 = vadd.f32 0.0, %v737
      %v739 = vpop.f32.mrf.mxu0
      %v740 = vadd.f32 0.0, %v739
      %741 = vdwg.mxu0
      %v742 = vadd.f32 %v616, %v714
      %v743 = vadd.f32 %v635, %v733
      %v744 = vadd.f32 %v618, %v716
      %v745 = vadd.f32 %v637, %v735
      %v746 = vadd.f32 %v621, %v719
      %v747 = vadd.f32 %v640, %v738
      %v748 = vadd.f32 %v623, %v721
      %v749 = vadd.f32 %v642, %v740
      %v750 = vld [vmem:[%s1 + $0xc0] sm:$0xff]
      %v751 = vld [vmem:[%s1 + $0xc8] sm:$0xff]
      %v752 = vld [vmem:[%s1 + $0xd0] sm:$0xff]
      %v753 = vld [vmem:[%s1 + $0xd8] sm:$0xff]
      %v754 = vld [vmem:[%s1 + $0xe0] sm:$0xff]
      %v755 = vld [vmem:[%s1 + $0xe8] sm:$0xff]
      %v756 = vld [vmem:[%s1 + $0xf0] sm:$0xff]
      %v757 = vld [vmem:[%s1 + $0xf8] sm:$0xff]
      %v758 = vpack.c.b16 %v450, %v449
      %v759 = vpack.c.b16 %v452, %v451
      %v768 = vunpack.c.l.b16 %v750
      %v769 = vunpack.c.h.b16 %v750
      %v770 = vunpack.c.l.b16 %v751
      %v771 = vunpack.c.h.b16 %v751
      %v772 = vunpack.c.l.b16 %v752
      %v773 = vunpack.c.h.b16 %v752
      %v774 = vunpack.c.l.b16 %v753
      %v775 = vunpack.c.h.b16 %v753
      %v776 = vunpack.c.l.b16 %v754
      %v777 = vunpack.c.h.b16 %v754
      %v778 = vunpack.c.l.b16 %v755
      %v779 = vunpack.c.h.b16 %v755
      %v780 = vunpack.c.l.b16 %v756
      %v781 = vunpack.c.h.b16 %v756
      %v782 = vunpack.c.l.b16 %v757
      %v783 = vunpack.c.h.b16 %v757
      %v784 = vpack.c.b16 %v770, %v768
      %v785 = vpack.c.b16 %v771, %v769
      %v786 = vpack.c.b16 %v774, %v772
      %v787 = vpack.c.b16 %v775, %v773
      %v788 = vpack.c.b16 %v778, %v776
      %v789 = vpack.c.b16 %v779, %v777
      %v790 = vpack.c.b16 %v782, %v780
      %v791 = vpack.c.b16 %v783, %v781
      %v801 = vsel %vm517, %v758, 0
      %v804 = vsel %vm517, %v759, 0
      %806 = vmatpush.bf16.msra.mxu0 0
      %807 = vmatpush.bf16.msra.mxu0 0
      %808 = vmatpush.bf16.msra.mxu0 0
      %809 = vmatpush.bf16.msra.mxu0 0
      %810 = vmatpush.bf16.msra.mxu0 %v790
      %811 = vmatpush.bf16.msra.mxu0 %v788
      %812 = vmatpush.bf16.msra.mxu0 %v786
      %813 = vmatpush.bf16.msra.mxu0 %v784
      %814 = vmatmul.bf16.gmra.mxu0 %v801
      %v815 = vpop.f32.mrf.mxu0
      %v816 = vadd.f32 0.0, %v815
      %v817 = vpop.f32.mrf.mxu0
      %v818 = vadd.f32 0.0, %v817
      %819 = vmatmul.bf16.gmra.mxu0 %v804
      %v820 = vpop.f32.mrf.mxu0
      %v821 = vadd.f32 0.0, %v820
      %v822 = vpop.f32.mrf.mxu0
      %v823 = vadd.f32 0.0, %v822
      %824 = vdwg.mxu0
      %825 = vmatpush.bf16.msra.mxu0 0
      %826 = vmatpush.bf16.msra.mxu0 0
      %827 = vmatpush.bf16.msra.mxu0 0
      %828 = vmatpush.bf16.msra.mxu0 0
      %829 = vmatpush.bf16.msra.mxu0 %v791
      %830 = vmatpush.bf16.msra.mxu0 %v789
      %831 = vmatpush.bf16.msra.mxu0 %v787
      %832 = vmatpush.bf16.msra.mxu0 %v785
      %833 = vmatmul.bf16.gmra.mxu0 %v801
      %v834 = vpop.f32.mrf.mxu0
      %v835 = vadd.f32 0.0, %v834
      %v836 = vpop.f32.mrf.mxu0
      %v837 = vadd.f32 0.0, %v836
      %838 = vmatmul.bf16.gmra.mxu0 %v804
      %v839 = vpop.f32.mrf.mxu0
      %v840 = vadd.f32 0.0, %v839
      %v841 = vpop.f32.mrf.mxu0
      %v842 = vadd.f32 0.0, %v841
      %843 = vdwg.mxu0
      %v844 = vadd.f32 %v742, %v816
      %v845 = vadd.f32 %v743, %v835
      %v846 = vadd.f32 %v744, %v818
      %v847 = vadd.f32 %v745, %v837
      %v848 = vadd.f32 %v746, %v821
      %v849 = vadd.f32 %v747, %v840
      %v850 = vadd.f32 %v748, %v823
      %v851 = vadd.f32 %v749, %v842
      %v852 = vld [vmem:[%s1 + $0x100] sm:$0xff]
      %v853 = vld [vmem:[%s1 + $0x108] sm:$0xff]
      %v854 = vld [vmem:[%s1 + $0x110] sm:$0xff]
      %v855 = vld [vmem:[%s1 + $0x118] sm:$0xff]
      %v856 = vld [vmem:[%s1 + $0x120] sm:$0xff]
      %v857 = vld [vmem:[%s1 + $0x128] sm:$0xff]
      %v858 = vld [vmem:[%s1 + $0x130] sm:$0xff]
      %v859 = vld [vmem:[%s1 + $0x138] sm:$0xff]
      %v861 = vunpack.c.l.b16 %v425
      %v862 = vpack.c.b16 %v861, %v861
      %v863 = vshrl.u32 %v758, 16
      %v865 = vshll.u32 %v758, 16
      %v867 = vrot.slane %v865, 1
      %v868 = vor.u32 %v863, %v867
      %v869 = vshll.u32 %v759, 16
      %v871 = vrot.slane %v869, 1
      %v872 = vsel %vm456, %v868, %v871
      %v873 = vshrl.u32 %v759, 16
      %v875 = vor.u32 %v873, %v871
      %v877 = vshll.u32 %v862, 16
      %v879 = vrot.slane %v877, 1
      %v880 = vsel %vm456, %v875, %v879
      %v889 = vunpack.c.l.b16 %v852
      %v890 = vunpack.c.h.b16 %v852
      %v891 = vunpack.c.l.b16 %v853
      %v892 = vunpack.c.h.b16 %v853
      %v893 = vunpack.c.l.b16 %v854
      %v894 = vunpack.c.h.b16 %v854
      %v895 = vunpack.c.l.b16 %v855
      %v896 = vunpack.c.h.b16 %v855
      %v897 = vunpack.c.l.b16 %v856
      %v898 = vunpack.c.h.b16 %v856
      %v899 = vunpack.c.l.b16 %v857
      %v900 = vunpack.c.h.b16 %v857
      %v901 = vunpack.c.l.b16 %v858
      %v902 = vunpack.c.h.b16 %v858
      %v903 = vunpack.c.l.b16 %v859
      %v904 = vunpack.c.h.b16 %v859
      %v905 = vpack.c.b16 %v891, %v889
      %v906 = vpack.c.b16 %v892, %v890
      %v907 = vpack.c.b16 %v895, %v893
      %v908 = vpack.c.b16 %v896, %v894
      %v909 = vpack.c.b16 %v899, %v897
      %v910 = vpack.c.b16 %v900, %v898
      %v911 = vpack.c.b16 %v903, %v901
      %v912 = vpack.c.b16 %v904, %v902
      %v922 = vsel %vm517, %v872, 0
      %v925 = vsel %vm517, %v880, 0
      %927 = vmatpush.bf16.msra.mxu0 0
      %928 = vmatpush.bf16.msra.mxu0 0
      %929 = vmatpush.bf16.msra.mxu0 0
      %930 = vmatpush.bf16.msra.mxu0 0
      %931 = vmatpush.bf16.msra.mxu0 %v911
      %932 = vmatpush.bf16.msra.mxu0 %v909
      %933 = vmatpush.bf16.msra.mxu0 %v907
      %934 = vmatpush.bf16.msra.mxu0 %v905
      %935 = vmatmul.bf16.gmra.mxu0 %v922
      %v936 = vpop.f32.mrf.mxu0
      %v937 = vadd.f32 0.0, %v936
      %v938 = vpop.f32.mrf.mxu0
      %v939 = vadd.f32 0.0, %v938
      %940 = vmatmul.bf16.gmra.mxu0 %v925
      %v941 = vpop.f32.mrf.mxu0
      %v942 = vadd.f32 0.0, %v941
      %v943 = vpop.f32.mrf.mxu0
      %v944 = vadd.f32 0.0, %v943
      %945 = vdwg.mxu0
      %946 = vmatpush.bf16.msra.mxu0 0
      %947 = vmatpush.bf16.msra.mxu0 0
      %948 = vmatpush.bf16.msra.mxu0 0
      %949 = vmatpush.bf16.msra.mxu0 0
      %950 = vmatpush.bf16.msra.mxu0 %v912
      %951 = vmatpush.bf16.msra.mxu0 %v910
      %952 = vmatpush.bf16.msra.mxu0 %v908
      %953 = vmatpush.bf16.msra.mxu0 %v906
      %954 = vmatmul.bf16.gmra.mxu0 %v922
      %v955 = vpop.f32.mrf.mxu0
      %v956 = vadd.f32 0.0, %v955
      %v957 = vpop.f32.mrf.mxu0
      %v958 = vadd.f32 0.0, %v957
      %959 = vmatmul.bf16.gmra.mxu0 %v925
      %v960 = vpop.f32.mrf.mxu0
      %v961 = vadd.f32 0.0, %v960
      %v962 = vpop.f32.mrf.mxu0
      %v963 = vadd.f32 0.0, %v962
      %964 = vdwg.mxu0
      %v965 = vadd.f32 %v844, %v937
      %v966 = vadd.f32 %v845, %v956
      %v967 = vadd.f32 %v846, %v939
      %v968 = vadd.f32 %v847, %v958
      %v969 = vadd.f32 %v848, %v942
      %v970 = vadd.f32 %v849, %v961
      %v971 = vadd.f32 %v850, %v944
      %v972 = vadd.f32 %v851, %v963
      %v973 = vld [vmem:[%s1 + $0x140] sm:$0xff]
      %v974 = vld [vmem:[%s1 + $0x148] sm:$0xff]
      %v975 = vld [vmem:[%s1 + $0x150] sm:$0xff]
      %v976 = vld [vmem:[%s1 + $0x158] sm:$0xff]
      %v977 = vld [vmem:[%s1 + $0x160] sm:$0xff]
      %v978 = vld [vmem:[%s1 + $0x168] sm:$0xff]
      %v979 = vld [vmem:[%s1 + $0x170] sm:$0xff]
      %v980 = vld [vmem:[%s1 + $0x178] sm:$0xff]
      %v981 = vrot.slane %v758, 1
      %v982 = vrot.slane %v759, 1
      %v983 = vsel %vm652, %v981, %v982
      %v984 = vrot.slane %v862, 1
      %v985 = vsel %vm652, %v982, %v984
      %v994 = vunpack.c.l.b16 %v973
      %v995 = vunpack.c.h.b16 %v973
      %v996 = vunpack.c.l.b16 %v974
      %v997 = vunpack.c.h.b16 %v974
      %v998 = vunpack.c.l.b16 %v975
      %v999 = vunpack.c.h.b16 %v975
      %v1000 = vunpack.c.l.b16 %v976
      %v1001 = vunpack.c.h.b16 %v976
      %v1002 = vunpack.c.l.b16 %v977
      %v1003 = vunpack.c.h.b16 %v977
      %v1004 = vunpack.c.l.b16 %v978
      %v1005 = vunpack.c.h.b16 %v978
      %v1006 = vunpack.c.l.b16 %v979
      %v1007 = vunpack.c.h.b16 %v979
      %v1008 = vunpack.c.l.b16 %v980
      %v1009 = vunpack.c.h.b16 %v980
      %v1010 = vpack.c.b16 %v996, %v994
      %v1011 = vpack.c.b16 %v997, %v995
      %v1012 = vpack.c.b16 %v1000, %v998
      %v1013 = vpack.c.b16 %v1001, %v999
      %v1014 = vpack.c.b16 %v1004, %v1002
      %v1015 = vpack.c.b16 %v1005, %v1003
      %v1016 = vpack.c.b16 %v1008, %v1006
      %v1017 = vpack.c.b16 %v1009, %v1007
      %v1027 = vsel %vm517, %v983, 0
      %v1030 = vsel %vm517, %v985, 0
      %1032 = vmatpush.bf16.msra.mxu0 0
      %1033 = vmatpush.bf16.msra.mxu0 0
      %1034 = vmatpush.bf16.msra.mxu0 0
      %1035 = vmatpush.bf16.msra.mxu0 0
      %1036 = vmatpush.bf16.msra.mxu0 %v1016
      %1037 = vmatpush.bf16.msra.mxu0 %v1014
      %1038 = vmatpush.bf16.msra.mxu0 %v1012
      %1039 = vmatpush.bf16.msra.mxu0 %v1010
      %1040 = vmatmul.bf16.gmra.mxu0 %v1027
      %v1041 = vpop.f32.mrf.mxu0
      %v1042 = vadd.f32 0.0, %v1041
      %v1043 = vpop.f32.mrf.mxu0
      %v1044 = vadd.f32 0.0, %v1043
      %1045 = vmatmul.bf16.gmra.mxu0 %v1030
      %v1046 = vpop.f32.mrf.mxu0
      %v1047 = vadd.f32 0.0, %v1046
      %v1048 = vpop.f32.mrf.mxu0
      %v1049 = vadd.f32 0.0, %v1048
      %1050 = vdwg.mxu0
      %1051 = vmatpush.bf16.msra.mxu0 0
      %1052 = vmatpush.bf16.msra.mxu0 0
      %1053 = vmatpush.bf16.msra.mxu0 0
      %1054 = vmatpush.bf16.msra.mxu0 0
      %1055 = vmatpush.bf16.msra.mxu0 %v1017
      %1056 = vmatpush.bf16.msra.mxu0 %v1015
      %1057 = vmatpush.bf16.msra.mxu0 %v1013
      %1058 = vmatpush.bf16.msra.mxu0 %v1011
      %1059 = vmatmul.bf16.gmra.mxu0 %v1027
      %v1060 = vpop.f32.mrf.mxu0
      %v1061 = vadd.f32 0.0, %v1060
      %v1062 = vpop.f32.mrf.mxu0
      %v1063 = vadd.f32 0.0, %v1062
      %1064 = vmatmul.bf16.gmra.mxu0 %v1030
      %v1065 = vpop.f32.mrf.mxu0
      %v1066 = vadd.f32 0.0, %v1065
      %v1067 = vpop.f32.mrf.mxu0
      %v1068 = vadd.f32 0.0, %v1067
      %1069 = vdwg.mxu0
      %v1070 = vadd.f32 %v965, %v1042
      %v1071 = vadd.f32 %v966, %v1061
      %v1072 = vadd.f32 %v967, %v1044
      %v1073 = vadd.f32 %v968, %v1063
      %v1074 = vadd.f32 %v969, %v1047
      %v1075 = vadd.f32 %v970, %v1066
      %v1076 = vadd.f32 %v971, %v1049
      %v1077 = vadd.f32 %v972, %v1068
      %v1078 = vld [vmem:[%s1 + $0x180] sm:$0xff]
      %v1079 = vld [vmem:[%s1 + $0x188] sm:$0xff]
      %v1080 = vld [vmem:[%s1 + $0x190] sm:$0xff]
      %v1081 = vld [vmem:[%s1 + $0x198] sm:$0xff]
      %v1082 = vld [vmem:[%s1 + $0x1a0] sm:$0xff]
      %v1083 = vld [vmem:[%s1 + $0x1a8] sm:$0xff]
      %v1084 = vld [vmem:[%s1 + $0x1b0] sm:$0xff]
      %v1085 = vld [vmem:[%s1 + $0x1b8] sm:$0xff]
      %v1086 = vpack.c.b16 %v861, %v452
      %v1095 = vunpack.c.l.b16 %v1078
      %v1096 = vunpack.c.h.b16 %v1078
      %v1097 = vunpack.c.l.b16 %v1079
      %v1098 = vunpack.c.h.b16 %v1079
      %v1099 = vunpack.c.l.b16 %v1080
      %v1100 = vunpack.c.h.b16 %v1080
      %v1101 = vunpack.c.l.b16 %v1081
      %v1102 = vunpack.c.h.b16 %v1081
      %v1103 = vunpack.c.l.b16 %v1082
      %v1104 = vunpack.c.h.b16 %v1082
      %v1105 = vunpack.c.l.b16 %v1083
      %v1106 = vunpack.c.h.b16 %v1083
      %v1107 = vunpack.c.l.b16 %v1084
      %v1108 = vunpack.c.h.b16 %v1084
      %v1109 = vunpack.c.l.b16 %v1085
      %v1110 = vunpack.c.h.b16 %v1085
      %v1111 = vpack.c.b16 %v1097, %v1095
      %v1112 = vpack.c.b16 %v1098, %v1096
      %v1113 = vpack.c.b16 %v1101, %v1099
      %v1114 = vpack.c.b16 %v1102, %v1100
      %v1115 = vpack.c.b16 %v1105, %v1103
      %v1116 = vpack.c.b16 %v1106, %v1104
      %v1117 = vpack.c.b16 %v1109, %v1107
      %v1118 = vpack.c.b16 %v1110, %v1108
      %v1128 = vsel %vm517, %v1086, 0
      %1130 = vmatpush.bf16.msra.mxu0 0
      %1131 = vmatpush.bf16.msra.mxu0 0
      %1132 = vmatpush.bf16.msra.mxu0 0
      %1133 = vmatpush.bf16.msra.mxu0 0
      %1134 = vmatpush.bf16.msra.mxu0 %v1117
      %1135 = vmatpush.bf16.msra.mxu0 %v1115
      %1136 = vmatpush.bf16.msra.mxu0 %v1113
      %1137 = vmatpush.bf16.msra.mxu0 %v1111
      %1138 = vmatmul.bf16.gmra.mxu0 %v604
      %v1139 = vpop.f32.mrf.mxu0
      %v1140 = vadd.f32 0.0, %v1139
      %v1141 = vpop.f32.mrf.mxu0
      %v1142 = vadd.f32 0.0, %v1141
      %1143 = vmatmul.bf16.gmra.mxu0 %v1128
      %v1144 = vpop.f32.mrf.mxu0
      %v1145 = vadd.f32 0.0, %v1144
      %v1146 = vpop.f32.mrf.mxu0
      %v1147 = vadd.f32 0.0, %v1146
      %1148 = vdwg.mxu0
      %1149 = vmatpush.bf16.msra.mxu0 0
      %1150 = vmatpush.bf16.msra.mxu0 0
      %1151 = vmatpush.bf16.msra.mxu0 0
      %1152 = vmatpush.bf16.msra.mxu0 0
      %1153 = vmatpush.bf16.msra.mxu0 %v1118
      %1154 = vmatpush.bf16.msra.mxu0 %v1116
      %1155 = vmatpush.bf16.msra.mxu0 %v1114
      %1156 = vmatpush.bf16.msra.mxu0 %v1112
      %1157 = vmatmul.bf16.gmra.mxu0 %v604
      %v1158 = vpop.f32.mrf.mxu0
      %v1159 = vadd.f32 0.0, %v1158
      %v1160 = vpop.f32.mrf.mxu0
      %v1161 = vadd.f32 0.0, %v1160
      %1162 = vmatmul.bf16.gmra.mxu0 %v1128
      %v1163 = vpop.f32.mrf.mxu0
      %v1164 = vadd.f32 0.0, %v1163
      %v1165 = vpop.f32.mrf.mxu0
      %v1166 = vadd.f32 0.0, %v1165
      %1167 = vdwg.mxu0
      %v1168 = vadd.f32 %v1070, %v1140
      %v1169 = vadd.f32 %v1071, %v1159
      %v1170 = vadd.f32 %v1072, %v1142
      %v1171 = vadd.f32 %v1073, %v1161
      %v1172 = vadd.f32 %v1074, %v1145
      %v1173 = vadd.f32 %v1075, %v1164
      %v1174 = vadd.f32 %v1076, %v1147
      %v1175 = vadd.f32 %v1077, %v1166
      %v1176 = vld [vmem:[%s1 + $0x1c0] sm:$0xff]
      %v1177 = vld [vmem:[%s1 + $0x1c8] sm:$0xff]
      %v1178 = vld [vmem:[%s1 + $0x1d0] sm:$0xff]
      %v1179 = vld [vmem:[%s1 + $0x1d8] sm:$0xff]
      %v1180 = vld [vmem:[%s1 + $0x1e0] sm:$0xff]
      %v1181 = vld [vmem:[%s1 + $0x1e8] sm:$0xff]
      %v1182 = vld [vmem:[%s1 + $0x1f0] sm:$0xff]
      %v1183 = vld [vmem:[%s1 + $0x1f8] sm:$0xff]
      %v1185 = vunpack.c.l.b16 %v426
      %v1186 = vpack.c.b16 %v1185, %v1185
      %v1187 = vshll.u32 %v1086, 16
      %v1189 = vrot.slane %v1187, 1
      %v1190 = vsel %vm456, %v471, %v1189
      %v1191 = vshrl.u32 %v1086, 16
      %v1193 = vor.u32 %v1191, %v1189
      %v1195 = vshll.u32 %v1186, 16
      %v1197 = vrot.slane %v1195, 1
      %v1198 = vsel %vm456, %v1193, %v1197
      %v1207 = vunpack.c.l.b16 %v1176
      %v1208 = vunpack.c.h.b16 %v1176
      %v1209 = vunpack.c.l.b16 %v1177
      %v1210 = vunpack.c.h.b16 %v1177
      %v1211 = vunpack.c.l.b16 %v1178
      %v1212 = vunpack.c.h.b16 %v1178
      %v1213 = vunpack.c.l.b16 %v1179
      %v1214 = vunpack.c.h.b16 %v1179
      %v1215 = vunpack.c.l.b16 %v1180
      %v1216 = vunpack.c.h.b16 %v1180
      %v1217 = vunpack.c.l.b16 %v1181
      %v1218 = vunpack.c.h.b16 %v1181
      %v1219 = vunpack.c.l.b16 %v1182
      %v1220 = vunpack.c.h.b16 %v1182
      %v1221 = vunpack.c.l.b16 %v1183
      %v1222 = vunpack.c.h.b16 %v1183
      %v1223 = vpack.c.b16 %v1209, %v1207
      %v1224 = vpack.c.b16 %v1210, %v1208
      %v1225 = vpack.c.b16 %v1213, %v1211
      %v1226 = vpack.c.b16 %v1214, %v1212
      %v1227 = vpack.c.b16 %v1217, %v1215
      %v1228 = vpack.c.b16 %v1218, %v1216
      %v1229 = vpack.c.b16 %v1221, %v1219
      %v1230 = vpack.c.b16 %v1222, %v1220
      %v1240 = vsel %vm517, %v1190, 0
      %v1243 = vsel %vm517, %v1198, 0
      %1245 = vmatpush.bf16.msra.mxu0 0
      %1246 = vmatpush.bf16.msra.mxu0 0
      %1247 = vmatpush.bf16.msra.mxu0 0
      %1248 = vmatpush.bf16.msra.mxu0 0
      %1249 = vmatpush.bf16.msra.mxu0 %v1229
      %1250 = vmatpush.bf16.msra.mxu0 %v1227
      %1251 = vmatpush.bf16.msra.mxu0 %v1225
      %1252 = vmatpush.bf16.msra.mxu0 %v1223
      %1253 = vmatmul.bf16.gmra.mxu0 %v1240
      %v1254 = vpop.f32.mrf.mxu0
      %v1255 = vadd.f32 0.0, %v1254
      %v1256 = vpop.f32.mrf.mxu0
      %v1257 = vadd.f32 0.0, %v1256
      %1258 = vmatmul.bf16.gmra.mxu0 %v1243
      %v1259 = vpop.f32.mrf.mxu0
      %v1260 = vadd.f32 0.0, %v1259
      %v1261 = vpop.f32.mrf.mxu0
      %v1262 = vadd.f32 0.0, %v1261
      %1263 = vdwg.mxu0
      %1264 = vmatpush.bf16.msra.mxu0 0
      %1265 = vmatpush.bf16.msra.mxu0 0
      %1266 = vmatpush.bf16.msra.mxu0 0
      %1267 = vmatpush.bf16.msra.mxu0 0
      %1268 = vmatpush.bf16.msra.mxu0 %v1230
      %1269 = vmatpush.bf16.msra.mxu0 %v1228
      %1270 = vmatpush.bf16.msra.mxu0 %v1226
      %1271 = vmatpush.bf16.msra.mxu0 %v1224
      %1272 = vmatmul.bf16.gmra.mxu0 %v1240
      %v1273 = vpop.f32.mrf.mxu0
      %v1274 = vadd.f32 0.0, %v1273
      %v1275 = vpop.f32.mrf.mxu0
      %v1276 = vadd.f32 0.0, %v1275
      %1277 = vmatmul.bf16.gmra.mxu0 %v1243
      %v1278 = vpop.f32.mrf.mxu0
      %v1279 = vadd.f32 0.0, %v1278
      %v1280 = vpop.f32.mrf.mxu0
      %v1281 = vadd.f32 0.0, %v1280
      %1282 = vdwg.mxu0
      %v1283 = vadd.f32 %v1168, %v1255
      %v1284 = vadd.f32 %v1169, %v1274
      %v1285 = vadd.f32 %v1170, %v1257
      %v1286 = vadd.f32 %v1171, %v1276
      %v1287 = vadd.f32 %v1172, %v1260
      %v1288 = vadd.f32 %v1173, %v1279
      %v1289 = vadd.f32 %v1174, %v1262
      %v1290 = vadd.f32 %v1175, %v1281
      %v1291 = vld [vmem:[%s1 + $0x200] sm:$0xff]
      %v1292 = vld [vmem:[%s1 + $0x208] sm:$0xff]
      %v1293 = vld [vmem:[%s1 + $0x210] sm:$0xff]
      %v1294 = vld [vmem:[%s1 + $0x218] sm:$0xff]
      %v1295 = vld [vmem:[%s1 + $0x220] sm:$0xff]
      %v1296 = vld [vmem:[%s1 + $0x228] sm:$0xff]
      %v1297 = vld [vmem:[%s1 + $0x230] sm:$0xff]
      %v1298 = vld [vmem:[%s1 + $0x238] sm:$0xff]
      %v1299 = vrot.slane %v1086, 1
      %v1300 = vsel %vm652, %v654, %v1299
      %v1301 = vrot.slane %v1186, 1
      %v1302 = vsel %vm652, %v1299, %v1301
      %v1311 = vunpack.c.l.b16 %v1291
      %v1312 = vunpack.c.h.b16 %v1291
      %v1313 = vunpack.c.l.b16 %v1292
      %v1314 = vunpack.c.h.b16 %v1292
      %v1315 = vunpack.c.l.b16 %v1293
      %v1316 = vunpack.c.h.b16 %v1293
      %v1317 = vunpack.c.l.b16 %v1294
      %v1318 = vunpack.c.h.b16 %v1294
      %v1319 = vunpack.c.l.b16 %v1295
      %v1320 = vunpack.c.h.b16 %v1295
      %v1321 = vunpack.c.l.b16 %v1296
      %v1322 = vunpack.c.h.b16 %v1296
      %v1323 = vunpack.c.l.b16 %v1297
      %v1324 = vunpack.c.h.b16 %v1297
      %v1325 = vunpack.c.l.b16 %v1298
      %v1326 = vunpack.c.h.b16 %v1298
      %v1327 = vpack.c.b16 %v1313, %v1311
      %v1328 = vpack.c.b16 %v1314, %v1312
      %v1329 = vpack.c.b16 %v1317, %v1315
      %v1330 = vpack.c.b16 %v1318, %v1316
      %v1331 = vpack.c.b16 %v1321, %v1319
      %v1332 = vpack.c.b16 %v1322, %v1320
      %v1333 = vpack.c.b16 %v1325, %v1323
      %v1334 = vpack.c.b16 %v1326, %v1324
      %v1344 = vsel %vm517, %v1300, 0
      %v1347 = vsel %vm517, %v1302, 0
      %1349 = vmatpush.bf16.msra.mxu0 0
      %1350 = vmatpush.bf16.msra.mxu0 0
      %1351 = vmatpush.bf16.msra.mxu0 0
      %1352 = vmatpush.bf16.msra.mxu0 0
      %1353 = vmatpush.bf16.msra.mxu0 %v1333
      %1354 = vmatpush.bf16.msra.mxu0 %v1331
      %1355 = vmatpush.bf16.msra.mxu0 %v1329
      %1356 = vmatpush.bf16.msra.mxu0 %v1327
      %1357 = vmatmul.bf16.gmra.mxu0 %v1344
      %v1358 = vpop.f32.mrf.mxu0
      %v1359 = vadd.f32 0.0, %v1358
      %v1360 = vpop.f32.mrf.mxu0
      %v1361 = vadd.f32 0.0, %v1360
      %1362 = vmatmul.bf16.gmra.mxu0 %v1347
      %v1363 = vpop.f32.mrf.mxu0
      %v1364 = vadd.f32 0.0, %v1363
      %v1365 = vpop.f32.mrf.mxu0
      %v1366 = vadd.f32 0.0, %v1365
      %1367 = vdwg.mxu0
      %1368 = vmatpush.bf16.msra.mxu0 0
      %1369 = vmatpush.bf16.msra.mxu0 0
      %1370 = vmatpush.bf16.msra.mxu0 0
      %1371 = vmatpush.bf16.msra.mxu0 0
      %1372 = vmatpush.bf16.msra.mxu0 %v1334
      %1373 = vmatpush.bf16.msra.mxu0 %v1332
      %1374 = vmatpush.bf16.msra.mxu0 %v1330
      %1375 = vmatpush.bf16.msra.mxu0 %v1328
      %1376 = vmatmul.bf16.gmra.mxu0 %v1344
      %v1377 = vpop.f32.mrf.mxu0
      %v1378 = vadd.f32 0.0, %v1377
      %v1379 = vpop.f32.mrf.mxu0
      %v1380 = vadd.f32 0.0, %v1379
      %1381 = vmatmul.bf16.gmra.mxu0 %v1347
      %v1382 = vpop.f32.mrf.mxu0
      %v1383 = vadd.f32 0.0, %v1382
      %v1384 = vpop.f32.mrf.mxu0
      %v1385 = vadd.f32 0.0, %v1384
      %1386 = vdwg.mxu0
      %v1387 = vadd.f32 %v1283, %v1359
      %v1388 = vadd.f32 %v1284, %v1378
      %v1389 = vadd.f32 %v1285, %v1361
      %v1390 = vadd.f32 %v1286, %v1380
      %v1391 = vadd.f32 %v1287, %v1364
      %v1392 = vadd.f32 %v1288, %v1383
      %v1393 = vadd.f32 %v1289, %v1366
      %v1394 = vadd.f32 %v1290, %v1385
      %v1395 = vld [vmem:[%s5] sm:$0xff]
      %v1396 = vld [vmem:[%s5 + $0x8] sm:$0xff]
      %v1397 = vld [vmem:[%s5 + $0x10] sm:$0xff]
      %v1398 = vld [vmem:[%s5 + $0x18] sm:$0xff]
      %1400 = vset.pattern.permute.xlu0 0
      %1401 = vperm.xlu0 %1400, %v1395
      %v1402 = vpop.permute.xlu0 %1401
      %1405 = vset.pattern.permute.xlu0 0
      %1406 = vperm.xlu0 %1405, %v1396
      %v1407 = vpop.permute.xlu0 %1406
      %1410 = vset.pattern.permute.xlu0 0
      %1411 = vperm.xlu0 %1410, %v1397
      %v1412 = vpop.permute.xlu0 %1411
      %1415 = vset.pattern.permute.xlu0 0
      %1416 = vperm.xlu0 %1415, %v1398
      %v1417 = vpop.permute.xlu0 %1416
      %v1419 = vmul.f32 %v1387, %v1402
      %v1420 = vmul.f32 %v1388, %v1402
      %v1421 = vmul.f32 %v1389, %v1407
      %v1422 = vmul.f32 %v1390, %v1407
      %v1423 = vmul.f32 %v1391, %v1412
      %v1424 = vmul.f32 %v1392, %v1412
      %v1425 = vmul.f32 %v1393, %v1417
      %v1426 = vmul.f32 %v1394, %v1417
      %v1427 = vpack.c.bf16 %v1420, %v1419
      %v1428 = vpack.c.bf16 %v1422, %v1421
      %v1429 = vpack.c.bf16 %v1424, %v1423
      %v1430 = vpack.c.bf16 %v1426, %v1425
      %vm1431 = vcmask 1043456
      %vm1432 = vcmask 523268
      %vm1433 = vmor %vm1432, %vm1431
      %1434 = vst.msk [vmem:[%s318] sm:$0xff] %vm1433, %v1427
      %1435 = vst.msk [vmem:[%s318 + $0x8] sm:$0xff] %vm1433, %v1428
      %1436 = vst.msk [vmem:[%s318 + $0x10] sm:$0xff] %vm1433, %v1429
      %1437 = vst.msk [vmem:[%s318 + $0x18] sm:$0xff] %vm1433, %v1430
      %v1438 = vadd.f32 %v1419, %v1421
      %v1439 = vadd.f32 %v1438, %v1423
      %v1440 = vadd.f32 %v1439, %v1425
      %v1441 = vrot.slane %v1440, 4
      %v1442 = vadd.f32 %v1440, %v1441
      %v1443 = vrot.slane %v1442, 2
      %v1444 = vadd.f32 %v1442, %v1443
      %v1445 = vrot.slane %v1444, 1
      %v1446 = vadd.f32 %v1444, %v1445
      %v1447 = vsel %vm517, %v1420, 0.0
      %v1448 = vsel %vm517, %v1422, 0.0
      %v1449 = vadd.f32 %v1447, %v1448
      %v1450 = vsel %vm517, %v1424, 0.0
      %v1451 = vadd.f32 %v1449, %v1450
      %v1452 = vsel %vm517, %v1426, 0.0
      %v1453 = vadd.f32 %v1451, %v1452
      %v1454 = vrot.slane %v1453, 4
      %v1455 = vadd.f32 %v1453, %v1454
      %v1456 = vrot.slane %v1455, 2
      %v1457 = vadd.f32 %v1455, %v1456
      %v1458 = vrot.slane %v1457, 1
      %v1459 = vadd.f32 %v1457, %v1458
      %v1460 = vadd.f32 %v1446, 0.0
      %v1461 = vadd.f32 %v1459, 0.0
      %v1462 = vmul.f32 %v1419, %v1419
      %v1463 = vmul.f32 %v1420, %v1420
      %v1464 = vmul.f32 %v1421, %v1421
      %v1465 = vmul.f32 %v1422, %v1422
      %v1466 = vmul.f32 %v1423, %v1423
      %v1467 = vmul.f32 %v1424, %v1424
      %v1468 = vmul.f32 %v1425, %v1425
      %v1469 = vmul.f32 %v1426, %v1426
      %v1470 = vadd.f32 %v1462, %v1464
      %v1471 = vadd.f32 %v1470, %v1466
      %v1472 = vadd.f32 %v1471, %v1468
      %v1473 = vrot.slane %v1472, 4
      %v1474 = vadd.f32 %v1472, %v1473
      %v1475 = vrot.slane %v1474, 2
      %v1476 = vadd.f32 %v1474, %v1475
      %v1477 = vrot.slane %v1476, 1
      %v1478 = vadd.f32 %v1476, %v1477
      %v1479 = vsel %vm517, %v1463, 0.0
      %v1480 = vsel %vm517, %v1465, 0.0
      %v1481 = vadd.f32 %v1479, %v1480
      %v1482 = vsel %vm517, %v1467, 0.0
      %v1483 = vadd.f32 %v1481, %v1482
      %v1484 = vsel %vm517, %v1469, 0.0
      %v1485 = vadd.f32 %v1483, %v1484
      %v1486 = vrot.slane %v1485, 4
      %v1487 = vadd.f32 %v1485, %v1486
      %v1488 = vrot.slane %v1487, 2
      %v1489 = vadd.f32 %v1487, %v1488
      %v1490 = vrot.slane %v1489, 1
      %v1491 = vadd.f32 %v1489, %v1490
      %v1492 = vadd.f32 %v1478, 0.0
      %v1493 = vadd.f32 %v1491, 0.0
      %v1496 = vrot.slane %v1461, 7
      %vm1497 = vcmask 1040384
      %v1498 = vsel %vm1497, %v1460, %v1496
      %v1500 = vlaneseq
      %vm1501 = vcmp.ge.s32.totalorder %v1500, 0
      %vm1502 = vcmp.lt.s32.totalorder %v1500, 192
      %vm1503 = vmand %vm1501, %vm1502
      %1504 = vst.msk [vmem:[%s322] sm:$0x3] %vm1503, %v1498
      %v1507 = vrot.slane %v1493, 7
      %v1508 = vsel %vm1497, %v1492, %v1507
      %1510 = vst.msk [vmem:[%s326] sm:$0x3] %vm1503, %v1508
      %p1511 = scmp.lt.s32.totalorder %s20, 1
      %s1512 = scalar_select %p1511, %s20, 1
      %s1513 = smul.addr %s1512, 8
      %s1514 = smul.addr %s1513, 4
      %s1515 = scalar_lea.vmem %s6, %s1514
      %p1516 = scmp.lt.s32.totalorder %s20, 1
      %s1517 = scalar_select %p1516, %s20, 1
      %s1518 = smul.addr %s1517, 2
      %s1519 = scalar_lea.vmem %s7, %s1518
      %p1520 = scmp.lt.s32.totalorder %s20, 1
      %s1521 = scalar_select %p1520, %s20, 1
      %s1522 = smul.addr %s1521, 2
      %s1523 = scalar_lea.vmem %s8, %s1522
      // Predicated region
      $region45: #{inception2_forward.11} parent=43 // pred_check
        %p1524 = pneg %p169
      $region46: #{inception2_forward.11} parent=43 // pred_check_branch
        %1526 = sbr.rel (%p1524) target = $region48
      $region47: #{inception2_forward.11} parent=43 // pred_region
        _
      $region48: #{inception2_forward.11} parent=43 // pred_fallthru
        _
      // Predicated region
      $region49: #{inception2_forward.11} parent=43 // pred_check
        %p1527 = pneg %p195
      $region50: #{inception2_forward.11} parent=43 // pred_check_branch
        %1529 = sbr.rel (%p1527) target = $region52
      $region51: #{inception2_forward.11} parent=43 // pred_region
        _
      $region52: #{inception2_forward.11} parent=43 // pred_fallthru
        _
      // Predicated region
      $region53: #{inception2_forward.11} parent=43 // pred_check
        %p1530 = pneg %p221
      $region54: #{inception2_forward.11} parent=43 // pred_check_branch
        %1532 = sbr.rel (%p1530) target = $region56
      $region55: #{inception2_forward.11} parent=43 // pred_region
        _
      $region56: #{inception2_forward.11} parent=43 // pred_fallthru
        _
    $region44: #{inception2_forward.11} parent=5 // pred_fallthru
      _
    %p1533 = scmp.le.s32.totalorder 2, %s15
    // Predicated region
    $region57: #{inception2_forward.11} parent=5 // pred_check
      %p1534 = pneg %p1533
    $region58: #{inception2_forward.11} parent=5 // pred_check_branch
      %1536 = sbr.rel (%p1534) target = $region60
    $region59: #{inception2_forward.11} parent=5 // pred_region
      %s1537 = ssub.s32 %s15, 2
      // Predicated region
      $region61: #{inception2_forward.11} parent=59 // pred_check
        %p1538 = pneg %p175
      $region62: #{inception2_forward.11} parent=59 // pred_check_branch
        %1540 = sbr.rel (%p1538) target = $region64
      $region63: #{inception2_forward.11} parent=59 // pred_region
        %p1541 = scmp.lt.s32.totalorder %s21, 1
        %s1542 = scalar_select %p1541, %s21, 1
        %s1543 = smul.addr %s1542, 8
        %s1544 = smul.addr %s1543, 4
        %s1545 = scalar_lea.vmem %s6, %s1544
      $region64: #{inception2_forward.11} parent=59 // pred_fallthru
        _
      // Predicated region
      $region65: #{inception2_forward.11} parent=59 // pred_check
        %p1546 = pneg %p201
      $region66: #{inception2_forward.11} parent=59 // pred_check_branch
        %1548 = sbr.rel (%p1546) target = $region68
      $region67: #{inception2_forward.11} parent=59 // pred_region
        %p1549 = scmp.lt.s32.totalorder %s21, 1
        %s1550 = scalar_select %p1549, %s21, 1
        %s1551 = smul.addr %s1550, 2
        %s1552 = scalar_lea.vmem %s7, %s1551
      $region68: #{inception2_forward.11} parent=59 // pred_fallthru
        _
      // Predicated region
      $region69: #{inception2_forward.11} parent=59 // pred_check
        %p1553 = pneg %p227
      $region70: #{inception2_forward.11} parent=59 // pred_check_branch
        %1555 = sbr.rel (%p1553) target = $region72
      $region71: #{inception2_forward.11} parent=59 // pred_region
        %p1556 = scmp.lt.s32.totalorder %s21, 1
        %s1557 = scalar_select %p1556, %s21, 1
        %s1558 = smul.addr %s1557, 2
        %s1559 = scalar_lea.vmem %s8, %s1558
      $region72: #{inception2_forward.11} parent=59 // pred_fallthru
        _
    $region60: #{inception2_forward.11} parent=5 // pred_fallthru
      _
  $region6: #{inception2_forward.11} parent=0 // loop_footer
    %s19 = sadd.s32 1, %s15
  $region7: #{inception2_forward.11} parent=0 // loop_footer_branch
    %14 = sbr.rel target = $region3
  $region8: #{inception2_forward.11} parent=0 // loop_exit
    _

// kernel: inception2_forward.13
$region0: #{inception2_forward.13}
  #allocation0 [shape = 'u32[]', space=smem, size = 0x4, offset = 0x4, fixed_abs, tag = 'smem constant byte address 0x4 - core index']
  #allocation1 [shape = 'u32[72,128]{1,0:T(1,128)}', space=vmem, size = 0x9000, scoped, tag = 'internal scratch']
  %s0 = inlined_call_operand.vmem [shape: bf16[16,192], index: 0, kind: input, shape index: {}]
  %s1 = inlined_call_operand.vmem [shape: bf16[192,192], index: 1, kind: input, shape index: {}]
  %s2 = inlined_call_operand.vmem [shape: bf16[16,192], index: 2, kind: output, shape index: {}]
  %s3 = sld [smem:[#allocation0]]
  $region18: #{inception2_forward.13} parent=0
    _
  %s5 = ssub.s32 1, %s3
  %s6 = scalar_select 0, %s5, %s3
  // Predicated region
  $region2: #{inception2_forward.13} parent=0 // pred_check
    _
  $region3: #{inception2_forward.13} parent=0 // pred_check_branch
    %8 = sbr.rel (0) target = $region5
  $region4: #{inception2_forward.13} parent=0 // pred_region
    _
  $region5: #{inception2_forward.13} parent=0 // pred_fallthru
    _
  // Predicated region
  $region6: #{inception2_forward.13} parent=0 // pred_check
    _
  $region7: #{inception2_forward.13} parent=0 // pred_check_branch
    %10 = sbr.rel (0) target = $region9
  $region8: #{inception2_forward.13} parent=0 // pred_region
    _
  $region9: #{inception2_forward.13} parent=0 // pred_fallthru
    _
  %v12 = vld [vmem:[%s0] sm:$0xff]
  %v13 = vld [vmem:[%s0 + $0x8] sm:$0xff]
  %v14 = vld [vmem:[%s1] sm:$0xff]
  %v15 = vld [vmem:[%s1 + $0x8] sm:$0xff]
  %v16 = vld [vmem:[%s1 + $0x10] sm:$0xff]
  %v17 = vld [vmem:[%s1 + $0x18] sm:$0xff]
  %v18 = vld [vmem:[%s1 + $0x20] sm:$0xff]
  %v19 = vld [vmem:[%s1 + $0x28] sm:$0xff]
  %v20 = vld [vmem:[%s1 + $0x30] sm:$0xff]
  %v21 = vld [vmem:[%s1 + $0x38] sm:$0xff]
  %v22 = vld [vmem:[%s1 + $0x40] sm:$0xff]
  %v23 = vld [vmem:[%s1 + $0x48] sm:$0xff]
  %v24 = vld [vmem:[%s1 + $0x50] sm:$0xff]
  %v25 = vld [vmem:[%s1 + $0x58] sm:$0xff]
  %v26 = vld [vmem:[%s1 + $0x60] sm:$0xff]
  %v27 = vld [vmem:[%s1 + $0x68] sm:$0xff]
  %v28 = vld [vmem:[%s1 + $0x70] sm:$0xff]
  %v29 = vld [vmem:[%s1 + $0x78] sm:$0xff]
  %v30 = vld [vmem:[%s1 + $0x80] sm:$0xff]
  %v31 = vld [vmem:[%s1 + $0x88] sm:$0xff]
  %v32 = vld [vmem:[%s1 + $0x90] sm:$0xff]
  %v33 = vld [vmem:[%s1 + $0x98] sm:$0xff]
  %v34 = vld [vmem:[%s1 + $0xa0] sm:$0xff]
  %v35 = vld [vmem:[%s1 + $0xa8] sm:$0xff]
  %v36 = vld [vmem:[%s1 + $0xb0] sm:$0xff]
  %v37 = vld [vmem:[%s1 + $0xb8] sm:$0xff]
  %v40 = vunpack.c.l.b16 %v12
  %v41 = vunpack.c.h.b16 %v12
  %v42 = vunpack.c.l.b16 %v13
  %v43 = vunpack.c.h.b16 %v13
  %v44 = vpack.c.b16 %v42, %v40
  %v45 = vpack.c.b16 %v43, %v41
  %v71 = vunpack.c.l.b16 %v14
  %v72 = vunpack.c.h.b16 %v14
  %v73 = vunpack.c.l.b16 %v15
  %v74 = vunpack.c.h.b16 %v15
  %v75 = vunpack.c.l.b16 %v16
  %v76 = vunpack.c.h.b16 %v16
  %v77 = vunpack.c.l.b16 %v17
  %v78 = vunpack.c.h.b16 %v17
  %v79 = vunpack.c.l.b16 %v18
  %v80 = vunpack.c.h.b16 %v18
  %v81 = vunpack.c.l.b16 %v19
  %v82 = vunpack.c.h.b16 %v19
  %v83 = vunpack.c.l.b16 %v20
  %v84 = vunpack.c.h.b16 %v20
  %v85 = vunpack.c.l.b16 %v21
  %v86 = vunpack.c.h.b16 %v21
  %v87 = vunpack.c.l.b16 %v22
  %v88 = vunpack.c.h.b16 %v22
  %v89 = vunpack.c.l.b16 %v23
  %v90 = vunpack.c.h.b16 %v23
  %v91 = vunpack.c.l.b16 %v24
  %v92 = vunpack.c.h.b16 %v24
  %v93 = vunpack.c.l.b16 %v25
  %v94 = vunpack.c.h.b16 %v25
  %v95 = vunpack.c.l.b16 %v26
  %v96 = vunpack.c.h.b16 %v26
  %v97 = vunpack.c.l.b16 %v27
  %v98 = vunpack.c.h.b16 %v27
  %v99 = vunpack.c.l.b16 %v28
  %v100 = vunpack.c.h.b16 %v28
  %v101 = vunpack.c.l.b16 %v29
  %v102 = vunpack.c.h.b16 %v29
  %v103 = vunpack.c.l.b16 %v30
  %v104 = vunpack.c.h.b16 %v30
  %v105 = vunpack.c.l.b16 %v31
  %v106 = vunpack.c.h.b16 %v31
  %v107 = vunpack.c.l.b16 %v32
  %v108 = vunpack.c.h.b16 %v32
  %v109 = vunpack.c.l.b16 %v33
  %v110 = vunpack.c.h.b16 %v33
  %v111 = vunpack.c.l.b16 %v34
  %v112 = vunpack.c.h.b16 %v34
  %v113 = vunpack.c.l.b16 %v35
  %v114 = vunpack.c.h.b16 %v35
  %v115 = vunpack.c.l.b16 %v36
  %v116 = vunpack.c.h.b16 %v36
  %v117 = vunpack.c.l.b16 %v37
  %v118 = vunpack.c.h.b16 %v37
  %v119 = vpack.c.b16 %v73, %v71
  %v120 = vpack.c.b16 %v74, %v72
  %v121 = vpack.c.b16 %v77, %v75
  %v122 = vpack.c.b16 %v78, %v76
  %v123 = vpack.c.b16 %v81, %v79
  %v124 = vpack.c.b16 %v82, %v80
  %v125 = vpack.c.b16 %v85, %v83
  %v126 = vpack.c.b16 %v86, %v84
  %v127 = vpack.c.b16 %v89, %v87
  %v128 = vpack.c.b16 %v90, %v88
  %v129 = vpack.c.b16 %v93, %v91
  %v130 = vpack.c.b16 %v94, %v92
  %v131 = vpack.c.b16 %v97, %v95
  %v132 = vpack.c.b16 %v98, %v96
  %v133 = vpack.c.b16 %v101, %v99
  %v134 = vpack.c.b16 %v102, %v100
  %v135 = vpack.c.b16 %v105, %v103
  %v136 = vpack.c.b16 %v106, %v104
  %v137 = vpack.c.b16 %v109, %v107
  %v138 = vpack.c.b16 %v110, %v108
  %v139 = vpack.c.b16 %v113, %v111
  %v140 = vpack.c.b16 %v114, %v112
  %v141 = vpack.c.b16 %v117, %v115
  %v142 = vpack.c.b16 %v118, %v116
  %vm167 = vcmask 523264
  %v169 = vsel %vm167, %v45, 0
  %171 = vmatpush.bf16.msra.mxu0 %v133
  %172 = vmatpush.bf16.msra.mxu0 %v131
  %173 = vmatpush.bf16.msra.mxu0 %v129
  %174 = vmatpush.bf16.msra.mxu0 %v127
  %175 = vmatpush.bf16.msra.mxu0 %v125
  %176 = vmatpush.bf16.msra.mxu0 %v123
  %177 = vmatpush.bf16.msra.mxu0 %v121
  %178 = vmatpush.bf16.msra.mxu0 %v119
  %179 = vmatmul.bf16.gmra.mxu0 %v44
  %v180 = vpop.f32.mrf.mxu0
  %v181 = vadd.f32 0.0, %v180
  %v182 = vpop.f32.mrf.mxu0
  %v183 = vadd.f32 0.0, %v182
  %184 = vdwg.mxu0
  %185 = vmatpush.bf16.msra.mxu0 0
  %186 = vmatpush.bf16.msra.mxu0 0
  %187 = vmatpush.bf16.msra.mxu0 0
  %188 = vmatpush.bf16.msra.mxu0 0
  %189 = vmatpush.bf16.msra.mxu0 %v141
  %190 = vmatpush.bf16.msra.mxu0 %v139
  %191 = vmatpush.bf16.msra.mxu0 %v137
  %192 = vmatpush.bf16.msra.mxu0 %v135
  %193 = vmatmul.bf16.gmra.mxu0 %v169
  %v194 = vpop.f32.mrf.mxu0
  %v195 = vadd.f32 %v181, %v194
  %v196 = vpop.f32.mrf.mxu0
  %v197 = vadd.f32 %v183, %v196
  %198 = vdwg.mxu0
  %199 = vmatpush.bf16.msra.mxu0 %v134
  %200 = vmatpush.bf16.msra.mxu0 %v132
  %201 = vmatpush.bf16.msra.mxu0 %v130
  %202 = vmatpush.bf16.msra.mxu0 %v128
  %203 = vmatpush.bf16.msra.mxu0 %v126
  %204 = vmatpush.bf16.msra.mxu0 %v124
  %205 = vmatpush.bf16.msra.mxu0 %v122
  %206 = vmatpush.bf16.msra.mxu0 %v120
  %207 = vmatmul.bf16.gmra.mxu0 %v44
  %v208 = vpop.f32.mrf.mxu0
  %v209 = vadd.f32 0.0, %v208
  %v210 = vpop.f32.mrf.mxu0
  %v211 = vadd.f32 0.0, %v210
  %212 = vdwg.mxu0
  %213 = vmatpush.bf16.msra.mxu0 0
  %214 = vmatpush.bf16.msra.mxu0 0
  %215 = vmatpush.bf16.msra.mxu0 0
  %216 = vmatpush.bf16.msra.mxu0 0
  %217 = vmatpush.bf16.msra.mxu0 %v142
  %218 = vmatpush.bf16.msra.mxu0 %v140
  %219 = vmatpush.bf16.msra.mxu0 %v138
  %220 = vmatpush.bf16.msra.mxu0 %v136
  %221 = vmatmul.bf16.gmra.mxu0 %v169
  %v222 = vpop.f32.mrf.mxu0
  %v223 = vadd.f32 %v209, %v222
  %v224 = vpop.f32.mrf.mxu0
  %v225 = vadd.f32 %v211, %v224
  %226 = vdwg.mxu0
  %v227 = vmax.f32 %v195, 0.0
  %v228 = vmax.f32 %v223, 0.0
  %v229 = vmax.f32 %v197, 0.0
  %v230 = vmax.f32 %v225, 0.0
  %v231 = vpack.c.bf16 %v228, %v227
  %v232 = vpack.c.bf16 %v230, %v229
  %vm233 = vcmask 1043456
  %vm234 = vcmask 523268
  %vm235 = vmor %vm234, %vm233
  %236 = vst.msk [vmem:[%s2] sm:$0xff] %vm235, %v231
  %237 = vst.msk [vmem:[%s2 + $0x8] sm:$0xff] %vm235, %v232
  // Predicated region
  $region10: #{inception2_forward.13} parent=0 // pred_check
    _
  $region11: #{inception2_forward.13} parent=0 // pred_check_branch
    %239 = sbr.rel (0) target = $region13
  $region12: #{inception2_forward.13} parent=0 // pred_region
    _
  $region13: #{inception2_forward.13} parent=0 // pred_fallthru
    _
  // Predicated region
  $region14: #{inception2_forward.13} parent=0 // pred_check
    _
  $region15: #{inception2_forward.13} parent=0 // pred_check_branch
    %241 = sbr.rel (0) target = $region17
  $region16: #{inception2_forward.13} parent=0 // pred_region
    _
  $region17: #{inception2_forward.13} parent=0 // pred_fallthru
    _

// kernel: inception2_forward.14
$region0: #{inception2_forward.14}
  #allocation0 [shape = 'u32[]', space=smem, size = 0x4, offset = 0x4, fixed_abs, tag = 'smem constant byte address 0x4 - core index']
  #allocation1 [shape = 'u32[72,128]{1,0:T(1,128)}', space=vmem, size = 0x9000, scoped, tag = 'internal scratch']
  %s0 = inlined_call_operand.vmem [shape: bf16[2,40,192], index: 0, kind: input, shape index: {}]
  %s1 = inlined_call_operand.vmem [shape: bf16[1152,160], index: 1, kind: input, shape index: {}]
  %s2 = inlined_call_operand.vmem [shape: bf16[2,16,128], index: 2, kind: output, shape index: {0}]
  %s3 = inlined_call_operand.vmem [shape: bf16[2,16,96], index: 3, kind: output, shape index: {1}]
  %4 = xla_tuple %s2, %s3
  %s5 = sld [smem:[#allocation0]]
  $region49: #{inception2_forward.14} parent=0
    _
  %s7 = ssub.s32 1, %s5
  %s8 = scalar_select 0, %s7, %s5
  loop: start=0, step=1, limit=4
  $region2: #{inception2_forward.14} parent=0 // loop_pre_header
    _
  $region3: #{inception2_forward.14} parent=0 // loop_header
    %s10 = sphi 0, %s14
    %p11 = scmp.ge.s32.totalorder %s10, 4
    %s20 = sphi 0, %s22
    %s23 = sphi 0, %s20
    %s24 = sphi 0, %s23
    %s40 = sphi 0, %s24
    %s44 = sphi 0, %s44
    %s46 = sphi 0, %s44
    %s47 = sphi 0, %s46
    %s61 = sphi 0, %s47
    %s67 = sphi 0, %s69
    %s70 = sphi 0, %s67
    %s71 = sphi 0, %s70
    %s87 = sphi 0, %s71
    %s93 = sphi 0, %s95
    %s96 = sphi 0, %s93
    %s97 = sphi 0, %s96
    %s113 = sphi 0, %s97
  $region4: #{inception2_forward.14} parent=0 // loop_header_branch
    %13 = sbr.rel (%p11) target = $region8
  $region5: #{inception2_forward.14} parent=0 // loop_body
    %s15 = ssub.s32 %s10, 1
    %s16 = ssub.s32 %s10, 2
    %s17 = sadd.s32 %s10, 1
    %s18 = ssub.s32 %s10, %s17
    %p19 = scmp.eq.s32.totalorder %s18, 0
    %s21 = sadd.s32 %s20, 1
    %s22 = scalar_select %p19, %s20, %s21
    %p25 = pneg %p19
    %p26 = scmp.eq.s32.totalorder %s10, 1
    %p27 = por %p25, %p26
    %p28 = scmp.ne.s32.totalorder %s20, %s23
    %p29 = scmp.eq.s32.totalorder %s10, 0
    %p30 = por %p28, %p29
    %p31 = scmp.ne.s32.totalorder %s20, %s23
    %p32 = scmp.eq.s32.totalorder %s15, 1
    %p33 = por %p31, %p32
    %p34 = scmp.ne.s32.totalorder %s23, %s24
    %p35 = scmp.eq.s32.totalorder %s15, 0
    %p36 = por %p34, %p35
    %p37 = scmp.ne.s32.totalorder %s23, %s24
    %p38 = scmp.eq.s32.totalorder %s16, 1
    %p39 = por %p37, %p38
    %p41 = scmp.ne.s32.totalorder %s24, %s40
    %p42 = scmp.eq.s32.totalorder %s16, 0
    %p43 = por %p41, %p42
    %s45 = sadd.s32 %s44, 1
    %p48 = scmp.eq.s32.totalorder %s10, 1
    %p49 = scmp.ne.s32.totalorder %s44, %s46
    %p50 = scmp.eq.s32.totalorder %s10, 0
    %p51 = por %p49, %p50
    %p52 = scmp.ne.s32.totalorder %s44, %s46
    %p53 = scmp.eq.s32.totalorder %s15, 1
    %p54 = por %p52, %p53
    %p55 = scmp.ne.s32.totalorder %s46, %s47
    %p56 = scmp.eq.s32.totalorder %s15, 0
    %p57 = por %p55, %p56
    %p58 = scmp.ne.s32.totalorder %s46, %s47
    %p59 = scmp.eq.s32.totalorder %s16, 1
    %p60 = por %p58, %p59
    %p62 = scmp.ne.s32.totalorder %s47, %s61
    %p63 = scmp.eq.s32.totalorder %s16, 0
    %p64 = por %p62, %p63
    %s65 = ssub.s32 %s10, %s17
    %p66 = scmp.eq.s32.totalorder %s65, 0
    %s68 = sadd.s32 %s67, 1
    %s69 = scalar_select %p66, %s67, %s68
    %p72 = pneg %p66
    %p73 = scmp.eq.s32.totalorder %s10, 1
    %p74 = por %p72, %p73
    %p75 = scmp.ne.s32.totalorder %s67, %s70
    %p76 = scmp.eq.s32.totalorder %s10, 0
    %p77 = por %p75, %p76
    %p78 = scmp.ne.s32.totalorder %s67, %s70
    %p79 = scmp.eq.s32.totalorder %s15, 1
    %p80 = por %p78, %p79
    %p81 = scmp.ne.s32.totalorder %s70, %s71
    %p82 = scmp.eq.s32.totalorder %s15, 0
    %p83 = por %p81, %p82
    %p84 = scmp.ne.s32.totalorder %s70, %s71
    %p85 = scmp.eq.s32.totalorder %s16, 1
    %p86 = por %p84, %p85
    %p88 = scmp.ne.s32.totalorder %s71, %s87
    %p89 = scmp.eq.s32.totalorder %s16, 0
    %p90 = por %p88, %p89
    %s91 = ssub.s32 %s10, %s17
    %p92 = scmp.eq.s32.totalorder %s91, 0
    %s94 = sadd.s32 %s93, 1
    %s95 = scalar_select %p92, %s93, %s94
    %p98 = pneg %p92
    %p99 = scmp.eq.s32.totalorder %s10, 1
    %p100 = por %p98, %p99
    %p101 = scmp.ne.s32.totalorder %s93, %s96
    %p102 = scmp.eq.s32.totalorder %s10, 0
    %p103 = por %p101, %p102
    %p104 = scmp.ne.s32.totalorder %s93, %s96
    %p105 = scmp.eq.s32.totalorder %s15, 1
    %p106 = por %p104, %p105
    %p107 = scmp.ne.s32.totalorder %s96, %s97
    %p108 = scmp.eq.s32.totalorder %s15, 0
    %p109 = por %p107, %p108
    %p110 = scmp.ne.s32.totalorder %s96, %s97
    %p111 = scmp.eq.s32.totalorder %s16, 1
    %p112 = por %p110, %p111
    %p114 = scmp.ne.s32.totalorder %s97, %s113
    %p115 = scmp.eq.s32.totalorder %s16, 0
    %p116 = por %p114, %p115
    %p117 = scmp.le.s32.totalorder 1, %s10
    %p118 = scmp.lt.s32.totalorder %s10, 3
    %p119 = pnand %p117, %p118
    %p120 = pneg %p119
    // Predicated region
    $region9: #{inception2_forward.14} parent=5 // pred_check
      _
    $region10: #{inception2_forward.14} parent=5 // pred_check_branch
      %122 = sbr.rel (%p119) target = $region12
    $region11: #{inception2_forward.14} parent=5 // pred_region
      %s123 = ssub.s32 %s10, 1
      // Predicated region
      $region13: #{inception2_forward.14} parent=11 // pred_check
        %p124 = pneg %p57
      $region14: #{inception2_forward.14} parent=11 // pred_check_branch
        %126 = sbr.rel (%p124) target = $region16
      $region15: #{inception2_forward.14} parent=11 // pred_region
        _
      $region16: #{inception2_forward.14} parent=11 // pred_fallthru
        _
    $region12: #{inception2_forward.14} parent=5 // pred_fallthru
      _
    %p127 = scmp.lt.s32.totalorder %s10, 2
    // Predicated region
    $region17: #{inception2_forward.14} parent=5 // pred_check
      %p128 = pneg %p127
    $region18: #{inception2_forward.14} parent=5 // pred_check_branch
      %130 = sbr.rel (%p128) target = $region20
    $region19: #{inception2_forward.14} parent=5 // pred_region
      // Predicated region
      $region21: #{inception2_forward.14} parent=19 // pred_check
        %p131 = pneg %p30
      $region22: #{inception2_forward.14} parent=19 // pred_check_branch
        %133 = sbr.rel (%p131) target = $region24
      $region23: #{inception2_forward.14} parent=19 // pred_region
        %p134 = scmp.lt.s32.totalorder %s10, 1
        %s135 = scalar_select %p134, %s10, 1
        %s136 = smul.addr %s135, 10
        %s137 = smul.addr %s136, 4
        %s138 = scalar_lea.vmem %s0, %s137
      $region24: #{inception2_forward.14} parent=19 // pred_fallthru
        _
    $region20: #{inception2_forward.14} parent=5 // pred_fallthru
      _
    %p139 = scmp.le.s32.totalorder 1, %s10
    %p140 = scmp.lt.s32.totalorder %s10, 3
    %p141 = pnand %p139, %p140
    %p142 = pneg %p141
    // Predicated region
    $region25: #{inception2_forward.14} parent=5 // pred_check
      _
    $region26: #{inception2_forward.14} parent=5 // pred_check_branch
      %144 = sbr.rel (%p141) target = $region28
    $region27: #{inception2_forward.14} parent=5 // pred_region
      %s145 = ssub.s32 %s10, 1
      %p146 = scmp.lt.s32.totalorder %s15, 1
      %s147 = scalar_select %p146, %s15, 1
      %s148 = smul.addr %s147, 10
      %s149 = smul.addr %s148, 4
      %s150 = scalar_lea.vmem %s0, %s149
      %p151 = pneg %p36
      %p152 = pneg %p33
      %p153 = pneg %p57
      %p154 = pneg %p54
      %p155 = pneg %p83
      %p156 = pneg %p80
      %p157 = scmp.lt.s32.totalorder %s15, 1
      %s158 = scalar_select %p157, %s15, 1
      %s159 = smul.addr %s158, 2
      %s160 = smul.addr %s159, 4
      %s161 = scalar_lea.vmem %s2, %s160
      %p162 = pneg %p109
      %p163 = pneg %p106
      %p164 = scmp.lt.s32.totalorder %s15, 1
      %s165 = scalar_select %p164, %s15, 1
      %s166 = smul.addr %s165, 2
      %s167 = smul.addr %s166, 4
      %s168 = scalar_lea.vmem %s3, %s167
      %p169 = scmp.lt.s32.totalorder %s15, 1
      %s170 = scalar_select %p169, %s15, 1
      %s171 = smul.addr %s170, 10
      %s172 = smul.addr %s171, 4
      %s173 = scalar_lea.vmem %s0, %s172
      %p174 = scmp.lt.s32.totalorder %s15, 1
      %s175 = scalar_select %p174, %s15, 1
      %s176 = smul.addr %s175, 2
      %s177 = smul.addr %s176, 4
      %s178 = scalar_lea.vmem %s2, %s177
      %p179 = scmp.lt.s32.totalorder %s15, 1
      %s180 = scalar_select %p179, %s15, 1
      %s181 = smul.addr %s180, 2
      %s182 = smul.addr %s181, 4
      %s183 = scalar_lea.vmem %s3, %s182
      %v184 = vld [vmem:[%s173] sm:$0xff]
      %v185 = vld [vmem:[%s173 + $0x8] sm:$0xff]
      %v186 = vld [vmem:[%s173 + $0x10] sm:$0xff]
      %v187 = vld [vmem:[%s173 + $0x18] sm:$0xff]
      %v188 = vld [vmem:[%s173 + $0x20] sm:$0xff]
      %v189 = vld [vmem:[%s1] sm:$0xff]
      %v190 = vld [vmem:[%s1 + $0x8] sm:$0xff]
      %v191 = vld [vmem:[%s1 + $0x10] sm:$0xff]
      %v192 = vld [vmem:[%s1 + $0x18] sm:$0xff]
      %v193 = vld [vmem:[%s1 + $0x20] sm:$0xff]
      %v194 = vld [vmem:[%s1 + $0x28] sm:$0xff]
      %v195 = vld [vmem:[%s1 + $0x30] sm:$0xff]
      %v196 = vld [vmem:[%s1 + $0x38] sm:$0xff]
      %v197 = vld [vmem:[%s1 + $0x40] sm:$0xff]
      %v198 = vld [vmem:[%s1 + $0x48] sm:$0xff]
      %v199 = vld [vmem:[%s1 + $0x50] sm:$0xff]
      %v200 = vld [vmem:[%s1 + $0x58] sm:$0xff]
      %v201 = vld [vmem:[%s1 + $0x60] sm:$0xff]
      %v202 = vld [vmem:[%s1 + $0x68] sm:$0xff]
      %v203 = vld [vmem:[%s1 + $0x70] sm:$0xff]
      %v204 = vld [vmem:[%s1 + $0x78] sm:$0xff]
      %v205 = vld [vmem:[%s1 + $0x80] sm:$0xff]
      %v206 = vld [vmem:[%s1 + $0x88] sm:$0xff]
      %v207 = vld [vmem:[%s1 + $0x90] sm:$0xff]
      %v208 = vld [vmem:[%s1 + $0x98] sm:$0xff]
      %v209 = vld [vmem:[%s1 + $0xa0] sm:$0xff]
      %v210 = vld [vmem:[%s1 + $0xa8] sm:$0xff]
      %v211 = vld [vmem:[%s1 + $0xb0] sm:$0xff]
      %v212 = vld [vmem:[%s1 + $0xb8] sm:$0xff]
      %v213 = vld [vmem:[%s1 + $0xc0] sm:$0xff]
      %v214 = vld [vmem:[%s1 + $0xc8] sm:$0xff]
      %v215 = vld [vmem:[%s1 + $0xd0] sm:$0xff]
      %v216 = vld [vmem:[%s1 + $0xd8] sm:$0xff]
      %v217 = vld [vmem:[%s1 + $0xe0] sm:$0xff]
      %v218 = vld [vmem:[%s1 + $0xe8] sm:$0xff]
      %v219 = vld [vmem:[%s1 + $0xf0] sm:$0xff]
      %v220 = vld [vmem:[%s1 + $0xf8] sm:$0xff]
      %v224 = vunpack.c.l.b16 %v184
      %v225 = vunpack.c.h.b16 %v184
      %v226 = vunpack.c.l.b16 %v185
      %v227 = vunpack.c.h.b16 %v185
      %v228 = vunpack.c.l.b16 %v186
      %v229 = vunpack.c.h.b16 %v186
      %v230 = vpack.c.b16 %v226, %v224
      %v231 = vpack.c.b16 %v227, %v225
      %v232 = vpack.c.b16 %v228, %v228
      %v233 = vpack.c.b16 %v229, %v229
      %vm234 = vsmask.f32 7424
      %v236 = vshrl.u32 %v230, 16
      %v238 = vshll.u32 %v230, 16
      %v240 = vrot.slane %v238, 1
      %v241 = vor.u32 %v236, %v240
      %v243 = vshll.u32 %v232, 16
      %v245 = vrot.slane %v243, 1
      %v246 = vsel %vm234, %v241, %v245
      %v248 = vshrl.u32 %v231, 16
      %v250 = vshll.u32 %v231, 16
      %v252 = vrot.slane %v250, 1
      %v253 = vor.u32 %v248, %v252
      %v255 = vshll.u32 %v233, 16
      %v257 = vrot.slane %v255, 1
      %v258 = vsel %vm234, %v253, %v257
      %259 = vrot.lane.b32.xlu0 %v246, 64
      %v260 = vpop.permute.xlu0 %259
      %261 = vrot.lane.b32.xlu0 %v258, 64
      %v262 = vpop.permute.xlu0 %261
      %vm263 = vcmask 523264
      %v264 = vsel %vm263, %v260, %v262
      %v282 = vunpack.c.l.b16 %v205
      %v283 = vunpack.c.h.b16 %v205
      %v284 = vunpack.c.l.b16 %v206
      %v285 = vunpack.c.h.b16 %v206
      %v286 = vunpack.c.l.b16 %v207
      %v287 = vunpack.c.h.b16 %v207
      %v288 = vunpack.c.l.b16 %v208
      %v289 = vunpack.c.h.b16 %v208
      %v290 = vunpack.c.l.b16 %v209
      %v291 = vunpack.c.h.b16 %v209
      %v292 = vunpack.c.l.b16 %v210
      %v293 = vunpack.c.h.b16 %v210
      %v294 = vunpack.c.l.b16 %v211
      %v295 = vunpack.c.h.b16 %v211
      %v296 = vunpack.c.l.b16 %v212
      %v297 = vunpack.c.h.b16 %v212
      %v298 = vunpack.c.l.b16 %v213
      %v299 = vunpack.c.h.b16 %v213
      %v300 = vunpack.c.l.b16 %v214
      %v301 = vunpack.c.h.b16 %v214
      %v302 = vunpack.c.l.b16 %v215
      %v303 = vunpack.c.h.b16 %v215
      %v304 = vunpack.c.l.b16 %v216
      %v305 = vunpack.c.h.b16 %v216
      %v306 = vunpack.c.l.b16 %v217
      %v307 = vunpack.c.h.b16 %v217
      %v308 = vunpack.c.l.b16 %v218
      %v309 = vunpack.c.h.b16 %v218
      %v310 = vunpack.c.l.b16 %v219
      %v311 = vunpack.c.h.b16 %v219
      %v312 = vunpack.c.l.b16 %v220
      %v313 = vunpack.c.h.b16 %v220
      %v314 = vpack.c.b16 %v284, %v282
      %v315 = vpack.c.b16 %v285, %v283
      %v316 = vpack.c.b16 %v288, %v286
      %v317 = vpack.c.b16 %v289, %v287
      %v318 = vpack.c.b16 %v292, %v290
      %v319 = vpack.c.b16 %v293, %v291
      %v320 = vpack.c.b16 %v296, %v294
      %v321 = vpack.c.b16 %v297, %v295
      %v322 = vpack.c.b16 %v300, %v298
      %v323 = vpack.c.b16 %v301, %v299
      %v324 = vpack.c.b16 %v304, %v302
      %v325 = vpack.c.b16 %v305, %v303
      %v326 = vpack.c.b16 %v308, %v306
      %v327 = vpack.c.b16 %v309, %v307
      %v328 = vpack.c.b16 %v312, %v310
      %v329 = vpack.c.b16 %v313, %v311
      %346 = vmatpush.bf16.msra.mxu0 %v328
      %347 = vmatpush.bf16.msra.mxu0 %v326
      %348 = vmatpush.bf16.msra.mxu0 %v324
      %349 = vmatpush.bf16.msra.mxu0 %v322
      %350 = vmatpush.bf16.msra.mxu0 %v320
      %351 = vmatpush.bf16.msra.mxu0 %v318
      %352 = vmatpush.bf16.msra.mxu0 %v316
      %353 = vmatpush.bf16.msra.mxu0 %v314
      %354 = vmatmul.bf16.gmra.mxu0 %v264
      %v355 = vpop.f32.mrf.mxu0
      %v356 = vadd.f32 0.0, %v355
      %v357 = vpop.f32.mrf.mxu0
      %v358 = vadd.f32 0.0, %v357
      %359 = vdwg.mxu0
      %360 = vmatpush.bf16.msra.mxu0 %v329
      %361 = vmatpush.bf16.msra.mxu0 %v327
      %362 = vmatpush.bf16.msra.mxu0 %v325
      %363 = vmatpush.bf16.msra.mxu0 %v323
      %364 = vmatpush.bf16.msra.mxu0 %v321
      %365 = vmatpush.bf16.msra.mxu0 %v319
      %366 = vmatpush.bf16.msra.mxu0 %v317
      %367 = vmatpush.bf16.msra.mxu0 %v315
      %368 = vmatmul.bf16.gmra.mxu0 %v264
      %v369 = vpop.f32.mrf.mxu0
      %v370 = vadd.f32 0.0, %v369
      %v371 = vpop.f32.mrf.mxu0
      %v372 = vadd.f32 0.0, %v371
      %373 = vdwg.mxu0
      %374 = vrot.lane.b32.xlu0 %v230, 64
      %v375 = vpop.permute.xlu0 %374
      %376 = vrot.lane.b32.xlu0 %v231, 64
      %v377 = vpop.permute.xlu0 %376
      %v378 = vsel %vm263, %v375, %v377
      %v396 = vunpack.c.l.b16 %v189
      %v397 = vunpack.c.h.b16 %v189
      %v398 = vunpack.c.l.b16 %v190
      %v399 = vunpack.c.h.b16 %v190
      %v400 = vunpack.c.l.b16 %v191
      %v401 = vunpack.c.h.b16 %v191
      %v402 = vunpack.c.l.b16 %v192
      %v403 = vunpack.c.h.b16 %v192
      %v404 = vunpack.c.l.b16 %v193
      %v405 = vunpack.c.h.b16 %v193
      %v406 = vunpack.c.l.b16 %v194
      %v407 = vunpack.c.h.b16 %v194
      %v408 = vunpack.c.l.b16 %v195
      %v409 = vunpack.c.h.b16 %v195
      %v410 = vunpack.c.l.b16 %v196
      %v411 = vunpack.c.h.b16 %v196
      %v412 = vunpack.c.l.b16 %v197
      %v413 = vunpack.c.h.b16 %v197
      %v414 = vunpack.c.l.b16 %v198
      %v415 = vunpack.c.h.b16 %v198
      %v416 = vunpack.c.l.b16 %v199
      %v417 = vunpack.c.h.b16 %v199
      %v418 = vunpack.c.l.b16 %v200
      %v419 = vunpack.c.h.b16 %v200
      %v420 = vunpack.c.l.b16 %v201
      %v421 = vunpack.c.h.b16 %v201
      %v422 = vunpack.c.l.b16 %v202
      %v423 = vunpack.c.h.b16 %v202
      %v424 = vunpack.c.l.b16 %v203
      %v425 = vunpack.c.h.b16 %v203
      %v426 = vunpack.c.l.b16 %v204
      %v427 = vunpack.c.h.b16 %v204
      %v428 = vpack.c.b16 %v398, %v396
      %v429 = vpack.c.b16 %v399, %v397
      %v430 = vpack.c.b16 %v402, %v400
      %v431 = vpack.c.b16 %v403, %v401
      %v432 = vpack.c.b16 %v406, %v404
      %v433 = vpack.c.b16 %v407, %v405
      %v434 = vpack.c.b16 %v410, %v408
      %v435 = vpack.c.b16 %v411, %v409
      %v436 = vpack.c.b16 %v414, %v412
      %v437 = vpack.c.b16 %v415, %v413
      %v438 = vpack.c.b16 %v418, %v416
      %v439 = vpack.c.b16 %v419, %v417
      %v440 = vpack.c.b16 %v422, %v420
      %v441 = vpack.c.b16 %v423, %v421
      %v442 = vpack.c.b16 %v426, %v424
      %v443 = vpack.c.b16 %v427, %v425
      %460 = vmatpush.bf16.msra.mxu0 %v442
      %461 = vmatpush.bf16.msra.mxu0 %v440
      %462 = vmatpush.bf16.msra.mxu0 %v438
      %463 = vmatpush.bf16.msra.mxu0 %v436
      %464 = vmatpush.bf16.msra.mxu0 %v434
      %465 = vmatpush.bf16.msra.mxu0 %v432
      %466 = vmatpush.bf16.msra.mxu0 %v430
      %467 = vmatpush.bf16.msra.mxu0 %v428
      %468 = vmatmul.bf16.gmra.mxu0 %v378
      %v469 = vpop.f32.mrf.mxu0
      %v470 = vadd.f32 %v356, %v469
      %v471 = vpop.f32.mrf.mxu0
      %v472 = vadd.f32 %v358, %v471
      %473 = vdwg.mxu0
      %474 = vmatpush.bf16.msra.mxu0 %v443
      %475 = vmatpush.bf16.msra.mxu0 %v441
      %476 = vmatpush.bf16.msra.mxu0 %v439
      %477 = vmatpush.bf16.msra.mxu0 %v437
      %478 = vmatpush.bf16.msra.mxu0 %v435
      %479 = vmatpush.bf16.msra.mxu0 %v433
      %480 = vmatpush.bf16.msra.mxu0 %v431
      %481 = vmatpush.bf16.msra.mxu0 %v429
      %482 = vmatmul.bf16.gmra.mxu0 %v378
      %v483 = vpop.f32.mrf.mxu0
      %v484 = vadd.f32 %v370, %v483
      %v485 = vpop.f32.mrf.mxu0
      %v486 = vadd.f32 %v372, %v485
      %487 = vdwg.mxu0
      %v488 = vld [vmem:[%s1 + $0x100] sm:$0xff]
      %v489 = vld [vmem:[%s1 + $0x108] sm:$0xff]
      %v490 = vld [vmem:[%s1 + $0x110] sm:$0xff]
      %v491 = vld [vmem:[%s1 + $0x118] sm:$0xff]
      %v492 = vld [vmem:[%s1 + $0x120] sm:$0xff]
      %v493 = vld [vmem:[%s1 + $0x128] sm:$0xff]
      %v494 = vld [vmem:[%s1 + $0x130] sm:$0xff]
      %v495 = vld [vmem:[%s1 + $0x138] sm:$0xff]
      %v496 = vld [vmem:[%s1 + $0x140] sm:$0xff]
      %v497 = vld [vmem:[%s1 + $0x148] sm:$0xff]
      %v498 = vld [vmem:[%s1 + $0x150] sm:$0xff]
      %v499 = vld [vmem:[%s1 + $0x158] sm:$0xff]
      %v500 = vld [vmem:[%s1 + $0x160] sm:$0xff]
      %v501 = vld [vmem:[%s1 + $0x168] sm:$0xff]
      %v502 = vld [vmem:[%s1 + $0x170] sm:$0xff]
      %v503 = vld [vmem:[%s1 + $0x178] sm:$0xff]
      %vm504 = vcmask 1046528
      %v505 = vrot.slane %v230, 1
      %v506 = vrot.slane %v232, 1
      %v507 = vsel %vm504, %v505, %v506
      %v508 = vrot.slane %v231, 1
      %v509 = vrot.slane %v233, 1
      %v510 = vsel %vm504, %v508, %v509
      %511 = vrot.lane.b32.xlu0 %v507, 64
      %v512 = vpop.permute.xlu0 %511
      %513 = vrot.lane.b32.xlu0 %v510, 64
      %v514 = vpop.permute.xlu0 %513
      %v515 = vsel %vm263, %v512, %v514
      %v533 = vunpack.c.l.b16 %v488
      %v534 = vunpack.c.h.b16 %v488
      %v535 = vunpack.c.l.b16 %v489
      %v536 = vunpack.c.h.b16 %v489
      %v537 = vunpack.c.l.b16 %v490
      %v538 = vunpack.c.h.b16 %v490
      %v539 = vunpack.c.l.b16 %v491
      %v540 = vunpack.c.h.b16 %v491
      %v541 = vunpack.c.l.b16 %v492
      %v542 = vunpack.c.h.b16 %v492
      %v543 = vunpack.c.l.b16 %v493
      %v544 = vunpack.c.h.b16 %v493
      %v545 = vunpack.c.l.b16 %v494
      %v546 = vunpack.c.h.b16 %v494
      %v547 = vunpack.c.l.b16 %v495
      %v548 = vunpack.c.h.b16 %v495
      %v549 = vunpack.c.l.b16 %v496
      %v550 = vunpack.c.h.b16 %v496
      %v551 = vunpack.c.l.b16 %v497
      %v552 = vunpack.c.h.b16 %v497
      %v553 = vunpack.c.l.b16 %v498
      %v554 = vunpack.c.h.b16 %v498
      %v555 = vunpack.c.l.b16 %v499
      %v556 = vunpack.c.h.b16 %v499
      %v557 = vunpack.c.l.b16 %v500
      %v558 = vunpack.c.h.b16 %v500
      %v559 = vunpack.c.l.b16 %v501
      %v560 = vunpack.c.h.b16 %v501
      %v561 = vunpack.c.l.b16 %v502
      %v562 = vunpack.c.h.b16 %v502
      %v563 = vunpack.c.l.b16 %v503
      %v564 = vunpack.c.h.b16 %v503
      %v565 = vpack.c.b16 %v535, %v533
      %v566 = vpack.c.b16 %v536, %v534
      %v567 = vpack.c.b16 %v539, %v537
      %v568 = vpack.c.b16 %v540, %v538
      %v569 = vpack.c.b16 %v543, %v541
      %v570 = vpack.c.b16 %v544, %v542
      %v571 = vpack.c.b16 %v547, %v545
      %v572 = vpack.c.b16 %v548, %v546
      %v573 = vpack.c.b16 %v551, %v549
      %v574 = vpack.c.b16 %v552, %v550
      %v575 = vpack.c.b16 %v555, %v553
      %v576 = vpack.c.b16 %v556, %v554
      %v577 = vpack.c.b16 %v559, %v557
      %v578 = vpack.c.b16 %v560, %v558
      %v579 = vpack.c.b16 %v563, %v561
      %v580 = vpack.c.b16 %v564, %v562
      %597 = vmatpush.bf16.msra.mxu0 %v579
      %598 = vmatpush.bf16.msra.mxu0 %v577
      %599 = vmatpush.bf16.msra.mxu0 %v575
      %600 = vmatpush.bf16.msra.mxu0 %v573
      %601 = vmatpush.bf16.msra.mxu0 %v571
      %602 = vmatpush.bf16.msra.mxu0 %v569
      %603 = vmatpush.bf16.msra.mxu0 %v567
      %604 = vmatpush.bf16.msra.mxu0 %v565
      %605 = vmatmul.bf16.gmra.mxu0 %v515
      %v606 = vpop.f32.mrf.mxu0
      %v607 = vadd.f32 0.0, %v606
      %v608 = vpop.f32.mrf.mxu0
      %v609 = vadd.f32 0.0, %v608
      %610 = vdwg.mxu0
      %611 = vmatpush.bf16.msra.mxu0 %v580
      %612 = vmatpush.bf16.msra.mxu0 %v578
      %613 = vmatpush.bf16.msra.mxu0 %v576
      %614 = vmatpush.bf16.msra.mxu0 %v574
      %615 = vmatpush.bf16.msra.mxu0 %v572
      %616 = vmatpush.bf16.msra.mxu0 %v570
      %617 = vmatpush.bf16.msra.mxu0 %v568
      %618 = vmatpush.bf16.msra.mxu0 %v566
      %619 = vmatmul.bf16.gmra.mxu0 %v515
      %v620 = vpop.f32.mrf.mxu0
      %v621 = vadd.f32 0.0, %v620
      %v622 = vpop.f32.mrf.mxu0
      %v623 = vadd.f32 0.0, %v622
      %624 = vdwg.mxu0
      %v625 = vadd.f32 %v470, %v607
      %v626 = vadd.f32 %v484, %v621
      %v627 = vadd.f32 %v472, %v609
      %v628 = vadd.f32 %v486, %v623
      %v629 = vld [vmem:[%s1 + $0x180] sm:$0xff]
      %v630 = vld [vmem:[%s1 + $0x188] sm:$0xff]
      %v631 = vld [vmem:[%s1 + $0x190] sm:$0xff]
      %v632 = vld [vmem:[%s1 + $0x198] sm:$0xff]
      %v633 = vld [vmem:[%s1 + $0x1a0] sm:$0xff]
      %v634 = vld [vmem:[%s1 + $0x1a8] sm:$0xff]
      %v635 = vld [vmem:[%s1 + $0x1b0] sm:$0xff]
      %v636 = vld [vmem:[%s1 + $0x1b8] sm:$0xff]
      %v637 = vld [vmem:[%s1 + $0x1c0] sm:$0xff]
      %v638 = vld [vmem:[%s1 + $0x1c8] sm:$0xff]
      %v639 = vld [vmem:[%s1 + $0x1d0] sm:$0xff]
      %v640 = vld [vmem:[%s1 + $0x1d8] sm:$0xff]
      %v641 = vld [vmem:[%s1 + $0x1e0] sm:$0xff]
      %v642 = vld [vmem:[%s1 + $0x1e8] sm:$0xff]
      %v643 = vld [vmem:[%s1 + $0x1f0] sm:$0xff]
      %v644 = vld [vmem:[%s1 + $0x1f8] sm:$0xff]
      %v645 = vpack.c.b16 %v228, %v226
      %v646 = vpack.c.b16 %v229, %v227
      %647 = vrot.lane.b32.xlu0 %v645, 64
      %v648 = vpop.permute.xlu0 %647
      %649 = vrot.lane.b32.xlu0 %v646, 64
      %v650 = vpop.permute.xlu0 %649
      %v651 = vsel %vm263, %v648, %v650
      %v669 = vunpack.c.l.b16 %v629
      %v670 = vunpack.c.h.b16 %v629
      %v671 = vunpack.c.l.b16 %v630
      %v672 = vunpack.c.h.b16 %v630
      %v673 = vunpack.c.l.b16 %v631
      %v674 = vunpack.c.h.b16 %v631
      %v675 = vunpack.c.l.b16 %v632
      %v676 = vunpack.c.h.b16 %v632
      %v677 = vunpack.c.l.b16 %v633
      %v678 = vunpack.c.h.b16 %v633
      %v679 = vunpack.c.l.b16 %v634
      %v680 = vunpack.c.h.b16 %v634
      %v681 = vunpack.c.l.b16 %v635
      %v682 = vunpack.c.h.b16 %v635
      %v683 = vunpack.c.l.b16 %v636
      %v684 = vunpack.c.h.b16 %v636
      %v685 = vunpack.c.l.b16 %v637
      %v686 = vunpack.c.h.b16 %v637
      %v687 = vunpack.c.l.b16 %v638
      %v688 = vunpack.c.h.b16 %v638
      %v689 = vunpack.c.l.b16 %v639
      %v690 = vunpack.c.h.b16 %v639
      %v691 = vunpack.c.l.b16 %v640
      %v692 = vunpack.c.h.b16 %v640
      %v693 = vunpack.c.l.b16 %v641
      %v694 = vunpack.c.h.b16 %v641
      %v695 = vunpack.c.l.b16 %v642
      %v696 = vunpack.c.h.b16 %v642
      %v697 = vunpack.c.l.b16 %v643
      %v698 = vunpack.c.h.b16 %v643
      %v699 = vunpack.c.l.b16 %v644
      %v700 = vunpack.c.h.b16 %v644
      %v701 = vpack.c.b16 %v671, %v669
      %v702 = vpack.c.b16 %v672, %v670
      %v703 = vpack.c.b16 %v675, %v673
      %v704 = vpack.c.b16 %v676, %v674
      %v705 = vpack.c.b16 %v679, %v677
      %v706 = vpack.c.b16 %v680, %v678
      %v707 = vpack.c.b16 %v683, %v681
      %v708 = vpack.c.b16 %v684, %v682
      %v709 = vpack.c.b16 %v687, %v685
      %v710 = vpack.c.b16 %v688, %v686
      %v711 = vpack.c.b16 %v691, %v689
      %v712 = vpack.c.b16 %v692, %v690
      %v713 = vpack.c.b16 %v695, %v693
      %v714 = vpack.c.b16 %v696, %v694
      %v715 = vpack.c.b16 %v699, %v697
      %v716 = vpack.c.b16 %v700, %v698
      %733 = vmatpush.bf16.msra.mxu0 %v715
      %734 = vmatpush.bf16.msra.mxu0 %v713
      %735 = vmatpush.bf16.msra.mxu0 %v711
      %736 = vmatpush.bf16.msra.mxu0 %v709
      %737 = vmatpush.bf16.msra.mxu0 %v707
      %738 = vmatpush.bf16.msra.mxu0 %v705
      %739 = vmatpush.bf16.msra.mxu0 %v703
      %740 = vmatpush.bf16.msra.mxu0 %v701
      %741 = vmatmul.bf16.gmra.mxu0 %v651
      %v742 = vpop.f32.mrf.mxu0
      %v743 = vadd.f32 0.0, %v742
      %v744 = vpop.f32.mrf.mxu0
      %v745 = vadd.f32 0.0, %v744
      %746 = vdwg.mxu0
      %747 = vmatpush.bf16.msra.mxu0 %v716
      %748 = vmatpush.bf16.msra.mxu0 %v714
      %749 = vmatpush.bf16.msra.mxu0 %v712
      %750 = vmatpush.bf16.msra.mxu0 %v710
      %751 = vmatpush.bf16.msra.mxu0 %v708
      %752 = vmatpush.bf16.msra.mxu0 %v706
      %753 = vmatpush.bf16.msra.mxu0 %v704
      %754 = vmatpush.bf16.msra.mxu0 %v702
      %755 = vmatmul.bf16.gmra.mxu0 %v651
      %v756 = vpop.f32.mrf.mxu0
      %v757 = vadd.f32 0.0, %v756
      %v758 = vpop.f32.mrf.mxu0
      %v759 = vadd.f32 0.0, %v758
      %760 = vdwg.mxu0
      %v761 = vadd.f32 %v625, %v743
      %v762 = vadd.f32 %v626, %v757
      %v763 = vadd.f32 %v627, %v745
      %v764 = vadd.f32 %v628, %v759
      %v765 = vld [vmem:[%s1 + $0x200] sm:$0xff]
      %v766 = vld [vmem:[%s1 + $0x208] sm:$0xff]
      %v767 = vld [vmem:[%s1 + $0x210] sm:$0xff]
      %v768 = vld [vmem:[%s1 + $0x218] sm:$0xff]
      %v769 = vld [vmem:[%s1 + $0x220] sm:$0xff]
      %v770 = vld [vmem:[%s1 + $0x228] sm:$0xff]
      %v771 = vld [vmem:[%s1 + $0x230] sm:$0xff]
      %v772 = vld [vmem:[%s1 + $0x238] sm:$0xff]
      %v773 = vld [vmem:[%s1 + $0x240] sm:$0xff]
      %v774 = vld [vmem:[%s1 + $0x248] sm:$0xff]
      %v775 = vld [vmem:[%s1 + $0x250] sm:$0xff]
      %v776 = vld [vmem:[%s1 + $0x258] sm:$0xff]
      %v777 = vld [vmem:[%s1 + $0x260] sm:$0xff]
      %v778 = vld [vmem:[%s1 + $0x268] sm:$0xff]
      %v779 = vld [vmem:[%s1 + $0x270] sm:$0xff]
      %v780 = vld [vmem:[%s1 + $0x278] sm:$0xff]
      %v782 = vunpack.c.l.b16 %v187
      %v783 = vunpack.c.h.b16 %v187
      %v784 = vpack.c.b16 %v782, %v782
      %v785 = vpack.c.b16 %v783, %v783
      %v787 = vshrl.u32 %v645, 16
      %v789 = vshll.u32 %v645, 16
      %v791 = vrot.slane %v789, 1
      %v792 = vor.u32 %v787, %v791
      %v794 = vshll.u32 %v784, 16
      %v796 = vrot.slane %v794, 1
      %v797 = vsel %vm234, %v792, %v796
      %v799 = vshrl.u32 %v646, 16
      %v801 = vshll.u32 %v646, 16
      %v803 = vrot.slane %v801, 1
      %v804 = vor.u32 %v799, %v803
      %v806 = vshll.u32 %v785, 16
      %v808 = vrot.slane %v806, 1
      %v809 = vsel %vm234, %v804, %v808
      %810 = vrot.lane.b32.xlu0 %v797, 64
      %v811 = vpop.permute.xlu0 %810
      %812 = vrot.lane.b32.xlu0 %v809, 64
      %v813 = vpop.permute.xlu0 %812
      %v814 = vsel %vm263, %v811, %v813
      %v832 = vunpack.c.l.b16 %v765
      %v833 = vunpack.c.h.b16 %v765
      %v834 = vunpack.c.l.b16 %v766
      %v835 = vunpack.c.h.b16 %v766
      %v836 = vunpack.c.l.b16 %v767
      %v837 = vunpack.c.h.b16 %v767
      %v838 = vunpack.c.l.b16 %v768
      %v839 = vunpack.c.h.b16 %v768
      %v840 = vunpack.c.l.b16 %v769
      %v841 = vunpack.c.h.b16 %v769
      %v842 = vunpack.c.l.b16 %v770
      %v843 = vunpack.c.h.b16 %v770
      %v844 = vunpack.c.l.b16 %v771
      %v845 = vunpack.c.h.b16 %v771
      %v846 = vunpack.c.l.b16 %v772
      %v847 = vunpack.c.h.b16 %v772
      %v848 = vunpack.c.l.b16 %v773
      %v849 = vunpack.c.h.b16 %v773
      %v850 = vunpack.c.l.b16 %v774
      %v851 = vunpack.c.h.b16 %v774
      %v852 = vunpack.c.l.b16 %v775
      %v853 = vunpack.c.h.b16 %v775
      %v854 = vunpack.c.l.b16 %v776
      %v855 = vunpack.c.h.b16 %v776
      %v856 = vunpack.c.l.b16 %v777
      %v857 = vunpack.c.h.b16 %v777
      %v858 = vunpack.c.l.b16 %v778
      %v859 = vunpack.c.h.b16 %v778
      %v860 = vunpack.c.l.b16 %v779
      %v861 = vunpack.c.h.b16 %v779
      %v862 = vunpack.c.l.b16 %v780
      %v863 = vunpack.c.h.b16 %v780
      %v864 = vpack.c.b16 %v834, %v832
      %v865 = vpack.c.b16 %v835, %v833
      %v866 = vpack.c.b16 %v838, %v836
      %v867 = vpack.c.b16 %v839, %v837
      %v868 = vpack.c.b16 %v842, %v840
      %v869 = vpack.c.b16 %v843, %v841
      %v870 = vpack.c.b16 %v846, %v844
      %v871 = vpack.c.b16 %v847, %v845
      %v872 = vpack.c.b16 %v850, %v848
      %v873 = vpack.c.b16 %v851, %v849
      %v874 = vpack.c.b16 %v854, %v852
      %v875 = vpack.c.b16 %v855, %v853
      %v876 = vpack.c.b16 %v858, %v856
      %v877 = vpack.c.b16 %v859, %v857
      %v878 = vpack.c.b16 %v862, %v860
      %v879 = vpack.c.b16 %v863, %v861
      %896 = vmatpush.bf16.msra.mxu0 %v878
      %897 = vmatpush.bf16.msra.mxu0 %v876
      %898 = vmatpush.bf16.msra.mxu0 %v874
      %899 = vmatpush.bf16.msra.mxu0 %v872
      %900 = vmatpush.bf16.msra.mxu0 %v870
      %901 = vmatpush.bf16.msra.mxu0 %v868
      %902 = vmatpush.bf16.msra.mxu0 %v866
      %903 = vmatpush.bf16.msra.mxu0 %v864
      %904 = vmatmul.bf16.gmra.mxu0 %v814
      %v905 = vpop.f32.mrf.mxu0
      %v906 = vadd.f32 0.0, %v905
      %v907 = vpop.f32.mrf.mxu0
      %v908 = vadd.f32 0.0, %v907
      %909 = vdwg.mxu0
      %910 = vmatpush.bf16.msra.mxu0 %v879
      %911 = vmatpush.bf16.msra.mxu0 %v877
      %912 = vmatpush.bf16.msra.mxu0 %v875
      %913 = vmatpush.bf16.msra.mxu0 %v873
      %914 = vmatpush.bf16.msra.mxu0 %v871
      %915 = vmatpush.bf16.msra.mxu0 %v869
      %916 = vmatpush.bf16.msra.mxu0 %v867
      %917 = vmatpush.bf16.msra.mxu0 %v865
      %918 = vmatmul.bf16.gmra.mxu0 %v814
      %v919 = vpop.f32.mrf.mxu0
      %v920 = vadd.f32 0.0, %v919
      %v921 = vpop.f32.mrf.mxu0
      %v922 = vadd.f32 0.0, %v921
      %923 = vdwg.mxu0
      %v924 = vadd.f32 %v761, %v906
      %v925 = vadd.f32 %v762, %v920
      %v926 = vadd.f32 %v763, %v908
      %v927 = vadd.f32 %v764, %v922
      %v928 = vld [vmem:[%s1 + $0x280] sm:$0xff]
      %v929 = vld [vmem:[%s1 + $0x288] sm:$0xff]
      %v930 = vld [vmem:[%s1 + $0x290] sm:$0xff]
      %v931 = vld [vmem:[%s1 + $0x298] sm:$0xff]
      %v932 = vld [vmem:[%s1 + $0x2a0] sm:$0xff]
      %v933 = vld [vmem:[%s1 + $0x2a8] sm:$0xff]
      %v934 = vld [vmem:[%s1 + $0x2b0] sm:$0xff]
      %v935 = vld [vmem:[%s1 + $0x2b8] sm:$0xff]
      %v936 = vld [vmem:[%s1 + $0x2c0] sm:$0xff]
      %v937 = vld [vmem:[%s1 + $0x2c8] sm:$0xff]
      %v938 = vld [vmem:[%s1 + $0x2d0] sm:$0xff]
      %v939 = vld [vmem:[%s1 + $0x2d8] sm:$0xff]
      %v940 = vld [vmem:[%s1 + $0x2e0] sm:$0xff]
      %v941 = vld [vmem:[%s1 + $0x2e8] sm:$0xff]
      %v942 = vld [vmem:[%s1 + $0x2f0] sm:$0xff]
      %v943 = vld [vmem:[%s1 + $0x2f8] sm:$0xff]
      %v944 = vrot.slane %v645, 1
      %v945 = vrot.slane %v784, 1
      %v946 = vsel %vm504, %v944, %v945
      %v947 = vrot.slane %v646, 1
      %v948 = vrot.slane %v785, 1
      %v949 = vsel %vm504, %v947, %v948
      %950 = vrot.lane.b32.xlu0 %v946, 64
      %v951 = vpop.permute.xlu0 %950
      %952 = vrot.lane.b32.xlu0 %v949, 64
      %v953 = vpop.permute.xlu0 %952
      %v954 = vsel %vm263, %v951, %v953
      %v972 = vunpack.c.l.b16 %v928
      %v973 = vunpack.c.h.b16 %v928
      %v974 = vunpack.c.l.b16 %v929
      %v975 = vunpack.c.h.b16 %v929
      %v976 = vunpack.c.l.b16 %v930
      %v977 = vunpack.c.h.b16 %v930
      %v978 = vunpack.c.l.b16 %v931
      %v979 = vunpack.c.h.b16 %v931
      %v980 = vunpack.c.l.b16 %v932
      %v981 = vunpack.c.h.b16 %v932
      %v982 = vunpack.c.l.b16 %v933
      %v983 = vunpack.c.h.b16 %v933
      %v984 = vunpack.c.l.b16 %v934
      %v985 = vunpack.c.h.b16 %v934
      %v986 = vunpack.c.l.b16 %v935
      %v987 = vunpack.c.h.b16 %v935
      %v988 = vunpack.c.l.b16 %v936
      %v989 = vunpack.c.h.b16 %v936
      %v990 = vunpack.c.l.b16 %v937
      %v991 = vunpack.c.h.b16 %v937
      %v992 = vunpack.c.l.b16 %v938
      %v993 = vunpack.c.h.b16 %v938
      %v994 = vunpack.c.l.b16 %v939
      %v995 = vunpack.c.h.b16 %v939
      %v996 = vunpack.c.l.b16 %v940
      %v997 = vunpack.c.h.b16 %v940
      %v998 = vunpack.c.l.b16 %v941
      %v999 = vunpack.c.h.b16 %v941
      %v1000 = vunpack.c.l.b16 %v942
      %v1001 = vunpack.c.h.b16 %v942
      %v1002 = vunpack.c.l.b16 %v943
      %v1003 = vunpack.c.h.b16 %v943
      %v1004 = vpack.c.b16 %v974, %v972
      %v1005 = vpack.c.b16 %v975, %v973
      %v1006 = vpack.c.b16 %v978, %v976
      %v1007 = vpack.c.b16 %v979, %v977
      %v1008 = vpack.c.b16 %v982, %v980
      %v1009 = vpack.c.b16 %v983, %v981
      %v1010 = vpack.c.b16 %v986, %v984
      %v1011 = vpack.c.b16 %v987, %v985
      %v1012 = vpack.c.b16 %v990, %v988
      %v1013 = vpack.c.b16 %v991, %v989
      %v1014 = vpack.c.b16 %v994, %v992
      %v1015 = vpack.c.b16 %v995, %v993
      %v1016 = vpack.c.b16 %v998, %v996
      %v1017 = vpack.c.b16 %v999, %v997
      %v1018 = vpack.c.b16 %v1002, %v1000
      %v1019 = vpack.c.b16 %v1003, %v1001
      %1036 = vmatpush.bf16.msra.mxu0 %v1018
      %1037 = vmatpush.bf16.msra.mxu0 %v1016
      %1038 = vmatpush.bf16.msra.mxu0 %v1014
      %1039 = vmatpush.bf16.msra.mxu0 %v1012
      %1040 = vmatpush.bf16.msra.mxu0 %v1010
      %1041 = vmatpush.bf16.msra.mxu0 %v1008
      %1042 = vmatpush.bf16.msra.mxu0 %v1006
      %1043 = vmatpush.bf16.msra.mxu0 %v1004
      %1044 = vmatmul.bf16.gmra.mxu0 %v954
      %v1045 = vpop.f32.mrf.mxu0
      %v1046 = vadd.f32 0.0, %v1045
      %v1047 = vpop.f32.mrf.mxu0
      %v1048 = vadd.f32 0.0, %v1047
      %1049 = vdwg.mxu0
      %1050 = vmatpush.bf16.msra.mxu0 %v1019
      %1051 = vmatpush.bf16.msra.mxu0 %v1017
      %1052 = vmatpush.bf16.msra.mxu0 %v1015
      %1053 = vmatpush.bf16.msra.mxu0 %v1013
      %1054 = vmatpush.bf16.msra.mxu0 %v1011
      %1055 = vmatpush.bf16.msra.mxu0 %v1009
      %1056 = vmatpush.bf16.msra.mxu0 %v1007
      %1057 = vmatpush.bf16.msra.mxu0 %v1005
      %1058 = vmatmul.bf16.gmra.mxu0 %v954
      %v1059 = vpop.f32.mrf.mxu0
      %v1060 = vadd.f32 0.0, %v1059
      %v1061 = vpop.f32.mrf.mxu0
      %v1062 = vadd.f32 0.0, %v1061
      %1063 = vdwg.mxu0
      %v1064 = vadd.f32 %v924, %v1046
      %v1065 = vadd.f32 %v925, %v1060
      %v1066 = vadd.f32 %v926, %v1048
      %v1067 = vadd.f32 %v927, %v1062
      %v1068 = vld [vmem:[%s1 + $0x300] sm:$0xff]
      %v1069 = vld [vmem:[%s1 + $0x308] sm:$0xff]
      %v1070 = vld [vmem:[%s1 + $0x310] sm:$0xff]
      %v1071 = vld [vmem:[%s1 + $0x318] sm:$0xff]
      %v1072 = vld [vmem:[%s1 + $0x320] sm:$0xff]
      %v1073 = vld [vmem:[%s1 + $0x328] sm:$0xff]
      %v1074 = vld [vmem:[%s1 + $0x330] sm:$0xff]
      %v1075 = vld [vmem:[%s1 + $0x338] sm:$0xff]
      %v1076 = vld [vmem:[%s1 + $0x340] sm:$0xff]
      %v1077 = vld [vmem:[%s1 + $0x348] sm:$0xff]
      %v1078 = vld [vmem:[%s1 + $0x350] sm:$0xff]
      %v1079 = vld [vmem:[%s1 + $0x358] sm:$0xff]
      %v1080 = vld [vmem:[%s1 + $0x360] sm:$0xff]
      %v1081 = vld [vmem:[%s1 + $0x368] sm:$0xff]
      %v1082 = vld [vmem:[%s1 + $0x370] sm:$0xff]
      %v1083 = vld [vmem:[%s1 + $0x378] sm:$0xff]
      %v1084 = vpack.c.b16 %v782, %v228
      %v1085 = vpack.c.b16 %v783, %v229
      %1086 = vrot.lane.b32.xlu0 %v1084, 64
      %v1087 = vpop.permute.xlu0 %1086
      %1088 = vrot.lane.b32.xlu0 %v1085, 64
      %v1089 = vpop.permute.xlu0 %1088
      %v1090 = vsel %vm263, %v1087, %v1089
      %v1108 = vunpack.c.l.b16 %v1068
      %v1109 = vunpack.c.h.b16 %v1068
      %v1110 = vunpack.c.l.b16 %v1069
      %v1111 = vunpack.c.h.b16 %v1069
      %v1112 = vunpack.c.l.b16 %v1070
      %v1113 = vunpack.c.h.b16 %v1070
      %v1114 = vunpack.c.l.b16 %v1071
      %v1115 = vunpack.c.h.b16 %v1071
      %v1116 = vunpack.c.l.b16 %v1072
      %v1117 = vunpack.c.h.b16 %v1072
      %v1118 = vunpack.c.l.b16 %v1073
      %v1119 = vunpack.c.h.b16 %v1073
      %v1120 = vunpack.c.l.b16 %v1074
      %v1121 = vunpack.c.h.b16 %v1074
      %v1122 = vunpack.c.l.b16 %v1075
      %v1123 = vunpack.c.h.b16 %v1075
      %v1124 = vunpack.c.l.b16 %v1076
      %v1125 = vunpack.c.h.b16 %v1076
      %v1126 = vunpack.c.l.b16 %v1077
      %v1127 = vunpack.c.h.b16 %v1077
      %v1128 = vunpack.c.l.b16 %v1078
      %v1129 = vunpack.c.h.b16 %v1078
      %v1130 = vunpack.c.l.b16 %v1079
      %v1131 = vunpack.c.h.b16 %v1079
      %v1132 = vunpack.c.l.b16 %v1080
      %v1133 = vunpack.c.h.b16 %v1080
      %v1134 = vunpack.c.l.b16 %v1081
      %v1135 = vunpack.c.h.b16 %v1081
      %v1136 = vunpack.c.l.b16 %v1082
      %v1137 = vunpack.c.h.b16 %v1082
      %v1138 = vunpack.c.l.b16 %v1083
      %v1139 = vunpack.c.h.b16 %v1083
      %v1140 = vpack.c.b16 %v1110, %v1108
      %v1141 = vpack.c.b16 %v1111, %v1109
      %v1142 = vpack.c.b16 %v1114, %v1112
      %v1143 = vpack.c.b16 %v1115, %v1113
      %v1144 = vpack.c.b16 %v1118, %v1116
      %v1145 = vpack.c.b16 %v1119, %v1117
      %v1146 = vpack.c.b16 %v1122, %v1120
      %v1147 = vpack.c.b16 %v1123, %v1121
      %v1148 = vpack.c.b16 %v1126, %v1124
      %v1149 = vpack.c.b16 %v1127, %v1125
      %v1150 = vpack.c.b16 %v1130, %v1128
      %v1151 = vpack.c.b16 %v1131, %v1129
      %v1152 = vpack.c.b16 %v1134, %v1132
      %v1153 = vpack.c.b16 %v1135, %v1133
      %v1154 = vpack.c.b16 %v1138, %v1136
      %v1155 = vpack.c.b16 %v1139, %v1137
      %1172 = vmatpush.bf16.msra.mxu0 %v1154
      %1173 = vmatpush.bf16.msra.mxu0 %v1152
      %1174 = vmatpush.bf16.msra.mxu0 %v1150
      %1175 = vmatpush.bf16.msra.mxu0 %v1148
      %1176 = vmatpush.bf16.msra.mxu0 %v1146
      %1177 = vmatpush.bf16.msra.mxu0 %v1144
      %1178 = vmatpush.bf16.msra.mxu0 %v1142
      %1179 = vmatpush.bf16.msra.mxu0 %v1140
      %1180 = vmatmul.bf16.gmra.mxu0 %v1090
      %v1181 = vpop.f32.mrf.mxu0
      %v1182 = vadd.f32 0.0, %v1181
      %v1183 = vpop.f32.mrf.mxu0
      %v1184 = vadd.f32 0.0, %v1183
      %1185 = vdwg.mxu0
      %1186 = vmatpush.bf16.msra.mxu0 %v1155
      %1187 = vmatpush.bf16.msra.mxu0 %v1153
      %1188 = vmatpush.bf16.msra.mxu0 %v1151
      %1189 = vmatpush.bf16.msra.mxu0 %v1149
      %1190 = vmatpush.bf16.msra.mxu0 %v1147
      %1191 = vmatpush.bf16.msra.mxu0 %v1145
      %1192 = vmatpush.bf16.msra.mxu0 %v1143
      %1193 = vmatpush.bf16.msra.mxu0 %v1141
      %1194 = vmatmul.bf16.gmra.mxu0 %v1090
      %v1195 = vpop.f32.mrf.mxu0
      %v1196 = vadd.f32 0.0, %v1195
      %v1197 = vpop.f32.mrf.mxu0
      %v1198 = vadd.f32 0.0, %v1197
      %1199 = vdwg.mxu0
      %v1200 = vadd.f32 %v1064, %v1182
      %v1201 = vadd.f32 %v1065, %v1196
      %v1202 = vadd.f32 %v1066, %v1184
      %v1203 = vadd.f32 %v1067, %v1198
      %v1204 = vld [vmem:[%s1 + $0x380] sm:$0xff]
      %v1205 = vld [vmem:[%s1 + $0x388] sm:$0xff]
      %v1206 = vld [vmem:[%s1 + $0x390] sm:$0xff]
      %v1207 = vld [vmem:[%s1 + $0x398] sm:$0xff]
      %v1208 = vld [vmem:[%s1 + $0x3a0] sm:$0xff]
      %v1209 = vld [vmem:[%s1 + $0x3a8] sm:$0xff]
      %v1210 = vld [vmem:[%s1 + $0x3b0] sm:$0xff]
      %v1211 = vld [vmem:[%s1 + $0x3b8] sm:$0xff]
      %v1212 = vld [vmem:[%s1 + $0x3c0] sm:$0xff]
      %v1213 = vld [vmem:[%s1 + $0x3c8] sm:$0xff]
      %v1214 = vld [vmem:[%s1 + $0x3d0] sm:$0xff]
      %v1215 = vld [vmem:[%s1 + $0x3d8] sm:$0xff]
      %v1216 = vld [vmem:[%s1 + $0x3e0] sm:$0xff]
      %v1217 = vld [vmem:[%s1 + $0x3e8] sm:$0xff]
      %v1218 = vld [vmem:[%s1 + $0x3f0] sm:$0xff]
      %v1219 = vld [vmem:[%s1 + $0x3f8] sm:$0xff]
      %v1221 = vunpack.c.l.b16 %v188
      %v1222 = vunpack.c.h.b16 %v188
      %v1223 = vpack.c.b16 %v1221, %v1221
      %v1224 = vpack.c.b16 %v1222, %v1222
      %v1226 = vshrl.u32 %v1084, 16
      %v1228 = vshll.u32 %v1084, 16
      %v1230 = vrot.slane %v1228, 1
      %v1231 = vor.u32 %v1226, %v1230
      %v1233 = vshll.u32 %v1223, 16
      %v1235 = vrot.slane %v1233, 1
      %v1236 = vsel %vm234, %v1231, %v1235
      %v1238 = vshrl.u32 %v1085, 16
      %v1240 = vshll.u32 %v1085, 16
      %v1242 = vrot.slane %v1240, 1
      %v1243 = vor.u32 %v1238, %v1242
      %v1245 = vshll.u32 %v1224, 16
      %v1247 = vrot.slane %v1245, 1
      %v1248 = vsel %vm234, %v1243, %v1247
      %1249 = vrot.lane.b32.xlu0 %v1236, 64
      %v1250 = vpop.permute.xlu0 %1249
      %1251 = vrot.lane.b32.xlu0 %v1248, 64
      %v1252 = vpop.permute.xlu0 %1251
      %v1253 = vsel %vm263, %v1250, %v1252
      %v1271 = vunpack.c.l.b16 %v1204
      %v1272 = vunpack.c.h.b16 %v1204
      %v1273 = vunpack.c.l.b16 %v1205
      %v1274 = vunpack.c.h.b16 %v1205
      %v1275 = vunpack.c.l.b16 %v1206
      %v1276 = vunpack.c.h.b16 %v1206
      %v1277 = vunpack.c.l.b16 %v1207
      %v1278 = vunpack.c.h.b16 %v1207
      %v1279 = vunpack.c.l.b16 %v1208
      %v1280 = vunpack.c.h.b16 %v1208
      %v1281 = vunpack.c.l.b16 %v1209
      %v1282 = vunpack.c.h.b16 %v1209
      %v1283 = vunpack.c.l.b16 %v1210
      %v1284 = vunpack.c.h.b16 %v1210
      %v1285 = vunpack.c.l.b16 %v1211
      %v1286 = vunpack.c.h.b16 %v1211
      %v1287 = vunpack.c.l.b16 %v1212
      %v1288 = vunpack.c.h.b16 %v1212
      %v1289 = vunpack.c.l.b16 %v1213
      %v1290 = vunpack.c.h.b16 %v1213
      %v1291 = vunpack.c.l.b16 %v1214
      %v1292 = vunpack.c.h.b16 %v1214
      %v1293 = vunpack.c.l.b16 %v1215
      %v1294 = vunpack.c.h.b16 %v1215
      %v1295 = vunpack.c.l.b16 %v1216
      %v1296 = vunpack.c.h.b16 %v1216
      %v1297 = vunpack.c.l.b16 %v1217
      %v1298 = vunpack.c.h.b16 %v1217
      %v1299 = vunpack.c.l.b16 %v1218
      %v1300 = vunpack.c.h.b16 %v1218
      %v1301 = vunpack.c.l.b16 %v1219
      %v1302 = vunpack.c.h.b16 %v1219
      %v1303 = vpack.c.b16 %v1273, %v1271
      %v1304 = vpack.c.b16 %v1274, %v1272
      %v1305 = vpack.c.b16 %v1277, %v1275
      %v1306 = vpack.c.b16 %v1278, %v1276
      %v1307 = vpack.c.b16 %v1281, %v1279
      %v1308 = vpack.c.b16 %v1282, %v1280
      %v1309 = vpack.c.b16 %v1285, %v1283
      %v1310 = vpack.c.b16 %v1286, %v1284
      %v1311 = vpack.c.b16 %v1289, %v1287
      %v1312 = vpack.c.b16 %v1290, %v1288
      %v1313 = vpack.c.b16 %v1293, %v1291
      %v1314 = vpack.c.b16 %v1294, %v1292
      %v1315 = vpack.c.b16 %v1297, %v1295
      %v1316 = vpack.c.b16 %v1298, %v1296
      %v1317 = vpack.c.b16 %v1301, %v1299
      %v1318 = vpack.c.b16 %v1302, %v1300
      %1335 = vmatpush.bf16.msra.mxu0 %v1317
      %1336 = vmatpush.bf16.msra.mxu0 %v1315
      %1337 = vmatpush.bf16.msra.mxu0 %v1313
      %1338 = vmatpush.bf16.msra.mxu0 %v1311
      %1339 = vmatpush.bf16.msra.mxu0 %v1309
      %1340 = vmatpush.bf16.msra.mxu0 %v1307
      %1341 = vmatpush.bf16.msra.mxu0 %v1305
      %1342 = vmatpush.bf16.msra.mxu0 %v1303
      %1343 = vmatmul.bf16.gmra.mxu0 %v1253
      %v1344 = vpop.f32.mrf.mxu0
      %v1345 = vadd.f32 0.0, %v1344
      %v1346 = vpop.f32.mrf.mxu0
      %v1347 = vadd.f32 0.0, %v1346
      %1348 = vdwg.mxu0
      %1349 = vmatpush.bf16.msra.mxu0 %v1318
      %1350 = vmatpush.bf16.msra.mxu0 %v1316
      %1351 = vmatpush.bf16.msra.mxu0 %v1314
      %1352 = vmatpush.bf16.msra.mxu0 %v1312
      %1353 = vmatpush.bf16.msra.mxu0 %v1310
      %1354 = vmatpush.bf16.msra.mxu0 %v1308
      %1355 = vmatpush.bf16.msra.mxu0 %v1306
      %1356 = vmatpush.bf16.msra.mxu0 %v1304
      %1357 = vmatmul.bf16.gmra.mxu0 %v1253
      %v1358 = vpop.f32.mrf.mxu0
      %v1359 = vadd.f32 0.0, %v1358
      %v1360 = vpop.f32.mrf.mxu0
      %v1361 = vadd.f32 0.0, %v1360
      %1362 = vdwg.mxu0
      %v1363 = vadd.f32 %v1200, %v1345
      %v1364 = vadd.f32 %v1201, %v1359
      %v1365 = vadd.f32 %v1202, %v1347
      %v1366 = vadd.f32 %v1203, %v1361
      %v1367 = vld [vmem:[%s1 + $0x400] sm:$0xff]
      %v1368 = vld [vmem:[%s1 + $0x408] sm:$0xff]
      %v1369 = vld [vmem:[%s1 + $0x410] sm:$0xff]
      %v1370 = vld [vmem:[%s1 + $0x418] sm:$0xff]
      %v1371 = vld [vmem:[%s1 + $0x420] sm:$0xff]
      %v1372 = vld [vmem:[%s1 + $0x428] sm:$0xff]
      %v1373 = vld [vmem:[%s1 + $0x430] sm:$0xff]
      %v1374 = vld [vmem:[%s1 + $0x438] sm:$0xff]
      %v1375 = vld [vmem:[%s1 + $0x440] sm:$0xff]
      %v1376 = vld [vmem:[%s1 + $0x448] sm:$0xff]
      %v1377 = vld [vmem:[%s1 + $0x450] sm:$0xff]
      %v1378 = vld [vmem:[%s1 + $0x458] sm:$0xff]
      %v1379 = vld [vmem:[%s1 + $0x460] sm:$0xff]
      %v1380 = vld [vmem:[%s1 + $0x468] sm:$0xff]
      %v1381 = vld [vmem:[%s1 + $0x470] sm:$0xff]
      %v1382 = vld [vmem:[%s1 + $0x478] sm:$0xff]
      %v1383 = vrot.slane %v1084, 1
      %v1384 = vrot.slane %v1223, 1
      %v1385 = vsel %vm504, %v1383, %v1384
      %v1386 = vrot.slane %v1085, 1
      %v1387 = vrot.slane %v1224, 1
      %v1388 = vsel %vm504, %v1386, %v1387
      %1389 = vrot.lane.b32.xlu0 %v1385, 64
      %v1390 = vpop.permute.xlu0 %1389
      %1391 = vrot.lane.b32.xlu0 %v1388, 64
      %v1392 = vpop.permute.xlu0 %1391
      %v1393 = vsel %vm263, %v1390, %v1392
      %v1411 = vunpack.c.l.b16 %v1367
      %v1412 = vunpack.c.h.b16 %v1367
      %v1413 = vunpack.c.l.b16 %v1368
      %v1414 = vunpack.c.h.b16 %v1368
      %v1415 = vunpack.c.l.b16 %v1369
      %v1416 = vunpack.c.h.b16 %v1369
      %v1417 = vunpack.c.l.b16 %v1370
      %v1418 = vunpack.c.h.b16 %v1370
      %v1419 = vunpack.c.l.b16 %v1371
      %v1420 = vunpack.c.h.b16 %v1371
      %v1421 = vunpack.c.l.b16 %v1372
      %v1422 = vunpack.c.h.b16 %v1372
      %v1423 = vunpack.c.l.b16 %v1373
      %v1424 = vunpack.c.h.b16 %v1373
      %v1425 = vunpack.c.l.b16 %v1374
      %v1426 = vunpack.c.h.b16 %v1374
      %v1427 = vunpack.c.l.b16 %v1375
      %v1428 = vunpack.c.h.b16 %v1375
      %v1429 = vunpack.c.l.b16 %v1376
      %v1430 = vunpack.c.h.b16 %v1376
      %v1431 = vunpack.c.l.b16 %v1377
      %v1432 = vunpack.c.h.b16 %v1377
      %v1433 = vunpack.c.l.b16 %v1378
      %v1434 = vunpack.c.h.b16 %v1378
      %v1435 = vunpack.c.l.b16 %v1379
      %v1436 = vunpack.c.h.b16 %v1379
      %v1437 = vunpack.c.l.b16 %v1380
      %v1438 = vunpack.c.h.b16 %v1380
      %v1439 = vunpack.c.l.b16 %v1381
      %v1440 = vunpack.c.h.b16 %v1381
      %v1441 = vunpack.c.l.b16 %v1382
      %v1442 = vunpack.c.h.b16 %v1382
      %v1443 = vpack.c.b16 %v1413, %v1411
      %v1444 = vpack.c.b16 %v1414, %v1412
      %v1445 = vpack.c.b16 %v1417, %v1415
      %v1446 = vpack.c.b16 %v1418, %v1416
      %v1447 = vpack.c.b16 %v1421, %v1419
      %v1448 = vpack.c.b16 %v1422, %v1420
      %v1449 = vpack.c.b16 %v1425, %v1423
      %v1450 = vpack.c.b16 %v1426, %v1424
      %v1451 = vpack.c.b16 %v1429, %v1427
      %v1452 = vpack.c.b16 %v1430, %v1428
      %v1453 = vpack.c.b16 %v1433, %v1431
      %v1454 = vpack.c.b16 %v1434, %v1432
      %v1455 = vpack.c.b16 %v1437, %v1435
      %v1456 = vpack.c.b16 %v1438, %v1436
      %v1457 = vpack.c.b16 %v1441, %v1439
      %v1458 = vpack.c.b16 %v1442, %v1440
      %1475 = vmatpush.bf16.msra.mxu0 %v1457
      %1476 = vmatpush.bf16.msra.mxu0 %v1455
      %1477 = vmatpush.bf16.msra.mxu0 %v1453
      %1478 = vmatpush.bf16.msra.mxu0 %v1451
      %1479 = vmatpush.bf16.msra.mxu0 %v1449
      %1480 = vmatpush.bf16.msra.mxu0 %v1447
      %1481 = vmatpush.bf16.msra.mxu0 %v1445
      %1482 = vmatpush.bf16.msra.mxu0 %v1443
      %1483 = vmatmul.bf16.gmra.mxu0 %v1393
      %v1484 = vpop.f32.mrf.mxu0
      %v1485 = vadd.f32 0.0, %v1484
      %v1486 = vpop.f32.mrf.mxu0
      %v1487 = vadd.f32 0.0, %v1486
      %1488 = vdwg.mxu0
      %1489 = vmatpush.bf16.msra.mxu0 %v1458
      %1490 = vmatpush.bf16.msra.mxu0 %v1456
      %1491 = vmatpush.bf16.msra.mxu0 %v1454
      %1492 = vmatpush.bf16.msra.mxu0 %v1452
      %1493 = vmatpush.bf16.msra.mxu0 %v1450
      %1494 = vmatpush.bf16.msra.mxu0 %v1448
      %1495 = vmatpush.bf16.msra.mxu0 %v1446
      %1496 = vmatpush.bf16.msra.mxu0 %v1444
      %1497 = vmatmul.bf16.gmra.mxu0 %v1393
      %v1498 = vpop.f32.mrf.mxu0
      %v1499 = vadd.f32 0.0, %v1498
      %v1500 = vpop.f32.mrf.mxu0
      %v1501 = vadd.f32 0.0, %v1500
      %1502 = vdwg.mxu0
      %v1503 = vadd.f32 %v1363, %v1485
      %v1504 = vadd.f32 %v1364, %v1499
      %v1505 = vadd.f32 %v1365, %v1487
      %v1506 = vadd.f32 %v1366, %v1501
      %v1507 = vmax.f32 %v1503, 0.0
      %v1508 = vmax.f32 %v1504, 0.0
      %v1509 = vmax.f32 %v1505, 0.0
      %v1510 = vmax.f32 %v1506, 0.0
      %vm1511 = vsmask.f32 3328
      %vm1512 = vsmask.f32 7440
      %vm1513 = vmor %vm1511, %vm1512
      %v1515 = vshrl.u32 %v185, 16
      %v1517 = vrot.slane %v1515, 4
      %v1518 = vshll.u32 %v185, 16
      %v1520 = vrot.slane %v1518, 5
      %v1521 = vor.u32 %v1517, %v1520
      %v1522 = vrot.slane %v1521, 4
      %v1524 = vshll.u32 %v186, 16
      %v1526 = vrot.slane %v1524, 5
      %v1527 = vsel %vm1513, %v1522, %v1526
      %v1528 = vshrl.u32 %v186, 16
      %v1530 = vrot.slane %v1528, 4
      %v1531 = vor.u32 %v1530, %v1526
      %v1532 = vrot.slane %v1531, 4
      %v1534 = vshll.u32 %v187, 16
      %v1536 = vrot.slane %v1534, 5
      %v1537 = vsel %vm1513, %v1532, %v1536
      %vm1540 = vcmask 519168
      %1541 = vst.msk [vmem:[%s178] sm:$0xf] %vm1540, %v1527
      %1542 = vst.msk [vmem:[%s178 + $0x4] sm:$0xf] %vm1540, %v1537
      %v1543 = vpack.c.bf16 %v1507, %v1507
      %v1544 = vpack.c.bf16 %v1509, %v1509
      %1547 = vrot.lane.b32.xlu0 %v1543, 64
      %v1548 = vpop.permute.xlu0 %1547
      %1549 = vrot.lane.b32.xlu0 %v1544, 64
      %v1550 = vpop.permute.xlu0 %1549
      %vm1553 = vcmask 1043968
      %1554 = vst.msk [vmem:[%s178] sm:$0xf] %vm1553, %v1548
      %1555 = vst.msk [vmem:[%s178 + $0x4] sm:$0xf] %vm1553, %v1550
      %v1556 = vpack.c.bf16 %v1508, %v1507
      %v1557 = vpack.c.bf16 %v1510, %v1509
      %1560 = vrot.lane.b32.xlu0 %v1556, 64
      %v1561 = vpop.permute.xlu0 %1560
      %1562 = vrot.lane.b32.xlu0 %v1557, 64
      %v1563 = vpop.permute.xlu0 %1562
      %v1564 = vrot.slane %v1561, 4
      %v1565 = vrot.slane %v1563, 4
      %v1566 = vsel %vm263, %v1561, %v1564
      %v1567 = vsel %vm263, %v1563, %v1565
      %vm1570 = vcmask 781312
      %1571 = vst.msk [vmem:[%s183] sm:$0xf] %vm1570, %v1566
      %1572 = vst.msk [vmem:[%s183 + $0x4] sm:$0xf] %vm1570, %v1567
      %p1573 = scmp.lt.s32.totalorder %s15, 1
      %s1574 = scalar_select %p1573, %s15, 1
      %s1575 = smul.addr %s1574, 2
      %s1576 = smul.addr %s1575, 4
      %s1577 = scalar_lea.vmem %s2, %s1576
      %p1578 = scmp.lt.s32.totalorder %s15, 1
      %s1579 = scalar_select %p1578, %s15, 1
      %s1580 = smul.addr %s1579, 2
      %s1581 = smul.addr %s1580, 4
      %s1582 = scalar_lea.vmem %s3, %s1581
      // Predicated region
      $region29: #{inception2_forward.14} parent=27 // pred_check
        %p1583 = pneg %p80
      $region30: #{inception2_forward.14} parent=27 // pred_check_branch
        %1585 = sbr.rel (%p1583) target = $region32
      $region31: #{inception2_forward.14} parent=27 // pred_region
        _
      $region32: #{inception2_forward.14} parent=27 // pred_fallthru
        _
      // Predicated region
      $region33: #{inception2_forward.14} parent=27 // pred_check
        %p1586 = pneg %p106
      $region34: #{inception2_forward.14} parent=27 // pred_check_branch
        %1588 = sbr.rel (%p1586) target = $region36
      $region35: #{inception2_forward.14} parent=27 // pred_region
        _
      $region36: #{inception2_forward.14} parent=27 // pred_fallthru
        _
    $region28: #{inception2_forward.14} parent=5 // pred_fallthru
      _
    %p1589 = scmp.le.s32.totalorder 2, %s10
    // Predicated region
    $region37: #{inception2_forward.14} parent=5 // pred_check
      %p1590 = pneg %p1589
    $region38: #{inception2_forward.14} parent=5 // pred_check_branch
      %1592 = sbr.rel (%p1590) target = $region40
    $region39: #{inception2_forward.14} parent=5 // pred_region
      %s1593 = ssub.s32 %s10, 2
      // Predicated region
      $region41: #{inception2_forward.14} parent=39 // pred_check
        %p1594 = pneg %p86
      $region42: #{inception2_forward.14} parent=39 // pred_check_branch
        %1596 = sbr.rel (%p1594) target = $region44
      $region43: #{inception2_forward.14} parent=39 // pred_region
        %p1597 = scmp.lt.s32.totalorder %s16, 1
        %s1598 = scalar_select %p1597, %s16, 1
        %s1599 = smul.addr %s1598, 2
        %s1600 = smul.addr %s1599, 4
        %s1601 = scalar_lea.vmem %s2, %s1600
      $region44: #{inception2_forward.14} parent=39 // pred_fallthru
        _
      // Predicated region
      $region45: #{inception2_forward.14} parent=39 // pred_check
        %p1602 = pneg %p112
      $region46: #{inception2_forward.14} parent=39 // pred_check_branch
        %1604 = sbr.rel (%p1602) target = $region48
      $region47: #{inception2_forward.14} parent=39 // pred_region
        %p1605 = scmp.lt.s32.totalorder %s16, 1
        %s1606 = scalar_select %p1605, %s16, 1
        %s1607 = smul.addr %s1606, 2
        %s1608 = smul.addr %s1607, 4
        %s1609 = scalar_lea.vmem %s3, %s1608
      $region48: #{inception2_forward.14} parent=39 // pred_fallthru
        _
    $region40: #{inception2_forward.14} parent=5 // pred_fallthru
      _
  $region6: #{inception2_forward.14} parent=0 // loop_footer
    %s14 = sadd.s32 1, %s10
  $region7: #{inception2_forward.14} parent=0 // loop_footer_branch
    %9 = sbr.rel target = $region3
  $region8: #{inception2_forward.14} parent=0 // loop_exit
    _

// kernel: inception2_forward.15
$region0: #{inception2_forward.15}
  #allocation0 [shape = 'u32[]', space=smem, size = 0x4, offset = 0x4, fixed_abs, tag = 'smem constant byte address 0x4 - core index']
  #allocation1 [shape = 'u32[72,128]{1,0:T(1,128)}', space=vmem, size = 0x9000, scoped, tag = 'internal scratch']
  %s0 = inlined_call_operand.vmem [shape: bf16[2,40,96], index: 0, kind: input, shape index: {}]
  %s1 = inlined_call_operand.vmem [shape: bf16[2,40,192], index: 1, kind: input, shape index: {}]
  %s2 = inlined_call_operand.vmem [shape: bf16[864,96], index: 2, kind: input, shape index: {}]
  %s3 = inlined_call_operand.vmem [shape: bf16[1728,32], index: 3, kind: input, shape index: {}]
  %s4 = inlined_call_operand.vmem [shape: bf16[2,16,128], index: 4, kind: output, shape index: {}]
  %s5 = sld [smem:[#allocation0]]
  $region49: #{inception2_forward.15} parent=0
    _
  %s7 = ssub.s32 1, %s5
  %s8 = scalar_select 0, %s7, %s5
  loop: start=0, step=1, limit=4
  $region2: #{inception2_forward.15} parent=0 // loop_pre_header
    _
  $region3: #{inception2_forward.15} parent=0 // loop_header
    %s10 = sphi 0, %s14
    %p11 = scmp.ge.s32.totalorder %s10, 4
    %s20 = sphi 0, %s22
    %s23 = sphi 0, %s20
    %s24 = sphi 0, %s23
    %s40 = sphi 0, %s24
    %s46 = sphi 0, %s48
    %s49 = sphi 0, %s46
    %s50 = sphi 0, %s49
    %s66 = sphi 0, %s50
    %s70 = sphi 0, %s70
    %s72 = sphi 0, %s70
    %s73 = sphi 0, %s72
    %s87 = sphi 0, %s73
    %s91 = sphi 0, %s91
    %s93 = sphi 0, %s91
    %s94 = sphi 0, %s93
    %s108 = sphi 0, %s94
    %s114 = sphi 0, %s116
    %s117 = sphi 0, %s114
    %s118 = sphi 0, %s117
    %s134 = sphi 0, %s118
  $region4: #{inception2_forward.15} parent=0 // loop_header_branch
    %13 = sbr.rel (%p11) target = $region8
  $region5: #{inception2_forward.15} parent=0 // loop_body
    %s15 = ssub.s32 %s10, 1
    %s16 = ssub.s32 %s10, 2
    %s17 = sadd.s32 %s10, 1
    %s18 = ssub.s32 %s10, %s17
    %p19 = scmp.eq.s32.totalorder %s18, 0
    %s21 = sadd.s32 %s20, 1
    %s22 = scalar_select %p19, %s20, %s21
    %p25 = pneg %p19
    %p26 = scmp.eq.s32.totalorder %s10, 1
    %p27 = por %p25, %p26
    %p28 = scmp.ne.s32.totalorder %s20, %s23
    %p29 = scmp.eq.s32.totalorder %s10, 0
    %p30 = por %p28, %p29
    %p31 = scmp.ne.s32.totalorder %s20, %s23
    %p32 = scmp.eq.s32.totalorder %s15, 1
    %p33 = por %p31, %p32
    %p34 = scmp.ne.s32.totalorder %s23, %s24
    %p35 = scmp.eq.s32.totalorder %s15, 0
    %p36 = por %p34, %p35
    %p37 = scmp.ne.s32.totalorder %s23, %s24
    %p38 = scmp.eq.s32.totalorder %s16, 1
    %p39 = por %p37, %p38
    %p41 = scmp.ne.s32.totalorder %s24, %s40
    %p42 = scmp.eq.s32.totalorder %s16, 0
    %p43 = por %p41, %p42
    %s44 = ssub.s32 %s10, %s17
    %p45 = scmp.eq.s32.totalorder %s44, 0
    %s47 = sadd.s32 %s46, 1
    %s48 = scalar_select %p45, %s46, %s47
    %p51 = pneg %p45
    %p52 = scmp.eq.s32.totalorder %s10, 1
    %p53 = por %p51, %p52
    %p54 = scmp.ne.s32.totalorder %s46, %s49
    %p55 = scmp.eq.s32.totalorder %s10, 0
    %p56 = por %p54, %p55
    %p57 = scmp.ne.s32.totalorder %s46, %s49
    %p58 = scmp.eq.s32.totalorder %s15, 1
    %p59 = por %p57, %p58
    %p60 = scmp.ne.s32.totalorder %s49, %s50
    %p61 = scmp.eq.s32.totalorder %s15, 0
    %p62 = por %p60, %p61
    %p63 = scmp.ne.s32.totalorder %s49, %s50
    %p64 = scmp.eq.s32.totalorder %s16, 1
    %p65 = por %p63, %p64
    %p67 = scmp.ne.s32.totalorder %s50, %s66
    %p68 = scmp.eq.s32.totalorder %s16, 0
    %p69 = por %p67, %p68
    %s71 = sadd.s32 %s70, 1
    %p74 = scmp.eq.s32.totalorder %s10, 1
    %p75 = scmp.ne.s32.totalorder %s70, %s72
    %p76 = scmp.eq.s32.totalorder %s10, 0
    %p77 = por %p75, %p76
    %p78 = scmp.ne.s32.totalorder %s70, %s72
    %p79 = scmp.eq.s32.totalorder %s15, 1
    %p80 = por %p78, %p79
    %p81 = scmp.ne.s32.totalorder %s72, %s73
    %p82 = scmp.eq.s32.totalorder %s15, 0
    %p83 = por %p81, %p82
    %p84 = scmp.ne.s32.totalorder %s72, %s73
    %p85 = scmp.eq.s32.totalorder %s16, 1
    %p86 = por %p84, %p85
    %p88 = scmp.ne.s32.totalorder %s73, %s87
    %p89 = scmp.eq.s32.totalorder %s16, 0
    %p90 = por %p88, %p89
    %s92 = sadd.s32 %s91, 1
    %p95 = scmp.eq.s32.totalorder %s10, 1
    %p96 = scmp.ne.s32.totalorder %s91, %s93
    %p97 = scmp.eq.s32.totalorder %s10, 0
    %p98 = por %p96, %p97
    %p99 = scmp.ne.s32.totalorder %s91, %s93
    %p100 = scmp.eq.s32.totalorder %s15, 1
    %p101 = por %p99, %p100
    %p102 = scmp.ne.s32.totalorder %s93, %s94
    %p103 = scmp.eq.s32.totalorder %s15, 0
    %p104 = por %p102, %p103
    %p105 = scmp.ne.s32.totalorder %s93, %s94
    %p106 = scmp.eq.s32.totalorder %s16, 1
    %p107 = por %p105, %p106
    %p109 = scmp.ne.s32.totalorder %s94, %s108
    %p110 = scmp.eq.s32.totalorder %s16, 0
    %p111 = por %p109, %p110
    %s112 = ssub.s32 %s10, %s17
    %p113 = scmp.eq.s32.totalorder %s112, 0
    %s115 = sadd.s32 %s114, 1
    %s116 = scalar_select %p113, %s114, %s115
    %p119 = pneg %p113
    %p120 = scmp.eq.s32.totalorder %s10, 1
    %p121 = por %p119, %p120
    %p122 = scmp.ne.s32.totalorder %s114, %s117
    %p123 = scmp.eq.s32.totalorder %s10, 0
    %p124 = por %p122, %p123
    %p125 = scmp.ne.s32.totalorder %s114, %s117
    %p126 = scmp.eq.s32.totalorder %s15, 1
    %p127 = por %p125, %p126
    %p128 = scmp.ne.s32.totalorder %s117, %s118
    %p129 = scmp.eq.s32.totalorder %s15, 0
    %p130 = por %p128, %p129
    %p131 = scmp.ne.s32.totalorder %s117, %s118
    %p132 = scmp.eq.s32.totalorder %s16, 1
    %p133 = por %p131, %p132
    %p135 = scmp.ne.s32.totalorder %s118, %s134
    %p136 = scmp.eq.s32.totalorder %s16, 0
    %p137 = por %p135, %p136
    %p138 = scmp.le.s32.totalorder 1, %s10
    %p139 = scmp.lt.s32.totalorder %s10, 3
    %p140 = pnand %p138, %p139
    %p141 = pneg %p140
    // Predicated region
    $region9: #{inception2_forward.15} parent=5 // pred_check
      _
    $region10: #{inception2_forward.15} parent=5 // pred_check_branch
      %143 = sbr.rel (%p140) target = $region12
    $region11: #{inception2_forward.15} parent=5 // pred_region
      %s144 = ssub.s32 %s10, 1
      // Predicated region
      $region13: #{inception2_forward.15} parent=11 // pred_check
        %p145 = pneg %p83
      $region14: #{inception2_forward.15} parent=11 // pred_check_branch
        %147 = sbr.rel (%p145) target = $region16
      $region15: #{inception2_forward.15} parent=11 // pred_region
        _
      $region16: #{inception2_forward.15} parent=11 // pred_fallthru
        _
      // Predicated region
      $region17: #{inception2_forward.15} parent=11 // pred_check
        %p148 = pneg %p104
      $region18: #{inception2_forward.15} parent=11 // pred_check_branch
        %150 = sbr.rel (%p148) target = $region20
      $region19: #{inception2_forward.15} parent=11 // pred_region
        _
      $region20: #{inception2_forward.15} parent=11 // pred_fallthru
        _
    $region12: #{inception2_forward.15} parent=5 // pred_fallthru
      _
    %p151 = scmp.lt.s32.totalorder %s10, 2
    // Predicated region
    $region21: #{inception2_forward.15} parent=5 // pred_check
      %p152 = pneg %p151
    $region22: #{inception2_forward.15} parent=5 // pred_check_branch
      %154 = sbr.rel (%p152) target = $region24
    $region23: #{inception2_forward.15} parent=5 // pred_region
      // Predicated region
      $region25: #{inception2_forward.15} parent=23 // pred_check
        %p155 = pneg %p30
      $region26: #{inception2_forward.15} parent=23 // pred_check_branch
        %157 = sbr.rel (%p155) target = $region28
      $region27: #{inception2_forward.15} parent=23 // pred_region
        %p158 = scmp.lt.s32.totalorder %s10, 1
        %s159 = scalar_select %p158, %s10, 1
        %s160 = smul.addr %s159, 5
        %s161 = smul.addr %s160, 4
        %s162 = scalar_lea.vmem %s0, %s161
      $region28: #{inception2_forward.15} parent=23 // pred_fallthru
        _
      // Predicated region
      $region29: #{inception2_forward.15} parent=23 // pred_check
        %p163 = pneg %p56
      $region30: #{inception2_forward.15} parent=23 // pred_check_branch
        %165 = sbr.rel (%p163) target = $region32
      $region31: #{inception2_forward.15} parent=23 // pred_region
        %p166 = scmp.lt.s32.totalorder %s10, 1
        %s167 = scalar_select %p166, %s10, 1
        %s168 = smul.addr %s167, 10
        %s169 = smul.addr %s168, 4
        %s170 = scalar_lea.vmem %s1, %s169
      $region32: #{inception2_forward.15} parent=23 // pred_fallthru
        _
    $region24: #{inception2_forward.15} parent=5 // pred_fallthru
      _
    %p171 = scmp.le.s32.totalorder 1, %s10
    %p172 = scmp.lt.s32.totalorder %s10, 3
    %p173 = pnand %p171, %p172
    %p174 = pneg %p173
    // Predicated region
    $region33: #{inception2_forward.15} parent=5 // pred_check
      _
    $region34: #{inception2_forward.15} parent=5 // pred_check_branch
      %176 = sbr.rel (%p173) target = $region36
    $region35: #{inception2_forward.15} parent=5 // pred_region
      %s177 = ssub.s32 %s10, 1
      %p178 = scmp.lt.s32.totalorder %s15, 1
      %s179 = scalar_select %p178, %s15, 1
      %s180 = smul.addr %s179, 5
      %s181 = smul.addr %s180, 4
      %s182 = scalar_lea.vmem %s0, %s181
      %p183 = pneg %p36
      %p184 = pneg %p33
      %p185 = scmp.lt.s32.totalorder %s15, 1
      %s186 = scalar_select %p185, %s15, 1
      %s187 = smul.addr %s186, 10
      %s188 = smul.addr %s187, 4
      %s189 = scalar_lea.vmem %s1, %s188
      %p190 = pneg %p62
      %p191 = pneg %p59
      %p192 = pneg %p83
      %p193 = pneg %p80
      %p194 = pneg %p104
      %p195 = pneg %p101
      %p196 = pneg %p130
      %p197 = pneg %p127
      %p198 = scmp.lt.s32.totalorder %s15, 1
      %s199 = scalar_select %p198, %s15, 1
      %s200 = smul.addr %s199, 2
      %s201 = smul.addr %s200, 4
      %s202 = scalar_lea.vmem %s4, %s201
      %p203 = scmp.lt.s32.totalorder %s15, 1
      %s204 = scalar_select %p203, %s15, 1
      %s205 = smul.addr %s204, 5
      %s206 = smul.addr %s205, 4
      %s207 = scalar_lea.vmem %s0, %s206
      %p208 = scmp.lt.s32.totalorder %s15, 1
      %s209 = scalar_select %p208, %s15, 1
      %s210 = smul.addr %s209, 10
      %s211 = smul.addr %s210, 4
      %s212 = scalar_lea.vmem %s1, %s211
      %p213 = scmp.lt.s32.totalorder %s15, 1
      %s214 = scalar_select %p213, %s15, 1
      %s215 = smul.addr %s214, 2
      %s216 = smul.addr %s215, 4
      %s217 = scalar_lea.vmem %s4, %s216
      %v219 = vld [vmem:[%s207] sm:$0xf]
      %v220 = vld [vmem:[%s207 + $0x4] sm:$0xf]
      %v221 = vld [vmem:[%s207 + $0x8] sm:$0xf]
      %v222 = vld [vmem:[%s207 + $0xc] sm:$0xf]
      %v223 = vld [vmem:[%s207 + $0x10] sm:$0xf]
      %v224 = vld [vmem:[%s212] sm:$0xff]
      %v225 = vld [vmem:[%s212 + $0x8] sm:$0xff]
      %v226 = vld [vmem:[%s212 + $0x10] sm:$0xff]
      %v227 = vld [vmem:[%s212 + $0x18] sm:$0xff]
      %v228 = vld [vmem:[%s212 + $0x20] sm:$0xff]
      %v229 = vld [vmem:[%s2] sm:$0xf]
      %v230 = vld [vmem:[%s2 + $0x4] sm:$0xf]
      %v231 = vld [vmem:[%s2 + $0x8] sm:$0xf]
      %v232 = vld [vmem:[%s2 + $0xc] sm:$0xf]
      %v233 = vld [vmem:[%s2 + $0x10] sm:$0xf]
      %v234 = vld [vmem:[%s2 + $0x14] sm:$0xf]
      %v235 = vld [vmem:[%s2 + $0x18] sm:$0xf]
      %v236 = vld [vmem:[%s2 + $0x1c] sm:$0xf]
      %v237 = vld [vmem:[%s2 + $0x20] sm:$0xf]
      %v238 = vld [vmem:[%s2 + $0x24] sm:$0xf]
      %v239 = vld [vmem:[%s2 + $0x28] sm:$0xf]
      %v240 = vld [vmem:[%s2 + $0x2c] sm:$0xf]
      %v241 = vld [vmem:[%s2 + $0x30] sm:$0xf]
      %v242 = vld [vmem:[%s2 + $0x34] sm:$0xf]
      %v243 = vld [vmem:[%s2 + $0x38] sm:$0xf]
      %v244 = vld [vmem:[%s2 + $0x3c] sm:$0xf]
      %v245 = vld [vmem:[%s2 + $0x40] sm:$0xf]
      %v246 = vld [vmem:[%s2 + $0x44] sm:$0xf]
      %v247 = vld [vmem:[%s2 + $0x48] sm:$0xf]
      %v248 = vld [vmem:[%s2 + $0x4c] sm:$0xf]
      %v249 = vld [vmem:[%s2 + $0x50] sm:$0xf]
      %v250 = vld [vmem:[%s2 + $0x54] sm:$0xf]
      %v251 = vld [vmem:[%s2 + $0x58] sm:$0xf]
      %v252 = vld [vmem:[%s2 + $0x5c] sm:$0xf]
      %v256 = vunpack.c.l.b16 %v219
      %v257 = vunpack.c.l.b16 %v220
      %v258 = vunpack.c.l.b16 %v221
      %v259 = vpack.c.b16 %v257, %v256
      %v260 = vpack.c.b16 %v258, %v258
      %vm261 = vsmask.f32 7424
      %v263 = vshrl.u32 %v259, 16
      %v265 = vshll.u32 %v259, 16
      %v267 = vrot.slane %v265, 1
      %v268 = vor.u32 %v263, %v267
      %v270 = vshll.u32 %v260, 16
      %v272 = vrot.slane %v270, 1
      %v273 = vsel %vm261, %v268, %v272
      %v286 = vunpack.c.l.b16 %v241
      %v287 = vunpack.c.l.b16 %v242
      %v288 = vunpack.c.l.b16 %v243
      %v289 = vunpack.c.l.b16 %v244
      %v290 = vunpack.c.l.b16 %v245
      %v291 = vunpack.c.l.b16 %v246
      %v292 = vunpack.c.l.b16 %v247
      %v293 = vunpack.c.l.b16 %v248
      %v294 = vunpack.c.l.b16 %v249
      %v295 = vunpack.c.l.b16 %v250
      %v296 = vunpack.c.l.b16 %v251
      %v297 = vunpack.c.l.b16 %v252
      %v298 = vpack.c.b16 %v287, %v286
      %v299 = vpack.c.b16 %v289, %v288
      %v300 = vpack.c.b16 %v291, %v290
      %v301 = vpack.c.b16 %v293, %v292
      %v302 = vpack.c.b16 %v295, %v294
      %v303 = vpack.c.b16 %v297, %v296
      %vm310 = vcmask 785408
      %v312 = vsel %vm310, %v273, 0
      %314 = vmatpush.bf16.msra.mxu0 0
      %315 = vmatpush.bf16.msra.mxu0 0
      %316 = vmatpush.bf16.msra.mxu0 %v303
      %317 = vmatpush.bf16.msra.mxu0 %v302
      %318 = vmatpush.bf16.msra.mxu0 %v301
      %319 = vmatpush.bf16.msra.mxu0 %v300
      %320 = vmatpush.bf16.msra.mxu0 %v299
      %321 = vmatpush.bf16.msra.mxu0 %v298
      %322 = vmatmul.bf16.gmra.mxu0 %v312
      %v323 = vpop.f32.mrf.mxu0
      %v324 = vadd.f32 0.0, %v323
      %v325 = vpop.f32.mrf.mxu0
      %v326 = vadd.f32 0.0, %v325
      %327 = vdwg.mxu0
      %v340 = vunpack.c.l.b16 %v229
      %v341 = vunpack.c.l.b16 %v230
      %v342 = vunpack.c.l.b16 %v231
      %v343 = vunpack.c.l.b16 %v232
      %v344 = vunpack.c.l.b16 %v233
      %v345 = vunpack.c.l.b16 %v234
      %v346 = vunpack.c.l.b16 %v235
      %v347 = vunpack.c.l.b16 %v236
      %v348 = vunpack.c.l.b16 %v237
      %v349 = vunpack.c.l.b16 %v238
      %v350 = vunpack.c.l.b16 %v239
      %v351 = vunpack.c.l.b16 %v240
      %v352 = vpack.c.b16 %v341, %v340
      %v353 = vpack.c.b16 %v343, %v342
      %v354 = vpack.c.b16 %v345, %v344
      %v355 = vpack.c.b16 %v347, %v346
      %v356 = vpack.c.b16 %v349, %v348
      %v357 = vpack.c.b16 %v351, %v350
      %v364 = vsel %vm310, %v259, 0
      %366 = vmatpush.bf16.msra.mxu0 0
      %367 = vmatpush.bf16.msra.mxu0 0
      %368 = vmatpush.bf16.msra.mxu0 %v357
      %369 = vmatpush.bf16.msra.mxu0 %v356
      %370 = vmatpush.bf16.msra.mxu0 %v355
      %371 = vmatpush.bf16.msra.mxu0 %v354
      %372 = vmatpush.bf16.msra.mxu0 %v353
      %373 = vmatpush.bf16.msra.mxu0 %v352
      %374 = vmatmul.bf16.gmra.mxu0 %v364
      %v375 = vpop.f32.mrf.mxu0
      %v376 = vadd.f32 %v324, %v375
      %v377 = vpop.f32.mrf.mxu0
      %v378 = vadd.f32 %v326, %v377
      %379 = vdwg.mxu0
      %v380 = vld [vmem:[%s2 + $0x60] sm:$0xf]
      %v381 = vld [vmem:[%s2 + $0x64] sm:$0xf]
      %v382 = vld [vmem:[%s2 + $0x68] sm:$0xf]
      %v383 = vld [vmem:[%s2 + $0x6c] sm:$0xf]
      %v384 = vld [vmem:[%s2 + $0x70] sm:$0xf]
      %v385 = vld [vmem:[%s2 + $0x74] sm:$0xf]
      %v386 = vld [vmem:[%s2 + $0x78] sm:$0xf]
      %v387 = vld [vmem:[%s2 + $0x7c] sm:$0xf]
      %v388 = vld [vmem:[%s2 + $0x80] sm:$0xf]
      %v389 = vld [vmem:[%s2 + $0x84] sm:$0xf]
      %v390 = vld [vmem:[%s2 + $0x88] sm:$0xf]
      %v391 = vld [vmem:[%s2 + $0x8c] sm:$0xf]
      %vm392 = vcmask 1046528
      %v393 = vrot.slane %v259, 1
      %v394 = vrot.slane %v260, 1
      %v395 = vsel %vm392, %v393, %v394
      %v408 = vunpack.c.l.b16 %v380
      %v409 = vunpack.c.l.b16 %v381
      %v410 = vunpack.c.l.b16 %v382
      %v411 = vunpack.c.l.b16 %v383
      %v412 = vunpack.c.l.b16 %v384
      %v413 = vunpack.c.l.b16 %v385
      %v414 = vunpack.c.l.b16 %v386
      %v415 = vunpack.c.l.b16 %v387
      %v416 = vunpack.c.l.b16 %v388
      %v417 = vunpack.c.l.b16 %v389
      %v418 = vunpack.c.l.b16 %v390
      %v419 = vunpack.c.l.b16 %v391
      %v420 = vpack.c.b16 %v409, %v408
      %v421 = vpack.c.b16 %v411, %v410
      %v422 = vpack.c.b16 %v413, %v412
      %v423 = vpack.c.b16 %v415, %v414
      %v424 = vpack.c.b16 %v417, %v416
      %v425 = vpack.c.b16 %v419, %v418
      %v433 = vsel %vm310, %v395, 0
      %435 = vmatpush.bf16.msra.mxu0 0
      %436 = vmatpush.bf16.msra.mxu0 0
      %437 = vmatpush.bf16.msra.mxu0 %v425
      %438 = vmatpush.bf16.msra.mxu0 %v424
      %439 = vmatpush.bf16.msra.mxu0 %v423
      %440 = vmatpush.bf16.msra.mxu0 %v422
      %441 = vmatpush.bf16.msra.mxu0 %v421
      %442 = vmatpush.bf16.msra.mxu0 %v420
      %443 = vmatmul.bf16.gmra.mxu0 %v433
      %v444 = vpop.f32.mrf.mxu0
      %v445 = vadd.f32 0.0, %v444
      %v446 = vpop.f32.mrf.mxu0
      %v447 = vadd.f32 0.0, %v446
      %448 = vdwg.mxu0
      %v449 = vadd.f32 %v376, %v445
      %v450 = vadd.f32 %v378, %v447
      %v451 = vld [vmem:[%s2 + $0x90] sm:$0xf]
      %v452 = vld [vmem:[%s2 + $0x94] sm:$0xf]
      %v453 = vld [vmem:[%s2 + $0x98] sm:$0xf]
      %v454 = vld [vmem:[%s2 + $0x9c] sm:$0xf]
      %v455 = vld [vmem:[%s2 + $0xa0] sm:$0xf]
      %v456 = vld [vmem:[%s2 + $0xa4] sm:$0xf]
      %v457 = vld [vmem:[%s2 + $0xa8] sm:$0xf]
      %v458 = vld [vmem:[%s2 + $0xac] sm:$0xf]
      %v459 = vld [vmem:[%s2 + $0xb0] sm:$0xf]
      %v460 = vld [vmem:[%s2 + $0xb4] sm:$0xf]
      %v461 = vld [vmem:[%s2 + $0xb8] sm:$0xf]
      %v462 = vld [vmem:[%s2 + $0xbc] sm:$0xf]
      %v463 = vpack.c.b16 %v258, %v257
      %v476 = vunpack.c.l.b16 %v451
      %v477 = vunpack.c.l.b16 %v452
      %v478 = vunpack.c.l.b16 %v453
      %v479 = vunpack.c.l.b16 %v454
      %v480 = vunpack.c.l.b16 %v455
      %v481 = vunpack.c.l.b16 %v456
      %v482 = vunpack.c.l.b16 %v457
      %v483 = vunpack.c.l.b16 %v458
      %v484 = vunpack.c.l.b16 %v459
      %v485 = vunpack.c.l.b16 %v460
      %v486 = vunpack.c.l.b16 %v461
      %v487 = vunpack.c.l.b16 %v462
      %v488 = vpack.c.b16 %v477, %v476
      %v489 = vpack.c.b16 %v479, %v478
      %v490 = vpack.c.b16 %v481, %v480
      %v491 = vpack.c.b16 %v483, %v482
      %v492 = vpack.c.b16 %v485, %v484
      %v493 = vpack.c.b16 %v487, %v486
      %v501 = vsel %vm310, %v463, 0
      %503 = vmatpush.bf16.msra.mxu0 0
      %504 = vmatpush.bf16.msra.mxu0 0
      %505 = vmatpush.bf16.msra.mxu0 %v493
      %506 = vmatpush.bf16.msra.mxu0 %v492
      %507 = vmatpush.bf16.msra.mxu0 %v491
      %508 = vmatpush.bf16.msra.mxu0 %v490
      %509 = vmatpush.bf16.msra.mxu0 %v489
      %510 = vmatpush.bf16.msra.mxu0 %v488
      %511 = vmatmul.bf16.gmra.mxu0 %v501
      %v512 = vpop.f32.mrf.mxu0
      %v513 = vadd.f32 0.0, %v512
      %v514 = vpop.f32.mrf.mxu0
      %v515 = vadd.f32 0.0, %v514
      %516 = vdwg.mxu0
      %v517 = vadd.f32 %v449, %v513
      %v518 = vadd.f32 %v450, %v515
      %v519 = vld [vmem:[%s2 + $0xc0] sm:$0xf]
      %v520 = vld [vmem:[%s2 + $0xc4] sm:$0xf]
      %v521 = vld [vmem:[%s2 + $0xc8] sm:$0xf]
      %v522 = vld [vmem:[%s2 + $0xcc] sm:$0xf]
      %v523 = vld [vmem:[%s2 + $0xd0] sm:$0xf]
      %v524 = vld [vmem:[%s2 + $0xd4] sm:$0xf]
      %v525 = vld [vmem:[%s2 + $0xd8] sm:$0xf]
      %v526 = vld [vmem:[%s2 + $0xdc] sm:$0xf]
      %v527 = vld [vmem:[%s2 + $0xe0] sm:$0xf]
      %v528 = vld [vmem:[%s2 + $0xe4] sm:$0xf]
      %v529 = vld [vmem:[%s2 + $0xe8] sm:$0xf]
      %v530 = vld [vmem:[%s2 + $0xec] sm:$0xf]
      %v532 = vunpack.c.l.b16 %v222
      %v533 = vpack.c.b16 %v532, %v532
      %v534 = vshrl.u32 %v463, 16
      %v536 = vshll.u32 %v463, 16
      %v538 = vrot.slane %v536, 1
      %v539 = vor.u32 %v534, %v538
      %v541 = vshll.u32 %v533, 16
      %v543 = vrot.slane %v541, 1
      %v544 = vsel %vm261, %v539, %v543
      %v557 = vunpack.c.l.b16 %v519
      %v558 = vunpack.c.l.b16 %v520
      %v559 = vunpack.c.l.b16 %v521
      %v560 = vunpack.c.l.b16 %v522
      %v561 = vunpack.c.l.b16 %v523
      %v562 = vunpack.c.l.b16 %v524
      %v563 = vunpack.c.l.b16 %v525
      %v564 = vunpack.c.l.b16 %v526
      %v565 = vunpack.c.l.b16 %v527
      %v566 = vunpack.c.l.b16 %v528
      %v567 = vunpack.c.l.b16 %v529
      %v568 = vunpack.c.l.b16 %v530
      %v569 = vpack.c.b16 %v558, %v557
      %v570 = vpack.c.b16 %v560, %v559
      %v571 = vpack.c.b16 %v562, %v561
      %v572 = vpack.c.b16 %v564, %v563
      %v573 = vpack.c.b16 %v566, %v565
      %v574 = vpack.c.b16 %v568, %v567
      %v582 = vsel %vm310, %v544, 0
      %584 = vmatpush.bf16.msra.mxu0 0
      %585 = vmatpush.bf16.msra.mxu0 0
      %586 = vmatpush.bf16.msra.mxu0 %v574
      %587 = vmatpush.bf16.msra.mxu0 %v573
      %588 = vmatpush.bf16.msra.mxu0 %v572
      %589 = vmatpush.bf16.msra.mxu0 %v571
      %590 = vmatpush.bf16.msra.mxu0 %v570
      %591 = vmatpush.bf16.msra.mxu0 %v569
      %592 = vmatmul.bf16.gmra.mxu0 %v582
      %v593 = vpop.f32.mrf.mxu0
      %v594 = vadd.f32 0.0, %v593
      %v595 = vpop.f32.mrf.mxu0
      %v596 = vadd.f32 0.0, %v595
      %597 = vdwg.mxu0
      %v598 = vadd.f32 %v517, %v594
      %v599 = vadd.f32 %v518, %v596
      %v600 = vld [vmem:[%s2 + $0xf0] sm:$0xf]
      %v601 = vld [vmem:[%s2 + $0xf4] sm:$0xf]
      %v602 = vld [vmem:[%s2 + $0xf8] sm:$0xf]
      %v603 = vld [vmem:[%s2 + $0xfc] sm:$0xf]
      %v604 = vld [vmem:[%s2 + $0x100] sm:$0xf]
      %v605 = vld [vmem:[%s2 + $0x104] sm:$0xf]
      %v606 = vld [vmem:[%s2 + $0x108] sm:$0xf]
      %v607 = vld [vmem:[%s2 + $0x10c] sm:$0xf]
      %v608 = vld [vmem:[%s2 + $0x110] sm:$0xf]
      %v609 = vld [vmem:[%s2 + $0x114] sm:$0xf]
      %v610 = vld [vmem:[%s2 + $0x118] sm:$0xf]
      %v611 = vld [vmem:[%s2 + $0x11c] sm:$0xf]
      %v612 = vrot.slane %v463, 1
      %v613 = vrot.slane %v533, 1
      %v614 = vsel %vm392, %v612, %v613
      %v627 = vunpack.c.l.b16 %v600
      %v628 = vunpack.c.l.b16 %v601
      %v629 = vunpack.c.l.b16 %v602
      %v630 = vunpack.c.l.b16 %v603
      %v631 = vunpack.c.l.b16 %v604
      %v632 = vunpack.c.l.b16 %v605
      %v633 = vunpack.c.l.b16 %v606
      %v634 = vunpack.c.l.b16 %v607
      %v635 = vunpack.c.l.b16 %v608
      %v636 = vunpack.c.l.b16 %v609
      %v637 = vunpack.c.l.b16 %v610
      %v638 = vunpack.c.l.b16 %v611
      %v639 = vpack.c.b16 %v628, %v627
      %v640 = vpack.c.b16 %v630, %v629
      %v641 = vpack.c.b16 %v632, %v631
      %v642 = vpack.c.b16 %v634, %v633
      %v643 = vpack.c.b16 %v636, %v635
      %v644 = vpack.c.b16 %v638, %v637
      %v652 = vsel %vm310, %v614, 0
      %654 = vmatpush.bf16.msra.mxu0 0
      %655 = vmatpush.bf16.msra.mxu0 0
      %656 = vmatpush.bf16.msra.mxu0 %v644
      %657 = vmatpush.bf16.msra.mxu0 %v643
      %658 = vmatpush.bf16.msra.mxu0 %v642
      %659 = vmatpush.bf16.msra.mxu0 %v641
      %660 = vmatpush.bf16.msra.mxu0 %v640
      %661 = vmatpush.bf16.msra.mxu0 %v639
      %662 = vmatmul.bf16.gmra.mxu0 %v652
      %v663 = vpop.f32.mrf.mxu0
      %v664 = vadd.f32 0.0, %v663
      %v665 = vpop.f32.mrf.mxu0
      %v666 = vadd.f32 0.0, %v665
      %667 = vdwg.mxu0
      %v668 = vadd.f32 %v598, %v664
      %v669 = vadd.f32 %v599, %v666
      %v670 = vld [vmem:[%s2 + $0x120] sm:$0xf]
      %v671 = vld [vmem:[%s2 + $0x124] sm:$0xf]
      %v672 = vld [vmem:[%s2 + $0x128] sm:$0xf]
      %v673 = vld [vmem:[%s2 + $0x12c] sm:$0xf]
      %v674 = vld [vmem:[%s2 + $0x130] sm:$0xf]
      %v675 = vld [vmem:[%s2 + $0x134] sm:$0xf]
      %v676 = vld [vmem:[%s2 + $0x138] sm:$0xf]
      %v677 = vld [vmem:[%s2 + $0x13c] sm:$0xf]
      %v678 = vld [vmem:[%s2 + $0x140] sm:$0xf]
      %v679 = vld [vmem:[%s2 + $0x144] sm:$0xf]
      %v680 = vld [vmem:[%s2 + $0x148] sm:$0xf]
      %v681 = vld [vmem:[%s2 + $0x14c] sm:$0xf]
      %v682 = vpack.c.b16 %v532, %v258
      %v695 = vunpack.c.l.b16 %v670
      %v696 = vunpack.c.l.b16 %v671
      %v697 = vunpack.c.l.b16 %v672
      %v698 = vunpack.c.l.b16 %v673
      %v699 = vunpack.c.l.b16 %v674
      %v700 = vunpack.c.l.b16 %v675
      %v701 = vunpack.c.l.b16 %v676
      %v702 = vunpack.c.l.b16 %v677
      %v703 = vunpack.c.l.b16 %v678
      %v704 = vunpack.c.l.b16 %v679
      %v705 = vunpack.c.l.b16 %v680
      %v706 = vunpack.c.l.b16 %v681
      %v707 = vpack.c.b16 %v696, %v695
      %v708 = vpack.c.b16 %v698, %v697
      %v709 = vpack.c.b16 %v700, %v699
      %v710 = vpack.c.b16 %v702, %v701
      %v711 = vpack.c.b16 %v704, %v703
      %v712 = vpack.c.b16 %v706, %v705
      %v720 = vsel %vm310, %v682, 0
      %722 = vmatpush.bf16.msra.mxu0 0
      %723 = vmatpush.bf16.msra.mxu0 0
      %724 = vmatpush.bf16.msra.mxu0 %v712
      %725 = vmatpush.bf16.msra.mxu0 %v711
      %726 = vmatpush.bf16.msra.mxu0 %v710
      %727 = vmatpush.bf16.msra.mxu0 %v709
      %728 = vmatpush.bf16.msra.mxu0 %v708
      %729 = vmatpush.bf16.msra.mxu0 %v707
      %730 = vmatmul.bf16.gmra.mxu0 %v720
      %v731 = vpop.f32.mrf.mxu0
      %v732 = vadd.f32 0.0, %v731
      %v733 = vpop.f32.mrf.mxu0
      %v734 = vadd.f32 0.0, %v733
      %735 = vdwg.mxu0
      %v736 = vadd.f32 %v668, %v732
      %v737 = vadd.f32 %v669, %v734
      %v738 = vld [vmem:[%s2 + $0x150] sm:$0xf]
      %v739 = vld [vmem:[%s2 + $0x154] sm:$0xf]
      %v740 = vld [vmem:[%s2 + $0x158] sm:$0xf]
      %v741 = vld [vmem:[%s2 + $0x15c] sm:$0xf]
      %v742 = vld [vmem:[%s2 + $0x160] sm:$0xf]
      %v743 = vld [vmem:[%s2 + $0x164] sm:$0xf]
      %v744 = vld [vmem:[%s2 + $0x168] sm:$0xf]
      %v745 = vld [vmem:[%s2 + $0x16c] sm:$0xf]
      %v746 = vld [vmem:[%s2 + $0x170] sm:$0xf]
      %v747 = vld [vmem:[%s2 + $0x174] sm:$0xf]
      %v748 = vld [vmem:[%s2 + $0x178] sm:$0xf]
      %v749 = vld [vmem:[%s2 + $0x17c] sm:$0xf]
      %v751 = vunpack.c.l.b16 %v223
      %v752 = vpack.c.b16 %v751, %v751
      %v753 = vshrl.u32 %v682, 16
      %v755 = vshll.u32 %v682, 16
      %v757 = vrot.slane %v755, 1
      %v758 = vor.u32 %v753, %v757
      %v760 = vshll.u32 %v752, 16
      %v762 = vrot.slane %v760, 1
      %v763 = vsel %vm261, %v758, %v762
      %v776 = vunpack.c.l.b16 %v738
      %v777 = vunpack.c.l.b16 %v739
      %v778 = vunpack.c.l.b16 %v740
      %v779 = vunpack.c.l.b16 %v741
      %v780 = vunpack.c.l.b16 %v742
      %v781 = vunpack.c.l.b16 %v743
      %v782 = vunpack.c.l.b16 %v744
      %v783 = vunpack.c.l.b16 %v745
      %v784 = vunpack.c.l.b16 %v746
      %v785 = vunpack.c.l.b16 %v747
      %v786 = vunpack.c.l.b16 %v748
      %v787 = vunpack.c.l.b16 %v749
      %v788 = vpack.c.b16 %v777, %v776
      %v789 = vpack.c.b16 %v779, %v778
      %v790 = vpack.c.b16 %v781, %v780
      %v791 = vpack.c.b16 %v783, %v782
      %v792 = vpack.c.b16 %v785, %v784
      %v793 = vpack.c.b16 %v787, %v786
      %v801 = vsel %vm310, %v763, 0
      %803 = vmatpush.bf16.msra.mxu0 0
      %804 = vmatpush.bf16.msra.mxu0 0
      %805 = vmatpush.bf16.msra.mxu0 %v793
      %806 = vmatpush.bf16.msra.mxu0 %v792
      %807 = vmatpush.bf16.msra.mxu0 %v791
      %808 = vmatpush.bf16.msra.mxu0 %v790
      %809 = vmatpush.bf16.msra.mxu0 %v789
      %810 = vmatpush.bf16.msra.mxu0 %v788
      %811 = vmatmul.bf16.gmra.mxu0 %v801
      %v812 = vpop.f32.mrf.mxu0
      %v813 = vadd.f32 0.0, %v812
      %v814 = vpop.f32.mrf.mxu0
      %v815 = vadd.f32 0.0, %v814
      %816 = vdwg.mxu0
      %v817 = vadd.f32 %v736, %v813
      %v818 = vadd.f32 %v737, %v815
      %v819 = vld [vmem:[%s2 + $0x180] sm:$0xf]
      %v820 = vld [vmem:[%s2 + $0x184] sm:$0xf]
      %v821 = vld [vmem:[%s2 + $0x188] sm:$0xf]
      %v822 = vld [vmem:[%s2 + $0x18c] sm:$0xf]
      %v823 = vld [vmem:[%s2 + $0x190] sm:$0xf]
      %v824 = vld [vmem:[%s2 + $0x194] sm:$0xf]
      %v825 = vld [vmem:[%s2 + $0x198] sm:$0xf]
      %v826 = vld [vmem:[%s2 + $0x19c] sm:$0xf]
      %v827 = vld [vmem:[%s2 + $0x1a0] sm:$0xf]
      %v828 = vld [vmem:[%s2 + $0x1a4] sm:$0xf]
      %v829 = vld [vmem:[%s2 + $0x1a8] sm:$0xf]
      %v830 = vld [vmem:[%s2 + $0x1ac] sm:$0xf]
      %v831 = vrot.slane %v682, 1
      %v832 = vrot.slane %v752, 1
      %v833 = vsel %vm392, %v831, %v832
      %v846 = vunpack.c.l.b16 %v819
      %v847 = vunpack.c.l.b16 %v820
      %v848 = vunpack.c.l.b16 %v821
      %v849 = vunpack.c.l.b16 %v822
      %v850 = vunpack.c.l.b16 %v823
      %v851 = vunpack.c.l.b16 %v824
      %v852 = vunpack.c.l.b16 %v825
      %v853 = vunpack.c.l.b16 %v826
      %v854 = vunpack.c.l.b16 %v827
      %v855 = vunpack.c.l.b16 %v828
      %v856 = vunpack.c.l.b16 %v829
      %v857 = vunpack.c.l.b16 %v830
      %v858 = vpack.c.b16 %v847, %v846
      %v859 = vpack.c.b16 %v849, %v848
      %v860 = vpack.c.b16 %v851, %v850
      %v861 = vpack.c.b16 %v853, %v852
      %v862 = vpack.c.b16 %v855, %v854
      %v863 = vpack.c.b16 %v857, %v856
      %v871 = vsel %vm310, %v833, 0
      %873 = vmatpush.bf16.msra.mxu0 0
      %874 = vmatpush.bf16.msra.mxu0 0
      %875 = vmatpush.bf16.msra.mxu0 %v863
      %876 = vmatpush.bf16.msra.mxu0 %v862
      %877 = vmatpush.bf16.msra.mxu0 %v861
      %878 = vmatpush.bf16.msra.mxu0 %v860
      %879 = vmatpush.bf16.msra.mxu0 %v859
      %880 = vmatpush.bf16.msra.mxu0 %v858
      %881 = vmatmul.bf16.gmra.mxu0 %v871
      %v882 = vpop.f32.mrf.mxu0
      %v883 = vadd.f32 0.0, %v882
      %v884 = vpop.f32.mrf.mxu0
      %v885 = vadd.f32 0.0, %v884
      %886 = vdwg.mxu0
      %v887 = vadd.f32 %v817, %v883
      %v888 = vadd.f32 %v818, %v885
      %v889 = vmax.f32 %v887, 0.0
      %v890 = vmax.f32 %v888, 0.0
      %v891 = vld [vmem:[%s3] sm:$0xf]
      %v892 = vld [vmem:[%s3 + $0x4] sm:$0xf]
      %v893 = vld [vmem:[%s3 + $0x8] sm:$0xf]
      %v894 = vld [vmem:[%s3 + $0xc] sm:$0xf]
      %v895 = vld [vmem:[%s3 + $0x10] sm:$0xf]
      %v896 = vld [vmem:[%s3 + $0x14] sm:$0xf]
      %v897 = vld [vmem:[%s3 + $0x18] sm:$0xf]
      %v898 = vld [vmem:[%s3 + $0x1c] sm:$0xf]
      %v899 = vld [vmem:[%s3 + $0x20] sm:$0xf]
      %v900 = vld [vmem:[%s3 + $0x24] sm:$0xf]
      %v901 = vld [vmem:[%s3 + $0x28] sm:$0xf]
      %v902 = vld [vmem:[%s3 + $0x2c] sm:$0xf]
      %v903 = vld [vmem:[%s3 + $0x30] sm:$0xf]
      %v904 = vld [vmem:[%s3 + $0x34] sm:$0xf]
      %v905 = vld [vmem:[%s3 + $0x38] sm:$0xf]
      %v906 = vld [vmem:[%s3 + $0x3c] sm:$0xf]
      %v907 = vld [vmem:[%s3 + $0x40] sm:$0xf]
      %v908 = vld [vmem:[%s3 + $0x44] sm:$0xf]
      %v909 = vld [vmem:[%s3 + $0x48] sm:$0xf]
      %v910 = vld [vmem:[%s3 + $0x4c] sm:$0xf]
      %v911 = vld [vmem:[%s3 + $0x50] sm:$0xf]
      %v912 = vld [vmem:[%s3 + $0x54] sm:$0xf]
      %v913 = vld [vmem:[%s3 + $0x58] sm:$0xf]
      %v914 = vld [vmem:[%s3 + $0x5c] sm:$0xf]
      %v915 = vld [vmem:[%s3 + $0x60] sm:$0xf]
      %v916 = vld [vmem:[%s3 + $0x64] sm:$0xf]
      %v917 = vld [vmem:[%s3 + $0x68] sm:$0xf]
      %v918 = vld [vmem:[%s3 + $0x6c] sm:$0xf]
      %v919 = vld [vmem:[%s3 + $0x70] sm:$0xf]
      %v920 = vld [vmem:[%s3 + $0x74] sm:$0xf]
      %v921 = vld [vmem:[%s3 + $0x78] sm:$0xf]
      %v922 = vld [vmem:[%s3 + $0x7c] sm:$0xf]
      %v923 = vld [vmem:[%s3 + $0x80] sm:$0xf]
      %v924 = vld [vmem:[%s3 + $0x84] sm:$0xf]
      %v925 = vld [vmem:[%s3 + $0x88] sm:$0xf]
      %v926 = vld [vmem:[%s3 + $0x8c] sm:$0xf]
      %v927 = vld [vmem:[%s3 + $0x90] sm:$0xf]
      %v928 = vld [vmem:[%s3 + $0x94] sm:$0xf]
      %v929 = vld [vmem:[%s3 + $0x98] sm:$0xf]
      %v930 = vld [vmem:[%s3 + $0x9c] sm:$0xf]
      %v931 = vld [vmem:[%s3 + $0xa0] sm:$0xf]
      %v932 = vld [vmem:[%s3 + $0xa4] sm:$0xf]
      %v933 = vld [vmem:[%s3 + $0xa8] sm:$0xf]
      %v934 = vld [vmem:[%s3 + $0xac] sm:$0xf]
      %v935 = vld [vmem:[%s3 + $0xb0] sm:$0xf]
      %v936 = vld [vmem:[%s3 + $0xb4] sm:$0xf]
      %v937 = vld [vmem:[%s3 + $0xb8] sm:$0xf]
      %v938 = vld [vmem:[%s3 + $0xbc] sm:$0xf]
      %v942 = vunpack.c.l.b16 %v224
      %v943 = vunpack.c.h.b16 %v224
      %v944 = vunpack.c.l.b16 %v225
      %v945 = vunpack.c.h.b16 %v225
      %v946 = vunpack.c.l.b16 %v226
      %v947 = vunpack.c.h.b16 %v226
      %v948 = vpack.c.b16 %v944, %v942
      %v949 = vpack.c.b16 %v945, %v943
      %v950 = vpack.c.b16 %v946, %v946
      %v951 = vpack.c.b16 %v947, %v947
      %v953 = vshrl.u32 %v948, 16
      %v955 = vshll.u32 %v948, 16
      %v957 = vrot.slane %v955, 1
      %v958 = vor.u32 %v953, %v957
      %v960 = vshll.u32 %v950, 16
      %v962 = vrot.slane %v960, 1
      %v963 = vsel %vm261, %v958, %v962
      %v965 = vshrl.u32 %v949, 16
      %v967 = vshll.u32 %v949, 16
      %v969 = vrot.slane %v967, 1
      %v970 = vor.u32 %v965, %v969
      %v972 = vshll.u32 %v951, 16
      %v974 = vrot.slane %v972, 1
      %v975 = vsel %vm261, %v970, %v974
      %v1001 = vunpack.c.l.b16 %v915
      %v1002 = vunpack.c.l.b16 %v916
      %v1003 = vunpack.c.l.b16 %v917
      %v1004 = vunpack.c.l.b16 %v918
      %v1005 = vunpack.c.l.b16 %v919
      %v1006 = vunpack.c.l.b16 %v920
      %v1007 = vunpack.c.l.b16 %v921
      %v1008 = vunpack.c.l.b16 %v922
      %v1009 = vunpack.c.l.b16 %v923
      %v1010 = vunpack.c.l.b16 %v924
      %v1011 = vunpack.c.l.b16 %v925
      %v1012 = vunpack.c.l.b16 %v926
      %v1013 = vunpack.c.l.b16 %v927
      %v1014 = vunpack.c.l.b16 %v928
      %v1015 = vunpack.c.l.b16 %v929
      %v1016 = vunpack.c.l.b16 %v930
      %v1017 = vunpack.c.l.b16 %v931
      %v1018 = vunpack.c.l.b16 %v932
      %v1019 = vunpack.c.l.b16 %v933
      %v1020 = vunpack.c.l.b16 %v934
      %v1021 = vunpack.c.l.b16 %v935
      %v1022 = vunpack.c.l.b16 %v936
      %v1023 = vunpack.c.l.b16 %v937
      %v1024 = vunpack.c.l.b16 %v938
      %v1025 = vpack.c.b16 %v1002, %v1001
      %v1026 = vpack.c.b16 %v1004, %v1003
      %v1027 = vpack.c.b16 %v1006, %v1005
      %v1028 = vpack.c.b16 %v1008, %v1007
      %v1029 = vpack.c.b16 %v1010, %v1009
      %v1030 = vpack.c.b16 %v1012, %v1011
      %v1031 = vpack.c.b16 %v1014, %v1013
      %v1032 = vpack.c.b16 %v1016, %v1015
      %v1033 = vpack.c.b16 %v1018, %v1017
      %v1034 = vpack.c.b16 %v1020, %v1019
      %v1035 = vpack.c.b16 %v1022, %v1021
      %v1036 = vpack.c.b16 %v1024, %v1023
      %vm1049 = vcmask 523264
      %v1051 = vsel %vm1049, %v975, 0
      %1053 = vmatpush.bf16.msra.mxu0 %v1032
      %1054 = vmatpush.bf16.msra.mxu0 %v1031
      %1055 = vmatpush.bf16.msra.mxu0 %v1030
      %1056 = vmatpush.bf16.msra.mxu0 %v1029
      %1057 = vmatpush.bf16.msra.mxu0 %v1028
      %1058 = vmatpush.bf16.msra.mxu0 %v1027
      %1059 = vmatpush.bf16.msra.mxu0 %v1026
      %1060 = vmatpush.bf16.msra.mxu0 %v1025
      %1061 = vmatmul.bf16.gmra.mxu0 %v963
      %v1062 = vpop.f32.mrf.mxu0
      %v1063 = vadd.f32 0.0, %v1062
      %v1064 = vpop.f32.mrf.mxu0
      %v1065 = vadd.f32 0.0, %v1064
      %1066 = vdwg.mxu0
      %1067 = vmatpush.bf16.msra.mxu0 0
      %1068 = vmatpush.bf16.msra.mxu0 0
      %1069 = vmatpush.bf16.msra.mxu0 0
      %1070 = vmatpush.bf16.msra.mxu0 0
      %1071 = vmatpush.bf16.msra.mxu0 %v1036
      %1072 = vmatpush.bf16.msra.mxu0 %v1035
      %1073 = vmatpush.bf16.msra.mxu0 %v1034
      %1074 = vmatpush.bf16.msra.mxu0 %v1033
      %1075 = vmatmul.bf16.gmra.mxu0 %v1051
      %v1076 = vpop.f32.mrf.mxu0
      %v1077 = vadd.f32 %v1063, %v1076
      %v1078 = vpop.f32.mrf.mxu0
      %v1079 = vadd.f32 %v1065, %v1078
      %1080 = vdwg.mxu0
      %v1106 = vunpack.c.l.b16 %v891
      %v1107 = vunpack.c.l.b16 %v892
      %v1108 = vunpack.c.l.b16 %v893
      %v1109 = vunpack.c.l.b16 %v894
      %v1110 = vunpack.c.l.b16 %v895
      %v1111 = vunpack.c.l.b16 %v896
      %v1112 = vunpack.c.l.b16 %v897
      %v1113 = vunpack.c.l.b16 %v898
      %v1114 = vunpack.c.l.b16 %v899
      %v1115 = vunpack.c.l.b16 %v900
      %v1116 = vunpack.c.l.b16 %v901
      %v1117 = vunpack.c.l.b16 %v902
      %v1118 = vunpack.c.l.b16 %v903
      %v1119 = vunpack.c.l.b16 %v904
      %v1120 = vunpack.c.l.b16 %v905
      %v1121 = vunpack.c.l.b16 %v906
      %v1122 = vunpack.c.l.b16 %v907
      %v1123 = vunpack.c.l.b16 %v908
      %v1124 = vunpack.c.l.b16 %v909
      %v1125 = vunpack.c.l.b16 %v910
      %v1126 = vunpack.c.l.b16 %v911
      %v1127 = vunpack.c.l.b16 %v912
      %v1128 = vunpack.c.l.b16 %v913
      %v1129 = vunpack.c.l.b16 %v914
      %v1130 = vpack.c.b16 %v1107, %v1106
      %v1131 = vpack.c.b16 %v1109, %v1108
      %v1132 = vpack.c.b16 %v1111, %v1110
      %v1133 = vpack.c.b16 %v1113, %v1112
      %v1134 = vpack.c.b16 %v1115, %v1114
      %v1135 = vpack.c.b16 %v1117, %v1116
      %v1136 = vpack.c.b16 %v1119, %v1118
      %v1137 = vpack.c.b16 %v1121, %v1120
      %v1138 = vpack.c.b16 %v1123, %v1122
      %v1139 = vpack.c.b16 %v1125, %v1124
      %v1140 = vpack.c.b16 %v1127, %v1126
      %v1141 = vpack.c.b16 %v1129, %v1128
      %v1154 = vsel %vm1049, %v949, 0
      %1156 = vmatpush.bf16.msra.mxu0 %v1137
      %1157 = vmatpush.bf16.msra.mxu0 %v1136
      %1158 = vmatpush.bf16.msra.mxu0 %v1135
      %1159 = vmatpush.bf16.msra.mxu0 %v1134
      %1160 = vmatpush.bf16.msra.mxu0 %v1133
      %1161 = vmatpush.bf16.msra.mxu0 %v1132
      %1162 = vmatpush.bf16.msra.mxu0 %v1131
      %1163 = vmatpush.bf16.msra.mxu0 %v1130
      %1164 = vmatmul.bf16.gmra.mxu0 %v948
      %v1165 = vpop.f32.mrf.mxu0
      %v1166 = vadd.f32 %v1077, %v1165
      %v1167 = vpop.f32.mrf.mxu0
      %v1168 = vadd.f32 %v1079, %v1167
      %1169 = vdwg.mxu0
      %1170 = vmatpush.bf16.msra.mxu0 0
      %1171 = vmatpush.bf16.msra.mxu0 0
      %1172 = vmatpush.bf16.msra.mxu0 0
      %1173 = vmatpush.bf16.msra.mxu0 0
      %1174 = vmatpush.bf16.msra.mxu0 %v1141
      %1175 = vmatpush.bf16.msra.mxu0 %v1140
      %1176 = vmatpush.bf16.msra.mxu0 %v1139
      %1177 = vmatpush.bf16.msra.mxu0 %v1138
      %1178 = vmatmul.bf16.gmra.mxu0 %v1154
      %v1179 = vpop.f32.mrf.mxu0
      %v1180 = vadd.f32 %v1166, %v1179
      %v1181 = vpop.f32.mrf.mxu0
      %v1182 = vadd.f32 %v1168, %v1181
      %1183 = vdwg.mxu0
      %v1184 = vld [vmem:[%s3 + $0xc0] sm:$0xf]
      %v1185 = vld [vmem:[%s3 + $0xc4] sm:$0xf]
      %v1186 = vld [vmem:[%s3 + $0xc8] sm:$0xf]
      %v1187 = vld [vmem:[%s3 + $0xcc] sm:$0xf]
      %v1188 = vld [vmem:[%s3 + $0xd0] sm:$0xf]
      %v1189 = vld [vmem:[%s3 + $0xd4] sm:$0xf]
      %v1190 = vld [vmem:[%s3 + $0xd8] sm:$0xf]
      %v1191 = vld [vmem:[%s3 + $0xdc] sm:$0xf]
      %v1192 = vld [vmem:[%s3 + $0xe0] sm:$0xf]
      %v1193 = vld [vmem:[%s3 + $0xe4] sm:$0xf]
      %v1194 = vld [vmem:[%s3 + $0xe8] sm:$0xf]
      %v1195 = vld [vmem:[%s3 + $0xec] sm:$0xf]
      %v1196 = vld [vmem:[%s3 + $0xf0] sm:$0xf]
      %v1197 = vld [vmem:[%s3 + $0xf4] sm:$0xf]
      %v1198 = vld [vmem:[%s3 + $0xf8] sm:$0xf]
      %v1199 = vld [vmem:[%s3 + $0xfc] sm:$0xf]
      %v1200 = vld [vmem:[%s3 + $0x100] sm:$0xf]
      %v1201 = vld [vmem:[%s3 + $0x104] sm:$0xf]
      %v1202 = vld [vmem:[%s3 + $0x108] sm:$0xf]
      %v1203 = vld [vmem:[%s3 + $0x10c] sm:$0xf]
      %v1204 = vld [vmem:[%s3 + $0x110] sm:$0xf]
      %v1205 = vld [vmem:[%s3 + $0x114] sm:$0xf]
      %v1206 = vld [vmem:[%s3 + $0x118] sm:$0xf]
      %v1207 = vld [vmem:[%s3 + $0x11c] sm:$0xf]
      %v1208 = vrot.slane %v948, 1
      %v1209 = vrot.slane %v950, 1
      %v1210 = vsel %vm392, %v1208, %v1209
      %v1211 = vrot.slane %v949, 1
      %v1212 = vrot.slane %v951, 1
      %v1213 = vsel %vm392, %v1211, %v1212
      %v1239 = vunpack.c.l.b16 %v1184
      %v1240 = vunpack.c.l.b16 %v1185
      %v1241 = vunpack.c.l.b16 %v1186
      %v1242 = vunpack.c.l.b16 %v1187
      %v1243 = vunpack.c.l.b16 %v1188
      %v1244 = vunpack.c.l.b16 %v1189
      %v1245 = vunpack.c.l.b16 %v1190
      %v1246 = vunpack.c.l.b16 %v1191
      %v1247 = vunpack.c.l.b16 %v1192
      %v1248 = vunpack.c.l.b16 %v1193
      %v1249 = vunpack.c.l.b16 %v1194
      %v1250 = vunpack.c.l.b16 %v1195
      %v1251 = vunpack.c.l.b16 %v1196
      %v1252 = vunpack.c.l.b16 %v1197
      %v1253 = vunpack.c.l.b16 %v1198
      %v1254 = vunpack.c.l.b16 %v1199
      %v1255 = vunpack.c.l.b16 %v1200
      %v1256 = vunpack.c.l.b16 %v1201
      %v1257 = vunpack.c.l.b16 %v1202
      %v1258 = vunpack.c.l.b16 %v1203
      %v1259 = vunpack.c.l.b16 %v1204
      %v1260 = vunpack.c.l.b16 %v1205
      %v1261 = vunpack.c.l.b16 %v1206
      %v1262 = vunpack.c.l.b16 %v1207
      %v1263 = vpack.c.b16 %v1240, %v1239
      %v1264 = vpack.c.b16 %v1242, %v1241
      %v1265 = vpack.c.b16 %v1244, %v1243
      %v1266 = vpack.c.b16 %v1246, %v1245
      %v1267 = vpack.c.b16 %v1248, %v1247
      %v1268 = vpack.c.b16 %v1250, %v1249
      %v1269 = vpack.c.b16 %v1252, %v1251
      %v1270 = vpack.c.b16 %v1254, %v1253
      %v1271 = vpack.c.b16 %v1256, %v1255
      %v1272 = vpack.c.b16 %v1258, %v1257
      %v1273 = vpack.c.b16 %v1260, %v1259
      %v1274 = vpack.c.b16 %v1262, %v1261
      %v1288 = vsel %vm1049, %v1213, 0
      %1290 = vmatpush.bf16.msra.mxu0 %v1270
      %1291 = vmatpush.bf16.msra.mxu0 %v1269
      %1292 = vmatpush.bf16.msra.mxu0 %v1268
      %1293 = vmatpush.bf16.msra.mxu0 %v1267
      %1294 = vmatpush.bf16.msra.mxu0 %v1266
      %1295 = vmatpush.bf16.msra.mxu0 %v1265
      %1296 = vmatpush.bf16.msra.mxu0 %v1264
      %1297 = vmatpush.bf16.msra.mxu0 %v1263
      %1298 = vmatmul.bf16.gmra.mxu0 %v1210
      %v1299 = vpop.f32.mrf.mxu0
      %v1300 = vadd.f32 0.0, %v1299
      %v1301 = vpop.f32.mrf.mxu0
      %v1302 = vadd.f32 0.0, %v1301
      %1303 = vdwg.mxu0
      %1304 = vmatpush.bf16.msra.mxu0 0
      %1305 = vmatpush.bf16.msra.mxu0 0
      %1306 = vmatpush.bf16.msra.mxu0 0
      %1307 = vmatpush.bf16.msra.mxu0 0
      %1308 = vmatpush.bf16.msra.mxu0 %v1274
      %1309 = vmatpush.bf16.msra.mxu0 %v1273
      %1310 = vmatpush.bf16.msra.mxu0 %v1272
      %1311 = vmatpush.bf16.msra.mxu0 %v1271
      %1312 = vmatmul.bf16.gmra.mxu0 %v1288
      %v1313 = vpop.f32.mrf.mxu0
      %v1314 = vadd.f32 %v1300, %v1313
      %v1315 = vpop.f32.mrf.mxu0
      %v1316 = vadd.f32 %v1302, %v1315
      %1317 = vdwg.mxu0
      %v1318 = vadd.f32 %v1180, %v1314
      %v1319 = vadd.f32 %v1182, %v1316
      %v1320 = vld [vmem:[%s3 + $0x120] sm:$0xf]
      %v1321 = vld [vmem:[%s3 + $0x124] sm:$0xf]
      %v1322 = vld [vmem:[%s3 + $0x128] sm:$0xf]
      %v1323 = vld [vmem:[%s3 + $0x12c] sm:$0xf]
      %v1324 = vld [vmem:[%s3 + $0x130] sm:$0xf]
      %v1325 = vld [vmem:[%s3 + $0x134] sm:$0xf]
      %v1326 = vld [vmem:[%s3 + $0x138] sm:$0xf]
      %v1327 = vld [vmem:[%s3 + $0x13c] sm:$0xf]
      %v1328 = vld [vmem:[%s3 + $0x140] sm:$0xf]
      %v1329 = vld [vmem:[%s3 + $0x144] sm:$0xf]
      %v1330 = vld [vmem:[%s3 + $0x148] sm:$0xf]
      %v1331 = vld [vmem:[%s3 + $0x14c] sm:$0xf]
      %v1332 = vld [vmem:[%s3 + $0x150] sm:$0xf]
      %v1333 = vld [vmem:[%s3 + $0x154] sm:$0xf]
      %v1334 = vld [vmem:[%s3 + $0x158] sm:$0xf]
      %v1335 = vld [vmem:[%s3 + $0x15c] sm:$0xf]
      %v1336 = vld [vmem:[%s3 + $0x160] sm:$0xf]
      %v1337 = vld [vmem:[%s3 + $0x164] sm:$0xf]
      %v1338 = vld [vmem:[%s3 + $0x168] sm:$0xf]
      %v1339 = vld [vmem:[%s3 + $0x16c] sm:$0xf]
      %v1340 = vld [vmem:[%s3 + $0x170] sm:$0xf]
      %v1341 = vld [vmem:[%s3 + $0x174] sm:$0xf]
      %v1342 = vld [vmem:[%s3 + $0x178] sm:$0xf]
      %v1343 = vld [vmem:[%s3 + $0x17c] sm:$0xf]
      %v1344 = vpack.c.b16 %v946, %v944
      %v1345 = vpack.c.b16 %v947, %v945
      %v1371 = vunpack.c.l.b16 %v1320
      %v1372 = vunpack.c.l.b16 %v1321
      %v1373 = vunpack.c.l.b16 %v1322
      %v1374 = vunpack.c.l.b16 %v1323
      %v1375 = vunpack.c.l.b16 %v1324
      %v1376 = vunpack.c.l.b16 %v1325
      %v1377 = vunpack.c.l.b16 %v1326
      %v1378 = vunpack.c.l.b16 %v1327
      %v1379 = vunpack.c.l.b16 %v1328
      %v1380 = vunpack.c.l.b16 %v1329
      %v1381 = vunpack.c.l.b16 %v1330
      %v1382 = vunpack.c.l.b16 %v1331
      %v1383 = vunpack.c.l.b16 %v1332
      %v1384 = vunpack.c.l.b16 %v1333
      %v1385 = vunpack.c.l.b16 %v1334
      %v1386 = vunpack.c.l.b16 %v1335
      %v1387 = vunpack.c.l.b16 %v1336
      %v1388 = vunpack.c.l.b16 %v1337
      %v1389 = vunpack.c.l.b16 %v1338
      %v1390 = vunpack.c.l.b16 %v1339
      %v1391 = vunpack.c.l.b16 %v1340
      %v1392 = vunpack.c.l.b16 %v1341
      %v1393 = vunpack.c.l.b16 %v1342
      %v1394 = vunpack.c.l.b16 %v1343
      %v1395 = vpack.c.b16 %v1372, %v1371
      %v1396 = vpack.c.b16 %v1374, %v1373
      %v1397 = vpack.c.b16 %v1376, %v1375
      %v1398 = vpack.c.b16 %v1378, %v1377
      %v1399 = vpack.c.b16 %v1380, %v1379
      %v1400 = vpack.c.b16 %v1382, %v1381
      %v1401 = vpack.c.b16 %v1384, %v1383
      %v1402 = vpack.c.b16 %v1386, %v1385
      %v1403 = vpack.c.b16 %v1388, %v1387
      %v1404 = vpack.c.b16 %v1390, %v1389
      %v1405 = vpack.c.b16 %v1392, %v1391
      %v1406 = vpack.c.b16 %v1394, %v1393
      %v1420 = vsel %vm1049, %v1345, 0
      %1422 = vmatpush.bf16.msra.mxu0 %v1402
      %1423 = vmatpush.bf16.msra.mxu0 %v1401
      %1424 = vmatpush.bf16.msra.mxu0 %v1400
      %1425 = vmatpush.bf16.msra.mxu0 %v1399
      %1426 = vmatpush.bf16.msra.mxu0 %v1398
      %1427 = vmatpush.bf16.msra.mxu0 %v1397
      %1428 = vmatpush.bf16.msra.mxu0 %v1396
      %1429 = vmatpush.bf16.msra.mxu0 %v1395
      %1430 = vmatmul.bf16.gmra.mxu0 %v1344
      %v1431 = vpop.f32.mrf.mxu0
      %v1432 = vadd.f32 0.0, %v1431
      %v1433 = vpop.f32.mrf.mxu0
      %v1434 = vadd.f32 0.0, %v1433
      %1435 = vdwg.mxu0
      %1436 = vmatpush.bf16.msra.mxu0 0
      %1437 = vmatpush.bf16.msra.mxu0 0
      %1438 = vmatpush.bf16.msra.mxu0 0
      %1439 = vmatpush.bf16.msra.mxu0 0
      %1440 = vmatpush.bf16.msra.mxu0 %v1406
      %1441 = vmatpush.bf16.msra.mxu0 %v1405
      %1442 = vmatpush.bf16.msra.mxu0 %v1404
      %1443 = vmatpush.bf16.msra.mxu0 %v1403
      %1444 = vmatmul.bf16.gmra.mxu0 %v1420
      %v1445 = vpop.f32.mrf.mxu0
      %v1446 = vadd.f32 %v1432, %v1445
      %v1447 = vpop.f32.mrf.mxu0
      %v1448 = vadd.f32 %v1434, %v1447
      %1449 = vdwg.mxu0
      %v1450 = vadd.f32 %v1318, %v1446
      %v1451 = vadd.f32 %v1319, %v1448
      %v1452 = vld [vmem:[%s3 + $0x180] sm:$0xf]
      %v1453 = vld [vmem:[%s3 + $0x184] sm:$0xf]
      %v1454 = vld [vmem:[%s3 + $0x188] sm:$0xf]
      %v1455 = vld [vmem:[%s3 + $0x18c] sm:$0xf]
      %v1456 = vld [vmem:[%s3 + $0x190] sm:$0xf]
      %v1457 = vld [vmem:[%s3 + $0x194] sm:$0xf]
      %v1458 = vld [vmem:[%s3 + $0x198] sm:$0xf]
      %v1459 = vld [vmem:[%s3 + $0x19c] sm:$0xf]
      %v1460 = vld [vmem:[%s3 + $0x1a0] sm:$0xf]
      %v1461 = vld [vmem:[%s3 + $0x1a4] sm:$0xf]
      %v1462 = vld [vmem:[%s3 + $0x1a8] sm:$0xf]
      %v1463 = vld [vmem:[%s3 + $0x1ac] sm:$0xf]
      %v1464 = vld [vmem:[%s3 + $0x1b0] sm:$0xf]
      %v1465 = vld [vmem:[%s3 + $0x1b4] sm:$0xf]
      %v1466 = vld [vmem:[%s3 + $0x1b8] sm:$0xf]
      %v1467 = vld [vmem:[%s3 + $0x1bc] sm:$0xf]
      %v1468 = vld [vmem:[%s3 + $0x1c0] sm:$0xf]
      %v1469 = vld [vmem:[%s3 + $0x1c4] sm:$0xf]
      %v1470 = vld [vmem:[%s3 + $0x1c8] sm:$0xf]
      %v1471 = vld [vmem:[%s3 + $0x1cc] sm:$0xf]
      %v1472 = vld [vmem:[%s3 + $0x1d0] sm:$0xf]
      %v1473 = vld [vmem:[%s3 + $0x1d4] sm:$0xf]
      %v1474 = vld [vmem:[%s3 + $0x1d8] sm:$0xf]
      %v1475 = vld [vmem:[%s3 + $0x1dc] sm:$0xf]
      %v1477 = vunpack.c.l.b16 %v227
      %v1478 = vunpack.c.h.b16 %v227
      %v1479 = vpack.c.b16 %v1477, %v1477
      %v1480 = vpack.c.b16 %v1478, %v1478
      %v1482 = vshrl.u32 %v1344, 16
      %v1484 = vshll.u32 %v1344, 16
      %v1486 = vrot.slane %v1484, 1
      %v1487 = vor.u32 %v1482, %v1486
      %v1489 = vshll.u32 %v1479, 16
      %v1491 = vrot.slane %v1489, 1
      %v1492 = vsel %vm261, %v1487, %v1491
      %v1493 = vshrl.u32 %v1345, 16
      %v1495 = vshll.u32 %v1345, 16
      %v1497 = vrot.slane %v1495, 1
      %v1498 = vor.u32 %v1493, %v1497
      %v1500 = vshll.u32 %v1480, 16
      %v1502 = vrot.slane %v1500, 1
      %v1503 = vsel %vm261, %v1498, %v1502
      %v1529 = vunpack.c.l.b16 %v1452
      %v1530 = vunpack.c.l.b16 %v1453
      %v1531 = vunpack.c.l.b16 %v1454
      %v1532 = vunpack.c.l.b16 %v1455
      %v1533 = vunpack.c.l.b16 %v1456
      %v1534 = vunpack.c.l.b16 %v1457
      %v1535 = vunpack.c.l.b16 %v1458
      %v1536 = vunpack.c.l.b16 %v1459
      %v1537 = vunpack.c.l.b16 %v1460
      %v1538 = vunpack.c.l.b16 %v1461
      %v1539 = vunpack.c.l.b16 %v1462
      %v1540 = vunpack.c.l.b16 %v1463
      %v1541 = vunpack.c.l.b16 %v1464
      %v1542 = vunpack.c.l.b16 %v1465
      %v1543 = vunpack.c.l.b16 %v1466
      %v1544 = vunpack.c.l.b16 %v1467
      %v1545 = vunpack.c.l.b16 %v1468
      %v1546 = vunpack.c.l.b16 %v1469
      %v1547 = vunpack.c.l.b16 %v1470
      %v1548 = vunpack.c.l.b16 %v1471
      %v1549 = vunpack.c.l.b16 %v1472
      %v1550 = vunpack.c.l.b16 %v1473
      %v1551 = vunpack.c.l.b16 %v1474
      %v1552 = vunpack.c.l.b16 %v1475
      %v1553 = vpack.c.b16 %v1530, %v1529
      %v1554 = vpack.c.b16 %v1532, %v1531
      %v1555 = vpack.c.b16 %v1534, %v1533
      %v1556 = vpack.c.b16 %v1536, %v1535
      %v1557 = vpack.c.b16 %v1538, %v1537
      %v1558 = vpack.c.b16 %v1540, %v1539
      %v1559 = vpack.c.b16 %v1542, %v1541
      %v1560 = vpack.c.b16 %v1544, %v1543
      %v1561 = vpack.c.b16 %v1546, %v1545
      %v1562 = vpack.c.b16 %v1548, %v1547
      %v1563 = vpack.c.b16 %v1550, %v1549
      %v1564 = vpack.c.b16 %v1552, %v1551
      %v1578 = vsel %vm1049, %v1503, 0
      %1580 = vmatpush.bf16.msra.mxu0 %v1560
      %1581 = vmatpush.bf16.msra.mxu0 %v1559
      %1582 = vmatpush.bf16.msra.mxu0 %v1558
      %1583 = vmatpush.bf16.msra.mxu0 %v1557
      %1584 = vmatpush.bf16.msra.mxu0 %v1556
      %1585 = vmatpush.bf16.msra.mxu0 %v1555
      %1586 = vmatpush.bf16.msra.mxu0 %v1554
      %1587 = vmatpush.bf16.msra.mxu0 %v1553
      %1588 = vmatmul.bf16.gmra.mxu0 %v1492
      %v1589 = vpop.f32.mrf.mxu0
      %v1590 = vadd.f32 0.0, %v1589
      %v1591 = vpop.f32.mrf.mxu0
      %v1592 = vadd.f32 0.0, %v1591
      %1593 = vdwg.mxu0
      %1594 = vmatpush.bf16.msra.mxu0 0
      %1595 = vmatpush.bf16.msra.mxu0 0
      %1596 = vmatpush.bf16.msra.mxu0 0
      %1597 = vmatpush.bf16.msra.mxu0 0
      %1598 = vmatpush.bf16.msra.mxu0 %v1564
      %1599 = vmatpush.bf16.msra.mxu0 %v1563
      %1600 = vmatpush.bf16.msra.mxu0 %v1562
      %1601 = vmatpush.bf16.msra.mxu0 %v1561
      %1602 = vmatmul.bf16.gmra.mxu0 %v1578
      %v1603 = vpop.f32.mrf.mxu0
      %v1604 = vadd.f32 %v1590, %v1603
      %v1605 = vpop.f32.mrf.mxu0
      %v1606 = vadd.f32 %v1592, %v1605
      %1607 = vdwg.mxu0
      %v1608 = vadd.f32 %v1450, %v1604
      %v1609 = vadd.f32 %v1451, %v1606
      %v1610 = vld [vmem:[%s3 + $0x1e0] sm:$0xf]
      %v1611 = vld [vmem:[%s3 + $0x1e4] sm:$0xf]
      %v1612 = vld [vmem:[%s3 + $0x1e8] sm:$0xf]
      %v1613 = vld [vmem:[%s3 + $0x1ec] sm:$0xf]
      %v1614 = vld [vmem:[%s3 + $0x1f0] sm:$0xf]
      %v1615 = vld [vmem:[%s3 + $0x1f4] sm:$0xf]
      %v1616 = vld [vmem:[%s3 + $0x1f8] sm:$0xf]
      %v1617 = vld [vmem:[%s3 + $0x1fc] sm:$0xf]
      %v1618 = vld [vmem:[%s3 + $0x200] sm:$0xf]
      %v1619 = vld [vmem:[%s3 + $0x204] sm:$0xf]
      %v1620 = vld [vmem:[%s3 + $0x208] sm:$0xf]
      %v1621 = vld [vmem:[%s3 + $0x20c] sm:$0xf]
      %v1622 = vld [vmem:[%s3 + $0x210] sm:$0xf]
      %v1623 = vld [vmem:[%s3 + $0x214] sm:$0xf]
      %v1624 = vld [vmem:[%s3 + $0x218] sm:$0xf]
      %v1625 = vld [vmem:[%s3 + $0x21c] sm:$0xf]
      %v1626 = vld [vmem:[%s3 + $0x220] sm:$0xf]
      %v1627 = vld [vmem:[%s3 + $0x224] sm:$0xf]
      %v1628 = vld [vmem:[%s3 + $0x228] sm:$0xf]
      %v1629 = vld [vmem:[%s3 + $0x22c] sm:$0xf]
      %v1630 = vld [vmem:[%s3 + $0x230] sm:$0xf]
      %v1631 = vld [vmem:[%s3 + $0x234] sm:$0xf]
      %v1632 = vld [vmem:[%s3 + $0x238] sm:$0xf]
      %v1633 = vld [vmem:[%s3 + $0x23c] sm:$0xf]
      %v1634 = vrot.slane %v1344, 1
      %v1635 = vrot.slane %v1479, 1
      %v1636 = vsel %vm392, %v1634, %v1635
      %v1637 = vrot.slane %v1345, 1
      %v1638 = vrot.slane %v1480, 1
      %v1639 = vsel %vm392, %v1637, %v1638
      %v1665 = vunpack.c.l.b16 %v1610
      %v1666 = vunpack.c.l.b16 %v1611
      %v1667 = vunpack.c.l.b16 %v1612
      %v1668 = vunpack.c.l.b16 %v1613
      %v1669 = vunpack.c.l.b16 %v1614
      %v1670 = vunpack.c.l.b16 %v1615
      %v1671 = vunpack.c.l.b16 %v1616
      %v1672 = vunpack.c.l.b16 %v1617
      %v1673 = vunpack.c.l.b16 %v1618
      %v1674 = vunpack.c.l.b16 %v1619
      %v1675 = vunpack.c.l.b16 %v1620
      %v1676 = vunpack.c.l.b16 %v1621
      %v1677 = vunpack.c.l.b16 %v1622
      %v1678 = vunpack.c.l.b16 %v1623
      %v1679 = vunpack.c.l.b16 %v1624
      %v1680 = vunpack.c.l.b16 %v1625
      %v1681 = vunpack.c.l.b16 %v1626
      %v1682 = vunpack.c.l.b16 %v1627
      %v1683 = vunpack.c.l.b16 %v1628
      %v1684 = vunpack.c.l.b16 %v1629
      %v1685 = vunpack.c.l.b16 %v1630
      %v1686 = vunpack.c.l.b16 %v1631
      %v1687 = vunpack.c.l.b16 %v1632
      %v1688 = vunpack.c.l.b16 %v1633
      %v1689 = vpack.c.b16 %v1666, %v1665
      %v1690 = vpack.c.b16 %v1668, %v1667
      %v1691 = vpack.c.b16 %v1670, %v1669
      %v1692 = vpack.c.b16 %v1672, %v1671
      %v1693 = vpack.c.b16 %v1674, %v1673
      %v1694 = vpack.c.b16 %v1676, %v1675
      %v1695 = vpack.c.b16 %v1678, %v1677
      %v1696 = vpack.c.b16 %v1680, %v1679
      %v1697 = vpack.c.b16 %v1682, %v1681
      %v1698 = vpack.c.b16 %v1684, %v1683
      %v1699 = vpack.c.b16 %v1686, %v1685
      %v1700 = vpack.c.b16 %v1688, %v1687
      %v1714 = vsel %vm1049, %v1639, 0
      %1716 = vmatpush.bf16.msra.mxu0 %v1696
      %1717 = vmatpush.bf16.msra.mxu0 %v1695
      %1718 = vmatpush.bf16.msra.mxu0 %v1694
      %1719 = vmatpush.bf16.msra.mxu0 %v1693
      %1720 = vmatpush.bf16.msra.mxu0 %v1692
      %1721 = vmatpush.bf16.msra.mxu0 %v1691
      %1722 = vmatpush.bf16.msra.mxu0 %v1690
      %1723 = vmatpush.bf16.msra.mxu0 %v1689
      %1724 = vmatmul.bf16.gmra.mxu0 %v1636
      %v1725 = vpop.f32.mrf.mxu0
      %v1726 = vadd.f32 0.0, %v1725
      %v1727 = vpop.f32.mrf.mxu0
      %v1728 = vadd.f32 0.0, %v1727
      %1729 = vdwg.mxu0
      %1730 = vmatpush.bf16.msra.mxu0 0
      %1731 = vmatpush.bf16.msra.mxu0 0
      %1732 = vmatpush.bf16.msra.mxu0 0
      %1733 = vmatpush.bf16.msra.mxu0 0
      %1734 = vmatpush.bf16.msra.mxu0 %v1700
      %1735 = vmatpush.bf16.msra.mxu0 %v1699
      %1736 = vmatpush.bf16.msra.mxu0 %v1698
      %1737 = vmatpush.bf16.msra.mxu0 %v1697
      %1738 = vmatmul.bf16.gmra.mxu0 %v1714
      %v1739 = vpop.f32.mrf.mxu0
      %v1740 = vadd.f32 %v1726, %v1739
      %v1741 = vpop.f32.mrf.mxu0
      %v1742 = vadd.f32 %v1728, %v1741
      %1743 = vdwg.mxu0
      %v1744 = vadd.f32 %v1608, %v1740
      %v1745 = vadd.f32 %v1609, %v1742
      %v1746 = vld [vmem:[%s3 + $0x240] sm:$0xf]
      %v1747 = vld [vmem:[%s3 + $0x244] sm:$0xf]
      %v1748 = vld [vmem:[%s3 + $0x248] sm:$0xf]
      %v1749 = vld [vmem:[%s3 + $0x24c] sm:$0xf]
      %v1750 = vld [vmem:[%s3 + $0x250] sm:$0xf]
      %v1751 = vld [vmem:[%s3 + $0x254] sm:$0xf]
      %v1752 = vld [vmem:[%s3 + $0x258] sm:$0xf]
      %v1753 = vld [vmem:[%s3 + $0x25c] sm:$0xf]
      %v1754 = vld [vmem:[%s3 + $0x260] sm:$0xf]
      %v1755 = vld [vmem:[%s3 + $0x264] sm:$0xf]
      %v1756 = vld [vmem:[%s3 + $0x268] sm:$0xf]
      %v1757 = vld [vmem:[%s3 + $0x26c] sm:$0xf]
      %v1758 = vld [vmem:[%s3 + $0x270] sm:$0xf]
      %v1759 = vld [vmem:[%s3 + $0x274] sm:$0xf]
      %v1760 = vld [vmem:[%s3 + $0x278] sm:$0xf]
      %v1761 = vld [vmem:[%s3 + $0x27c] sm:$0xf]
      %v1762 = vld [vmem:[%s3 + $0x280] sm:$0xf]
      %v1763 = vld [vmem:[%s3 + $0x284] sm:$0xf]
      %v1764 = vld [vmem:[%s3 + $0x288] sm:$0xf]
      %v1765 = vld [vmem:[%s3 + $0x28c] sm:$0xf]
      %v1766 = vld [vmem:[%s3 + $0x290] sm:$0xf]
      %v1767 = vld [vmem:[%s3 + $0x294] sm:$0xf]
      %v1768 = vld [vmem:[%s3 + $0x298] sm:$0xf]
      %v1769 = vld [vmem:[%s3 + $0x29c] sm:$0xf]
      %v1770 = vpack.c.b16 %v1477, %v946
      %v1771 = vpack.c.b16 %v1478, %v947
      %v1797 = vunpack.c.l.b16 %v1746
      %v1798 = vunpack.c.l.b16 %v1747
      %v1799 = vunpack.c.l.b16 %v1748
      %v1800 = vunpack.c.l.b16 %v1749
      %v1801 = vunpack.c.l.b16 %v1750
      %v1802 = vunpack.c.l.b16 %v1751
      %v1803 = vunpack.c.l.b16 %v1752
      %v1804 = vunpack.c.l.b16 %v1753
      %v1805 = vunpack.c.l.b16 %v1754
      %v1806 = vunpack.c.l.b16 %v1755
      %v1807 = vunpack.c.l.b16 %v1756
      %v1808 = vunpack.c.l.b16 %v1757
      %v1809 = vunpack.c.l.b16 %v1758
      %v1810 = vunpack.c.l.b16 %v1759
      %v1811 = vunpack.c.l.b16 %v1760
      %v1812 = vunpack.c.l.b16 %v1761
      %v1813 = vunpack.c.l.b16 %v1762
      %v1814 = vunpack.c.l.b16 %v1763
      %v1815 = vunpack.c.l.b16 %v1764
      %v1816 = vunpack.c.l.b16 %v1765
      %v1817 = vunpack.c.l.b16 %v1766
      %v1818 = vunpack.c.l.b16 %v1767
      %v1819 = vunpack.c.l.b16 %v1768
      %v1820 = vunpack.c.l.b16 %v1769
      %v1821 = vpack.c.b16 %v1798, %v1797
      %v1822 = vpack.c.b16 %v1800, %v1799
      %v1823 = vpack.c.b16 %v1802, %v1801
      %v1824 = vpack.c.b16 %v1804, %v1803
      %v1825 = vpack.c.b16 %v1806, %v1805
      %v1826 = vpack.c.b16 %v1808, %v1807
      %v1827 = vpack.c.b16 %v1810, %v1809
      %v1828 = vpack.c.b16 %v1812, %v1811
      %v1829 = vpack.c.b16 %v1814, %v1813
      %v1830 = vpack.c.b16 %v1816, %v1815
      %v1831 = vpack.c.b16 %v1818, %v1817
      %v1832 = vpack.c.b16 %v1820, %v1819
      %v1846 = vsel %vm1049, %v1771, 0
      %1848 = vmatpush.bf16.msra.mxu0 %v1828
      %1849 = vmatpush.bf16.msra.mxu0 %v1827
      %1850 = vmatpush.bf16.msra.mxu0 %v1826
      %1851 = vmatpush.bf16.msra.mxu0 %v1825
      %1852 = vmatpush.bf16.msra.mxu0 %v1824
      %1853 = vmatpush.bf16.msra.mxu0 %v1823
      %1854 = vmatpush.bf16.msra.mxu0 %v1822
      %1855 = vmatpush.bf16.msra.mxu0 %v1821
      %1856 = vmatmul.bf16.gmra.mxu0 %v1770
      %v1857 = vpop.f32.mrf.mxu0
      %v1858 = vadd.f32 0.0, %v1857
      %v1859 = vpop.f32.mrf.mxu0
      %v1860 = vadd.f32 0.0, %v1859
      %1861 = vdwg.mxu0
      %1862 = vmatpush.bf16.msra.mxu0 0
      %1863 = vmatpush.bf16.msra.mxu0 0
      %1864 = vmatpush.bf16.msra.mxu0 0
      %1865 = vmatpush.bf16.msra.mxu0 0
      %1866 = vmatpush.bf16.msra.mxu0 %v1832
      %1867 = vmatpush.bf16.msra.mxu0 %v1831
      %1868 = vmatpush.bf16.msra.mxu0 %v1830
      %1869 = vmatpush.bf16.msra.mxu0 %v1829
      %1870 = vmatmul.bf16.gmra.mxu0 %v1846
      %v1871 = vpop.f32.mrf.mxu0
      %v1872 = vadd.f32 %v1858, %v1871
      %v1873 = vpop.f32.mrf.mxu0
      %v1874 = vadd.f32 %v1860, %v1873
      %1875 = vdwg.mxu0
      %v1876 = vadd.f32 %v1744, %v1872
      %v1877 = vadd.f32 %v1745, %v1874
      %v1878 = vld [vmem:[%s3 + $0x2a0] sm:$0xf]
      %v1879 = vld [vmem:[%s3 + $0x2a4] sm:$0xf]
      %v1880 = vld [vmem:[%s3 + $0x2a8] sm:$0xf]
      %v1881 = vld [vmem:[%s3 + $0x2ac] sm:$0xf]
      %v1882 = vld [vmem:[%s3 + $0x2b0] sm:$0xf]
      %v1883 = vld [vmem:[%s3 + $0x2b4] sm:$0xf]
      %v1884 = vld [vmem:[%s3 + $0x2b8] sm:$0xf]
      %v1885 = vld [vmem:[%s3 + $0x2bc] sm:$0xf]
      %v1886 = vld [vmem:[%s3 + $0x2c0] sm:$0xf]
      %v1887 = vld [vmem:[%s3 + $0x2c4] sm:$0xf]
      %v1888 = vld [vmem:[%s3 + $0x2c8] sm:$0xf]
      %v1889 = vld [vmem:[%s3 + $0x2cc] sm:$0xf]
      %v1890 = vld [vmem:[%s3 + $0x2d0] sm:$0xf]
      %v1891 = vld [vmem:[%s3 + $0x2d4] sm:$0xf]
      %v1892 = vld [vmem:[%s3 + $0x2d8] sm:$0xf]
      %v1893 = vld [vmem:[%s3 + $0x2dc] sm:$0xf]
      %v1894 = vld [vmem:[%s3 + $0x2e0] sm:$0xf]
      %v1895 = vld [vmem:[%s3 + $0x2e4] sm:$0xf]
      %v1896 = vld [vmem:[%s3 + $0x2e8] sm:$0xf]
      %v1897 = vld [vmem:[%s3 + $0x2ec] sm:$0xf]
      %v1898 = vld [vmem:[%s3 + $0x2f0] sm:$0xf]
      %v1899 = vld [vmem:[%s3 + $0x2f4] sm:$0xf]
      %v1900 = vld [vmem:[%s3 + $0x2f8] sm:$0xf]
      %v1901 = vld [vmem:[%s3 + $0x2fc] sm:$0xf]
      %v1903 = vunpack.c.l.b16 %v228
      %v1904 = vunpack.c.h.b16 %v228
      %v1905 = vpack.c.b16 %v1903, %v1903
      %v1906 = vpack.c.b16 %v1904, %v1904
      %v1908 = vshrl.u32 %v1770, 16
      %v1910 = vshll.u32 %v1770, 16
      %v1912 = vrot.slane %v1910, 1
      %v1913 = vor.u32 %v1908, %v1912
      %v1915 = vshll.u32 %v1905, 16
      %v1917 = vrot.slane %v1915, 1
      %v1918 = vsel %vm261, %v1913, %v1917
      %v1919 = vshrl.u32 %v1771, 16
      %v1921 = vshll.u32 %v1771, 16
      %v1923 = vrot.slane %v1921, 1
      %v1924 = vor.u32 %v1919, %v1923
      %v1926 = vshll.u32 %v1906, 16
      %v1928 = vrot.slane %v1926, 1
      %v1929 = vsel %vm261, %v1924, %v1928
      %v1955 = vunpack.c.l.b16 %v1878
      %v1956 = vunpack.c.l.b16 %v1879
      %v1957 = vunpack.c.l.b16 %v1880
      %v1958 = vunpack.c.l.b16 %v1881
      %v1959 = vunpack.c.l.b16 %v1882
      %v1960 = vunpack.c.l.b16 %v1883
      %v1961 = vunpack.c.l.b16 %v1884
      %v1962 = vunpack.c.l.b16 %v1885
      %v1963 = vunpack.c.l.b16 %v1886
      %v1964 = vunpack.c.l.b16 %v1887
      %v1965 = vunpack.c.l.b16 %v1888
      %v1966 = vunpack.c.l.b16 %v1889
      %v1967 = vunpack.c.l.b16 %v1890
      %v1968 = vunpack.c.l.b16 %v1891
      %v1969 = vunpack.c.l.b16 %v1892
      %v1970 = vunpack.c.l.b16 %v1893
      %v1971 = vunpack.c.l.b16 %v1894
      %v1972 = vunpack.c.l.b16 %v1895
      %v1973 = vunpack.c.l.b16 %v1896
      %v1974 = vunpack.c.l.b16 %v1897
      %v1975 = vunpack.c.l.b16 %v1898
      %v1976 = vunpack.c.l.b16 %v1899
      %v1977 = vunpack.c.l.b16 %v1900
      %v1978 = vunpack.c.l.b16 %v1901
      %v1979 = vpack.c.b16 %v1956, %v1955
      %v1980 = vpack.c.b16 %v1958, %v1957
      %v1981 = vpack.c.b16 %v1960, %v1959
      %v1982 = vpack.c.b16 %v1962, %v1961
      %v1983 = vpack.c.b16 %v1964, %v1963
      %v1984 = vpack.c.b16 %v1966, %v1965
      %v1985 = vpack.c.b16 %v1968, %v1967
      %v1986 = vpack.c.b16 %v1970, %v1969
      %v1987 = vpack.c.b16 %v1972, %v1971
      %v1988 = vpack.c.b16 %v1974, %v1973
      %v1989 = vpack.c.b16 %v1976, %v1975
      %v1990 = vpack.c.b16 %v1978, %v1977
      %v2004 = vsel %vm1049, %v1929, 0
      %2006 = vmatpush.bf16.msra.mxu0 %v1986
      %2007 = vmatpush.bf16.msra.mxu0 %v1985
      %2008 = vmatpush.bf16.msra.mxu0 %v1984
      %2009 = vmatpush.bf16.msra.mxu0 %v1983
      %2010 = vmatpush.bf16.msra.mxu0 %v1982
      %2011 = vmatpush.bf16.msra.mxu0 %v1981
      %2012 = vmatpush.bf16.msra.mxu0 %v1980
      %2013 = vmatpush.bf16.msra.mxu0 %v1979
      %2014 = vmatmul.bf16.gmra.mxu0 %v1918
      %v2015 = vpop.f32.mrf.mxu0
      %v2016 = vadd.f32 0.0, %v2015
      %v2017 = vpop.f32.mrf.mxu0
      %v2018 = vadd.f32 0.0, %v2017
      %2019 = vdwg.mxu0
      %2020 = vmatpush.bf16.msra.mxu0 0
      %2021 = vmatpush.bf16.msra.mxu0 0
      %2022 = vmatpush.bf16.msra.mxu0 0
      %2023 = vmatpush.bf16.msra.mxu0 0
      %2024 = vmatpush.bf16.msra.mxu0 %v1990
      %2025 = vmatpush.bf16.msra.mxu0 %v1989
      %2026 = vmatpush.bf16.msra.mxu0 %v1988
      %2027 = vmatpush.bf16.msra.mxu0 %v1987
      %2028 = vmatmul.bf16.gmra.mxu0 %v2004
      %v2029 = vpop.f32.mrf.mxu0
      %v2030 = vadd.f32 %v2016, %v2029
      %v2031 = vpop.f32.mrf.mxu0
      %v2032 = vadd.f32 %v2018, %v2031
      %2033 = vdwg.mxu0
      %v2034 = vadd.f32 %v1876, %v2030
      %v2035 = vadd.f32 %v1877, %v2032
      %v2036 = vld [vmem:[%s3 + $0x300] sm:$0xf]
      %v2037 = vld [vmem:[%s3 + $0x304] sm:$0xf]
      %v2038 = vld [vmem:[%s3 + $0x308] sm:$0xf]
      %v2039 = vld [vmem:[%s3 + $0x30c] sm:$0xf]
      %v2040 = vld [vmem:[%s3 + $0x310] sm:$0xf]
      %v2041 = vld [vmem:[%s3 + $0x314] sm:$0xf]
      %v2042 = vld [vmem:[%s3 + $0x318] sm:$0xf]
      %v2043 = vld [vmem:[%s3 + $0x31c] sm:$0xf]
      %v2044 = vld [vmem:[%s3 + $0x320] sm:$0xf]
      %v2045 = vld [vmem:[%s3 + $0x324] sm:$0xf]
      %v2046 = vld [vmem:[%s3 + $0x328] sm:$0xf]
      %v2047 = vld [vmem:[%s3 + $0x32c] sm:$0xf]
      %v2048 = vld [vmem:[%s3 + $0x330] sm:$0xf]
      %v2049 = vld [vmem:[%s3 + $0x334] sm:$0xf]
      %v2050 = vld [vmem:[%s3 + $0x338] sm:$0xf]
      %v2051 = vld [vmem:[%s3 + $0x33c] sm:$0xf]
      %v2052 = vld [vmem:[%s3 + $0x340] sm:$0xf]
      %v2053 = vld [vmem:[%s3 + $0x344] sm:$0xf]
      %v2054 = vld [vmem:[%s3 + $0x348] sm:$0xf]
      %v2055 = vld [vmem:[%s3 + $0x34c] sm:$0xf]
      %v2056 = vld [vmem:[%s3 + $0x350] sm:$0xf]
      %v2057 = vld [vmem:[%s3 + $0x354] sm:$0xf]
      %v2058 = vld [vmem:[%s3 + $0x358] sm:$0xf]
      %v2059 = vld [vmem:[%s3 + $0x35c] sm:$0xf]
      %v2060 = vrot.slane %v1770, 1
      %v2061 = vrot.slane %v1905, 1
      %v2062 = vsel %vm392, %v2060, %v2061
      %v2063 = vrot.slane %v1771, 1
      %v2064 = vrot.slane %v1906, 1
      %v2065 = vsel %vm392, %v2063, %v2064
      %v2091 = vunpack.c.l.b16 %v2036
      %v2092 = vunpack.c.l.b16 %v2037
      %v2093 = vunpack.c.l.b16 %v2038
      %v2094 = vunpack.c.l.b16 %v2039
      %v2095 = vunpack.c.l.b16 %v2040
      %v2096 = vunpack.c.l.b16 %v2041
      %v2097 = vunpack.c.l.b16 %v2042
      %v2098 = vunpack.c.l.b16 %v2043
      %v2099 = vunpack.c.l.b16 %v2044
      %v2100 = vunpack.c.l.b16 %v2045
      %v2101 = vunpack.c.l.b16 %v2046
      %v2102 = vunpack.c.l.b16 %v2047
      %v2103 = vunpack.c.l.b16 %v2048
      %v2104 = vunpack.c.l.b16 %v2049
      %v2105 = vunpack.c.l.b16 %v2050
      %v2106 = vunpack.c.l.b16 %v2051
      %v2107 = vunpack.c.l.b16 %v2052
      %v2108 = vunpack.c.l.b16 %v2053
      %v2109 = vunpack.c.l.b16 %v2054
      %v2110 = vunpack.c.l.b16 %v2055
      %v2111 = vunpack.c.l.b16 %v2056
      %v2112 = vunpack.c.l.b16 %v2057
      %v2113 = vunpack.c.l.b16 %v2058
      %v2114 = vunpack.c.l.b16 %v2059
      %v2115 = vpack.c.b16 %v2092, %v2091
      %v2116 = vpack.c.b16 %v2094, %v2093
      %v2117 = vpack.c.b16 %v2096, %v2095
      %v2118 = vpack.c.b16 %v2098, %v2097
      %v2119 = vpack.c.b16 %v2100, %v2099
      %v2120 = vpack.c.b16 %v2102, %v2101
      %v2121 = vpack.c.b16 %v2104, %v2103
      %v2122 = vpack.c.b16 %v2106, %v2105
      %v2123 = vpack.c.b16 %v2108, %v2107
      %v2124 = vpack.c.b16 %v2110, %v2109
      %v2125 = vpack.c.b16 %v2112, %v2111
      %v2126 = vpack.c.b16 %v2114, %v2113
      %v2140 = vsel %vm1049, %v2065, 0
      %2142 = vmatpush.bf16.msra.mxu0 %v2122
      %2143 = vmatpush.bf16.msra.mxu0 %v2121
      %2144 = vmatpush.bf16.msra.mxu0 %v2120
      %2145 = vmatpush.bf16.msra.mxu0 %v2119
      %2146 = vmatpush.bf16.msra.mxu0 %v2118
      %2147 = vmatpush.bf16.msra.mxu0 %v2117
      %2148 = vmatpush.bf16.msra.mxu0 %v2116
      %2149 = vmatpush.bf16.msra.mxu0 %v2115
      %2150 = vmatmul.bf16.gmra.mxu0 %v2062
      %v2151 = vpop.f32.mrf.mxu0
      %v2152 = vadd.f32 0.0, %v2151
      %v2153 = vpop.f32.mrf.mxu0
      %v2154 = vadd.f32 0.0, %v2153
      %2155 = vdwg.mxu0
      %2156 = vmatpush.bf16.msra.mxu0 0
      %2157 = vmatpush.bf16.msra.mxu0 0
      %2158 = vmatpush.bf16.msra.mxu0 0
      %2159 = vmatpush.bf16.msra.mxu0 0
      %2160 = vmatpush.bf16.msra.mxu0 %v2126
      %2161 = vmatpush.bf16.msra.mxu0 %v2125
      %2162 = vmatpush.bf16.msra.mxu0 %v2124
      %2163 = vmatpush.bf16.msra.mxu0 %v2123
      %2164 = vmatmul.bf16.gmra.mxu0 %v2140
      %v2165 = vpop.f32.mrf.mxu0
      %v2166 = vadd.f32 %v2152, %v2165
      %v2167 = vpop.f32.mrf.mxu0
      %v2168 = vadd.f32 %v2154, %v2167
      %2169 = vdwg.mxu0
      %v2170 = vadd.f32 %v2034, %v2166
      %v2171 = vadd.f32 %v2035, %v2168
      %v2172 = vmax.f32 %v2170, 0.0
      %v2173 = vmax.f32 %v2171, 0.0
      %v2174 = vpack.c.bf16 %v889, %v889
      %v2175 = vpack.c.bf16 %v890, %v890
      %vm2176 = vcmask 781312
      %2177 = vst.msk [vmem:[%s217] sm:$0xf] %vm2176, %v2174
      %2178 = vst.msk [vmem:[%s217 + $0x4] sm:$0xf] %vm2176, %v2175
      %v2179 = vpack.c.bf16 %v2172, %v2172
      %v2180 = vpack.c.bf16 %v2173, %v2173
      %2183 = vrot.lane.b32.xlu0 %v2179, 96
      %v2184 = vpop.permute.xlu0 %2183
      %2185 = vrot.lane.b32.xlu0 %v2180, 96
      %v2186 = vpop.permute.xlu0 %2185
      %vm2189 = vcmask 1044224
      %2190 = vst.msk [vmem:[%s217] sm:$0xf] %vm2189, %v2184
      %2191 = vst.msk [vmem:[%s217 + $0x4] sm:$0xf] %vm2189, %v2186
      %p2192 = scmp.lt.s32.totalorder %s15, 1
      %s2193 = scalar_select %p2192, %s15, 1
      %s2194 = smul.addr %s2193, 2
      %s2195 = smul.addr %s2194, 4
      %s2196 = scalar_lea.vmem %s4, %s2195
      // Predicated region
      $region37: #{inception2_forward.15} parent=35 // pred_check
        %p2197 = pneg %p127
      $region38: #{inception2_forward.15} parent=35 // pred_check_branch
        %2199 = sbr.rel (%p2197) target = $region40
      $region39: #{inception2_forward.15} parent=35 // pred_region
        _
      $region40: #{inception2_forward.15} parent=35 // pred_fallthru
        _
    $region36: #{inception2_forward.15} parent=5 // pred_fallthru
      _
    %p2200 = scmp.le.s32.totalorder 2, %s10
    // Predicated region
    $region41: #{inception2_forward.15} parent=5 // pred_check
      %p2201 = pneg %p2200
    $region42: #{inception2_forward.15} parent=5 // pred_check_branch
      %2203 = sbr.rel (%p2201) target = $region44
    $region43: #{inception2_forward.15} parent=5 // pred_region
      %s2204 = ssub.s32 %s10, 2
      // Predicated region
      $region45: #{inception2_forward.15} parent=43 // pred_check
        %p2205 = pneg %p133
      $region46: #{inception2_forward.15} parent=43 // pred_check_branch
        %2207 = sbr.rel (%p2205) target = $region48
      $region47: #{inception2_forward.15} parent=43 // pred_region
        %p2208 = scmp.lt.s32.totalorder %s16, 1
        %s2209 = scalar_select %p2208, %s16, 1
        %s2210 = smul.addr %s2209, 2
        %s2211 = smul.addr %s2210, 4
        %s2212 = scalar_lea.vmem %s4, %s2211
      $region48: #{inception2_forward.15} parent=43 // pred_fallthru
        _
    $region44: #{inception2_forward.15} parent=5 // pred_fallthru
      _
  $region6: #{inception2_forward.15} parent=0 // loop_footer
    %s14 = sadd.s32 1, %s10
  $region7: #{inception2_forward.15} parent=0 // loop_footer_branch
    %9 = sbr.rel target = $region3
  $region8: #{inception2_forward.15} parent=0 // loop_exit
    _

</llo_original>
